<compile_context>
chip_gen: v7x
topology: tpu7x:2x2x1
jax: 0.10.0
libtpu: 0.0.40
codegen_flags: <defaults>
</compile_context>

<pallas_src>
import functools

import jax
import jax.numpy as jnp
import numpy as np
from jax import lax
from jax.experimental import pallas as pl
from jax.experimental.pallas import tpu as pltpu


def _conv3x3_im2col(load_tap, col_ref, w_ref, *, Wp, C):
    """3x3 conv as one fused (M, 9*C) @ (9*C, C) bf16 MXU matmul.

    load_tap(off) returns the (M, C) bf16 slice of the zero-padded source
    starting at flat padded offset off = dy*Wp + dx (dy, dx in {0, 1, 2}).
    """
    k = 0
    for dy in range(3):
        for dx in range(3):
            col_ref[:, pl.ds(k * C, C)] = load_tap(dy * Wp + dx)
            k += 1
    return jnp.dot(col_ref[...], w_ref[...], preferred_element_type=jnp.float32)


def _basic_block_kernel(x_ref, w1_ref, s1_ref, t1_ref, w2_ref, s2_ref, t2_ref,
                        o_ref, col_ref, mid_ref, *, H, W):
    Hp, Wp = H + 2, W + 2
    HWp = Hp * Wp
    C = x_ref.shape[-1]
    # Rows computed per matmul: padded positions [Wp+1, HWp-Wp-1) cover every
    # interior pixel (plus a few halo-column rows that are masked / discarded).
    M = HWp - 2 * Wp - 2

    # ---- conv1 (im2col fused matmul, bf16) -> bn1 -> relu ----
    h = _conv3x3_im2col(
        lambda off: x_ref[pl.ds(off, M), :].astype(jnp.bfloat16),
        col_ref, w1_ref, Wp=Wp, C=C)
    h = jnp.maximum(h * s1_ref[...] + t1_ref[...], 0.0)

    # Park conv1 activations in a zero-padded bf16 scratch so conv2 reuses the
    # same constant-offset tap loads (and halves the scratch footprint).
    mid_ref[...] = jnp.zeros_like(mid_ref)                  # halo rows = 0
    mid_ref[pl.ds(Wp + 1, M), :] = h.astype(mid_ref.dtype)
    zrow = jnp.zeros((1, C), mid_ref.dtype)                 # hoisted constant
    for i in range(1, Hp - 1):                              # re-zero left/right halo
        mid_ref[pl.ds(i * Wp, 1), :] = zrow                 # columns clobbered by the
        mid_ref[pl.ds(i * Wp + Wp - 1, 1), :] = zrow        # flat (wrap-around) store

    # ---- conv2 (im2col fused matmul, bf16) -> bn2 ----
    y = _conv3x3_im2col(lambda off: mid_ref[pl.ds(off, M), :],
                        col_ref, w2_ref, Wp=Wp, C=C)
    y = y * s2_ref[...] + t2_ref[...]

    # ---- identity residual + relu ----
    y = jnp.maximum(y + x_ref[pl.ds(Wp + 1, M), :], 0.0)

    o_ref[...] = jnp.zeros_like(o_ref)                      # deterministic halo rows
    o_ref[pl.ds(Wp + 1, M), :] = y.astype(o_ref.dtype)


def basic_block_nhwc(x_nhwc, w1_oihw, bn1, w2_oihw, bn2, *, eps=1e-5):
    """NHWC-native BasicBlock. x_nhwc: (B, H, W, C); w*: (C, C, 3, 3) OIHW."""
    B, H, W, C = x_nhwc.shape
    Hp, Wp = H + 2, W + 2
    HWp = Hp * Wp
    M = HWp - 2 * Wp - 2

    # Zero-pad spatially and flatten: (B, HWp, C), channels on lanes.
    xp = jnp.pad(x_nhwc, ((0, 0), (1, 1), (1, 1), (0, 0))).reshape(B, HWp, C)

    def fold_bn(gamma, beta, mean, var):
        scale = gamma / jnp.sqrt(var + eps)
        shift = beta - mean * scale
        return (scale.reshape(1, C).astype(jnp.float32),
                shift.reshape(1, C).astype(jnp.float32))

    def taps(w_oihw):
        # OIHW -> (ky, kx, Cin, Cout) -> (9*Cin, Cout), tap-major, bf16 for the MXU.
        return (jnp.transpose(w_oihw, (2, 3, 1, 0))
                .reshape(9 * C, C).astype(jnp.bfloat16))

    s1, t1 = fold_bn(*bn1)
    s2, t2 = fold_bn(*bn2)
    w1 = taps(w1_oihw)
    w2 = taps(w2_oihw)

    kernel = functools.partial(_basic_block_kernel, H=H, W=W)

    flops = 2 * (2 * B * M * (9 * C) * C)                   # two fused 3x3 convs
    bytes_accessed = (4 * 2 * B * HWp * C                   # x in + out (f32)
                      + 2 * 2 * 9 * C * C                   # bf16 weights
                      + 4 * 4 * C)                          # folded BN params

    out_p = pl.pallas_call(
        kernel,
        out_shape=jax.ShapeDtypeStruct((B, HWp, C), x_nhwc.dtype),
        grid=(B,),
        in_specs=[
            pl.BlockSpec((None, HWp, C), lambda b: (b, 0, 0)),   # x (one image/step)
            pl.BlockSpec((9 * C, C), lambda b: (0, 0)),          # conv1 weights (bf16)
            pl.BlockSpec((1, C), lambda b: (0, 0)),              # bn1 scale
            pl.BlockSpec((1, C), lambda b: (0, 0)),              # bn1 shift
            pl.BlockSpec((9 * C, C), lambda b: (0, 0)),          # conv2 weights (bf16)
            pl.BlockSpec((1, C), lambda b: (0, 0)),              # bn2 scale
            pl.BlockSpec((1, C), lambda b: (0, 0)),              # bn2 shift
        ],
        out_specs=pl.BlockSpec((None, HWp, C), lambda b: (b, 0, 0)),
        scratch_shapes=[pltpu.VMEM((M, 9 * C), jnp.bfloat16),    # im2col (reused)
                        pltpu.VMEM((HWp, C), jnp.bfloat16)],     # padded conv1 act
        compiler_params=pltpu.CompilerParams(
            dimension_semantics=("parallel",)),
        cost_estimate=pl.CostEstimate(
            flops=flops, transcendentals=0, bytes_accessed=bytes_accessed),
    )(xp, w1, s1, t1, w2, s2, t2)

    # Strip the spatial halo.
    return out_p.reshape(B, Hp, Wp, C)[:, 1:-1, 1:-1, :]


def basic_block(x_nchw, w1_oihw, bn1, w2_oihw, bn2, *, eps=1e-5):
    """PyTorch-layout wrapper. x_nchw: (B, C, H, W). bn* = (gamma, beta, mean, var)."""
    x = jnp.transpose(x_nchw, (0, 2, 3, 1))                      # NCHW -> NHWC
    y = basic_block_nhwc(x, w1_oihw, bn1, w2_oihw, bn2, eps=eps)
    return jnp.transpose(y, (0, 3, 1, 2))                        # NHWC -> NCHW


def reference(x_nchw, w1_oihw, bn1, w2_oihw, bn2, *, eps=1e-5, mxu_dtype=None):
    """Pure-JAX reference matching the PyTorch BasicBlock (eval-mode BN).

    If mxu_dtype is set (e.g. bf16), conv inputs/weights are rounded to that
    dtype before the f32-accumulated conv, mirroring the kernel's bf16 MXU path.
    """
    x = jnp.transpose(x_nchw, (0, 2, 3, 1))                      # NHWC

    def rnd(a):
        return a if mxu_dtype is None else a.astype(mxu_dtype).astype(a.dtype)

    def conv(y, w_oihw):
        w = jnp.transpose(w_oihw, (2, 3, 1, 0))                  # HWIO
        return lax.conv_general_dilated(
            rnd(y), rnd(w), (1, 1), "SAME",
            dimension_numbers=("NHWC", "HWIO", "NHWC"),
            precision=lax.Precision.HIGHEST)

    def bn(y, params):
        gamma, beta, mean, var = params
        return (y - mean) * (gamma / jnp.sqrt(var + eps)) + beta

    y = jnp.maximum(bn(conv(x, w1_oihw), bn1), 0.0)
    y = bn(conv(y, w2_oihw), bn2)
    y = jnp.maximum(y + x, 0.0)
    return jnp.transpose(y, (0, 3, 1, 2))


if __name__ == "__main__":
    # inplanes == planes, stride=1 -> identity residual (module defaults).
    B, C, H, W = 2, 128, 16, 16
    key = jax.random.PRNGKey(0)
    (kx, kw1, kw2,
     kg1, kb1, km1, kv1,
     kg2, kb2, km2, kv2) = jax.random.split(key, 11)

    x = jax.random.normal(kx, (B, C, H, W), dtype=jnp.float32)
    wlim = 1.0 / np.sqrt(C * 9)
    w1 = jax.random.uniform(kw1, (C, C, 3, 3), jnp.float32, -wlim, wlim)
    w2 = jax.random.uniform(kw2, (C, C, 3, 3), jnp.float32, -wlim, wlim)

    def bn_params(kg, kb, km, kv):
        gamma = jax.random.uniform(kg, (C,), jnp.float32, 0.5, 1.5)
        beta = 0.1 * jax.random.normal(kb, (C,), dtype=jnp.float32)
        mean = 0.1 * jax.random.normal(km, (C,), dtype=jnp.float32)
        var = jax.random.uniform(kv, (C,), jnp.float32, 0.5, 1.5)
        return gamma, beta, mean, var

    bn1 = bn_params(kg1, kb1, km1, kv1)
    bn2 = bn_params(kg2, kb2, km2, kv2)

    out = basic_block(x, w1, bn1, w2, bn2)
    out = jax.block_until_ready(out)

    # The kernel runs its matmuls in bf16 (f32 accumulate) per the perf review,
    # so compare against a reference whose conv inputs/weights see the same
    # bf16 rounding; remaining differences are accumulation-order noise.
    ref = reference(x, w1, bn1, w2, bn2, mxu_dtype=jnp.bfloat16)
    np.testing.assert_allclose(np.asarray(out), np.asarray(ref),
                               rtol=2e-2, atol=2e-2)

    print("KERNEL_OK")
</pallas_src>

<mosaic_0001>
module attributes {stable_mosaic.version = 11 : i64} {
  func.func @_basic_block_kernel(%arg0: i32, %arg1: memref<1x324x128xf32, #tpu.memory_space<vmem>>, %arg2: memref<1152x128xbf16, #tpu.memory_space<vmem>>, %arg3: memref<1x128xf32, #tpu.memory_space<vmem>>, %arg4: memref<1x128xf32, #tpu.memory_space<vmem>>, %arg5: memref<1152x128xbf16, #tpu.memory_space<vmem>>, %arg6: memref<1x128xf32, #tpu.memory_space<vmem>>, %arg7: memref<1x128xf32, #tpu.memory_space<vmem>>, %arg8: memref<1x324x128xf32, #tpu.memory_space<vmem>>, %arg9: memref<286x1152xbf16, #tpu.memory_space<vmem>>, %arg10: memref<324x128xbf16, #tpu.memory_space<vmem>>) attributes {dimension_semantics = [#tpu.dimension_semantics<parallel>], iteration_bounds = array<i64: 2>, scalar_prefetch = 0 : i64, scratch_operands = 2 : i64, tpu.core_type = #tpu.core_type<tc>, window_params = [{transform_indices = @transform_0, window_bounds = array<i64: 1, 324, 128>}, {pipeline_mode = #tpu.pipeline_mode<synchronous>, transform_indices = @transform_1, window_bounds = array<i64: 1152, 128>}, {pipeline_mode = #tpu.pipeline_mode<synchronous>, transform_indices = @transform_2, window_bounds = array<i64: 1, 128>}, {pipeline_mode = #tpu.pipeline_mode<synchronous>, transform_indices = @transform_3, window_bounds = array<i64: 1, 128>}, {pipeline_mode = #tpu.pipeline_mode<synchronous>, transform_indices = @transform_4, window_bounds = array<i64: 1152, 128>}, {pipeline_mode = #tpu.pipeline_mode<synchronous>, transform_indices = @transform_5, window_bounds = array<i64: 1, 128>}, {pipeline_mode = #tpu.pipeline_mode<synchronous>, transform_indices = @transform_6, window_bounds = array<i64: 1, 128>}, {transform_indices = @transform_7, window_bounds = array<i64: 1, 324, 128>}]} {
    %c0 = arith.constant 0 : index
    %c0_0 = arith.constant 0 : index
    %c0_1 = arith.constant 0 : index
    %0 = vector.load %arg1[%c0, %c0_0, %c0_1] : memref<1x324x128xf32, #tpu.memory_space<vmem>>, vector<1x286x128xf32>
    %1 = vector.shape_cast %0 : vector<1x286x128xf32> to vector<286x128xf32>
    %2 = arith.truncf %1 : vector<286x128xf32> to vector<286x128xbf16>
    %c0_2 = arith.constant 0 : index
    %c0_3 = arith.constant 0 : index
    %3 = vector.load %arg9[%c0_2, %c0_3] : memref<286x1152xbf16, #tpu.memory_space<vmem>>, vector<286x128xbf16>
    tpu.vector_store %arg9[%c0_2, %c0_3], %2 {strides = array<i32>} : memref<286x1152xbf16, #tpu.memory_space<vmem>>, vector<286x128xbf16>,
    %c0_4 = arith.constant 0 : index
    %c1 = arith.constant 1 : index
    %c0_5 = arith.constant 0 : index
    %4 = vector.load %arg1[%c0_4, %c1, %c0_5] : memref<1x324x128xf32, #tpu.memory_space<vmem>>, vector<1x286x128xf32>
    %5 = vector.shape_cast %4 : vector<1x286x128xf32> to vector<286x128xf32>
    %6 = arith.truncf %5 : vector<286x128xf32> to vector<286x128xbf16>
    %c0_6 = arith.constant 0 : index
    %c128 = arith.constant 128 : index
    %7 = vector.load %arg9[%c0_6, %c128] : memref<286x1152xbf16, #tpu.memory_space<vmem>>, vector<286x128xbf16>
    tpu.vector_store %arg9[%c0_6, %c128], %6 {strides = array<i32>} : memref<286x1152xbf16, #tpu.memory_space<vmem>>, vector<286x128xbf16>,
    %c0_7 = arith.constant 0 : index
    %c2 = arith.constant 2 : index
    %c0_8 = arith.constant 0 : index
    %8 = vector.load %arg1[%c0_7, %c2, %c0_8] : memref<1x324x128xf32, #tpu.memory_space<vmem>>, vector<1x286x128xf32>
    %9 = vector.shape_cast %8 : vector<1x286x128xf32> to vector<286x128xf32>
    %10 = arith.truncf %9 : vector<286x128xf32> to vector<286x128xbf16>
    %c0_9 = arith.constant 0 : index
    %c256 = arith.constant 256 : index
    %11 = vector.load %arg9[%c0_9, %c256] : memref<286x1152xbf16, #tpu.memory_space<vmem>>, vector<286x128xbf16>
    tpu.vector_store %arg9[%c0_9, %c256], %10 {strides = array<i32>} : memref<286x1152xbf16, #tpu.memory_space<vmem>>, vector<286x128xbf16>,
    %c0_10 = arith.constant 0 : index
    %c18 = arith.constant 18 : index
    %c0_11 = arith.constant 0 : index
    %12 = vector.load %arg1[%c0_10, %c18, %c0_11] : memref<1x324x128xf32, #tpu.memory_space<vmem>>, vector<1x286x128xf32>
    %13 = vector.shape_cast %12 : vector<1x286x128xf32> to vector<286x128xf32>
    %14 = arith.truncf %13 : vector<286x128xf32> to vector<286x128xbf16>
    %c0_12 = arith.constant 0 : index
    %c384 = arith.constant 384 : index
    %15 = vector.load %arg9[%c0_12, %c384] : memref<286x1152xbf16, #tpu.memory_space<vmem>>, vector<286x128xbf16>
    tpu.vector_store %arg9[%c0_12, %c384], %14 {strides = array<i32>} : memref<286x1152xbf16, #tpu.memory_space<vmem>>, vector<286x128xbf16>,
    %c0_13 = arith.constant 0 : index
    %c19 = arith.constant 19 : index
    %c0_14 = arith.constant 0 : index
    %16 = vector.load %arg1[%c0_13, %c19, %c0_14] : memref<1x324x128xf32, #tpu.memory_space<vmem>>, vector<1x286x128xf32>
    %17 = vector.shape_cast %16 : vector<1x286x128xf32> to vector<286x128xf32>
    %18 = arith.truncf %17 : vector<286x128xf32> to vector<286x128xbf16>
    %c0_15 = arith.constant 0 : index
    %c512 = arith.constant 512 : index
    %19 = vector.load %arg9[%c0_15, %c512] : memref<286x1152xbf16, #tpu.memory_space<vmem>>, vector<286x128xbf16>
    tpu.vector_store %arg9[%c0_15, %c512], %18 {strides = array<i32>} : memref<286x1152xbf16, #tpu.memory_space<vmem>>, vector<286x128xbf16>,
    %c0_16 = arith.constant 0 : index
    %c20 = arith.constant 20 : index
    %c0_17 = arith.constant 0 : index
    %20 = vector.load %arg1[%c0_16, %c20, %c0_17] : memref<1x324x128xf32, #tpu.memory_space<vmem>>, vector<1x286x128xf32>
    %21 = vector.shape_cast %20 : vector<1x286x128xf32> to vector<286x128xf32>
    %22 = arith.truncf %21 : vector<286x128xf32> to vector<286x128xbf16>
    %c0_18 = arith.constant 0 : index
    %c640 = arith.constant 640 : index
    %23 = vector.load %arg9[%c0_18, %c640] : memref<286x1152xbf16, #tpu.memory_space<vmem>>, vector<286x128xbf16>
    tpu.vector_store %arg9[%c0_18, %c640], %22 {strides = array<i32>} : memref<286x1152xbf16, #tpu.memory_space<vmem>>, vector<286x128xbf16>,
    %c0_19 = arith.constant 0 : index
    %c36 = arith.constant 36 : index
    %c0_20 = arith.constant 0 : index
    %24 = vector.load %arg1[%c0_19, %c36, %c0_20] : memref<1x324x128xf32, #tpu.memory_space<vmem>>, vector<1x286x128xf32>
    %25 = vector.shape_cast %24 : vector<1x286x128xf32> to vector<286x128xf32>
    %26 = arith.truncf %25 : vector<286x128xf32> to vector<286x128xbf16>
    %c0_21 = arith.constant 0 : index
    %c768 = arith.constant 768 : index
    %27 = vector.load %arg9[%c0_21, %c768] : memref<286x1152xbf16, #tpu.memory_space<vmem>>, vector<286x128xbf16>
    tpu.vector_store %arg9[%c0_21, %c768], %26 {strides = array<i32>} : memref<286x1152xbf16, #tpu.memory_space<vmem>>, vector<286x128xbf16>,
    %c0_22 = arith.constant 0 : index
    %c37 = arith.constant 37 : index
    %c0_23 = arith.constant 0 : index
    %28 = vector.load %arg1[%c0_22, %c37, %c0_23] : memref<1x324x128xf32, #tpu.memory_space<vmem>>, vector<1x286x128xf32>
    %29 = vector.shape_cast %28 : vector<1x286x128xf32> to vector<286x128xf32>
    %30 = arith.truncf %29 : vector<286x128xf32> to vector<286x128xbf16>
    %c0_24 = arith.constant 0 : index
    %c896 = arith.constant 896 : index
    %31 = vector.load %arg9[%c0_24, %c896] : memref<286x1152xbf16, #tpu.memory_space<vmem>>, vector<286x128xbf16>
    tpu.vector_store %arg9[%c0_24, %c896], %30 {strides = array<i32>} : memref<286x1152xbf16, #tpu.memory_space<vmem>>, vector<286x128xbf16>,
    %c0_25 = arith.constant 0 : index
    %c38 = arith.constant 38 : index
    %c0_26 = arith.constant 0 : index
    %32 = vector.load %arg1[%c0_25, %c38, %c0_26] : memref<1x324x128xf32, #tpu.memory_space<vmem>>, vector<1x286x128xf32>
    %33 = vector.shape_cast %32 : vector<1x286x128xf32> to vector<286x128xf32>
    %34 = arith.truncf %33 : vector<286x128xf32> to vector<286x128xbf16>
    %c0_27 = arith.constant 0 : index
    %c1024 = arith.constant 1024 : index
    %35 = vector.load %arg9[%c0_27, %c1024] : memref<286x1152xbf16, #tpu.memory_space<vmem>>, vector<286x128xbf16>
    tpu.vector_store %arg9[%c0_27, %c1024], %34 {strides = array<i32>} : memref<286x1152xbf16, #tpu.memory_space<vmem>>, vector<286x128xbf16>,
    %c0_28 = arith.constant 0 : index
    %c0_29 = arith.constant 0 : index
    %36 = vector.load %arg9[%c0_28, %c0_29] : memref<286x1152xbf16, #tpu.memory_space<vmem>>, vector<286x1152xbf16>
    %c0_30 = arith.constant 0 : index
    %c0_31 = arith.constant 0 : index
    %37 = vector.load %arg2[%c0_30, %c0_31] : memref<1152x128xbf16, #tpu.memory_space<vmem>>, vector<1152x128xbf16>
    %cst = arith.constant dense<0.000000e+00> : vector<286x128xf32>
    %38 = tpu.matmul %36, %37, %cst {dimension_numbers = #tpu.dot_dimension_numbers<[1], [0], [0], [1], [0, 0, 1, 1], [], []>} : vector<286x1152xbf16>, vector<1152x128xbf16>, vector<286x128xf32> -> vector<286x128xf32>
    %c0_32 = arith.constant 0 : index
    %c0_33 = arith.constant 0 : index
    %39 = vector.load %arg3[%c0_32, %c0_33] : memref<1x128xf32, #tpu.memory_space<vmem>>, vector<1x128xf32>
    %40 = vector.broadcast %39 : vector<1x128xf32> to vector<286x128xf32>
    %41 = arith.mulf %38, %40 : vector<286x128xf32>
    %c0_34 = arith.constant 0 : index
    %c0_35 = arith.constant 0 : index
    %42 = vector.load %arg4[%c0_34, %c0_35] : memref<1x128xf32, #tpu.memory_space<vmem>>, vector<1x128xf32>
    %43 = vector.broadcast %42 : vector<1x128xf32> to vector<286x128xf32>
    %44 = arith.addf %41, %43 : vector<286x128xf32>
    %cst_36 = arith.constant 0.000000e+00 : f32
    %45 = vector.broadcast %cst_36 : f32 to vector<286x128xf32>
    %46 = arith.maximumf %44, %45 : vector<286x128xf32>
    %cst_37 = arith.constant 0.000000e+00 : bf16
    %47 = vector.broadcast %cst_37 : bf16 to vector<324x128xbf16>
    %c0_38 = arith.constant 0 : index
    %c0_39 = arith.constant 0 : index
    %48 = vector.load %arg10[%c0_38, %c0_39] : memref<324x128xbf16, #tpu.memory_space<vmem>>, vector<324x128xbf16>
    tpu.vector_store %arg10[%c0_38, %c0_39], %47 {strides = array<i32>} : memref<324x128xbf16, #tpu.memory_space<vmem>>, vector<324x128xbf16>,
    %49 = arith.truncf %46 : vector<286x128xf32> to vector<286x128xbf16>
    %c19_40 = arith.constant 19 : index
    %c0_41 = arith.constant 0 : index
    %50 = vector.load %arg10[%c19_40, %c0_41] : memref<324x128xbf16, #tpu.memory_space<vmem>>, vector<286x128xbf16>
    tpu.vector_store %arg10[%c19_40, %c0_41], %49 {strides = array<i32>} : memref<324x128xbf16, #tpu.memory_space<vmem>>, vector<286x128xbf16>,
    %cst_42 = arith.constant 0.000000e+00 : bf16
    %51 = vector.broadcast %cst_42 : bf16 to vector<1x128xbf16>
    %c18_43 = arith.constant 18 : index
    %c0_44 = arith.constant 0 : index
    %52 = vector.load %arg10[%c18_43, %c0_44] : memref<324x128xbf16, #tpu.memory_space<vmem>>, vector<1x128xbf16>
    tpu.vector_store %arg10[%c18_43, %c0_44], %51 {strides = array<i32>} : memref<324x128xbf16, #tpu.memory_space<vmem>>, vector<1x128xbf16>,
    %c35 = arith.constant 35 : index
    %c0_45 = arith.constant 0 : index
    %53 = vector.load %arg10[%c35, %c0_45] : memref<324x128xbf16, #tpu.memory_space<vmem>>, vector<1x128xbf16>
    tpu.vector_store %arg10[%c35, %c0_45], %51 {strides = array<i32>} : memref<324x128xbf16, #tpu.memory_space<vmem>>, vector<1x128xbf16>,
    %c36_46 = arith.constant 36 : index
    %c0_47 = arith.constant 0 : index
    %54 = vector.load %arg10[%c36_46, %c0_47] : memref<324x128xbf16, #tpu.memory_space<vmem>>, vector<1x128xbf16>
    tpu.vector_store %arg10[%c36_46, %c0_47], %51 {strides = array<i32>} : memref<324x128xbf16, #tpu.memory_space<vmem>>, vector<1x128xbf16>,
    %c53 = arith.constant 53 : index
    %c0_48 = arith.constant 0 : index
    %55 = vector.load %arg10[%c53, %c0_48] : memref<324x128xbf16, #tpu.memory_space<vmem>>, vector<1x128xbf16>
    tpu.vector_store %arg10[%c53, %c0_48], %51 {strides = array<i32>} : memref<324x128xbf16, #tpu.memory_space<vmem>>, vector<1x128xbf16>,
    %c54 = arith.constant 54 : index
    %c0_49 = arith.constant 0 : index
    %56 = vector.load %arg10[%c54, %c0_49] : memref<324x128xbf16, #tpu.memory_space<vmem>>, vector<1x128xbf16>
    tpu.vector_store %arg10[%c54, %c0_49], %51 {strides = array<i32>} : memref<324x128xbf16, #tpu.memory_space<vmem>>, vector<1x128xbf16>,
    %c71 = arith.constant 71 : index
    %c0_50 = arith.constant 0 : index
    %57 = vector.load %arg10[%c71, %c0_50] : memref<324x128xbf16, #tpu.memory_space<vmem>>, vector<1x128xbf16>
    tpu.vector_store %arg10[%c71, %c0_50], %51 {strides = array<i32>} : memref<324x128xbf16, #tpu.memory_space<vmem>>, vector<1x128xbf16>,
    %c72 = arith.constant 72 : index
    %c0_51 = arith.constant 0 : index
    %58 = vector.load %arg10[%c72, %c0_51] : memref<324x128xbf16, #tpu.memory_space<vmem>>, vector<1x128xbf16>
    tpu.vector_store %arg10[%c72, %c0_51], %51 {strides = array<i32>} : memref<324x128xbf16, #tpu.memory_space<vmem>>, vector<1x128xbf16>,
    %c89 = arith.constant 89 : index
    %c0_52 = arith.constant 0 : index
    %59 = vector.load %arg10[%c89, %c0_52] : memref<324x128xbf16, #tpu.memory_space<vmem>>, vector<1x128xbf16>
    tpu.vector_store %arg10[%c89, %c0_52], %51 {strides = array<i32>} : memref<324x128xbf16, #tpu.memory_space<vmem>>, vector<1x128xbf16>,
    %c90 = arith.constant 90 : index
    %c0_53 = arith.constant 0 : index
    %60 = vector.load %arg10[%c90, %c0_53] : memref<324x128xbf16, #tpu.memory_space<vmem>>, vector<1x128xbf16>
    tpu.vector_store %arg10[%c90, %c0_53], %51 {strides = array<i32>} : memref<324x128xbf16, #tpu.memory_space<vmem>>, vector<1x128xbf16>,
    %c107 = arith.constant 107 : index
    %c0_54 = arith.constant 0 : index
    %61 = vector.load %arg10[%c107, %c0_54] : memref<324x128xbf16, #tpu.memory_space<vmem>>, vector<1x128xbf16>
    tpu.vector_store %arg10[%c107, %c0_54], %51 {strides = array<i32>} : memref<324x128xbf16, #tpu.memory_space<vmem>>, vector<1x128xbf16>,
    %c108 = arith.constant 108 : index
    %c0_55 = arith.constant 0 : index
    %62 = vector.load %arg10[%c108, %c0_55] : memref<324x128xbf16, #tpu.memory_space<vmem>>, vector<1x128xbf16>
    tpu.vector_store %arg10[%c108, %c0_55], %51 {strides = array<i32>} : memref<324x128xbf16, #tpu.memory_space<vmem>>, vector<1x128xbf16>,
    %c125 = arith.constant 125 : index
    %c0_56 = arith.constant 0 : index
    %63 = vector.load %arg10[%c125, %c0_56] : memref<324x128xbf16, #tpu.memory_space<vmem>>, vector<1x128xbf16>
    tpu.vector_store %arg10[%c125, %c0_56], %51 {strides = array<i32>} : memref<324x128xbf16, #tpu.memory_space<vmem>>, vector<1x128xbf16>,
    %c126 = arith.constant 126 : index
    %c0_57 = arith.constant 0 : index
    %64 = vector.load %arg10[%c126, %c0_57] : memref<324x128xbf16, #tpu.memory_space<vmem>>, vector<1x128xbf16>
    tpu.vector_store %arg10[%c126, %c0_57], %51 {strides = array<i32>} : memref<324x128xbf16, #tpu.memory_space<vmem>>, vector<1x128xbf16>,
    %c143 = arith.constant 143 : index
    %c0_58 = arith.constant 0 : index
    %65 = vector.load %arg10[%c143, %c0_58] : memref<324x128xbf16, #tpu.memory_space<vmem>>, vector<1x128xbf16>
    tpu.vector_store %arg10[%c143, %c0_58], %51 {strides = array<i32>} : memref<324x128xbf16, #tpu.memory_space<vmem>>, vector<1x128xbf16>,
    %c144 = arith.constant 144 : index
    %c0_59 = arith.constant 0 : index
    %66 = vector.load %arg10[%c144, %c0_59] : memref<324x128xbf16, #tpu.memory_space<vmem>>, vector<1x128xbf16>
    tpu.vector_store %arg10[%c144, %c0_59], %51 {strides = array<i32>} : memref<324x128xbf16, #tpu.memory_space<vmem>>, vector<1x128xbf16>,
    %c161 = arith.constant 161 : index
    %c0_60 = arith.constant 0 : index
    %67 = vector.load %arg10[%c161, %c0_60] : memref<324x128xbf16, #tpu.memory_space<vmem>>, vector<1x128xbf16>
    tpu.vector_store %arg10[%c161, %c0_60], %51 {strides = array<i32>} : memref<324x128xbf16, #tpu.memory_space<vmem>>, vector<1x128xbf16>,
    %c162 = arith.constant 162 : index
    %c0_61 = arith.constant 0 : index
    %68 = vector.load %arg10[%c162, %c0_61] : memref<324x128xbf16, #tpu.memory_space<vmem>>, vector<1x128xbf16>
    tpu.vector_store %arg10[%c162, %c0_61], %51 {strides = array<i32>} : memref<324x128xbf16, #tpu.memory_space<vmem>>, vector<1x128xbf16>,
    %c179 = arith.constant 179 : index
    %c0_62 = arith.constant 0 : index
    %69 = vector.load %arg10[%c179, %c0_62] : memref<324x128xbf16, #tpu.memory_space<vmem>>, vector<1x128xbf16>
    tpu.vector_store %arg10[%c179, %c0_62], %51 {strides = array<i32>} : memref<324x128xbf16, #tpu.memory_space<vmem>>, vector<1x128xbf16>,
    %c180 = arith.constant 180 : index
    %c0_63 = arith.constant 0 : index
    %70 = vector.load %arg10[%c180, %c0_63] : memref<324x128xbf16, #tpu.memory_space<vmem>>, vector<1x128xbf16>
    tpu.vector_store %arg10[%c180, %c0_63], %51 {strides = array<i32>} : memref<324x128xbf16, #tpu.memory_space<vmem>>, vector<1x128xbf16>,
    %c197 = arith.constant 197 : index
    %c0_64 = arith.constant 0 : index
    %71 = vector.load %arg10[%c197, %c0_64] : memref<324x128xbf16, #tpu.memory_space<vmem>>, vector<1x128xbf16>
    tpu.vector_store %arg10[%c197, %c0_64], %51 {strides = array<i32>} : memref<324x128xbf16, #tpu.memory_space<vmem>>, vector<1x128xbf16>,
    %c198 = arith.constant 198 : index
    %c0_65 = arith.constant 0 : index
    %72 = vector.load %arg10[%c198, %c0_65] : memref<324x128xbf16, #tpu.memory_space<vmem>>, vector<1x128xbf16>
    tpu.vector_store %arg10[%c198, %c0_65], %51 {strides = array<i32>} : memref<324x128xbf16, #tpu.memory_space<vmem>>, vector<1x128xbf16>,
    %c215 = arith.constant 215 : index
    %c0_66 = arith.constant 0 : index
    %73 = vector.load %arg10[%c215, %c0_66] : memref<324x128xbf16, #tpu.memory_space<vmem>>, vector<1x128xbf16>
    tpu.vector_store %arg10[%c215, %c0_66], %51 {strides = array<i32>} : memref<324x128xbf16, #tpu.memory_space<vmem>>, vector<1x128xbf16>,
    %c216 = arith.constant 216 : index
    %c0_67 = arith.constant 0 : index
    %74 = vector.load %arg10[%c216, %c0_67] : memref<324x128xbf16, #tpu.memory_space<vmem>>, vector<1x128xbf16>
    tpu.vector_store %arg10[%c216, %c0_67], %51 {strides = array<i32>} : memref<324x128xbf16, #tpu.memory_space<vmem>>, vector<1x128xbf16>,
    %c233 = arith.constant 233 : index
    %c0_68 = arith.constant 0 : index
    %75 = vector.load %arg10[%c233, %c0_68] : memref<324x128xbf16, #tpu.memory_space<vmem>>, vector<1x128xbf16>
    tpu.vector_store %arg10[%c233, %c0_68], %51 {strides = array<i32>} : memref<324x128xbf16, #tpu.memory_space<vmem>>, vector<1x128xbf16>,
    %c234 = arith.constant 234 : index
    %c0_69 = arith.constant 0 : index
    %76 = vector.load %arg10[%c234, %c0_69] : memref<324x128xbf16, #tpu.memory_space<vmem>>, vector<1x128xbf16>
    tpu.vector_store %arg10[%c234, %c0_69], %51 {strides = array<i32>} : memref<324x128xbf16, #tpu.memory_space<vmem>>, vector<1x128xbf16>,
    %c251 = arith.constant 251 : index
    %c0_70 = arith.constant 0 : index
    %77 = vector.load %arg10[%c251, %c0_70] : memref<324x128xbf16, #tpu.memory_space<vmem>>, vector<1x128xbf16>
    tpu.vector_store %arg10[%c251, %c0_70], %51 {strides = array<i32>} : memref<324x128xbf16, #tpu.memory_space<vmem>>, vector<1x128xbf16>,
    %c252 = arith.constant 252 : index
    %c0_71 = arith.constant 0 : index
    %78 = vector.load %arg10[%c252, %c0_71] : memref<324x128xbf16, #tpu.memory_space<vmem>>, vector<1x128xbf16>
    tpu.vector_store %arg10[%c252, %c0_71], %51 {strides = array<i32>} : memref<324x128xbf16, #tpu.memory_space<vmem>>, vector<1x128xbf16>,
    %c269 = arith.constant 269 : index
    %c0_72 = arith.constant 0 : index
    %79 = vector.load %arg10[%c269, %c0_72] : memref<324x128xbf16, #tpu.memory_space<vmem>>, vector<1x128xbf16>
    tpu.vector_store %arg10[%c269, %c0_72], %51 {strides = array<i32>} : memref<324x128xbf16, #tpu.memory_space<vmem>>, vector<1x128xbf16>,
    %c270 = arith.constant 270 : index
    %c0_73 = arith.constant 0 : index
    %80 = vector.load %arg10[%c270, %c0_73] : memref<324x128xbf16, #tpu.memory_space<vmem>>, vector<1x128xbf16>
    tpu.vector_store %arg10[%c270, %c0_73], %51 {strides = array<i32>} : memref<324x128xbf16, #tpu.memory_space<vmem>>, vector<1x128xbf16>,
    %c287 = arith.constant 287 : index
    %c0_74 = arith.constant 0 : index
    %81 = vector.load %arg10[%c287, %c0_74] : memref<324x128xbf16, #tpu.memory_space<vmem>>, vector<1x128xbf16>
    tpu.vector_store %arg10[%c287, %c0_74], %51 {strides = array<i32>} : memref<324x128xbf16, #tpu.memory_space<vmem>>, vector<1x128xbf16>,
    %c288 = arith.constant 288 : index
    %c0_75 = arith.constant 0 : index
    %82 = vector.load %arg10[%c288, %c0_75] : memref<324x128xbf16, #tpu.memory_space<vmem>>, vector<1x128xbf16>
    tpu.vector_store %arg10[%c288, %c0_75], %51 {strides = array<i32>} : memref<324x128xbf16, #tpu.memory_space<vmem>>, vector<1x128xbf16>,
    %c305 = arith.constant 305 : index
    %c0_76 = arith.constant 0 : index
    %83 = vector.load %arg10[%c305, %c0_76] : memref<324x128xbf16, #tpu.memory_space<vmem>>, vector<1x128xbf16>
    tpu.vector_store %arg10[%c305, %c0_76], %51 {strides = array<i32>} : memref<324x128xbf16, #tpu.memory_space<vmem>>, vector<1x128xbf16>,
    %c0_77 = arith.constant 0 : index
    %c0_78 = arith.constant 0 : index
    %84 = vector.load %arg10[%c0_77, %c0_78] : memref<324x128xbf16, #tpu.memory_space<vmem>>, vector<286x128xbf16>
    %c0_79 = arith.constant 0 : index
    %c0_80 = arith.constant 0 : index
    %85 = vector.load %arg9[%c0_79, %c0_80] : memref<286x1152xbf16, #tpu.memory_space<vmem>>, vector<286x128xbf16>
    tpu.vector_store %arg9[%c0_79, %c0_80], %84 {strides = array<i32>} : memref<286x1152xbf16, #tpu.memory_space<vmem>>, vector<286x128xbf16>,
    %c1_81 = arith.constant 1 : index
    %c0_82 = arith.constant 0 : index
    %86 = vector.load %arg10[%c1_81, %c0_82] : memref<324x128xbf16, #tpu.memory_space<vmem>>, vector<286x128xbf16>
    %c0_83 = arith.constant 0 : index
    %c128_84 = arith.constant 128 : index
    %87 = vector.load %arg9[%c0_83, %c128_84] : memref<286x1152xbf16, #tpu.memory_space<vmem>>, vector<286x128xbf16>
    tpu.vector_store %arg9[%c0_83, %c128_84], %86 {strides = array<i32>} : memref<286x1152xbf16, #tpu.memory_space<vmem>>, vector<286x128xbf16>,
    %c2_85 = arith.constant 2 : index
    %c0_86 = arith.constant 0 : index
    %88 = vector.load %arg10[%c2_85, %c0_86] : memref<324x128xbf16, #tpu.memory_space<vmem>>, vector<286x128xbf16>
    %c0_87 = arith.constant 0 : index
    %c256_88 = arith.constant 256 : index
    %89 = vector.load %arg9[%c0_87, %c256_88] : memref<286x1152xbf16, #tpu.memory_space<vmem>>, vector<286x128xbf16>
    tpu.vector_store %arg9[%c0_87, %c256_88], %88 {strides = array<i32>} : memref<286x1152xbf16, #tpu.memory_space<vmem>>, vector<286x128xbf16>,
    %c18_89 = arith.constant 18 : index
    %c0_90 = arith.constant 0 : index
    %90 = vector.load %arg10[%c18_89, %c0_90] : memref<324x128xbf16, #tpu.memory_space<vmem>>, vector<286x128xbf16>
    %c0_91 = arith.constant 0 : index
    %c384_92 = arith.constant 384 : index
    %91 = vector.load %arg9[%c0_91, %c384_92] : memref<286x1152xbf16, #tpu.memory_space<vmem>>, vector<286x128xbf16>
    tpu.vector_store %arg9[%c0_91, %c384_92], %90 {strides = array<i32>} : memref<286x1152xbf16, #tpu.memory_space<vmem>>, vector<286x128xbf16>,
    %c19_93 = arith.constant 19 : index
    %c0_94 = arith.constant 0 : index
    %92 = vector.load %arg10[%c19_93, %c0_94] : memref<324x128xbf16, #tpu.memory_space<vmem>>, vector<286x128xbf16>
    %c0_95 = arith.constant 0 : index
    %c512_96 = arith.constant 512 : index
    %93 = vector.load %arg9[%c0_95, %c512_96] : memref<286x1152xbf16, #tpu.memory_space<vmem>>, vector<286x128xbf16>
    tpu.vector_store %arg9[%c0_95, %c512_96], %92 {strides = array<i32>} : memref<286x1152xbf16, #tpu.memory_space<vmem>>, vector<286x128xbf16>,
    %c20_97 = arith.constant 20 : index
    %c0_98 = arith.constant 0 : index
    %94 = vector.load %arg10[%c20_97, %c0_98] : memref<324x128xbf16, #tpu.memory_space<vmem>>, vector<286x128xbf16>
    %c0_99 = arith.constant 0 : index
    %c640_100 = arith.constant 640 : index
    %95 = vector.load %arg9[%c0_99, %c640_100] : memref<286x1152xbf16, #tpu.memory_space<vmem>>, vector<286x128xbf16>
    tpu.vector_store %arg9[%c0_99, %c640_100], %94 {strides = array<i32>} : memref<286x1152xbf16, #tpu.memory_space<vmem>>, vector<286x128xbf16>,
    %c36_101 = arith.constant 36 : index
    %c0_102 = arith.constant 0 : index
    %96 = vector.load %arg10[%c36_101, %c0_102] : memref<324x128xbf16, #tpu.memory_space<vmem>>, vector<286x128xbf16>
    %c0_103 = arith.constant 0 : index
    %c768_104 = arith.constant 768 : index
    %97 = vector.load %arg9[%c0_103, %c768_104] : memref<286x1152xbf16, #tpu.memory_space<vmem>>, vector<286x128xbf16>
    tpu.vector_store %arg9[%c0_103, %c768_104], %96 {strides = array<i32>} : memref<286x1152xbf16, #tpu.memory_space<vmem>>, vector<286x128xbf16>,
    %c37_105 = arith.constant 37 : index
    %c0_106 = arith.constant 0 : index
    %98 = vector.load %arg10[%c37_105, %c0_106] : memref<324x128xbf16, #tpu.memory_space<vmem>>, vector<286x128xbf16>
    %c0_107 = arith.constant 0 : index
    %c896_108 = arith.constant 896 : index
    %99 = vector.load %arg9[%c0_107, %c896_108] : memref<286x1152xbf16, #tpu.memory_space<vmem>>, vector<286x128xbf16>
    tpu.vector_store %arg9[%c0_107, %c896_108], %98 {strides = array<i32>} : memref<286x1152xbf16, #tpu.memory_space<vmem>>, vector<286x128xbf16>,
    %c38_109 = arith.constant 38 : index
    %c0_110 = arith.constant 0 : index
    %100 = vector.load %arg10[%c38_109, %c0_110] : memref<324x128xbf16, #tpu.memory_space<vmem>>, vector<286x128xbf16>
    %c0_111 = arith.constant 0 : index
    %c1024_112 = arith.constant 1024 : index
    %101 = vector.load %arg9[%c0_111, %c1024_112] : memref<286x1152xbf16, #tpu.memory_space<vmem>>, vector<286x128xbf16>
    tpu.vector_store %arg9[%c0_111, %c1024_112], %100 {strides = array<i32>} : memref<286x1152xbf16, #tpu.memory_space<vmem>>, vector<286x128xbf16>,
    %c0_113 = arith.constant 0 : index
    %c0_114 = arith.constant 0 : index
    %102 = vector.load %arg9[%c0_113, %c0_114] : memref<286x1152xbf16, #tpu.memory_space<vmem>>, vector<286x1152xbf16>
    %c0_115 = arith.constant 0 : index
    %c0_116 = arith.constant 0 : index
    %103 = vector.load %arg5[%c0_115, %c0_116] : memref<1152x128xbf16, #tpu.memory_space<vmem>>, vector<1152x128xbf16>
    %cst_117 = arith.constant dense<0.000000e+00> : vector<286x128xf32>
    %104 = tpu.matmul %102, %103, %cst_117 {dimension_numbers = #tpu.dot_dimension_numbers<[1], [0], [0], [1], [0, 0, 1, 1], [], []>} : vector<286x1152xbf16>, vector<1152x128xbf16>, vector<286x128xf32> -> vector<286x128xf32>
    %c0_118 = arith.constant 0 : index
    %c0_119 = arith.constant 0 : index
    %105 = vector.load %arg6[%c0_118, %c0_119] : memref<1x128xf32, #tpu.memory_space<vmem>>, vector<1x128xf32>
    %106 = vector.broadcast %105 : vector<1x128xf32> to vector<286x128xf32>
    %107 = arith.mulf %104, %106 : vector<286x128xf32>
    %c0_120 = arith.constant 0 : index
    %c0_121 = arith.constant 0 : index
    %108 = vector.load %arg7[%c0_120, %c0_121] : memref<1x128xf32, #tpu.memory_space<vmem>>, vector<1x128xf32>
    %109 = vector.broadcast %108 : vector<1x128xf32> to vector<286x128xf32>
    %110 = arith.addf %107, %109 : vector<286x128xf32>
    %c0_122 = arith.constant 0 : index
    %c19_123 = arith.constant 19 : index
    %c0_124 = arith.constant 0 : index
    %111 = vector.load %arg1[%c0_122, %c19_123, %c0_124] : memref<1x324x128xf32, #tpu.memory_space<vmem>>, vector<1x286x128xf32>
    %112 = vector.shape_cast %111 : vector<1x286x128xf32> to vector<286x128xf32>
    %113 = arith.addf %110, %112 : vector<286x128xf32>
    %cst_125 = arith.constant 0.000000e+00 : f32
    %114 = vector.broadcast %cst_125 : f32 to vector<286x128xf32>
    %115 = arith.maximumf %113, %114 : vector<286x128xf32>
    %cst_126 = arith.constant 0.000000e+00 : f32
    %116 = vector.broadcast %cst_126 : f32 to vector<324x128xf32>
    %c0_127 = arith.constant 0 : index
    %c0_128 = arith.constant 0 : index
    %c0_129 = arith.constant 0 : index
    %117 = vector.load %arg8[%c0_127, %c0_128, %c0_129] : memref<1x324x128xf32, #tpu.memory_space<vmem>>, vector<1x324x128xf32>
    %118 = vector.shape_cast %117 : vector<1x324x128xf32> to vector<324x128xf32>
    %119 = vector.shape_cast %116 : vector<324x128xf32> to vector<1x324x128xf32>
    tpu.vector_store %arg8[%c0_127, %c0_128, %c0_129], %119 {strides = array<i32>} : memref<1x324x128xf32, #tpu.memory_space<vmem>>, vector<1x324x128xf32>,
    %c0_130 = arith.constant 0 : index
    %c19_131 = arith.constant 19 : index
    %c0_132 = arith.constant 0 : index
    %120 = vector.load %arg8[%c0_130, %c19_131, %c0_132] : memref<1x324x128xf32, #tpu.memory_space<vmem>>, vector<1x286x128xf32>
    %121 = vector.shape_cast %120 : vector<1x286x128xf32> to vector<286x128xf32>
    %122 = vector.shape_cast %115 : vector<286x128xf32> to vector<1x286x128xf32>
    tpu.vector_store %arg8[%c0_130, %c19_131, %c0_132], %122 {strides = array<i32>} : memref<1x324x128xf32, #tpu.memory_space<vmem>>, vector<1x286x128xf32>,
    return
  }
  func.func @transform_0(%arg0: i32) -> (i32, i32, i32) {
    %c0_i32 = arith.constant 0 : i32
    %c0_i32_0 = arith.constant 0 : i32
    %c0_i32_1 = arith.constant 0 : i32
    return %arg0, %c0_i32, %c0_i32_0 : i32, i32, i32
  }
  func.func @transform_1(%arg0: i32) -> (i32, i32) {
    %c0_i32 = arith.constant 0 : i32
    %c0_i32_0 = arith.constant 0 : i32
    %c0_i32_1 = arith.constant 0 : i32
    return %c0_i32, %c0_i32_0 : i32, i32
  }
  func.func @transform_2(%arg0: i32) -> (i32, i32) {
    %c0_i32 = arith.constant 0 : i32
    %c0_i32_0 = arith.constant 0 : i32
    %c0_i32_1 = arith.constant 0 : i32
    return %c0_i32, %c0_i32_0 : i32, i32
  }
  func.func @transform_3(%arg0: i32) -> (i32, i32) {
    %c0_i32 = arith.constant 0 : i32
    %c0_i32_0 = arith.constant 0 : i32
    %c0_i32_1 = arith.constant 0 : i32
    return %c0_i32, %c0_i32_0 : i32, i32
  }
  func.func @transform_4(%arg0: i32) -> (i32, i32) {
    %c0_i32 = arith.constant 0 : i32
    %c0_i32_0 = arith.constant 0 : i32
    %c0_i32_1 = arith.constant 0 : i32
    return %c0_i32, %c0_i32_0 : i32, i32
  }
  func.func @transform_5(%arg0: i32) -> (i32, i32) {
    %c0_i32 = arith.constant 0 : i32
    %c0_i32_0 = arith.constant 0 : i32
    %c0_i32_1 = arith.constant 0 : i32
    return %c0_i32, %c0_i32_0 : i32, i32
  }
  func.func @transform_6(%arg0: i32) -> (i32, i32) {
    %c0_i32 = arith.constant 0 : i32
    %c0_i32_0 = arith.constant 0 : i32
    %c0_i32_1 = arith.constant 0 : i32
    return %c0_i32, %c0_i32_0 : i32, i32
  }
  func.func @transform_7(%arg0: i32) -> (i32, i32, i32) {
    %c0_i32 = arith.constant 0 : i32
    %c0_i32_0 = arith.constant 0 : i32
    %c0_i32_1 = arith.constant 0 : i32
    return %arg0, %c0_i32, %c0_i32_0 : i32, i32, i32
  }
}

</mosaic_0001>

<llo_original>
// kernel: tpu_custom_call.1
$region0: #{tpu_custom_call.1}
  #allocation0 [shape = 'u32[]', space=smem, size = 0x4, offset = 0x4, fixed_abs, tag = 'smem constant byte address 0x4 - core index']
  #allocation1 [shape = 'u32[144,128]{1,0:T(1,128)}', space=vmem, size = 0x12000, scoped, tag = 'internal scratch']
  #allocation2 [shape = 'bf16[286,1152]{1,0:T(8,128)(2,1)}', space=vmem, size = 0xa2000, scoped, tag = 'scratch operand']
  #allocation3 [shape = 'bf16[324,128]{1,0:T(8,128)(2,1)}', space=vmem, size = 0x14800, scoped, tag = 'scratch operand']
  %s0 = inlined_call_operand.vmem [shape: f32[2,324,128], index: 0, kind: input, shape index: {}]
  %s1 = inlined_call_operand.vmem [shape: bf16[1152,128], index: 1, kind: input, shape index: {}]
  %s2 = inlined_call_operand.vmem [shape: f32[1,128], index: 2, kind: input, shape index: {}]
  %s3 = inlined_call_operand.vmem [shape: f32[1,128], index: 3, kind: input, shape index: {}]
  %s4 = inlined_call_operand.vmem [shape: bf16[1152,128], index: 4, kind: input, shape index: {}]
  %s5 = inlined_call_operand.vmem [shape: f32[1,128], index: 5, kind: input, shape index: {}]
  %s6 = inlined_call_operand.vmem [shape: f32[1,128], index: 6, kind: input, shape index: {}]
  %s7 = inlined_call_operand.vmem [shape: f32[2,324,128], index: 7, kind: output, shape index: {}]
  %s8 = sld [smem:[#allocation0]]
  $region61: #{tpu_custom_call.1} parent=0
    _
  %s10 = ssub.s32 1, %s8
  %s11 = scalar_select 0, %s10, %s8
  loop: start=0, step=1, limit=4
  $region2: #{tpu_custom_call.1} parent=0 // loop_pre_header
    _
  $region3: #{tpu_custom_call.1} parent=0 // loop_header
    %s13 = sphi 0, %s17
    %p14 = scmp.ge.s32.totalorder %s13, 4
    %s23 = sphi 0, %s25
    %s26 = sphi 0, %s23
    %s27 = sphi 0, %s26
    %s43 = sphi 0, %s27
    %s47 = sphi 0, %s47
    %s49 = sphi 0, %s47
    %s50 = sphi 0, %s49
    %s64 = sphi 0, %s50
    %s68 = sphi 0, %s68
    %s70 = sphi 0, %s68
    %s71 = sphi 0, %s70
    %s85 = sphi 0, %s71
    %s89 = sphi 0, %s89
    %s91 = sphi 0, %s89
    %s92 = sphi 0, %s91
    %s106 = sphi 0, %s92
    %s110 = sphi 0, %s110
    %s112 = sphi 0, %s110
    %s113 = sphi 0, %s112
    %s127 = sphi 0, %s113
    %s131 = sphi 0, %s131
    %s133 = sphi 0, %s131
    %s134 = sphi 0, %s133
    %s148 = sphi 0, %s134
    %s152 = sphi 0, %s152
    %s154 = sphi 0, %s152
    %s155 = sphi 0, %s154
    %s169 = sphi 0, %s155
    %s175 = sphi 0, %s177
    %s178 = sphi 0, %s175
    %s179 = sphi 0, %s178
    %s195 = sphi 0, %s179
  $region4: #{tpu_custom_call.1} parent=0 // loop_header_branch
    %16 = sbr.rel (%p14) target = $region8
  $region5: #{tpu_custom_call.1} parent=0 // loop_body
    %s18 = ssub.s32 %s13, 1
    %s19 = ssub.s32 %s13, 2
    %s20 = sadd.s32 %s13, 1
    %s21 = ssub.s32 %s13, %s20
    %p22 = scmp.eq.s32.totalorder %s21, 0
    %s24 = sadd.s32 %s23, 1
    %s25 = scalar_select %p22, %s23, %s24
    %p28 = pneg %p22
    %p29 = scmp.eq.s32.totalorder %s13, 1
    %p30 = por %p28, %p29
    %p31 = scmp.ne.s32.totalorder %s23, %s26
    %p32 = scmp.eq.s32.totalorder %s13, 0
    %p33 = por %p31, %p32
    %p34 = scmp.ne.s32.totalorder %s23, %s26
    %p35 = scmp.eq.s32.totalorder %s18, 1
    %p36 = por %p34, %p35
    %p37 = scmp.ne.s32.totalorder %s26, %s27
    %p38 = scmp.eq.s32.totalorder %s18, 0
    %p39 = por %p37, %p38
    %p40 = scmp.ne.s32.totalorder %s26, %s27
    %p41 = scmp.eq.s32.totalorder %s19, 1
    %p42 = por %p40, %p41
    %p44 = scmp.ne.s32.totalorder %s27, %s43
    %p45 = scmp.eq.s32.totalorder %s19, 0
    %p46 = por %p44, %p45
    %s48 = sadd.s32 %s47, 1
    %p51 = scmp.eq.s32.totalorder %s13, 1
    %p52 = scmp.ne.s32.totalorder %s47, %s49
    %p53 = scmp.eq.s32.totalorder %s13, 0
    %p54 = por %p52, %p53
    %p55 = scmp.ne.s32.totalorder %s47, %s49
    %p56 = scmp.eq.s32.totalorder %s18, 1
    %p57 = por %p55, %p56
    %p58 = scmp.ne.s32.totalorder %s49, %s50
    %p59 = scmp.eq.s32.totalorder %s18, 0
    %p60 = por %p58, %p59
    %p61 = scmp.ne.s32.totalorder %s49, %s50
    %p62 = scmp.eq.s32.totalorder %s19, 1
    %p63 = por %p61, %p62
    %p65 = scmp.ne.s32.totalorder %s50, %s64
    %p66 = scmp.eq.s32.totalorder %s19, 0
    %p67 = por %p65, %p66
    %s69 = sadd.s32 %s68, 1
    %p72 = scmp.eq.s32.totalorder %s13, 1
    %p73 = scmp.ne.s32.totalorder %s68, %s70
    %p74 = scmp.eq.s32.totalorder %s13, 0
    %p75 = por %p73, %p74
    %p76 = scmp.ne.s32.totalorder %s68, %s70
    %p77 = scmp.eq.s32.totalorder %s18, 1
    %p78 = por %p76, %p77
    %p79 = scmp.ne.s32.totalorder %s70, %s71
    %p80 = scmp.eq.s32.totalorder %s18, 0
    %p81 = por %p79, %p80
    %p82 = scmp.ne.s32.totalorder %s70, %s71
    %p83 = scmp.eq.s32.totalorder %s19, 1
    %p84 = por %p82, %p83
    %p86 = scmp.ne.s32.totalorder %s71, %s85
    %p87 = scmp.eq.s32.totalorder %s19, 0
    %p88 = por %p86, %p87
    %s90 = sadd.s32 %s89, 1
    %p93 = scmp.eq.s32.totalorder %s13, 1
    %p94 = scmp.ne.s32.totalorder %s89, %s91
    %p95 = scmp.eq.s32.totalorder %s13, 0
    %p96 = por %p94, %p95
    %p97 = scmp.ne.s32.totalorder %s89, %s91
    %p98 = scmp.eq.s32.totalorder %s18, 1
    %p99 = por %p97, %p98
    %p100 = scmp.ne.s32.totalorder %s91, %s92
    %p101 = scmp.eq.s32.totalorder %s18, 0
    %p102 = por %p100, %p101
    %p103 = scmp.ne.s32.totalorder %s91, %s92
    %p104 = scmp.eq.s32.totalorder %s19, 1
    %p105 = por %p103, %p104
    %p107 = scmp.ne.s32.totalorder %s92, %s106
    %p108 = scmp.eq.s32.totalorder %s19, 0
    %p109 = por %p107, %p108
    %s111 = sadd.s32 %s110, 1
    %p114 = scmp.eq.s32.totalorder %s13, 1
    %p115 = scmp.ne.s32.totalorder %s110, %s112
    %p116 = scmp.eq.s32.totalorder %s13, 0
    %p117 = por %p115, %p116
    %p118 = scmp.ne.s32.totalorder %s110, %s112
    %p119 = scmp.eq.s32.totalorder %s18, 1
    %p120 = por %p118, %p119
    %p121 = scmp.ne.s32.totalorder %s112, %s113
    %p122 = scmp.eq.s32.totalorder %s18, 0
    %p123 = por %p121, %p122
    %p124 = scmp.ne.s32.totalorder %s112, %s113
    %p125 = scmp.eq.s32.totalorder %s19, 1
    %p126 = por %p124, %p125
    %p128 = scmp.ne.s32.totalorder %s113, %s127
    %p129 = scmp.eq.s32.totalorder %s19, 0
    %p130 = por %p128, %p129
    %s132 = sadd.s32 %s131, 1
    %p135 = scmp.eq.s32.totalorder %s13, 1
    %p136 = scmp.ne.s32.totalorder %s131, %s133
    %p137 = scmp.eq.s32.totalorder %s13, 0
    %p138 = por %p136, %p137
    %p139 = scmp.ne.s32.totalorder %s131, %s133
    %p140 = scmp.eq.s32.totalorder %s18, 1
    %p141 = por %p139, %p140
    %p142 = scmp.ne.s32.totalorder %s133, %s134
    %p143 = scmp.eq.s32.totalorder %s18, 0
    %p144 = por %p142, %p143
    %p145 = scmp.ne.s32.totalorder %s133, %s134
    %p146 = scmp.eq.s32.totalorder %s19, 1
    %p147 = por %p145, %p146
    %p149 = scmp.ne.s32.totalorder %s134, %s148
    %p150 = scmp.eq.s32.totalorder %s19, 0
    %p151 = por %p149, %p150
    %s153 = sadd.s32 %s152, 1
    %p156 = scmp.eq.s32.totalorder %s13, 1
    %p157 = scmp.ne.s32.totalorder %s152, %s154
    %p158 = scmp.eq.s32.totalorder %s13, 0
    %p159 = por %p157, %p158
    %p160 = scmp.ne.s32.totalorder %s152, %s154
    %p161 = scmp.eq.s32.totalorder %s18, 1
    %p162 = por %p160, %p161
    %p163 = scmp.ne.s32.totalorder %s154, %s155
    %p164 = scmp.eq.s32.totalorder %s18, 0
    %p165 = por %p163, %p164
    %p166 = scmp.ne.s32.totalorder %s154, %s155
    %p167 = scmp.eq.s32.totalorder %s19, 1
    %p168 = por %p166, %p167
    %p170 = scmp.ne.s32.totalorder %s155, %s169
    %p171 = scmp.eq.s32.totalorder %s19, 0
    %p172 = por %p170, %p171
    %s173 = ssub.s32 %s13, %s20
    %p174 = scmp.eq.s32.totalorder %s173, 0
    %s176 = sadd.s32 %s175, 1
    %s177 = scalar_select %p174, %s175, %s176
    %p180 = pneg %p174
    %p181 = scmp.eq.s32.totalorder %s13, 1
    %p182 = por %p180, %p181
    %p183 = scmp.ne.s32.totalorder %s175, %s178
    %p184 = scmp.eq.s32.totalorder %s13, 0
    %p185 = por %p183, %p184
    %p186 = scmp.ne.s32.totalorder %s175, %s178
    %p187 = scmp.eq.s32.totalorder %s18, 1
    %p188 = por %p186, %p187
    %p189 = scmp.ne.s32.totalorder %s178, %s179
    %p190 = scmp.eq.s32.totalorder %s18, 0
    %p191 = por %p189, %p190
    %p192 = scmp.ne.s32.totalorder %s178, %s179
    %p193 = scmp.eq.s32.totalorder %s19, 1
    %p194 = por %p192, %p193
    %p196 = scmp.ne.s32.totalorder %s179, %s195
    %p197 = scmp.eq.s32.totalorder %s19, 0
    %p198 = por %p196, %p197
    %p199 = scmp.le.s32.totalorder 1, %s13
    %p200 = scmp.lt.s32.totalorder %s13, 3
    %p201 = pnand %p199, %p200
    %p202 = pneg %p201
    // Predicated region
    $region9: #{tpu_custom_call.1} parent=5 // pred_check
      _
    $region10: #{tpu_custom_call.1} parent=5 // pred_check_branch
      %204 = sbr.rel (%p201) target = $region12
    $region11: #{tpu_custom_call.1} parent=5 // pred_region
      %s205 = ssub.s32 %s13, 1
      // Predicated region
      $region13: #{tpu_custom_call.1} parent=11 // pred_check
        %p206 = pneg %p60
      $region14: #{tpu_custom_call.1} parent=11 // pred_check_branch
        %208 = sbr.rel (%p206) target = $region16
      $region15: #{tpu_custom_call.1} parent=11 // pred_region
        _
      $region16: #{tpu_custom_call.1} parent=11 // pred_fallthru
        _
      // Predicated region
      $region17: #{tpu_custom_call.1} parent=11 // pred_check
        %p209 = pneg %p81
      $region18: #{tpu_custom_call.1} parent=11 // pred_check_branch
        %211 = sbr.rel (%p209) target = $region20
      $region19: #{tpu_custom_call.1} parent=11 // pred_region
        _
      $region20: #{tpu_custom_call.1} parent=11 // pred_fallthru
        _
      // Predicated region
      $region21: #{tpu_custom_call.1} parent=11 // pred_check
        %p212 = pneg %p102
      $region22: #{tpu_custom_call.1} parent=11 // pred_check_branch
        %214 = sbr.rel (%p212) target = $region24
      $region23: #{tpu_custom_call.1} parent=11 // pred_region
        _
      $region24: #{tpu_custom_call.1} parent=11 // pred_fallthru
        _
      // Predicated region
      $region25: #{tpu_custom_call.1} parent=11 // pred_check
        %p215 = pneg %p123
      $region26: #{tpu_custom_call.1} parent=11 // pred_check_branch
        %217 = sbr.rel (%p215) target = $region28
      $region27: #{tpu_custom_call.1} parent=11 // pred_region
        _
      $region28: #{tpu_custom_call.1} parent=11 // pred_fallthru
        _
      // Predicated region
      $region29: #{tpu_custom_call.1} parent=11 // pred_check
        %p218 = pneg %p144
      $region30: #{tpu_custom_call.1} parent=11 // pred_check_branch
        %220 = sbr.rel (%p218) target = $region32
      $region31: #{tpu_custom_call.1} parent=11 // pred_region
        _
      $region32: #{tpu_custom_call.1} parent=11 // pred_fallthru
        _
      // Predicated region
      $region33: #{tpu_custom_call.1} parent=11 // pred_check
        %p221 = pneg %p165
      $region34: #{tpu_custom_call.1} parent=11 // pred_check_branch
        %223 = sbr.rel (%p221) target = $region36
      $region35: #{tpu_custom_call.1} parent=11 // pred_region
        _
      $region36: #{tpu_custom_call.1} parent=11 // pred_fallthru
        _
    $region12: #{tpu_custom_call.1} parent=5 // pred_fallthru
      _
    %p224 = scmp.lt.s32.totalorder %s13, 2
    // Predicated region
    $region37: #{tpu_custom_call.1} parent=5 // pred_check
      %p225 = pneg %p224
    $region38: #{tpu_custom_call.1} parent=5 // pred_check_branch
      %227 = sbr.rel (%p225) target = $region40
    $region39: #{tpu_custom_call.1} parent=5 // pred_region
      // Predicated region
      $region41: #{tpu_custom_call.1} parent=39 // pred_check
        %p228 = pneg %p33
      $region42: #{tpu_custom_call.1} parent=39 // pred_check_branch
        %230 = sbr.rel (%p228) target = $region44
      $region43: #{tpu_custom_call.1} parent=39 // pred_region
        %p231 = scmp.lt.s32.totalorder %s13, 1
        %s232 = scalar_select %p231, %s13, 1
        %s233 = smul.addr %s232, 41
        %s234 = smul.addr %s233, 8
        %s235 = scalar_lea.vmem %s0, %s234
      $region44: #{tpu_custom_call.1} parent=39 // pred_fallthru
        _
    $region40: #{tpu_custom_call.1} parent=5 // pred_fallthru
      _
    %p236 = scmp.le.s32.totalorder 1, %s13
    %p237 = scmp.lt.s32.totalorder %s13, 3
    %p238 = pnand %p236, %p237
    %p239 = pneg %p238
    // Predicated region
    $region45: #{tpu_custom_call.1} parent=5 // pred_check
      _
    $region46: #{tpu_custom_call.1} parent=5 // pred_check_branch
      %241 = sbr.rel (%p238) target = $region48
    $region47: #{tpu_custom_call.1} parent=5 // pred_region
      %s242 = ssub.s32 %s13, 1
      %p243 = scmp.lt.s32.totalorder %s18, 1
      %s244 = scalar_select %p243, %s18, 1
      %s245 = smul.addr %s244, 41
      %s246 = smul.addr %s245, 8
      %s247 = scalar_lea.vmem %s0, %s246
      %p248 = pneg %p39
      %p249 = pneg %p36
      %p250 = pneg %p60
      %p251 = pneg %p57
      %p252 = pneg %p81
      %p253 = pneg %p78
      %p254 = pneg %p102
      %p255 = pneg %p99
      %p256 = pneg %p123
      %p257 = pneg %p120
      %p258 = pneg %p144
      %p259 = pneg %p141
      %p260 = pneg %p165
      %p261 = pneg %p162
      %p262 = pneg %p191
      %p263 = pneg %p188
      %p264 = scmp.lt.s32.totalorder %s18, 1
      %s265 = scalar_select %p264, %s18, 1
      %s266 = smul.addr %s265, 41
      %s267 = smul.addr %s266, 8
      %s268 = scalar_lea.vmem %s7, %s267
      %p269 = scmp.lt.s32.totalorder %s18, 1
      %s270 = scalar_select %p269, %s18, 1
      %s271 = smul.addr %s270, 41
      %s272 = smul.addr %s271, 8
      %s273 = scalar_lea.vmem %s0, %s272
      %p274 = scmp.lt.s32.totalorder %s18, 1
      %s275 = scalar_select %p274, %s18, 1
      %s276 = smul.addr %s275, 41
      %s277 = smul.addr %s276, 8
      %s278 = scalar_lea.vmem %s7, %s277
      %v280 = vld [vmem:[%s273] sm:$0xff]
      %v281 = vld [vmem:[%s273 + $0x8] sm:$0xff]
      %v282 = vld [vmem:[%s273 + $0x10] sm:$0xff]
      %v283 = vld [vmem:[%s273 + $0x18] sm:$0xff]
      %v284 = vld [vmem:[%s273 + $0x20] sm:$0xff]
      %v285 = vld [vmem:[%s273 + $0x28] sm:$0xff]
      %v286 = vld [vmem:[%s273 + $0x30] sm:$0xff]
      %v287 = vld [vmem:[%s273 + $0x38] sm:$0xff]
      %v288 = vld [vmem:[%s273 + $0x40] sm:$0xff]
      %v289 = vld [vmem:[%s273 + $0x48] sm:$0xff]
      %v290 = vld [vmem:[%s273 + $0x50] sm:$0xff]
      %v291 = vld [vmem:[%s273 + $0x58] sm:$0xff]
      %v292 = vld [vmem:[%s273 + $0x60] sm:$0xff]
      %v293 = vld [vmem:[%s273 + $0x68] sm:$0xff]
      %v294 = vld [vmem:[%s273 + $0x70] sm:$0xff]
      %v295 = vld [vmem:[%s273 + $0x78] sm:$0xff]
      %v296 = vld [vmem:[%s273 + $0x80] sm:$0xff]
      %v297 = vld [vmem:[%s273 + $0x88] sm:$0xff]
      %v298 = vld [vmem:[%s273 + $0x90] sm:$0xff]
      %v299 = vld [vmem:[%s273 + $0x98] sm:$0xff]
      %v300 = vld [vmem:[%s273 + $0xa0] sm:$0xff]
      %v301 = vld [vmem:[%s273 + $0xa8] sm:$0xff]
      %v302 = vld [vmem:[%s273 + $0xb0] sm:$0xff]
      %v303 = vld [vmem:[%s273 + $0xb8] sm:$0xff]
      %v304 = vld [vmem:[%s273 + $0xc0] sm:$0xff]
      %v305 = vld [vmem:[%s273 + $0xc8] sm:$0xff]
      %v306 = vld [vmem:[%s273 + $0xd0] sm:$0xff]
      %v307 = vld [vmem:[%s273 + $0xd8] sm:$0xff]
      %v308 = vld [vmem:[%s273 + $0xe0] sm:$0xff]
      %v309 = vld [vmem:[%s273 + $0xe8] sm:$0xff]
      %v310 = vld [vmem:[%s273 + $0xf0] sm:$0xff]
      %v311 = vld [vmem:[%s273 + $0xf8] sm:$0xff]
      %v312 = vld [vmem:[%s273 + $0x100] sm:$0xff]
      %v313 = vld [vmem:[%s273 + $0x108] sm:$0xff]
      %v314 = vld [vmem:[%s273 + $0x110] sm:$0xff]
      %v315 = vld [vmem:[%s273 + $0x118] sm:$0x3f]
      %v316 = vpack.c.bf16 %v281, %v280
      %v317 = vpack.c.bf16 %v283, %v282
      %v318 = vpack.c.bf16 %v285, %v284
      %v319 = vpack.c.bf16 %v287, %v286
      %v320 = vpack.c.bf16 %v289, %v288
      %v321 = vpack.c.bf16 %v291, %v290
      %v322 = vpack.c.bf16 %v293, %v292
      %v323 = vpack.c.bf16 %v295, %v294
      %v324 = vpack.c.bf16 %v297, %v296
      %v325 = vpack.c.bf16 %v299, %v298
      %v326 = vpack.c.bf16 %v301, %v300
      %v327 = vpack.c.bf16 %v303, %v302
      %v328 = vpack.c.bf16 %v305, %v304
      %v329 = vpack.c.bf16 %v307, %v306
      %v330 = vpack.c.bf16 %v309, %v308
      %v331 = vpack.c.bf16 %v311, %v310
      %v332 = vpack.c.bf16 %v313, %v312
      %v333 = vpack.c.bf16 %v315, %v314
      %v352 = vunpack.c.l.b16 %v316
      %v353 = vunpack.c.h.b16 %v316
      %v354 = vunpack.c.l.b16 %v317
      %v355 = vunpack.c.h.b16 %v317
      %v356 = vunpack.c.l.b16 %v318
      %v357 = vunpack.c.h.b16 %v318
      %v358 = vunpack.c.l.b16 %v319
      %v359 = vunpack.c.h.b16 %v319
      %v360 = vunpack.c.l.b16 %v320
      %v361 = vunpack.c.h.b16 %v320
      %v362 = vunpack.c.l.b16 %v321
      %v363 = vunpack.c.h.b16 %v321
      %v364 = vunpack.c.l.b16 %v322
      %v365 = vunpack.c.h.b16 %v322
      %v366 = vunpack.c.l.b16 %v323
      %v367 = vunpack.c.h.b16 %v323
      %v368 = vunpack.c.l.b16 %v324
      %v369 = vunpack.c.h.b16 %v324
      %v370 = vunpack.c.l.b16 %v325
      %v371 = vunpack.c.h.b16 %v325
      %v372 = vunpack.c.l.b16 %v326
      %v373 = vunpack.c.h.b16 %v326
      %v374 = vunpack.c.l.b16 %v327
      %v375 = vunpack.c.h.b16 %v327
      %v376 = vunpack.c.l.b16 %v328
      %v377 = vunpack.c.h.b16 %v328
      %v378 = vunpack.c.l.b16 %v329
      %v379 = vunpack.c.h.b16 %v329
      %v380 = vunpack.c.l.b16 %v330
      %v381 = vunpack.c.h.b16 %v330
      %v382 = vunpack.c.l.b16 %v331
      %v383 = vunpack.c.h.b16 %v331
      %v384 = vunpack.c.l.b16 %v332
      %v385 = vunpack.c.h.b16 %v332
      %v386 = vunpack.c.l.b16 %v333
      %v387 = vunpack.c.h.b16 %v333
      %v388 = vpack.c.b16 %v352, %v352
      %v389 = vpack.c.b16 %v353, %v353
      %v390 = vpack.c.b16 %v354, %v354
      %v391 = vpack.c.b16 %v355, %v355
      %v392 = vpack.c.b16 %v356, %v356
      %v393 = vpack.c.b16 %v357, %v357
      %v394 = vpack.c.b16 %v358, %v358
      %v395 = vpack.c.b16 %v359, %v359
      %v396 = vpack.c.b16 %v360, %v360
      %v397 = vpack.c.b16 %v361, %v361
      %v398 = vpack.c.b16 %v362, %v362
      %v399 = vpack.c.b16 %v363, %v363
      %v400 = vpack.c.b16 %v364, %v364
      %v401 = vpack.c.b16 %v365, %v365
      %v402 = vpack.c.b16 %v366, %v366
      %v403 = vpack.c.b16 %v367, %v367
      %v404 = vpack.c.b16 %v368, %v368
      %v405 = vpack.c.b16 %v369, %v369
      %v406 = vpack.c.b16 %v370, %v370
      %v407 = vpack.c.b16 %v371, %v371
      %v408 = vpack.c.b16 %v372, %v372
      %v409 = vpack.c.b16 %v373, %v373
      %v410 = vpack.c.b16 %v374, %v374
      %v411 = vpack.c.b16 %v375, %v375
      %v412 = vpack.c.b16 %v376, %v376
      %v413 = vpack.c.b16 %v377, %v377
      %v414 = vpack.c.b16 %v378, %v378
      %v415 = vpack.c.b16 %v379, %v379
      %v416 = vpack.c.b16 %v380, %v380
      %v417 = vpack.c.b16 %v381, %v381
      %v418 = vpack.c.b16 %v382, %v382
      %v419 = vpack.c.b16 %v383, %v383
      %v420 = vpack.c.b16 %v384, %v384
      %v421 = vpack.c.b16 %v385, %v385
      %v422 = vpack.c.b16 %v386, %v386
      %v423 = vpack.c.b16 %v387, %v387
      %460 = vst [vmem:[#allocation2] sm:$0xf] %v388
      %461 = vst [vmem:[#allocation2 + $0x24] sm:$0xf] %v389
      %462 = vst [vmem:[#allocation2 + $0x48] sm:$0xf] %v390
      %463 = vst [vmem:[#allocation2 + $0x6c] sm:$0xf] %v391
      %464 = vst [vmem:[#allocation2 + $0x90] sm:$0xf] %v392
      %465 = vst [vmem:[#allocation2 + $0xb4] sm:$0xf] %v393
      %466 = vst [vmem:[#allocation2 + $0xd8] sm:$0xf] %v394
      %467 = vst [vmem:[#allocation2 + $0xfc] sm:$0xf] %v395
      %468 = vst [vmem:[#allocation2 + $0x120] sm:$0xf] %v396
      %469 = vst [vmem:[#allocation2 + $0x144] sm:$0xf] %v397
      %470 = vst [vmem:[#allocation2 + $0x168] sm:$0xf] %v398
      %471 = vst [vmem:[#allocation2 + $0x18c] sm:$0xf] %v399
      %472 = vst [vmem:[#allocation2 + $0x1b0] sm:$0xf] %v400
      %473 = vst [vmem:[#allocation2 + $0x1d4] sm:$0xf] %v401
      %474 = vst [vmem:[#allocation2 + $0x1f8] sm:$0xf] %v402
      %475 = vst [vmem:[#allocation2 + $0x21c] sm:$0xf] %v403
      %476 = vst [vmem:[#allocation2 + $0x240] sm:$0xf] %v404
      %477 = vst [vmem:[#allocation2 + $0x264] sm:$0xf] %v405
      %478 = vst [vmem:[#allocation2 + $0x288] sm:$0xf] %v406
      %479 = vst [vmem:[#allocation2 + $0x2ac] sm:$0xf] %v407
      %480 = vst [vmem:[#allocation2 + $0x2d0] sm:$0xf] %v408
      %481 = vst [vmem:[#allocation2 + $0x2f4] sm:$0xf] %v409
      %482 = vst [vmem:[#allocation2 + $0x318] sm:$0xf] %v410
      %483 = vst [vmem:[#allocation2 + $0x33c] sm:$0xf] %v411
      %484 = vst [vmem:[#allocation2 + $0x360] sm:$0xf] %v412
      %485 = vst [vmem:[#allocation2 + $0x384] sm:$0xf] %v413
      %486 = vst [vmem:[#allocation2 + $0x3a8] sm:$0xf] %v414
      %487 = vst [vmem:[#allocation2 + $0x3cc] sm:$0xf] %v415
      %488 = vst [vmem:[#allocation2 + $0x3f0] sm:$0xf] %v416
      %489 = vst [vmem:[#allocation2 + $0x414] sm:$0xf] %v417
      %490 = vst [vmem:[#allocation2 + $0x438] sm:$0xf] %v418
      %491 = vst [vmem:[#allocation2 + $0x45c] sm:$0xf] %v419
      %492 = vst [vmem:[#allocation2 + $0x480] sm:$0xf] %v420
      %493 = vst [vmem:[#allocation2 + $0x4a4] sm:$0xf] %v421
      %494 = vst [vmem:[#allocation2 + $0x4c8] sm:$0xf] %v422
      %495 = vst [vmem:[#allocation2 + $0x4ec] sm:$0x7] %v423
      %v496 = vld [vmem:[%s273 + $0x1] sm:$0xff]
      %v497 = vld [vmem:[%s273 + $0x9] sm:$0xff]
      %v498 = vld [vmem:[%s273 + $0x11] sm:$0xff]
      %v499 = vld [vmem:[%s273 + $0x19] sm:$0xff]
      %v500 = vld [vmem:[%s273 + $0x21] sm:$0xff]
      %v501 = vld [vmem:[%s273 + $0x29] sm:$0xff]
      %v502 = vld [vmem:[%s273 + $0x31] sm:$0xff]
      %v503 = vld [vmem:[%s273 + $0x39] sm:$0xff]
      %v504 = vld [vmem:[%s273 + $0x41] sm:$0xff]
      %v505 = vld [vmem:[%s273 + $0x49] sm:$0xff]
      %v506 = vld [vmem:[%s273 + $0x51] sm:$0xff]
      %v507 = vld [vmem:[%s273 + $0x59] sm:$0xff]
      %v508 = vld [vmem:[%s273 + $0x61] sm:$0xff]
      %v509 = vld [vmem:[%s273 + $0x69] sm:$0xff]
      %v510 = vld [vmem:[%s273 + $0x71] sm:$0xff]
      %v511 = vld [vmem:[%s273 + $0x79] sm:$0xff]
      %v512 = vld [vmem:[%s273 + $0x81] sm:$0xff]
      %v513 = vld [vmem:[%s273 + $0x89] sm:$0xff]
      %v514 = vld [vmem:[%s273 + $0x91] sm:$0xff]
      %v515 = vld [vmem:[%s273 + $0x99] sm:$0xff]
      %v516 = vld [vmem:[%s273 + $0xa1] sm:$0xff]
      %v517 = vld [vmem:[%s273 + $0xa9] sm:$0xff]
      %v518 = vld [vmem:[%s273 + $0xb1] sm:$0xff]
      %v519 = vld [vmem:[%s273 + $0xb9] sm:$0xff]
      %v520 = vld [vmem:[%s273 + $0xc1] sm:$0xff]
      %v521 = vld [vmem:[%s273 + $0xc9] sm:$0xff]
      %v522 = vld [vmem:[%s273 + $0xd1] sm:$0xff]
      %v523 = vld [vmem:[%s273 + $0xd9] sm:$0xff]
      %v524 = vld [vmem:[%s273 + $0xe1] sm:$0xff]
      %v525 = vld [vmem:[%s273 + $0xe9] sm:$0xff]
      %v526 = vld [vmem:[%s273 + $0xf1] sm:$0xff]
      %v527 = vld [vmem:[%s273 + $0xf9] sm:$0xff]
      %v528 = vld [vmem:[%s273 + $0x101] sm:$0xff]
      %v529 = vld [vmem:[%s273 + $0x109] sm:$0xff]
      %v530 = vld [vmem:[%s273 + $0x111] sm:$0xff]
      %v531 = vld [vmem:[%s273 + $0x119] sm:$0x3f]
      %v532 = vpack.c.bf16 %v497, %v496
      %v533 = vpack.c.bf16 %v499, %v498
      %v534 = vpack.c.bf16 %v501, %v500
      %v535 = vpack.c.bf16 %v503, %v502
      %v536 = vpack.c.bf16 %v505, %v504
      %v537 = vpack.c.bf16 %v507, %v506
      %v538 = vpack.c.bf16 %v509, %v508
      %v539 = vpack.c.bf16 %v511, %v510
      %v540 = vpack.c.bf16 %v513, %v512
      %v541 = vpack.c.bf16 %v515, %v514
      %v542 = vpack.c.bf16 %v517, %v516
      %v543 = vpack.c.bf16 %v519, %v518
      %v544 = vpack.c.bf16 %v521, %v520
      %v545 = vpack.c.bf16 %v523, %v522
      %v546 = vpack.c.bf16 %v525, %v524
      %v547 = vpack.c.bf16 %v527, %v526
      %v548 = vpack.c.bf16 %v529, %v528
      %v549 = vpack.c.bf16 %v531, %v530
      %v568 = vunpack.c.l.b16 %v532
      %v569 = vunpack.c.h.b16 %v532
      %v570 = vunpack.c.l.b16 %v533
      %v571 = vunpack.c.h.b16 %v533
      %v572 = vunpack.c.l.b16 %v534
      %v573 = vunpack.c.h.b16 %v534
      %v574 = vunpack.c.l.b16 %v535
      %v575 = vunpack.c.h.b16 %v535
      %v576 = vunpack.c.l.b16 %v536
      %v577 = vunpack.c.h.b16 %v536
      %v578 = vunpack.c.l.b16 %v537
      %v579 = vunpack.c.h.b16 %v537
      %v580 = vunpack.c.l.b16 %v538
      %v581 = vunpack.c.h.b16 %v538
      %v582 = vunpack.c.l.b16 %v539
      %v583 = vunpack.c.h.b16 %v539
      %v584 = vunpack.c.l.b16 %v540
      %v585 = vunpack.c.h.b16 %v540
      %v586 = vunpack.c.l.b16 %v541
      %v587 = vunpack.c.h.b16 %v541
      %v588 = vunpack.c.l.b16 %v542
      %v589 = vunpack.c.h.b16 %v542
      %v590 = vunpack.c.l.b16 %v543
      %v591 = vunpack.c.h.b16 %v543
      %v592 = vunpack.c.l.b16 %v544
      %v593 = vunpack.c.h.b16 %v544
      %v594 = vunpack.c.l.b16 %v545
      %v595 = vunpack.c.h.b16 %v545
      %v596 = vunpack.c.l.b16 %v546
      %v597 = vunpack.c.h.b16 %v546
      %v598 = vunpack.c.l.b16 %v547
      %v599 = vunpack.c.h.b16 %v547
      %v600 = vunpack.c.l.b16 %v548
      %v601 = vunpack.c.h.b16 %v548
      %v602 = vunpack.c.l.b16 %v549
      %v603 = vunpack.c.h.b16 %v549
      %v604 = vpack.c.b16 %v568, %v568
      %v605 = vpack.c.b16 %v569, %v569
      %v606 = vpack.c.b16 %v570, %v570
      %v607 = vpack.c.b16 %v571, %v571
      %v608 = vpack.c.b16 %v572, %v572
      %v609 = vpack.c.b16 %v573, %v573
      %v610 = vpack.c.b16 %v574, %v574
      %v611 = vpack.c.b16 %v575, %v575
      %v612 = vpack.c.b16 %v576, %v576
      %v613 = vpack.c.b16 %v577, %v577
      %v614 = vpack.c.b16 %v578, %v578
      %v615 = vpack.c.b16 %v579, %v579
      %v616 = vpack.c.b16 %v580, %v580
      %v617 = vpack.c.b16 %v581, %v581
      %v618 = vpack.c.b16 %v582, %v582
      %v619 = vpack.c.b16 %v583, %v583
      %v620 = vpack.c.b16 %v584, %v584
      %v621 = vpack.c.b16 %v585, %v585
      %v622 = vpack.c.b16 %v586, %v586
      %v623 = vpack.c.b16 %v587, %v587
      %v624 = vpack.c.b16 %v588, %v588
      %v625 = vpack.c.b16 %v589, %v589
      %v626 = vpack.c.b16 %v590, %v590
      %v627 = vpack.c.b16 %v591, %v591
      %v628 = vpack.c.b16 %v592, %v592
      %v629 = vpack.c.b16 %v593, %v593
      %v630 = vpack.c.b16 %v594, %v594
      %v631 = vpack.c.b16 %v595, %v595
      %v632 = vpack.c.b16 %v596, %v596
      %v633 = vpack.c.b16 %v597, %v597
      %v634 = vpack.c.b16 %v598, %v598
      %v635 = vpack.c.b16 %v599, %v599
      %v636 = vpack.c.b16 %v600, %v600
      %v637 = vpack.c.b16 %v601, %v601
      %v638 = vpack.c.b16 %v602, %v602
      %v639 = vpack.c.b16 %v603, %v603
      %676 = vst [vmem:[#allocation2 + $0x4] sm:$0xf] %v604
      %677 = vst [vmem:[#allocation2 + $0x28] sm:$0xf] %v605
      %678 = vst [vmem:[#allocation2 + $0x4c] sm:$0xf] %v606
      %679 = vst [vmem:[#allocation2 + $0x70] sm:$0xf] %v607
      %680 = vst [vmem:[#allocation2 + $0x94] sm:$0xf] %v608
      %681 = vst [vmem:[#allocation2 + $0xb8] sm:$0xf] %v609
      %682 = vst [vmem:[#allocation2 + $0xdc] sm:$0xf] %v610
      %683 = vst [vmem:[#allocation2 + $0x100] sm:$0xf] %v611
      %684 = vst [vmem:[#allocation2 + $0x124] sm:$0xf] %v612
      %685 = vst [vmem:[#allocation2 + $0x148] sm:$0xf] %v613
      %686 = vst [vmem:[#allocation2 + $0x16c] sm:$0xf] %v614
      %687 = vst [vmem:[#allocation2 + $0x190] sm:$0xf] %v615
      %688 = vst [vmem:[#allocation2 + $0x1b4] sm:$0xf] %v616
      %689 = vst [vmem:[#allocation2 + $0x1d8] sm:$0xf] %v617
      %690 = vst [vmem:[#allocation2 + $0x1fc] sm:$0xf] %v618
      %691 = vst [vmem:[#allocation2 + $0x220] sm:$0xf] %v619
      %692 = vst [vmem:[#allocation2 + $0x244] sm:$0xf] %v620
      %693 = vst [vmem:[#allocation2 + $0x268] sm:$0xf] %v621
      %694 = vst [vmem:[#allocation2 + $0x28c] sm:$0xf] %v622
      %695 = vst [vmem:[#allocation2 + $0x2b0] sm:$0xf] %v623
      %696 = vst [vmem:[#allocation2 + $0x2d4] sm:$0xf] %v624
      %697 = vst [vmem:[#allocation2 + $0x2f8] sm:$0xf] %v625
      %698 = vst [vmem:[#allocation2 + $0x31c] sm:$0xf] %v626
      %699 = vst [vmem:[#allocation2 + $0x340] sm:$0xf] %v627
      %700 = vst [vmem:[#allocation2 + $0x364] sm:$0xf] %v628
      %701 = vst [vmem:[#allocation2 + $0x388] sm:$0xf] %v629
      %702 = vst [vmem:[#allocation2 + $0x3ac] sm:$0xf] %v630
      %703 = vst [vmem:[#allocation2 + $0x3d0] sm:$0xf] %v631
      %704 = vst [vmem:[#allocation2 + $0x3f4] sm:$0xf] %v632
      %705 = vst [vmem:[#allocation2 + $0x418] sm:$0xf] %v633
      %706 = vst [vmem:[#allocation2 + $0x43c] sm:$0xf] %v634
      %707 = vst [vmem:[#allocation2 + $0x460] sm:$0xf] %v635
      %708 = vst [vmem:[#allocation2 + $0x484] sm:$0xf] %v636
      %709 = vst [vmem:[#allocation2 + $0x4a8] sm:$0xf] %v637
      %710 = vst [vmem:[#allocation2 + $0x4cc] sm:$0xf] %v638
      %711 = vst [vmem:[#allocation2 + $0x4f0] sm:$0x7] %v639
      %v712 = vld [vmem:[%s273 + $0x2] sm:$0xff]
      %v713 = vld [vmem:[%s273 + $0xa] sm:$0xff]
      %v714 = vld [vmem:[%s273 + $0x12] sm:$0xff]
      %v715 = vld [vmem:[%s273 + $0x1a] sm:$0xff]
      %v716 = vld [vmem:[%s273 + $0x22] sm:$0xff]
      %v717 = vld [vmem:[%s273 + $0x2a] sm:$0xff]
      %v718 = vld [vmem:[%s273 + $0x32] sm:$0xff]
      %v719 = vld [vmem:[%s273 + $0x3a] sm:$0xff]
      %v720 = vld [vmem:[%s273 + $0x42] sm:$0xff]
      %v721 = vld [vmem:[%s273 + $0x4a] sm:$0xff]
      %v722 = vld [vmem:[%s273 + $0x52] sm:$0xff]
      %v723 = vld [vmem:[%s273 + $0x5a] sm:$0xff]
      %v724 = vld [vmem:[%s273 + $0x62] sm:$0xff]
      %v725 = vld [vmem:[%s273 + $0x6a] sm:$0xff]
      %v726 = vld [vmem:[%s273 + $0x72] sm:$0xff]
      %v727 = vld [vmem:[%s273 + $0x7a] sm:$0xff]
      %v728 = vld [vmem:[%s273 + $0x82] sm:$0xff]
      %v729 = vld [vmem:[%s273 + $0x8a] sm:$0xff]
      %v730 = vld [vmem:[%s273 + $0x92] sm:$0xff]
      %v731 = vld [vmem:[%s273 + $0x9a] sm:$0xff]
      %v732 = vld [vmem:[%s273 + $0xa2] sm:$0xff]
      %v733 = vld [vmem:[%s273 + $0xaa] sm:$0xff]
      %v734 = vld [vmem:[%s273 + $0xb2] sm:$0xff]
      %v735 = vld [vmem:[%s273 + $0xba] sm:$0xff]
      %v736 = vld [vmem:[%s273 + $0xc2] sm:$0xff]
      %v737 = vld [vmem:[%s273 + $0xca] sm:$0xff]
      %v738 = vld [vmem:[%s273 + $0xd2] sm:$0xff]
      %v739 = vld [vmem:[%s273 + $0xda] sm:$0xff]
      %v740 = vld [vmem:[%s273 + $0xe2] sm:$0xff]
      %v741 = vld [vmem:[%s273 + $0xea] sm:$0xff]
      %v742 = vld [vmem:[%s273 + $0xf2] sm:$0xff]
      %v743 = vld [vmem:[%s273 + $0xfa] sm:$0xff]
      %v744 = vld [vmem:[%s273 + $0x102] sm:$0xff]
      %v745 = vld [vmem:[%s273 + $0x10a] sm:$0xff]
      %v746 = vld [vmem:[%s273 + $0x112] sm:$0xff]
      %v747 = vld [vmem:[%s273 + $0x11a] sm:$0x3f]
      %v748 = vpack.c.bf16 %v713, %v712
      %v749 = vpack.c.bf16 %v715, %v714
      %v750 = vpack.c.bf16 %v717, %v716
      %v751 = vpack.c.bf16 %v719, %v718
      %v752 = vpack.c.bf16 %v721, %v720
      %v753 = vpack.c.bf16 %v723, %v722
      %v754 = vpack.c.bf16 %v725, %v724
      %v755 = vpack.c.bf16 %v727, %v726
      %v756 = vpack.c.bf16 %v729, %v728
      %v757 = vpack.c.bf16 %v731, %v730
      %v758 = vpack.c.bf16 %v733, %v732
      %v759 = vpack.c.bf16 %v735, %v734
      %v760 = vpack.c.bf16 %v737, %v736
      %v761 = vpack.c.bf16 %v739, %v738
      %v762 = vpack.c.bf16 %v741, %v740
      %v763 = vpack.c.bf16 %v743, %v742
      %v764 = vpack.c.bf16 %v745, %v744
      %v765 = vpack.c.bf16 %v747, %v746
      %v784 = vunpack.c.l.b16 %v748
      %v785 = vunpack.c.h.b16 %v748
      %v786 = vunpack.c.l.b16 %v749
      %v787 = vunpack.c.h.b16 %v749
      %v788 = vunpack.c.l.b16 %v750
      %v789 = vunpack.c.h.b16 %v750
      %v790 = vunpack.c.l.b16 %v751
      %v791 = vunpack.c.h.b16 %v751
      %v792 = vunpack.c.l.b16 %v752
      %v793 = vunpack.c.h.b16 %v752
      %v794 = vunpack.c.l.b16 %v753
      %v795 = vunpack.c.h.b16 %v753
      %v796 = vunpack.c.l.b16 %v754
      %v797 = vunpack.c.h.b16 %v754
      %v798 = vunpack.c.l.b16 %v755
      %v799 = vunpack.c.h.b16 %v755
      %v800 = vunpack.c.l.b16 %v756
      %v801 = vunpack.c.h.b16 %v756
      %v802 = vunpack.c.l.b16 %v757
      %v803 = vunpack.c.h.b16 %v757
      %v804 = vunpack.c.l.b16 %v758
      %v805 = vunpack.c.h.b16 %v758
      %v806 = vunpack.c.l.b16 %v759
      %v807 = vunpack.c.h.b16 %v759
      %v808 = vunpack.c.l.b16 %v760
      %v809 = vunpack.c.h.b16 %v760
      %v810 = vunpack.c.l.b16 %v761
      %v811 = vunpack.c.h.b16 %v761
      %v812 = vunpack.c.l.b16 %v762
      %v813 = vunpack.c.h.b16 %v762
      %v814 = vunpack.c.l.b16 %v763
      %v815 = vunpack.c.h.b16 %v763
      %v816 = vunpack.c.l.b16 %v764
      %v817 = vunpack.c.h.b16 %v764
      %v818 = vunpack.c.l.b16 %v765
      %v819 = vunpack.c.h.b16 %v765
      %v820 = vpack.c.b16 %v784, %v784
      %v821 = vpack.c.b16 %v785, %v785
      %v822 = vpack.c.b16 %v786, %v786
      %v823 = vpack.c.b16 %v787, %v787
      %v824 = vpack.c.b16 %v788, %v788
      %v825 = vpack.c.b16 %v789, %v789
      %v826 = vpack.c.b16 %v790, %v790
      %v827 = vpack.c.b16 %v791, %v791
      %v828 = vpack.c.b16 %v792, %v792
      %v829 = vpack.c.b16 %v793, %v793
      %v830 = vpack.c.b16 %v794, %v794
      %v831 = vpack.c.b16 %v795, %v795
      %v832 = vpack.c.b16 %v796, %v796
      %v833 = vpack.c.b16 %v797, %v797
      %v834 = vpack.c.b16 %v798, %v798
      %v835 = vpack.c.b16 %v799, %v799
      %v836 = vpack.c.b16 %v800, %v800
      %v837 = vpack.c.b16 %v801, %v801
      %v838 = vpack.c.b16 %v802, %v802
      %v839 = vpack.c.b16 %v803, %v803
      %v840 = vpack.c.b16 %v804, %v804
      %v841 = vpack.c.b16 %v805, %v805
      %v842 = vpack.c.b16 %v806, %v806
      %v843 = vpack.c.b16 %v807, %v807
      %v844 = vpack.c.b16 %v808, %v808
      %v845 = vpack.c.b16 %v809, %v809
      %v846 = vpack.c.b16 %v810, %v810
      %v847 = vpack.c.b16 %v811, %v811
      %v848 = vpack.c.b16 %v812, %v812
      %v849 = vpack.c.b16 %v813, %v813
      %v850 = vpack.c.b16 %v814, %v814
      %v851 = vpack.c.b16 %v815, %v815
      %v852 = vpack.c.b16 %v816, %v816
      %v853 = vpack.c.b16 %v817, %v817
      %v854 = vpack.c.b16 %v818, %v818
      %v855 = vpack.c.b16 %v819, %v819
      %892 = vst [vmem:[#allocation2 + $0x8] sm:$0xf] %v820
      %893 = vst [vmem:[#allocation2 + $0x2c] sm:$0xf] %v821
      %894 = vst [vmem:[#allocation2 + $0x50] sm:$0xf] %v822
      %895 = vst [vmem:[#allocation2 + $0x74] sm:$0xf] %v823
      %896 = vst [vmem:[#allocation2 + $0x98] sm:$0xf] %v824
      %897 = vst [vmem:[#allocation2 + $0xbc] sm:$0xf] %v825
      %898 = vst [vmem:[#allocation2 + $0xe0] sm:$0xf] %v826
      %899 = vst [vmem:[#allocation2 + $0x104] sm:$0xf] %v827
      %900 = vst [vmem:[#allocation2 + $0x128] sm:$0xf] %v828
      %901 = vst [vmem:[#allocation2 + $0x14c] sm:$0xf] %v829
      %902 = vst [vmem:[#allocation2 + $0x170] sm:$0xf] %v830
      %903 = vst [vmem:[#allocation2 + $0x194] sm:$0xf] %v831
      %904 = vst [vmem:[#allocation2 + $0x1b8] sm:$0xf] %v832
      %905 = vst [vmem:[#allocation2 + $0x1dc] sm:$0xf] %v833
      %906 = vst [vmem:[#allocation2 + $0x200] sm:$0xf] %v834
      %907 = vst [vmem:[#allocation2 + $0x224] sm:$0xf] %v835
      %908 = vst [vmem:[#allocation2 + $0x248] sm:$0xf] %v836
      %909 = vst [vmem:[#allocation2 + $0x26c] sm:$0xf] %v837
      %910 = vst [vmem:[#allocation2 + $0x290] sm:$0xf] %v838
      %911 = vst [vmem:[#allocation2 + $0x2b4] sm:$0xf] %v839
      %912 = vst [vmem:[#allocation2 + $0x2d8] sm:$0xf] %v840
      %913 = vst [vmem:[#allocation2 + $0x2fc] sm:$0xf] %v841
      %914 = vst [vmem:[#allocation2 + $0x320] sm:$0xf] %v842
      %915 = vst [vmem:[#allocation2 + $0x344] sm:$0xf] %v843
      %916 = vst [vmem:[#allocation2 + $0x368] sm:$0xf] %v844
      %917 = vst [vmem:[#allocation2 + $0x38c] sm:$0xf] %v845
      %918 = vst [vmem:[#allocation2 + $0x3b0] sm:$0xf] %v846
      %919 = vst [vmem:[#allocation2 + $0x3d4] sm:$0xf] %v847
      %920 = vst [vmem:[#allocation2 + $0x3f8] sm:$0xf] %v848
      %921 = vst [vmem:[#allocation2 + $0x41c] sm:$0xf] %v849
      %922 = vst [vmem:[#allocation2 + $0x440] sm:$0xf] %v850
      %923 = vst [vmem:[#allocation2 + $0x464] sm:$0xf] %v851
      %924 = vst [vmem:[#allocation2 + $0x488] sm:$0xf] %v852
      %925 = vst [vmem:[#allocation2 + $0x4ac] sm:$0xf] %v853
      %926 = vst [vmem:[#allocation2 + $0x4d0] sm:$0xf] %v854
      %927 = vst [vmem:[#allocation2 + $0x4f4] sm:$0x7] %v855
      %v928 = vld [vmem:[%s273 + $0x12] sm:$0xff]
      %v929 = vld [vmem:[%s273 + $0x1a] sm:$0xff]
      %v930 = vld [vmem:[%s273 + $0x22] sm:$0xff]
      %v931 = vld [vmem:[%s273 + $0x2a] sm:$0xff]
      %v932 = vld [vmem:[%s273 + $0x32] sm:$0xff]
      %v933 = vld [vmem:[%s273 + $0x3a] sm:$0xff]
      %v934 = vld [vmem:[%s273 + $0x42] sm:$0xff]
      %v935 = vld [vmem:[%s273 + $0x4a] sm:$0xff]
      %v936 = vld [vmem:[%s273 + $0x52] sm:$0xff]
      %v937 = vld [vmem:[%s273 + $0x5a] sm:$0xff]
      %v938 = vld [vmem:[%s273 + $0x62] sm:$0xff]
      %v939 = vld [vmem:[%s273 + $0x6a] sm:$0xff]
      %v940 = vld [vmem:[%s273 + $0x72] sm:$0xff]
      %v941 = vld [vmem:[%s273 + $0x7a] sm:$0xff]
      %v942 = vld [vmem:[%s273 + $0x82] sm:$0xff]
      %v943 = vld [vmem:[%s273 + $0x8a] sm:$0xff]
      %v944 = vld [vmem:[%s273 + $0x92] sm:$0xff]
      %v945 = vld [vmem:[%s273 + $0x9a] sm:$0xff]
      %v946 = vld [vmem:[%s273 + $0xa2] sm:$0xff]
      %v947 = vld [vmem:[%s273 + $0xaa] sm:$0xff]
      %v948 = vld [vmem:[%s273 + $0xb2] sm:$0xff]
      %v949 = vld [vmem:[%s273 + $0xba] sm:$0xff]
      %v950 = vld [vmem:[%s273 + $0xc2] sm:$0xff]
      %v951 = vld [vmem:[%s273 + $0xca] sm:$0xff]
      %v952 = vld [vmem:[%s273 + $0xd2] sm:$0xff]
      %v953 = vld [vmem:[%s273 + $0xda] sm:$0xff]
      %v954 = vld [vmem:[%s273 + $0xe2] sm:$0xff]
      %v955 = vld [vmem:[%s273 + $0xea] sm:$0xff]
      %v956 = vld [vmem:[%s273 + $0xf2] sm:$0xff]
      %v957 = vld [vmem:[%s273 + $0xfa] sm:$0xff]
      %v958 = vld [vmem:[%s273 + $0x102] sm:$0xff]
      %v959 = vld [vmem:[%s273 + $0x10a] sm:$0xff]
      %v960 = vld [vmem:[%s273 + $0x112] sm:$0xff]
      %v961 = vld [vmem:[%s273 + $0x11a] sm:$0xff]
      %v962 = vld [vmem:[%s273 + $0x122] sm:$0xff]
      %v963 = vld [vmem:[%s273 + $0x12a] sm:$0x3f]
      %v964 = vpack.c.bf16 %v929, %v928
      %v965 = vpack.c.bf16 %v931, %v930
      %v966 = vpack.c.bf16 %v933, %v932
      %v967 = vpack.c.bf16 %v935, %v934
      %v968 = vpack.c.bf16 %v937, %v936
      %v969 = vpack.c.bf16 %v939, %v938
      %v970 = vpack.c.bf16 %v941, %v940
      %v971 = vpack.c.bf16 %v943, %v942
      %v972 = vpack.c.bf16 %v945, %v944
      %v973 = vpack.c.bf16 %v947, %v946
      %v974 = vpack.c.bf16 %v949, %v948
      %v975 = vpack.c.bf16 %v951, %v950
      %v976 = vpack.c.bf16 %v953, %v952
      %v977 = vpack.c.bf16 %v955, %v954
      %v978 = vpack.c.bf16 %v957, %v956
      %v979 = vpack.c.bf16 %v959, %v958
      %v980 = vpack.c.bf16 %v961, %v960
      %v981 = vpack.c.bf16 %v963, %v962
      %v1000 = vunpack.c.l.b16 %v964
      %v1001 = vunpack.c.h.b16 %v964
      %v1002 = vunpack.c.l.b16 %v965
      %v1003 = vunpack.c.h.b16 %v965
      %v1004 = vunpack.c.l.b16 %v966
      %v1005 = vunpack.c.h.b16 %v966
      %v1006 = vunpack.c.l.b16 %v967
      %v1007 = vunpack.c.h.b16 %v967
      %v1008 = vunpack.c.l.b16 %v968
      %v1009 = vunpack.c.h.b16 %v968
      %v1010 = vunpack.c.l.b16 %v969
      %v1011 = vunpack.c.h.b16 %v969
      %v1012 = vunpack.c.l.b16 %v970
      %v1013 = vunpack.c.h.b16 %v970
      %v1014 = vunpack.c.l.b16 %v971
      %v1015 = vunpack.c.h.b16 %v971
      %v1016 = vunpack.c.l.b16 %v972
      %v1017 = vunpack.c.h.b16 %v972
      %v1018 = vunpack.c.l.b16 %v973
      %v1019 = vunpack.c.h.b16 %v973
      %v1020 = vunpack.c.l.b16 %v974
      %v1021 = vunpack.c.h.b16 %v974
      %v1022 = vunpack.c.l.b16 %v975
      %v1023 = vunpack.c.h.b16 %v975
      %v1024 = vunpack.c.l.b16 %v976
      %v1025 = vunpack.c.h.b16 %v976
      %v1026 = vunpack.c.l.b16 %v977
      %v1027 = vunpack.c.h.b16 %v977
      %v1028 = vunpack.c.l.b16 %v978
      %v1029 = vunpack.c.h.b16 %v978
      %v1030 = vunpack.c.l.b16 %v979
      %v1031 = vunpack.c.h.b16 %v979
      %v1032 = vunpack.c.l.b16 %v980
      %v1033 = vunpack.c.h.b16 %v980
      %v1034 = vunpack.c.l.b16 %v981
      %v1035 = vunpack.c.h.b16 %v981
      %v1036 = vpack.c.b16 %v1000, %v1000
      %v1037 = vpack.c.b16 %v1001, %v1001
      %v1038 = vpack.c.b16 %v1002, %v1002
      %v1039 = vpack.c.b16 %v1003, %v1003
      %v1040 = vpack.c.b16 %v1004, %v1004
      %v1041 = vpack.c.b16 %v1005, %v1005
      %v1042 = vpack.c.b16 %v1006, %v1006
      %v1043 = vpack.c.b16 %v1007, %v1007
      %v1044 = vpack.c.b16 %v1008, %v1008
      %v1045 = vpack.c.b16 %v1009, %v1009
      %v1046 = vpack.c.b16 %v1010, %v1010
      %v1047 = vpack.c.b16 %v1011, %v1011
      %v1048 = vpack.c.b16 %v1012, %v1012
      %v1049 = vpack.c.b16 %v1013, %v1013
      %v1050 = vpack.c.b16 %v1014, %v1014
      %v1051 = vpack.c.b16 %v1015, %v1015
      %v1052 = vpack.c.b16 %v1016, %v1016
      %v1053 = vpack.c.b16 %v1017, %v1017
      %v1054 = vpack.c.b16 %v1018, %v1018
      %v1055 = vpack.c.b16 %v1019, %v1019
      %v1056 = vpack.c.b16 %v1020, %v1020
      %v1057 = vpack.c.b16 %v1021, %v1021
      %v1058 = vpack.c.b16 %v1022, %v1022
      %v1059 = vpack.c.b16 %v1023, %v1023
      %v1060 = vpack.c.b16 %v1024, %v1024
      %v1061 = vpack.c.b16 %v1025, %v1025
      %v1062 = vpack.c.b16 %v1026, %v1026
      %v1063 = vpack.c.b16 %v1027, %v1027
      %v1064 = vpack.c.b16 %v1028, %v1028
      %v1065 = vpack.c.b16 %v1029, %v1029
      %v1066 = vpack.c.b16 %v1030, %v1030
      %v1067 = vpack.c.b16 %v1031, %v1031
      %v1068 = vpack.c.b16 %v1032, %v1032
      %v1069 = vpack.c.b16 %v1033, %v1033
      %v1070 = vpack.c.b16 %v1034, %v1034
      %v1071 = vpack.c.b16 %v1035, %v1035
      %1108 = vst [vmem:[#allocation2 + $0xc] sm:$0xf] %v1036
      %1109 = vst [vmem:[#allocation2 + $0x30] sm:$0xf] %v1037
      %1110 = vst [vmem:[#allocation2 + $0x54] sm:$0xf] %v1038
      %1111 = vst [vmem:[#allocation2 + $0x78] sm:$0xf] %v1039
      %1112 = vst [vmem:[#allocation2 + $0x9c] sm:$0xf] %v1040
      %1113 = vst [vmem:[#allocation2 + $0xc0] sm:$0xf] %v1041
      %1114 = vst [vmem:[#allocation2 + $0xe4] sm:$0xf] %v1042
      %1115 = vst [vmem:[#allocation2 + $0x108] sm:$0xf] %v1043
      %1116 = vst [vmem:[#allocation2 + $0x12c] sm:$0xf] %v1044
      %1117 = vst [vmem:[#allocation2 + $0x150] sm:$0xf] %v1045
      %1118 = vst [vmem:[#allocation2 + $0x174] sm:$0xf] %v1046
      %1119 = vst [vmem:[#allocation2 + $0x198] sm:$0xf] %v1047
      %1120 = vst [vmem:[#allocation2 + $0x1bc] sm:$0xf] %v1048
      %1121 = vst [vmem:[#allocation2 + $0x1e0] sm:$0xf] %v1049
      %1122 = vst [vmem:[#allocation2 + $0x204] sm:$0xf] %v1050
      %1123 = vst [vmem:[#allocation2 + $0x228] sm:$0xf] %v1051
      %1124 = vst [vmem:[#allocation2 + $0x24c] sm:$0xf] %v1052
      %1125 = vst [vmem:[#allocation2 + $0x270] sm:$0xf] %v1053
      %1126 = vst [vmem:[#allocation2 + $0x294] sm:$0xf] %v1054
      %1127 = vst [vmem:[#allocation2 + $0x2b8] sm:$0xf] %v1055
      %1128 = vst [vmem:[#allocation2 + $0x2dc] sm:$0xf] %v1056
      %1129 = vst [vmem:[#allocation2 + $0x300] sm:$0xf] %v1057
      %1130 = vst [vmem:[#allocation2 + $0x324] sm:$0xf] %v1058
      %1131 = vst [vmem:[#allocation2 + $0x348] sm:$0xf] %v1059
      %1132 = vst [vmem:[#allocation2 + $0x36c] sm:$0xf] %v1060
      %1133 = vst [vmem:[#allocation2 + $0x390] sm:$0xf] %v1061
      %1134 = vst [vmem:[#allocation2 + $0x3b4] sm:$0xf] %v1062
      %1135 = vst [vmem:[#allocation2 + $0x3d8] sm:$0xf] %v1063
      %1136 = vst [vmem:[#allocation2 + $0x3fc] sm:$0xf] %v1064
      %1137 = vst [vmem:[#allocation2 + $0x420] sm:$0xf] %v1065
      %1138 = vst [vmem:[#allocation2 + $0x444] sm:$0xf] %v1066
      %1139 = vst [vmem:[#allocation2 + $0x468] sm:$0xf] %v1067
      %1140 = vst [vmem:[#allocation2 + $0x48c] sm:$0xf] %v1068
      %1141 = vst [vmem:[#allocation2 + $0x4b0] sm:$0xf] %v1069
      %1142 = vst [vmem:[#allocation2 + $0x4d4] sm:$0xf] %v1070
      %1143 = vst [vmem:[#allocation2 + $0x4f8] sm:$0x7] %v1071
      %v1144 = vld [vmem:[%s273 + $0x13] sm:$0xff]
      %v1145 = vld [vmem:[%s273 + $0x1b] sm:$0xff]
      %v1146 = vld [vmem:[%s273 + $0x23] sm:$0xff]
      %v1147 = vld [vmem:[%s273 + $0x2b] sm:$0xff]
      %v1148 = vld [vmem:[%s273 + $0x33] sm:$0xff]
      %v1149 = vld [vmem:[%s273 + $0x3b] sm:$0xff]
      %v1150 = vld [vmem:[%s273 + $0x43] sm:$0xff]
      %v1151 = vld [vmem:[%s273 + $0x4b] sm:$0xff]
      %v1152 = vld [vmem:[%s273 + $0x53] sm:$0xff]
      %v1153 = vld [vmem:[%s273 + $0x5b] sm:$0xff]
      %v1154 = vld [vmem:[%s273 + $0x63] sm:$0xff]
      %v1155 = vld [vmem:[%s273 + $0x6b] sm:$0xff]
      %v1156 = vld [vmem:[%s273 + $0x73] sm:$0xff]
      %v1157 = vld [vmem:[%s273 + $0x7b] sm:$0xff]
      %v1158 = vld [vmem:[%s273 + $0x83] sm:$0xff]
      %v1159 = vld [vmem:[%s273 + $0x8b] sm:$0xff]
      %v1160 = vld [vmem:[%s273 + $0x93] sm:$0xff]
      %v1161 = vld [vmem:[%s273 + $0x9b] sm:$0xff]
      %v1162 = vld [vmem:[%s273 + $0xa3] sm:$0xff]
      %v1163 = vld [vmem:[%s273 + $0xab] sm:$0xff]
      %v1164 = vld [vmem:[%s273 + $0xb3] sm:$0xff]
      %v1165 = vld [vmem:[%s273 + $0xbb] sm:$0xff]
      %v1166 = vld [vmem:[%s273 + $0xc3] sm:$0xff]
      %v1167 = vld [vmem:[%s273 + $0xcb] sm:$0xff]
      %v1168 = vld [vmem:[%s273 + $0xd3] sm:$0xff]
      %v1169 = vld [vmem:[%s273 + $0xdb] sm:$0xff]
      %v1170 = vld [vmem:[%s273 + $0xe3] sm:$0xff]
      %v1171 = vld [vmem:[%s273 + $0xeb] sm:$0xff]
      %v1172 = vld [vmem:[%s273 + $0xf3] sm:$0xff]
      %v1173 = vld [vmem:[%s273 + $0xfb] sm:$0xff]
      %v1174 = vld [vmem:[%s273 + $0x103] sm:$0xff]
      %v1175 = vld [vmem:[%s273 + $0x10b] sm:$0xff]
      %v1176 = vld [vmem:[%s273 + $0x113] sm:$0xff]
      %v1177 = vld [vmem:[%s273 + $0x11b] sm:$0xff]
      %v1178 = vld [vmem:[%s273 + $0x123] sm:$0xff]
      %v1179 = vld [vmem:[%s273 + $0x12b] sm:$0x3f]
      %v1180 = vpack.c.bf16 %v1145, %v1144
      %v1181 = vpack.c.bf16 %v1147, %v1146
      %v1182 = vpack.c.bf16 %v1149, %v1148
      %v1183 = vpack.c.bf16 %v1151, %v1150
      %v1184 = vpack.c.bf16 %v1153, %v1152
      %v1185 = vpack.c.bf16 %v1155, %v1154
      %v1186 = vpack.c.bf16 %v1157, %v1156
      %v1187 = vpack.c.bf16 %v1159, %v1158
      %v1188 = vpack.c.bf16 %v1161, %v1160
      %v1189 = vpack.c.bf16 %v1163, %v1162
      %v1190 = vpack.c.bf16 %v1165, %v1164
      %v1191 = vpack.c.bf16 %v1167, %v1166
      %v1192 = vpack.c.bf16 %v1169, %v1168
      %v1193 = vpack.c.bf16 %v1171, %v1170
      %v1194 = vpack.c.bf16 %v1173, %v1172
      %v1195 = vpack.c.bf16 %v1175, %v1174
      %v1196 = vpack.c.bf16 %v1177, %v1176
      %v1197 = vpack.c.bf16 %v1179, %v1178
      %v1216 = vunpack.c.l.b16 %v1180
      %v1217 = vunpack.c.h.b16 %v1180
      %v1218 = vunpack.c.l.b16 %v1181
      %v1219 = vunpack.c.h.b16 %v1181
      %v1220 = vunpack.c.l.b16 %v1182
      %v1221 = vunpack.c.h.b16 %v1182
      %v1222 = vunpack.c.l.b16 %v1183
      %v1223 = vunpack.c.h.b16 %v1183
      %v1224 = vunpack.c.l.b16 %v1184
      %v1225 = vunpack.c.h.b16 %v1184
      %v1226 = vunpack.c.l.b16 %v1185
      %v1227 = vunpack.c.h.b16 %v1185
      %v1228 = vunpack.c.l.b16 %v1186
      %v1229 = vunpack.c.h.b16 %v1186
      %v1230 = vunpack.c.l.b16 %v1187
      %v1231 = vunpack.c.h.b16 %v1187
      %v1232 = vunpack.c.l.b16 %v1188
      %v1233 = vunpack.c.h.b16 %v1188
      %v1234 = vunpack.c.l.b16 %v1189
      %v1235 = vunpack.c.h.b16 %v1189
      %v1236 = vunpack.c.l.b16 %v1190
      %v1237 = vunpack.c.h.b16 %v1190
      %v1238 = vunpack.c.l.b16 %v1191
      %v1239 = vunpack.c.h.b16 %v1191
      %v1240 = vunpack.c.l.b16 %v1192
      %v1241 = vunpack.c.h.b16 %v1192
      %v1242 = vunpack.c.l.b16 %v1193
      %v1243 = vunpack.c.h.b16 %v1193
      %v1244 = vunpack.c.l.b16 %v1194
      %v1245 = vunpack.c.h.b16 %v1194
      %v1246 = vunpack.c.l.b16 %v1195
      %v1247 = vunpack.c.h.b16 %v1195
      %v1248 = vunpack.c.l.b16 %v1196
      %v1249 = vunpack.c.h.b16 %v1196
      %v1250 = vunpack.c.l.b16 %v1197
      %v1251 = vunpack.c.h.b16 %v1197
      %v1252 = vpack.c.b16 %v1216, %v1216
      %v1253 = vpack.c.b16 %v1217, %v1217
      %v1254 = vpack.c.b16 %v1218, %v1218
      %v1255 = vpack.c.b16 %v1219, %v1219
      %v1256 = vpack.c.b16 %v1220, %v1220
      %v1257 = vpack.c.b16 %v1221, %v1221
      %v1258 = vpack.c.b16 %v1222, %v1222
      %v1259 = vpack.c.b16 %v1223, %v1223
      %v1260 = vpack.c.b16 %v1224, %v1224
      %v1261 = vpack.c.b16 %v1225, %v1225
      %v1262 = vpack.c.b16 %v1226, %v1226
      %v1263 = vpack.c.b16 %v1227, %v1227
      %v1264 = vpack.c.b16 %v1228, %v1228
      %v1265 = vpack.c.b16 %v1229, %v1229
      %v1266 = vpack.c.b16 %v1230, %v1230
      %v1267 = vpack.c.b16 %v1231, %v1231
      %v1268 = vpack.c.b16 %v1232, %v1232
      %v1269 = vpack.c.b16 %v1233, %v1233
      %v1270 = vpack.c.b16 %v1234, %v1234
      %v1271 = vpack.c.b16 %v1235, %v1235
      %v1272 = vpack.c.b16 %v1236, %v1236
      %v1273 = vpack.c.b16 %v1237, %v1237
      %v1274 = vpack.c.b16 %v1238, %v1238
      %v1275 = vpack.c.b16 %v1239, %v1239
      %v1276 = vpack.c.b16 %v1240, %v1240
      %v1277 = vpack.c.b16 %v1241, %v1241
      %v1278 = vpack.c.b16 %v1242, %v1242
      %v1279 = vpack.c.b16 %v1243, %v1243
      %v1280 = vpack.c.b16 %v1244, %v1244
      %v1281 = vpack.c.b16 %v1245, %v1245
      %v1282 = vpack.c.b16 %v1246, %v1246
      %v1283 = vpack.c.b16 %v1247, %v1247
      %v1284 = vpack.c.b16 %v1248, %v1248
      %v1285 = vpack.c.b16 %v1249, %v1249
      %v1286 = vpack.c.b16 %v1250, %v1250
      %v1287 = vpack.c.b16 %v1251, %v1251
      %1324 = vst [vmem:[#allocation2 + $0x10] sm:$0xf] %v1252
      %1325 = vst [vmem:[#allocation2 + $0x34] sm:$0xf] %v1253
      %1326 = vst [vmem:[#allocation2 + $0x58] sm:$0xf] %v1254
      %1327 = vst [vmem:[#allocation2 + $0x7c] sm:$0xf] %v1255
      %1328 = vst [vmem:[#allocation2 + $0xa0] sm:$0xf] %v1256
      %1329 = vst [vmem:[#allocation2 + $0xc4] sm:$0xf] %v1257
      %1330 = vst [vmem:[#allocation2 + $0xe8] sm:$0xf] %v1258
      %1331 = vst [vmem:[#allocation2 + $0x10c] sm:$0xf] %v1259
      %1332 = vst [vmem:[#allocation2 + $0x130] sm:$0xf] %v1260
      %1333 = vst [vmem:[#allocation2 + $0x154] sm:$0xf] %v1261
      %1334 = vst [vmem:[#allocation2 + $0x178] sm:$0xf] %v1262
      %1335 = vst [vmem:[#allocation2 + $0x19c] sm:$0xf] %v1263
      %1336 = vst [vmem:[#allocation2 + $0x1c0] sm:$0xf] %v1264
      %1337 = vst [vmem:[#allocation2 + $0x1e4] sm:$0xf] %v1265
      %1338 = vst [vmem:[#allocation2 + $0x208] sm:$0xf] %v1266
      %1339 = vst [vmem:[#allocation2 + $0x22c] sm:$0xf] %v1267
      %1340 = vst [vmem:[#allocation2 + $0x250] sm:$0xf] %v1268
      %1341 = vst [vmem:[#allocation2 + $0x274] sm:$0xf] %v1269
      %1342 = vst [vmem:[#allocation2 + $0x298] sm:$0xf] %v1270
      %1343 = vst [vmem:[#allocation2 + $0x2bc] sm:$0xf] %v1271
      %1344 = vst [vmem:[#allocation2 + $0x2e0] sm:$0xf] %v1272
      %1345 = vst [vmem:[#allocation2 + $0x304] sm:$0xf] %v1273
      %1346 = vst [vmem:[#allocation2 + $0x328] sm:$0xf] %v1274
      %1347 = vst [vmem:[#allocation2 + $0x34c] sm:$0xf] %v1275
      %1348 = vst [vmem:[#allocation2 + $0x370] sm:$0xf] %v1276
      %1349 = vst [vmem:[#allocation2 + $0x394] sm:$0xf] %v1277
      %1350 = vst [vmem:[#allocation2 + $0x3b8] sm:$0xf] %v1278
      %1351 = vst [vmem:[#allocation2 + $0x3dc] sm:$0xf] %v1279
      %1352 = vst [vmem:[#allocation2 + $0x400] sm:$0xf] %v1280
      %1353 = vst [vmem:[#allocation2 + $0x424] sm:$0xf] %v1281
      %1354 = vst [vmem:[#allocation2 + $0x448] sm:$0xf] %v1282
      %1355 = vst [vmem:[#allocation2 + $0x46c] sm:$0xf] %v1283
      %1356 = vst [vmem:[#allocation2 + $0x490] sm:$0xf] %v1284
      %1357 = vst [vmem:[#allocation2 + $0x4b4] sm:$0xf] %v1285
      %1358 = vst [vmem:[#allocation2 + $0x4d8] sm:$0xf] %v1286
      %1359 = vst [vmem:[#allocation2 + $0x4fc] sm:$0x7] %v1287
      %v1360 = vld [vmem:[%s273 + $0x14] sm:$0xff]
      %v1361 = vld [vmem:[%s273 + $0x1c] sm:$0xff]
      %v1362 = vld [vmem:[%s273 + $0x24] sm:$0xff]
      %v1363 = vld [vmem:[%s273 + $0x2c] sm:$0xff]
      %v1364 = vld [vmem:[%s273 + $0x34] sm:$0xff]
      %v1365 = vld [vmem:[%s273 + $0x3c] sm:$0xff]
      %v1366 = vld [vmem:[%s273 + $0x44] sm:$0xff]
      %v1367 = vld [vmem:[%s273 + $0x4c] sm:$0xff]
      %v1368 = vld [vmem:[%s273 + $0x54] sm:$0xff]
      %v1369 = vld [vmem:[%s273 + $0x5c] sm:$0xff]
      %v1370 = vld [vmem:[%s273 + $0x64] sm:$0xff]
      %v1371 = vld [vmem:[%s273 + $0x6c] sm:$0xff]
      %v1372 = vld [vmem:[%s273 + $0x74] sm:$0xff]
      %v1373 = vld [vmem:[%s273 + $0x7c] sm:$0xff]
      %v1374 = vld [vmem:[%s273 + $0x84] sm:$0xff]
      %v1375 = vld [vmem:[%s273 + $0x8c] sm:$0xff]
      %v1376 = vld [vmem:[%s273 + $0x94] sm:$0xff]
      %v1377 = vld [vmem:[%s273 + $0x9c] sm:$0xff]
      %v1378 = vld [vmem:[%s273 + $0xa4] sm:$0xff]
      %v1379 = vld [vmem:[%s273 + $0xac] sm:$0xff]
      %v1380 = vld [vmem:[%s273 + $0xb4] sm:$0xff]
      %v1381 = vld [vmem:[%s273 + $0xbc] sm:$0xff]
      %v1382 = vld [vmem:[%s273 + $0xc4] sm:$0xff]
      %v1383 = vld [vmem:[%s273 + $0xcc] sm:$0xff]
      %v1384 = vld [vmem:[%s273 + $0xd4] sm:$0xff]
      %v1385 = vld [vmem:[%s273 + $0xdc] sm:$0xff]
      %v1386 = vld [vmem:[%s273 + $0xe4] sm:$0xff]
      %v1387 = vld [vmem:[%s273 + $0xec] sm:$0xff]
      %v1388 = vld [vmem:[%s273 + $0xf4] sm:$0xff]
      %v1389 = vld [vmem:[%s273 + $0xfc] sm:$0xff]
      %v1390 = vld [vmem:[%s273 + $0x104] sm:$0xff]
      %v1391 = vld [vmem:[%s273 + $0x10c] sm:$0xff]
      %v1392 = vld [vmem:[%s273 + $0x114] sm:$0xff]
      %v1393 = vld [vmem:[%s273 + $0x11c] sm:$0xff]
      %v1394 = vld [vmem:[%s273 + $0x124] sm:$0xff]
      %v1395 = vld [vmem:[%s273 + $0x12c] sm:$0x3f]
      %v1396 = vpack.c.bf16 %v1361, %v1360
      %v1397 = vpack.c.bf16 %v1363, %v1362
      %v1398 = vpack.c.bf16 %v1365, %v1364
      %v1399 = vpack.c.bf16 %v1367, %v1366
      %v1400 = vpack.c.bf16 %v1369, %v1368
      %v1401 = vpack.c.bf16 %v1371, %v1370
      %v1402 = vpack.c.bf16 %v1373, %v1372
      %v1403 = vpack.c.bf16 %v1375, %v1374
      %v1404 = vpack.c.bf16 %v1377, %v1376
      %v1405 = vpack.c.bf16 %v1379, %v1378
      %v1406 = vpack.c.bf16 %v1381, %v1380
      %v1407 = vpack.c.bf16 %v1383, %v1382
      %v1408 = vpack.c.bf16 %v1385, %v1384
      %v1409 = vpack.c.bf16 %v1387, %v1386
      %v1410 = vpack.c.bf16 %v1389, %v1388
      %v1411 = vpack.c.bf16 %v1391, %v1390
      %v1412 = vpack.c.bf16 %v1393, %v1392
      %v1413 = vpack.c.bf16 %v1395, %v1394
      %v1432 = vunpack.c.l.b16 %v1396
      %v1433 = vunpack.c.h.b16 %v1396
      %v1434 = vunpack.c.l.b16 %v1397
      %v1435 = vunpack.c.h.b16 %v1397
      %v1436 = vunpack.c.l.b16 %v1398
      %v1437 = vunpack.c.h.b16 %v1398
      %v1438 = vunpack.c.l.b16 %v1399
      %v1439 = vunpack.c.h.b16 %v1399
      %v1440 = vunpack.c.l.b16 %v1400
      %v1441 = vunpack.c.h.b16 %v1400
      %v1442 = vunpack.c.l.b16 %v1401
      %v1443 = vunpack.c.h.b16 %v1401
      %v1444 = vunpack.c.l.b16 %v1402
      %v1445 = vunpack.c.h.b16 %v1402
      %v1446 = vunpack.c.l.b16 %v1403
      %v1447 = vunpack.c.h.b16 %v1403
      %v1448 = vunpack.c.l.b16 %v1404
      %v1449 = vunpack.c.h.b16 %v1404
      %v1450 = vunpack.c.l.b16 %v1405
      %v1451 = vunpack.c.h.b16 %v1405
      %v1452 = vunpack.c.l.b16 %v1406
      %v1453 = vunpack.c.h.b16 %v1406
      %v1454 = vunpack.c.l.b16 %v1407
      %v1455 = vunpack.c.h.b16 %v1407
      %v1456 = vunpack.c.l.b16 %v1408
      %v1457 = vunpack.c.h.b16 %v1408
      %v1458 = vunpack.c.l.b16 %v1409
      %v1459 = vunpack.c.h.b16 %v1409
      %v1460 = vunpack.c.l.b16 %v1410
      %v1461 = vunpack.c.h.b16 %v1410
      %v1462 = vunpack.c.l.b16 %v1411
      %v1463 = vunpack.c.h.b16 %v1411
      %v1464 = vunpack.c.l.b16 %v1412
      %v1465 = vunpack.c.h.b16 %v1412
      %v1466 = vunpack.c.l.b16 %v1413
      %v1467 = vunpack.c.h.b16 %v1413
      %v1468 = vpack.c.b16 %v1432, %v1432
      %v1469 = vpack.c.b16 %v1433, %v1433
      %v1470 = vpack.c.b16 %v1434, %v1434
      %v1471 = vpack.c.b16 %v1435, %v1435
      %v1472 = vpack.c.b16 %v1436, %v1436
      %v1473 = vpack.c.b16 %v1437, %v1437
      %v1474 = vpack.c.b16 %v1438, %v1438
      %v1475 = vpack.c.b16 %v1439, %v1439
      %v1476 = vpack.c.b16 %v1440, %v1440
      %v1477 = vpack.c.b16 %v1441, %v1441
      %v1478 = vpack.c.b16 %v1442, %v1442
      %v1479 = vpack.c.b16 %v1443, %v1443
      %v1480 = vpack.c.b16 %v1444, %v1444
      %v1481 = vpack.c.b16 %v1445, %v1445
      %v1482 = vpack.c.b16 %v1446, %v1446
      %v1483 = vpack.c.b16 %v1447, %v1447
      %v1484 = vpack.c.b16 %v1448, %v1448
      %v1485 = vpack.c.b16 %v1449, %v1449
      %v1486 = vpack.c.b16 %v1450, %v1450
      %v1487 = vpack.c.b16 %v1451, %v1451
      %v1488 = vpack.c.b16 %v1452, %v1452
      %v1489 = vpack.c.b16 %v1453, %v1453
      %v1490 = vpack.c.b16 %v1454, %v1454
      %v1491 = vpack.c.b16 %v1455, %v1455
      %v1492 = vpack.c.b16 %v1456, %v1456
      %v1493 = vpack.c.b16 %v1457, %v1457
      %v1494 = vpack.c.b16 %v1458, %v1458
      %v1495 = vpack.c.b16 %v1459, %v1459
      %v1496 = vpack.c.b16 %v1460, %v1460
      %v1497 = vpack.c.b16 %v1461, %v1461
      %v1498 = vpack.c.b16 %v1462, %v1462
      %v1499 = vpack.c.b16 %v1463, %v1463
      %v1500 = vpack.c.b16 %v1464, %v1464
      %v1501 = vpack.c.b16 %v1465, %v1465
      %v1502 = vpack.c.b16 %v1466, %v1466
      %v1503 = vpack.c.b16 %v1467, %v1467
      %1540 = vst [vmem:[#allocation2 + $0x14] sm:$0xf] %v1468
      %1541 = vst [vmem:[#allocation2 + $0x38] sm:$0xf] %v1469
      %1542 = vst [vmem:[#allocation2 + $0x5c] sm:$0xf] %v1470
      %1543 = vst [vmem:[#allocation2 + $0x80] sm:$0xf] %v1471
      %1544 = vst [vmem:[#allocation2 + $0xa4] sm:$0xf] %v1472
      %1545 = vst [vmem:[#allocation2 + $0xc8] sm:$0xf] %v1473
      %1546 = vst [vmem:[#allocation2 + $0xec] sm:$0xf] %v1474
      %1547 = vst [vmem:[#allocation2 + $0x110] sm:$0xf] %v1475
      %1548 = vst [vmem:[#allocation2 + $0x134] sm:$0xf] %v1476
      %1549 = vst [vmem:[#allocation2 + $0x158] sm:$0xf] %v1477
      %1550 = vst [vmem:[#allocation2 + $0x17c] sm:$0xf] %v1478
      %1551 = vst [vmem:[#allocation2 + $0x1a0] sm:$0xf] %v1479
      %1552 = vst [vmem:[#allocation2 + $0x1c4] sm:$0xf] %v1480
      %1553 = vst [vmem:[#allocation2 + $0x1e8] sm:$0xf] %v1481
      %1554 = vst [vmem:[#allocation2 + $0x20c] sm:$0xf] %v1482
      %1555 = vst [vmem:[#allocation2 + $0x230] sm:$0xf] %v1483
      %1556 = vst [vmem:[#allocation2 + $0x254] sm:$0xf] %v1484
      %1557 = vst [vmem:[#allocation2 + $0x278] sm:$0xf] %v1485
      %1558 = vst [vmem:[#allocation2 + $0x29c] sm:$0xf] %v1486
      %1559 = vst [vmem:[#allocation2 + $0x2c0] sm:$0xf] %v1487
      %1560 = vst [vmem:[#allocation2 + $0x2e4] sm:$0xf] %v1488
      %1561 = vst [vmem:[#allocation2 + $0x308] sm:$0xf] %v1489
      %1562 = vst [vmem:[#allocation2 + $0x32c] sm:$0xf] %v1490
      %1563 = vst [vmem:[#allocation2 + $0x350] sm:$0xf] %v1491
      %1564 = vst [vmem:[#allocation2 + $0x374] sm:$0xf] %v1492
      %1565 = vst [vmem:[#allocation2 + $0x398] sm:$0xf] %v1493
      %1566 = vst [vmem:[#allocation2 + $0x3bc] sm:$0xf] %v1494
      %1567 = vst [vmem:[#allocation2 + $0x3e0] sm:$0xf] %v1495
      %1568 = vst [vmem:[#allocation2 + $0x404] sm:$0xf] %v1496
      %1569 = vst [vmem:[#allocation2 + $0x428] sm:$0xf] %v1497
      %1570 = vst [vmem:[#allocation2 + $0x44c] sm:$0xf] %v1498
      %1571 = vst [vmem:[#allocation2 + $0x470] sm:$0xf] %v1499
      %1572 = vst [vmem:[#allocation2 + $0x494] sm:$0xf] %v1500
      %1573 = vst [vmem:[#allocation2 + $0x4b8] sm:$0xf] %v1501
      %1574 = vst [vmem:[#allocation2 + $0x4dc] sm:$0xf] %v1502
      %1575 = vst [vmem:[#allocation2 + $0x500] sm:$0x7] %v1503
      %v1576 = vld [vmem:[%s273 + $0x24] sm:$0xff]
      %v1577 = vld [vmem:[%s273 + $0x2c] sm:$0xff]
      %v1578 = vld [vmem:[%s273 + $0x34] sm:$0xff]
      %v1579 = vld [vmem:[%s273 + $0x3c] sm:$0xff]
      %v1580 = vld [vmem:[%s273 + $0x44] sm:$0xff]
      %v1581 = vld [vmem:[%s273 + $0x4c] sm:$0xff]
      %v1582 = vld [vmem:[%s273 + $0x54] sm:$0xff]
      %v1583 = vld [vmem:[%s273 + $0x5c] sm:$0xff]
      %v1584 = vld [vmem:[%s273 + $0x64] sm:$0xff]
      %v1585 = vld [vmem:[%s273 + $0x6c] sm:$0xff]
      %v1586 = vld [vmem:[%s273 + $0x74] sm:$0xff]
      %v1587 = vld [vmem:[%s273 + $0x7c] sm:$0xff]
      %v1588 = vld [vmem:[%s273 + $0x84] sm:$0xff]
      %v1589 = vld [vmem:[%s273 + $0x8c] sm:$0xff]
      %v1590 = vld [vmem:[%s273 + $0x94] sm:$0xff]
      %v1591 = vld [vmem:[%s273 + $0x9c] sm:$0xff]
      %v1592 = vld [vmem:[%s273 + $0xa4] sm:$0xff]
      %v1593 = vld [vmem:[%s273 + $0xac] sm:$0xff]
      %v1594 = vld [vmem:[%s273 + $0xb4] sm:$0xff]
      %v1595 = vld [vmem:[%s273 + $0xbc] sm:$0xff]
      %v1596 = vld [vmem:[%s273 + $0xc4] sm:$0xff]
      %v1597 = vld [vmem:[%s273 + $0xcc] sm:$0xff]
      %v1598 = vld [vmem:[%s273 + $0xd4] sm:$0xff]
      %v1599 = vld [vmem:[%s273 + $0xdc] sm:$0xff]
      %v1600 = vld [vmem:[%s273 + $0xe4] sm:$0xff]
      %v1601 = vld [vmem:[%s273 + $0xec] sm:$0xff]
      %v1602 = vld [vmem:[%s273 + $0xf4] sm:$0xff]
      %v1603 = vld [vmem:[%s273 + $0xfc] sm:$0xff]
      %v1604 = vld [vmem:[%s273 + $0x104] sm:$0xff]
      %v1605 = vld [vmem:[%s273 + $0x10c] sm:$0xff]
      %v1606 = vld [vmem:[%s273 + $0x114] sm:$0xff]
      %v1607 = vld [vmem:[%s273 + $0x11c] sm:$0xff]
      %v1608 = vld [vmem:[%s273 + $0x124] sm:$0xff]
      %v1609 = vld [vmem:[%s273 + $0x12c] sm:$0xff]
      %v1610 = vld [vmem:[%s273 + $0x134] sm:$0xff]
      %v1611 = vld [vmem:[%s273 + $0x13c] sm:$0x3f]
      %v1612 = vpack.c.bf16 %v1577, %v1576
      %v1613 = vpack.c.bf16 %v1579, %v1578
      %v1614 = vpack.c.bf16 %v1581, %v1580
      %v1615 = vpack.c.bf16 %v1583, %v1582
      %v1616 = vpack.c.bf16 %v1585, %v1584
      %v1617 = vpack.c.bf16 %v1587, %v1586
      %v1618 = vpack.c.bf16 %v1589, %v1588
      %v1619 = vpack.c.bf16 %v1591, %v1590
      %v1620 = vpack.c.bf16 %v1593, %v1592
      %v1621 = vpack.c.bf16 %v1595, %v1594
      %v1622 = vpack.c.bf16 %v1597, %v1596
      %v1623 = vpack.c.bf16 %v1599, %v1598
      %v1624 = vpack.c.bf16 %v1601, %v1600
      %v1625 = vpack.c.bf16 %v1603, %v1602
      %v1626 = vpack.c.bf16 %v1605, %v1604
      %v1627 = vpack.c.bf16 %v1607, %v1606
      %v1628 = vpack.c.bf16 %v1609, %v1608
      %v1629 = vpack.c.bf16 %v1611, %v1610
      %v1648 = vunpack.c.l.b16 %v1612
      %v1649 = vunpack.c.h.b16 %v1612
      %v1650 = vunpack.c.l.b16 %v1613
      %v1651 = vunpack.c.h.b16 %v1613
      %v1652 = vunpack.c.l.b16 %v1614
      %v1653 = vunpack.c.h.b16 %v1614
      %v1654 = vunpack.c.l.b16 %v1615
      %v1655 = vunpack.c.h.b16 %v1615
      %v1656 = vunpack.c.l.b16 %v1616
      %v1657 = vunpack.c.h.b16 %v1616
      %v1658 = vunpack.c.l.b16 %v1617
      %v1659 = vunpack.c.h.b16 %v1617
      %v1660 = vunpack.c.l.b16 %v1618
      %v1661 = vunpack.c.h.b16 %v1618
      %v1662 = vunpack.c.l.b16 %v1619
      %v1663 = vunpack.c.h.b16 %v1619
      %v1664 = vunpack.c.l.b16 %v1620
      %v1665 = vunpack.c.h.b16 %v1620
      %v1666 = vunpack.c.l.b16 %v1621
      %v1667 = vunpack.c.h.b16 %v1621
      %v1668 = vunpack.c.l.b16 %v1622
      %v1669 = vunpack.c.h.b16 %v1622
      %v1670 = vunpack.c.l.b16 %v1623
      %v1671 = vunpack.c.h.b16 %v1623
      %v1672 = vunpack.c.l.b16 %v1624
      %v1673 = vunpack.c.h.b16 %v1624
      %v1674 = vunpack.c.l.b16 %v1625
      %v1675 = vunpack.c.h.b16 %v1625
      %v1676 = vunpack.c.l.b16 %v1626
      %v1677 = vunpack.c.h.b16 %v1626
      %v1678 = vunpack.c.l.b16 %v1627
      %v1679 = vunpack.c.h.b16 %v1627
      %v1680 = vunpack.c.l.b16 %v1628
      %v1681 = vunpack.c.h.b16 %v1628
      %v1682 = vunpack.c.l.b16 %v1629
      %v1683 = vunpack.c.h.b16 %v1629
      %v1684 = vpack.c.b16 %v1648, %v1648
      %v1685 = vpack.c.b16 %v1649, %v1649
      %v1686 = vpack.c.b16 %v1650, %v1650
      %v1687 = vpack.c.b16 %v1651, %v1651
      %v1688 = vpack.c.b16 %v1652, %v1652
      %v1689 = vpack.c.b16 %v1653, %v1653
      %v1690 = vpack.c.b16 %v1654, %v1654
      %v1691 = vpack.c.b16 %v1655, %v1655
      %v1692 = vpack.c.b16 %v1656, %v1656
      %v1693 = vpack.c.b16 %v1657, %v1657
      %v1694 = vpack.c.b16 %v1658, %v1658
      %v1695 = vpack.c.b16 %v1659, %v1659
      %v1696 = vpack.c.b16 %v1660, %v1660
      %v1697 = vpack.c.b16 %v1661, %v1661
      %v1698 = vpack.c.b16 %v1662, %v1662
      %v1699 = vpack.c.b16 %v1663, %v1663
      %v1700 = vpack.c.b16 %v1664, %v1664
      %v1701 = vpack.c.b16 %v1665, %v1665
      %v1702 = vpack.c.b16 %v1666, %v1666
      %v1703 = vpack.c.b16 %v1667, %v1667
      %v1704 = vpack.c.b16 %v1668, %v1668
      %v1705 = vpack.c.b16 %v1669, %v1669
      %v1706 = vpack.c.b16 %v1670, %v1670
      %v1707 = vpack.c.b16 %v1671, %v1671
      %v1708 = vpack.c.b16 %v1672, %v1672
      %v1709 = vpack.c.b16 %v1673, %v1673
      %v1710 = vpack.c.b16 %v1674, %v1674
      %v1711 = vpack.c.b16 %v1675, %v1675
      %v1712 = vpack.c.b16 %v1676, %v1676
      %v1713 = vpack.c.b16 %v1677, %v1677
      %v1714 = vpack.c.b16 %v1678, %v1678
      %v1715 = vpack.c.b16 %v1679, %v1679
      %v1716 = vpack.c.b16 %v1680, %v1680
      %v1717 = vpack.c.b16 %v1681, %v1681
      %v1718 = vpack.c.b16 %v1682, %v1682
      %v1719 = vpack.c.b16 %v1683, %v1683
      %1756 = vst [vmem:[#allocation2 + $0x18] sm:$0xf] %v1684
      %1757 = vst [vmem:[#allocation2 + $0x3c] sm:$0xf] %v1685
      %1758 = vst [vmem:[#allocation2 + $0x60] sm:$0xf] %v1686
      %1759 = vst [vmem:[#allocation2 + $0x84] sm:$0xf] %v1687
      %1760 = vst [vmem:[#allocation2 + $0xa8] sm:$0xf] %v1688
      %1761 = vst [vmem:[#allocation2 + $0xcc] sm:$0xf] %v1689
      %1762 = vst [vmem:[#allocation2 + $0xf0] sm:$0xf] %v1690
      %1763 = vst [vmem:[#allocation2 + $0x114] sm:$0xf] %v1691
      %1764 = vst [vmem:[#allocation2 + $0x138] sm:$0xf] %v1692
      %1765 = vst [vmem:[#allocation2 + $0x15c] sm:$0xf] %v1693
      %1766 = vst [vmem:[#allocation2 + $0x180] sm:$0xf] %v1694
      %1767 = vst [vmem:[#allocation2 + $0x1a4] sm:$0xf] %v1695
      %1768 = vst [vmem:[#allocation2 + $0x1c8] sm:$0xf] %v1696
      %1769 = vst [vmem:[#allocation2 + $0x1ec] sm:$0xf] %v1697
      %1770 = vst [vmem:[#allocation2 + $0x210] sm:$0xf] %v1698
      %1771 = vst [vmem:[#allocation2 + $0x234] sm:$0xf] %v1699
      %1772 = vst [vmem:[#allocation2 + $0x258] sm:$0xf] %v1700
      %1773 = vst [vmem:[#allocation2 + $0x27c] sm:$0xf] %v1701
      %1774 = vst [vmem:[#allocation2 + $0x2a0] sm:$0xf] %v1702
      %1775 = vst [vmem:[#allocation2 + $0x2c4] sm:$0xf] %v1703
      %1776 = vst [vmem:[#allocation2 + $0x2e8] sm:$0xf] %v1704
      %1777 = vst [vmem:[#allocation2 + $0x30c] sm:$0xf] %v1705
      %1778 = vst [vmem:[#allocation2 + $0x330] sm:$0xf] %v1706
      %1779 = vst [vmem:[#allocation2 + $0x354] sm:$0xf] %v1707
      %1780 = vst [vmem:[#allocation2 + $0x378] sm:$0xf] %v1708
      %1781 = vst [vmem:[#allocation2 + $0x39c] sm:$0xf] %v1709
      %1782 = vst [vmem:[#allocation2 + $0x3c0] sm:$0xf] %v1710
      %1783 = vst [vmem:[#allocation2 + $0x3e4] sm:$0xf] %v1711
      %1784 = vst [vmem:[#allocation2 + $0x408] sm:$0xf] %v1712
      %1785 = vst [vmem:[#allocation2 + $0x42c] sm:$0xf] %v1713
      %1786 = vst [vmem:[#allocation2 + $0x450] sm:$0xf] %v1714
      %1787 = vst [vmem:[#allocation2 + $0x474] sm:$0xf] %v1715
      %1788 = vst [vmem:[#allocation2 + $0x498] sm:$0xf] %v1716
      %1789 = vst [vmem:[#allocation2 + $0x4bc] sm:$0xf] %v1717
      %1790 = vst [vmem:[#allocation2 + $0x4e0] sm:$0xf] %v1718
      %1791 = vst [vmem:[#allocation2 + $0x504] sm:$0x7] %v1719
      %v1792 = vld [vmem:[%s273 + $0x25] sm:$0xff]
      %v1793 = vld [vmem:[%s273 + $0x2d] sm:$0xff]
      %v1794 = vld [vmem:[%s273 + $0x35] sm:$0xff]
      %v1795 = vld [vmem:[%s273 + $0x3d] sm:$0xff]
      %v1796 = vld [vmem:[%s273 + $0x45] sm:$0xff]
      %v1797 = vld [vmem:[%s273 + $0x4d] sm:$0xff]
      %v1798 = vld [vmem:[%s273 + $0x55] sm:$0xff]
      %v1799 = vld [vmem:[%s273 + $0x5d] sm:$0xff]
      %v1800 = vld [vmem:[%s273 + $0x65] sm:$0xff]
      %v1801 = vld [vmem:[%s273 + $0x6d] sm:$0xff]
      %v1802 = vld [vmem:[%s273 + $0x75] sm:$0xff]
      %v1803 = vld [vmem:[%s273 + $0x7d] sm:$0xff]
      %v1804 = vld [vmem:[%s273 + $0x85] sm:$0xff]
      %v1805 = vld [vmem:[%s273 + $0x8d] sm:$0xff]
      %v1806 = vld [vmem:[%s273 + $0x95] sm:$0xff]
      %v1807 = vld [vmem:[%s273 + $0x9d] sm:$0xff]
      %v1808 = vld [vmem:[%s273 + $0xa5] sm:$0xff]
      %v1809 = vld [vmem:[%s273 + $0xad] sm:$0xff]
      %v1810 = vld [vmem:[%s273 + $0xb5] sm:$0xff]
      %v1811 = vld [vmem:[%s273 + $0xbd] sm:$0xff]
      %v1812 = vld [vmem:[%s273 + $0xc5] sm:$0xff]
      %v1813 = vld [vmem:[%s273 + $0xcd] sm:$0xff]
      %v1814 = vld [vmem:[%s273 + $0xd5] sm:$0xff]
      %v1815 = vld [vmem:[%s273 + $0xdd] sm:$0xff]
      %v1816 = vld [vmem:[%s273 + $0xe5] sm:$0xff]
      %v1817 = vld [vmem:[%s273 + $0xed] sm:$0xff]
      %v1818 = vld [vmem:[%s273 + $0xf5] sm:$0xff]
      %v1819 = vld [vmem:[%s273 + $0xfd] sm:$0xff]
      %v1820 = vld [vmem:[%s273 + $0x105] sm:$0xff]
      %v1821 = vld [vmem:[%s273 + $0x10d] sm:$0xff]
      %v1822 = vld [vmem:[%s273 + $0x115] sm:$0xff]
      %v1823 = vld [vmem:[%s273 + $0x11d] sm:$0xff]
      %v1824 = vld [vmem:[%s273 + $0x125] sm:$0xff]
      %v1825 = vld [vmem:[%s273 + $0x12d] sm:$0xff]
      %v1826 = vld [vmem:[%s273 + $0x135] sm:$0xff]
      %v1827 = vld [vmem:[%s273 + $0x13d] sm:$0x3f]
      %v1828 = vpack.c.bf16 %v1793, %v1792
      %v1829 = vpack.c.bf16 %v1795, %v1794
      %v1830 = vpack.c.bf16 %v1797, %v1796
      %v1831 = vpack.c.bf16 %v1799, %v1798
      %v1832 = vpack.c.bf16 %v1801, %v1800
      %v1833 = vpack.c.bf16 %v1803, %v1802
      %v1834 = vpack.c.bf16 %v1805, %v1804
      %v1835 = vpack.c.bf16 %v1807, %v1806
      %v1836 = vpack.c.bf16 %v1809, %v1808
      %v1837 = vpack.c.bf16 %v1811, %v1810
      %v1838 = vpack.c.bf16 %v1813, %v1812
      %v1839 = vpack.c.bf16 %v1815, %v1814
      %v1840 = vpack.c.bf16 %v1817, %v1816
      %v1841 = vpack.c.bf16 %v1819, %v1818
      %v1842 = vpack.c.bf16 %v1821, %v1820
      %v1843 = vpack.c.bf16 %v1823, %v1822
      %v1844 = vpack.c.bf16 %v1825, %v1824
      %v1845 = vpack.c.bf16 %v1827, %v1826
      %v1864 = vunpack.c.l.b16 %v1828
      %v1865 = vunpack.c.h.b16 %v1828
      %v1866 = vunpack.c.l.b16 %v1829
      %v1867 = vunpack.c.h.b16 %v1829
      %v1868 = vunpack.c.l.b16 %v1830
      %v1869 = vunpack.c.h.b16 %v1830
      %v1870 = vunpack.c.l.b16 %v1831
      %v1871 = vunpack.c.h.b16 %v1831
      %v1872 = vunpack.c.l.b16 %v1832
      %v1873 = vunpack.c.h.b16 %v1832
      %v1874 = vunpack.c.l.b16 %v1833
      %v1875 = vunpack.c.h.b16 %v1833
      %v1876 = vunpack.c.l.b16 %v1834
      %v1877 = vunpack.c.h.b16 %v1834
      %v1878 = vunpack.c.l.b16 %v1835
      %v1879 = vunpack.c.h.b16 %v1835
      %v1880 = vunpack.c.l.b16 %v1836
      %v1881 = vunpack.c.h.b16 %v1836
      %v1882 = vunpack.c.l.b16 %v1837
      %v1883 = vunpack.c.h.b16 %v1837
      %v1884 = vunpack.c.l.b16 %v1838
      %v1885 = vunpack.c.h.b16 %v1838
      %v1886 = vunpack.c.l.b16 %v1839
      %v1887 = vunpack.c.h.b16 %v1839
      %v1888 = vunpack.c.l.b16 %v1840
      %v1889 = vunpack.c.h.b16 %v1840
      %v1890 = vunpack.c.l.b16 %v1841
      %v1891 = vunpack.c.h.b16 %v1841
      %v1892 = vunpack.c.l.b16 %v1842
      %v1893 = vunpack.c.h.b16 %v1842
      %v1894 = vunpack.c.l.b16 %v1843
      %v1895 = vunpack.c.h.b16 %v1843
      %v1896 = vunpack.c.l.b16 %v1844
      %v1897 = vunpack.c.h.b16 %v1844
      %v1898 = vunpack.c.l.b16 %v1845
      %v1899 = vunpack.c.h.b16 %v1845
      %v1900 = vpack.c.b16 %v1864, %v1864
      %v1901 = vpack.c.b16 %v1865, %v1865
      %v1902 = vpack.c.b16 %v1866, %v1866
      %v1903 = vpack.c.b16 %v1867, %v1867
      %v1904 = vpack.c.b16 %v1868, %v1868
      %v1905 = vpack.c.b16 %v1869, %v1869
      %v1906 = vpack.c.b16 %v1870, %v1870
      %v1907 = vpack.c.b16 %v1871, %v1871
      %v1908 = vpack.c.b16 %v1872, %v1872
      %v1909 = vpack.c.b16 %v1873, %v1873
      %v1910 = vpack.c.b16 %v1874, %v1874
      %v1911 = vpack.c.b16 %v1875, %v1875
      %v1912 = vpack.c.b16 %v1876, %v1876
      %v1913 = vpack.c.b16 %v1877, %v1877
      %v1914 = vpack.c.b16 %v1878, %v1878
      %v1915 = vpack.c.b16 %v1879, %v1879
      %v1916 = vpack.c.b16 %v1880, %v1880
      %v1917 = vpack.c.b16 %v1881, %v1881
      %v1918 = vpack.c.b16 %v1882, %v1882
      %v1919 = vpack.c.b16 %v1883, %v1883
      %v1920 = vpack.c.b16 %v1884, %v1884
      %v1921 = vpack.c.b16 %v1885, %v1885
      %v1922 = vpack.c.b16 %v1886, %v1886
      %v1923 = vpack.c.b16 %v1887, %v1887
      %v1924 = vpack.c.b16 %v1888, %v1888
      %v1925 = vpack.c.b16 %v1889, %v1889
      %v1926 = vpack.c.b16 %v1890, %v1890
      %v1927 = vpack.c.b16 %v1891, %v1891
      %v1928 = vpack.c.b16 %v1892, %v1892
      %v1929 = vpack.c.b16 %v1893, %v1893
      %v1930 = vpack.c.b16 %v1894, %v1894
      %v1931 = vpack.c.b16 %v1895, %v1895
      %v1932 = vpack.c.b16 %v1896, %v1896
      %v1933 = vpack.c.b16 %v1897, %v1897
      %v1934 = vpack.c.b16 %v1898, %v1898
      %v1935 = vpack.c.b16 %v1899, %v1899
      %1972 = vst [vmem:[#allocation2 + $0x1c] sm:$0xf] %v1900
      %1973 = vst [vmem:[#allocation2 + $0x40] sm:$0xf] %v1901
      %1974 = vst [vmem:[#allocation2 + $0x64] sm:$0xf] %v1902
      %1975 = vst [vmem:[#allocation2 + $0x88] sm:$0xf] %v1903
      %1976 = vst [vmem:[#allocation2 + $0xac] sm:$0xf] %v1904
      %1977 = vst [vmem:[#allocation2 + $0xd0] sm:$0xf] %v1905
      %1978 = vst [vmem:[#allocation2 + $0xf4] sm:$0xf] %v1906
      %1979 = vst [vmem:[#allocation2 + $0x118] sm:$0xf] %v1907
      %1980 = vst [vmem:[#allocation2 + $0x13c] sm:$0xf] %v1908
      %1981 = vst [vmem:[#allocation2 + $0x160] sm:$0xf] %v1909
      %1982 = vst [vmem:[#allocation2 + $0x184] sm:$0xf] %v1910
      %1983 = vst [vmem:[#allocation2 + $0x1a8] sm:$0xf] %v1911
      %1984 = vst [vmem:[#allocation2 + $0x1cc] sm:$0xf] %v1912
      %1985 = vst [vmem:[#allocation2 + $0x1f0] sm:$0xf] %v1913
      %1986 = vst [vmem:[#allocation2 + $0x214] sm:$0xf] %v1914
      %1987 = vst [vmem:[#allocation2 + $0x238] sm:$0xf] %v1915
      %1988 = vst [vmem:[#allocation2 + $0x25c] sm:$0xf] %v1916
      %1989 = vst [vmem:[#allocation2 + $0x280] sm:$0xf] %v1917
      %1990 = vst [vmem:[#allocation2 + $0x2a4] sm:$0xf] %v1918
      %1991 = vst [vmem:[#allocation2 + $0x2c8] sm:$0xf] %v1919
      %1992 = vst [vmem:[#allocation2 + $0x2ec] sm:$0xf] %v1920
      %1993 = vst [vmem:[#allocation2 + $0x310] sm:$0xf] %v1921
      %1994 = vst [vmem:[#allocation2 + $0x334] sm:$0xf] %v1922
      %1995 = vst [vmem:[#allocation2 + $0x358] sm:$0xf] %v1923
      %1996 = vst [vmem:[#allocation2 + $0x37c] sm:$0xf] %v1924
      %1997 = vst [vmem:[#allocation2 + $0x3a0] sm:$0xf] %v1925
      %1998 = vst [vmem:[#allocation2 + $0x3c4] sm:$0xf] %v1926
      %1999 = vst [vmem:[#allocation2 + $0x3e8] sm:$0xf] %v1927
      %2000 = vst [vmem:[#allocation2 + $0x40c] sm:$0xf] %v1928
      %2001 = vst [vmem:[#allocation2 + $0x430] sm:$0xf] %v1929
      %2002 = vst [vmem:[#allocation2 + $0x454] sm:$0xf] %v1930
      %2003 = vst [vmem:[#allocation2 + $0x478] sm:$0xf] %v1931
      %2004 = vst [vmem:[#allocation2 + $0x49c] sm:$0xf] %v1932
      %2005 = vst [vmem:[#allocation2 + $0x4c0] sm:$0xf] %v1933
      %2006 = vst [vmem:[#allocation2 + $0x4e4] sm:$0xf] %v1934
      %2007 = vst [vmem:[#allocation2 + $0x508] sm:$0x7] %v1935
      %v2008 = vld [vmem:[%s273 + $0x26] sm:$0xff]
      %v2009 = vld [vmem:[%s273 + $0x2e] sm:$0xff]
      %v2010 = vld [vmem:[%s273 + $0x36] sm:$0xff]
      %v2011 = vld [vmem:[%s273 + $0x3e] sm:$0xff]
      %v2012 = vld [vmem:[%s273 + $0x46] sm:$0xff]
      %v2013 = vld [vmem:[%s273 + $0x4e] sm:$0xff]
      %v2014 = vld [vmem:[%s273 + $0x56] sm:$0xff]
      %v2015 = vld [vmem:[%s273 + $0x5e] sm:$0xff]
      %v2016 = vld [vmem:[%s273 + $0x66] sm:$0xff]
      %v2017 = vld [vmem:[%s273 + $0x6e] sm:$0xff]
      %v2018 = vld [vmem:[%s273 + $0x76] sm:$0xff]
      %v2019 = vld [vmem:[%s273 + $0x7e] sm:$0xff]
      %v2020 = vld [vmem:[%s273 + $0x86] sm:$0xff]
      %v2021 = vld [vmem:[%s273 + $0x8e] sm:$0xff]
      %v2022 = vld [vmem:[%s273 + $0x96] sm:$0xff]
      %v2023 = vld [vmem:[%s273 + $0x9e] sm:$0xff]
      %v2024 = vld [vmem:[%s273 + $0xa6] sm:$0xff]
      %v2025 = vld [vmem:[%s273 + $0xae] sm:$0xff]
      %v2026 = vld [vmem:[%s273 + $0xb6] sm:$0xff]
      %v2027 = vld [vmem:[%s273 + $0xbe] sm:$0xff]
      %v2028 = vld [vmem:[%s273 + $0xc6] sm:$0xff]
      %v2029 = vld [vmem:[%s273 + $0xce] sm:$0xff]
      %v2030 = vld [vmem:[%s273 + $0xd6] sm:$0xff]
      %v2031 = vld [vmem:[%s273 + $0xde] sm:$0xff]
      %v2032 = vld [vmem:[%s273 + $0xe6] sm:$0xff]
      %v2033 = vld [vmem:[%s273 + $0xee] sm:$0xff]
      %v2034 = vld [vmem:[%s273 + $0xf6] sm:$0xff]
      %v2035 = vld [vmem:[%s273 + $0xfe] sm:$0xff]
      %v2036 = vld [vmem:[%s273 + $0x106] sm:$0xff]
      %v2037 = vld [vmem:[%s273 + $0x10e] sm:$0xff]
      %v2038 = vld [vmem:[%s273 + $0x116] sm:$0xff]
      %v2039 = vld [vmem:[%s273 + $0x11e] sm:$0xff]
      %v2040 = vld [vmem:[%s273 + $0x126] sm:$0xff]
      %v2041 = vld [vmem:[%s273 + $0x12e] sm:$0xff]
      %v2042 = vld [vmem:[%s273 + $0x136] sm:$0xff]
      %v2043 = vld [vmem:[%s273 + $0x13e] sm:$0x3f]
      %v2044 = vpack.c.bf16 %v2009, %v2008
      %v2045 = vpack.c.bf16 %v2011, %v2010
      %v2046 = vpack.c.bf16 %v2013, %v2012
      %v2047 = vpack.c.bf16 %v2015, %v2014
      %v2048 = vpack.c.bf16 %v2017, %v2016
      %v2049 = vpack.c.bf16 %v2019, %v2018
      %v2050 = vpack.c.bf16 %v2021, %v2020
      %v2051 = vpack.c.bf16 %v2023, %v2022
      %v2052 = vpack.c.bf16 %v2025, %v2024
      %v2053 = vpack.c.bf16 %v2027, %v2026
      %v2054 = vpack.c.bf16 %v2029, %v2028
      %v2055 = vpack.c.bf16 %v2031, %v2030
      %v2056 = vpack.c.bf16 %v2033, %v2032
      %v2057 = vpack.c.bf16 %v2035, %v2034
      %v2058 = vpack.c.bf16 %v2037, %v2036
      %v2059 = vpack.c.bf16 %v2039, %v2038
      %v2060 = vpack.c.bf16 %v2041, %v2040
      %v2061 = vpack.c.bf16 %v2043, %v2042
      %v2080 = vunpack.c.l.b16 %v2044
      %v2081 = vunpack.c.h.b16 %v2044
      %v2082 = vunpack.c.l.b16 %v2045
      %v2083 = vunpack.c.h.b16 %v2045
      %v2084 = vunpack.c.l.b16 %v2046
      %v2085 = vunpack.c.h.b16 %v2046
      %v2086 = vunpack.c.l.b16 %v2047
      %v2087 = vunpack.c.h.b16 %v2047
      %v2088 = vunpack.c.l.b16 %v2048
      %v2089 = vunpack.c.h.b16 %v2048
      %v2090 = vunpack.c.l.b16 %v2049
      %v2091 = vunpack.c.h.b16 %v2049
      %v2092 = vunpack.c.l.b16 %v2050
      %v2093 = vunpack.c.h.b16 %v2050
      %v2094 = vunpack.c.l.b16 %v2051
      %v2095 = vunpack.c.h.b16 %v2051
      %v2096 = vunpack.c.l.b16 %v2052
      %v2097 = vunpack.c.h.b16 %v2052
      %v2098 = vunpack.c.l.b16 %v2053
      %v2099 = vunpack.c.h.b16 %v2053
      %v2100 = vunpack.c.l.b16 %v2054
      %v2101 = vunpack.c.h.b16 %v2054
      %v2102 = vunpack.c.l.b16 %v2055
      %v2103 = vunpack.c.h.b16 %v2055
      %v2104 = vunpack.c.l.b16 %v2056
      %v2105 = vunpack.c.h.b16 %v2056
      %v2106 = vunpack.c.l.b16 %v2057
      %v2107 = vunpack.c.h.b16 %v2057
      %v2108 = vunpack.c.l.b16 %v2058
      %v2109 = vunpack.c.h.b16 %v2058
      %v2110 = vunpack.c.l.b16 %v2059
      %v2111 = vunpack.c.h.b16 %v2059
      %v2112 = vunpack.c.l.b16 %v2060
      %v2113 = vunpack.c.h.b16 %v2060
      %v2114 = vunpack.c.l.b16 %v2061
      %v2115 = vunpack.c.h.b16 %v2061
      %v2116 = vpack.c.b16 %v2080, %v2080
      %v2117 = vpack.c.b16 %v2081, %v2081
      %v2118 = vpack.c.b16 %v2082, %v2082
      %v2119 = vpack.c.b16 %v2083, %v2083
      %v2120 = vpack.c.b16 %v2084, %v2084
      %v2121 = vpack.c.b16 %v2085, %v2085
      %v2122 = vpack.c.b16 %v2086, %v2086
      %v2123 = vpack.c.b16 %v2087, %v2087
      %v2124 = vpack.c.b16 %v2088, %v2088
      %v2125 = vpack.c.b16 %v2089, %v2089
      %v2126 = vpack.c.b16 %v2090, %v2090
      %v2127 = vpack.c.b16 %v2091, %v2091
      %v2128 = vpack.c.b16 %v2092, %v2092
      %v2129 = vpack.c.b16 %v2093, %v2093
      %v2130 = vpack.c.b16 %v2094, %v2094
      %v2131 = vpack.c.b16 %v2095, %v2095
      %v2132 = vpack.c.b16 %v2096, %v2096
      %v2133 = vpack.c.b16 %v2097, %v2097
      %v2134 = vpack.c.b16 %v2098, %v2098
      %v2135 = vpack.c.b16 %v2099, %v2099
      %v2136 = vpack.c.b16 %v2100, %v2100
      %v2137 = vpack.c.b16 %v2101, %v2101
      %v2138 = vpack.c.b16 %v2102, %v2102
      %v2139 = vpack.c.b16 %v2103, %v2103
      %v2140 = vpack.c.b16 %v2104, %v2104
      %v2141 = vpack.c.b16 %v2105, %v2105
      %v2142 = vpack.c.b16 %v2106, %v2106
      %v2143 = vpack.c.b16 %v2107, %v2107
      %v2144 = vpack.c.b16 %v2108, %v2108
      %v2145 = vpack.c.b16 %v2109, %v2109
      %v2146 = vpack.c.b16 %v2110, %v2110
      %v2147 = vpack.c.b16 %v2111, %v2111
      %v2148 = vpack.c.b16 %v2112, %v2112
      %v2149 = vpack.c.b16 %v2113, %v2113
      %v2150 = vpack.c.b16 %v2114, %v2114
      %v2151 = vpack.c.b16 %v2115, %v2115
      %2188 = vst [vmem:[#allocation2 + $0x20] sm:$0xf] %v2116
      %2189 = vst [vmem:[#allocation2 + $0x44] sm:$0xf] %v2117
      %2190 = vst [vmem:[#allocation2 + $0x68] sm:$0xf] %v2118
      %2191 = vst [vmem:[#allocation2 + $0x8c] sm:$0xf] %v2119
      %2192 = vst [vmem:[#allocation2 + $0xb0] sm:$0xf] %v2120
      %2193 = vst [vmem:[#allocation2 + $0xd4] sm:$0xf] %v2121
      %2194 = vst [vmem:[#allocation2 + $0xf8] sm:$0xf] %v2122
      %2195 = vst [vmem:[#allocation2 + $0x11c] sm:$0xf] %v2123
      %2196 = vst [vmem:[#allocation2 + $0x140] sm:$0xf] %v2124
      %2197 = vst [vmem:[#allocation2 + $0x164] sm:$0xf] %v2125
      %2198 = vst [vmem:[#allocation2 + $0x188] sm:$0xf] %v2126
      %2199 = vst [vmem:[#allocation2 + $0x1ac] sm:$0xf] %v2127
      %2200 = vst [vmem:[#allocation2 + $0x1d0] sm:$0xf] %v2128
      %2201 = vst [vmem:[#allocation2 + $0x1f4] sm:$0xf] %v2129
      %2202 = vst [vmem:[#allocation2 + $0x218] sm:$0xf] %v2130
      %2203 = vst [vmem:[#allocation2 + $0x23c] sm:$0xf] %v2131
      %2204 = vst [vmem:[#allocation2 + $0x260] sm:$0xf] %v2132
      %2205 = vst [vmem:[#allocation2 + $0x284] sm:$0xf] %v2133
      %2206 = vst [vmem:[#allocation2 + $0x2a8] sm:$0xf] %v2134
      %2207 = vst [vmem:[#allocation2 + $0x2cc] sm:$0xf] %v2135
      %2208 = vst [vmem:[#allocation2 + $0x2f0] sm:$0xf] %v2136
      %2209 = vst [vmem:[#allocation2 + $0x314] sm:$0xf] %v2137
      %2210 = vst [vmem:[#allocation2 + $0x338] sm:$0xf] %v2138
      %2211 = vst [vmem:[#allocation2 + $0x35c] sm:$0xf] %v2139
      %2212 = vst [vmem:[#allocation2 + $0x380] sm:$0xf] %v2140
      %2213 = vst [vmem:[#allocation2 + $0x3a4] sm:$0xf] %v2141
      %2214 = vst [vmem:[#allocation2 + $0x3c8] sm:$0xf] %v2142
      %2215 = vst [vmem:[#allocation2 + $0x3ec] sm:$0xf] %v2143
      %2216 = vst [vmem:[#allocation2 + $0x410] sm:$0xf] %v2144
      %2217 = vst [vmem:[#allocation2 + $0x434] sm:$0xf] %v2145
      %2218 = vst [vmem:[#allocation2 + $0x458] sm:$0xf] %v2146
      %2219 = vst [vmem:[#allocation2 + $0x47c] sm:$0xf] %v2147
      %2220 = vst [vmem:[#allocation2 + $0x4a0] sm:$0xf] %v2148
      %2221 = vst [vmem:[#allocation2 + $0x4c4] sm:$0xf] %v2149
      %2222 = vst [vmem:[#allocation2 + $0x4e8] sm:$0xf] %v2150
      %2223 = vst [vmem:[#allocation2 + $0x50c] sm:$0x7] %v2151
      %v2224 = vld [vmem:[#allocation2] sm:$0xff]
      %v2225 = vld [vmem:[#allocation2 + $0x8] sm:$0xff]
      %v2226 = vld [vmem:[#allocation2 + $0x10] sm:$0xff]
      %v2227 = vld [vmem:[#allocation2 + $0x18] sm:$0xff]
      %v2228 = vld [vmem:[#allocation2 + $0x20] sm:$0xf]
      %v2229 = vld [vmem:[#allocation2 + $0x24] sm:$0xff]
      %v2230 = vld [vmem:[#allocation2 + $0x2c] sm:$0xff]
      %v2231 = vld [vmem:[#allocation2 + $0x34] sm:$0xff]
      %v2232 = vld [vmem:[#allocation2 + $0x3c] sm:$0xff]
      %v2233 = vld [vmem:[#allocation2 + $0x44] sm:$0xf]
      %v2234 = vld [vmem:[#allocation2 + $0x48] sm:$0xff]
      %v2235 = vld [vmem:[#allocation2 + $0x50] sm:$0xff]
      %v2236 = vld [vmem:[#allocation2 + $0x58] sm:$0xff]
      %v2237 = vld [vmem:[#allocation2 + $0x60] sm:$0xff]
      %v2238 = vld [vmem:[#allocation2 + $0x68] sm:$0xf]
      %v2239 = vld [vmem:[#allocation2 + $0x6c] sm:$0xff]
      %v2240 = vld [vmem:[#allocation2 + $0x74] sm:$0xff]
      %v2241 = vld [vmem:[#allocation2 + $0x7c] sm:$0xff]
      %v2242 = vld [vmem:[#allocation2 + $0x84] sm:$0xff]
      %v2243 = vld [vmem:[#allocation2 + $0x8c] sm:$0xf]
      %v2244 = vld [vmem:[#allocation2 + $0x90] sm:$0xff]
      %v2245 = vld [vmem:[#allocation2 + $0x98] sm:$0xff]
      %v2246 = vld [vmem:[#allocation2 + $0xa0] sm:$0xff]
      %v2247 = vld [vmem:[#allocation2 + $0xa8] sm:$0xff]
      %v2248 = vld [vmem:[#allocation2 + $0xb0] sm:$0xf]
      %v2249 = vld [vmem:[#allocation2 + $0xb4] sm:$0xff]
      %v2250 = vld [vmem:[#allocation2 + $0xbc] sm:$0xff]
      %v2251 = vld [vmem:[#allocation2 + $0xc4] sm:$0xff]
      %v2252 = vld [vmem:[#allocation2 + $0xcc] sm:$0xff]
      %v2253 = vld [vmem:[#allocation2 + $0xd4] sm:$0xf]
      %v2254 = vld [vmem:[#allocation2 + $0xd8] sm:$0xff]
      %v2255 = vld [vmem:[#allocation2 + $0xe0] sm:$0xff]
      %v2256 = vld [vmem:[#allocation2 + $0xe8] sm:$0xff]
      %v2257 = vld [vmem:[#allocation2 + $0xf0] sm:$0xff]
      %v2258 = vld [vmem:[#allocation2 + $0xf8] sm:$0xf]
      %v2259 = vld [vmem:[#allocation2 + $0xfc] sm:$0xff]
      %v2260 = vld [vmem:[#allocation2 + $0x104] sm:$0xff]
      %v2261 = vld [vmem:[#allocation2 + $0x10c] sm:$0xff]
      %v2262 = vld [vmem:[#allocation2 + $0x114] sm:$0xff]
      %v2263 = vld [vmem:[#allocation2 + $0x11c] sm:$0xf]
      %v2264 = vld [vmem:[#allocation2 + $0x120] sm:$0xff]
      %v2265 = vld [vmem:[#allocation2 + $0x128] sm:$0xff]
      %v2266 = vld [vmem:[#allocation2 + $0x130] sm:$0xff]
      %v2267 = vld [vmem:[#allocation2 + $0x138] sm:$0xff]
      %v2268 = vld [vmem:[#allocation2 + $0x140] sm:$0xf]
      %v2269 = vld [vmem:[#allocation2 + $0x144] sm:$0xff]
      %v2270 = vld [vmem:[#allocation2 + $0x14c] sm:$0xff]
      %v2271 = vld [vmem:[#allocation2 + $0x154] sm:$0xff]
      %v2272 = vld [vmem:[#allocation2 + $0x15c] sm:$0xff]
      %v2273 = vld [vmem:[#allocation2 + $0x164] sm:$0xf]
      %v2274 = vld [vmem:[#allocation2 + $0x168] sm:$0xff]
      %v2275 = vld [vmem:[#allocation2 + $0x170] sm:$0xff]
      %v2276 = vld [vmem:[#allocation2 + $0x178] sm:$0xff]
      %v2277 = vld [vmem:[#allocation2 + $0x180] sm:$0xff]
      %v2278 = vld [vmem:[#allocation2 + $0x188] sm:$0xf]
      %v2279 = vld [vmem:[#allocation2 + $0x18c] sm:$0xff]
      %v2280 = vld [vmem:[#allocation2 + $0x194] sm:$0xff]
      %v2281 = vld [vmem:[#allocation2 + $0x19c] sm:$0xff]
      %v2282 = vld [vmem:[#allocation2 + $0x1a4] sm:$0xff]
      %v2283 = vld [vmem:[#allocation2 + $0x1ac] sm:$0xf]
      %v2284 = vld [vmem:[#allocation2 + $0x1b0] sm:$0xff]
      %v2285 = vld [vmem:[#allocation2 + $0x1b8] sm:$0xff]
      %v2286 = vld [vmem:[#allocation2 + $0x1c0] sm:$0xff]
      %v2287 = vld [vmem:[#allocation2 + $0x1c8] sm:$0xff]
      %v2288 = vld [vmem:[#allocation2 + $0x1d0] sm:$0xf]
      %v2289 = vld [vmem:[#allocation2 + $0x1d4] sm:$0xff]
      %v2290 = vld [vmem:[#allocation2 + $0x1dc] sm:$0xff]
      %v2291 = vld [vmem:[#allocation2 + $0x1e4] sm:$0xff]
      %v2292 = vld [vmem:[#allocation2 + $0x1ec] sm:$0xff]
      %v2293 = vld [vmem:[#allocation2 + $0x1f4] sm:$0xf]
      %v2294 = vld [vmem:[#allocation2 + $0x1f8] sm:$0xff]
      %v2295 = vld [vmem:[#allocation2 + $0x200] sm:$0xff]
      %v2296 = vld [vmem:[#allocation2 + $0x208] sm:$0xff]
      %v2297 = vld [vmem:[#allocation2 + $0x210] sm:$0xff]
      %v2298 = vld [vmem:[#allocation2 + $0x218] sm:$0xf]
      %v2299 = vld [vmem:[#allocation2 + $0x21c] sm:$0xff]
      %v2300 = vld [vmem:[#allocation2 + $0x224] sm:$0xff]
      %v2301 = vld [vmem:[#allocation2 + $0x22c] sm:$0xff]
      %v2302 = vld [vmem:[#allocation2 + $0x234] sm:$0xff]
      %v2303 = vld [vmem:[#allocation2 + $0x23c] sm:$0xf]
      %v2304 = vld [vmem:[#allocation2 + $0x240] sm:$0xff]
      %v2305 = vld [vmem:[#allocation2 + $0x248] sm:$0xff]
      %v2306 = vld [vmem:[#allocation2 + $0x250] sm:$0xff]
      %v2307 = vld [vmem:[#allocation2 + $0x258] sm:$0xff]
      %v2308 = vld [vmem:[#allocation2 + $0x260] sm:$0xf]
      %v2309 = vld [vmem:[#allocation2 + $0x264] sm:$0xff]
      %v2310 = vld [vmem:[#allocation2 + $0x26c] sm:$0xff]
      %v2311 = vld [vmem:[#allocation2 + $0x274] sm:$0xff]
      %v2312 = vld [vmem:[#allocation2 + $0x27c] sm:$0xff]
      %v2313 = vld [vmem:[#allocation2 + $0x284] sm:$0xf]
      %v2314 = vld [vmem:[#allocation2 + $0x288] sm:$0xff]
      %v2315 = vld [vmem:[#allocation2 + $0x290] sm:$0xff]
      %v2316 = vld [vmem:[#allocation2 + $0x298] sm:$0xff]
      %v2317 = vld [vmem:[#allocation2 + $0x2a0] sm:$0xff]
      %v2318 = vld [vmem:[#allocation2 + $0x2a8] sm:$0xf]
      %v2319 = vld [vmem:[#allocation2 + $0x2ac] sm:$0xff]
      %v2320 = vld [vmem:[#allocation2 + $0x2b4] sm:$0xff]
      %v2321 = vld [vmem:[#allocation2 + $0x2bc] sm:$0xff]
      %v2322 = vld [vmem:[#allocation2 + $0x2c4] sm:$0xff]
      %v2323 = vld [vmem:[#allocation2 + $0x2cc] sm:$0xf]
      %v2324 = vld [vmem:[#allocation2 + $0x2d0] sm:$0xff]
      %v2325 = vld [vmem:[#allocation2 + $0x2d8] sm:$0xff]
      %v2326 = vld [vmem:[#allocation2 + $0x2e0] sm:$0xff]
      %v2327 = vld [vmem:[#allocation2 + $0x2e8] sm:$0xff]
      %v2328 = vld [vmem:[#allocation2 + $0x2f0] sm:$0xf]
      %v2329 = vld [vmem:[#allocation2 + $0x2f4] sm:$0xff]
      %v2330 = vld [vmem:[#allocation2 + $0x2fc] sm:$0xff]
      %v2331 = vld [vmem:[#allocation2 + $0x304] sm:$0xff]
      %v2332 = vld [vmem:[#allocation2 + $0x30c] sm:$0xff]
      %v2333 = vld [vmem:[#allocation2 + $0x314] sm:$0xf]
      %v2334 = vld [vmem:[#allocation2 + $0x318] sm:$0xff]
      %v2335 = vld [vmem:[#allocation2 + $0x320] sm:$0xff]
      %v2336 = vld [vmem:[#allocation2 + $0x328] sm:$0xff]
      %v2337 = vld [vmem:[#allocation2 + $0x330] sm:$0xff]
      %v2338 = vld [vmem:[#allocation2 + $0x338] sm:$0xf]
      %v2339 = vld [vmem:[#allocation2 + $0x33c] sm:$0xff]
      %v2340 = vld [vmem:[#allocation2 + $0x344] sm:$0xff]
      %v2341 = vld [vmem:[#allocation2 + $0x34c] sm:$0xff]
      %v2342 = vld [vmem:[#allocation2 + $0x354] sm:$0xff]
      %v2343 = vld [vmem:[#allocation2 + $0x35c] sm:$0xf]
      %v2344 = vld [vmem:[#allocation2 + $0x360] sm:$0xff]
      %v2345 = vld [vmem:[#allocation2 + $0x368] sm:$0xff]
      %v2346 = vld [vmem:[#allocation2 + $0x370] sm:$0xff]
      %v2347 = vld [vmem:[#allocation2 + $0x378] sm:$0xff]
      %v2348 = vld [vmem:[#allocation2 + $0x380] sm:$0xf]
      %v2349 = vld [vmem:[#allocation2 + $0x384] sm:$0xff]
      %v2350 = vld [vmem:[#allocation2 + $0x38c] sm:$0xff]
      %v2351 = vld [vmem:[#allocation2 + $0x394] sm:$0xff]
      %v2352 = vld [vmem:[#allocation2 + $0x39c] sm:$0xff]
      %v2353 = vld [vmem:[#allocation2 + $0x3a4] sm:$0xf]
      %v2354 = vld [vmem:[#allocation2 + $0x3a8] sm:$0xff]
      %v2355 = vld [vmem:[#allocation2 + $0x3b0] sm:$0xff]
      %v2356 = vld [vmem:[#allocation2 + $0x3b8] sm:$0xff]
      %v2357 = vld [vmem:[#allocation2 + $0x3c0] sm:$0xff]
      %v2358 = vld [vmem:[#allocation2 + $0x3c8] sm:$0xf]
      %v2359 = vld [vmem:[#allocation2 + $0x3cc] sm:$0xff]
      %v2360 = vld [vmem:[#allocation2 + $0x3d4] sm:$0xff]
      %v2361 = vld [vmem:[#allocation2 + $0x3dc] sm:$0xff]
      %v2362 = vld [vmem:[#allocation2 + $0x3e4] sm:$0xff]
      %v2363 = vld [vmem:[#allocation2 + $0x3ec] sm:$0xf]
      %v2364 = vld [vmem:[#allocation2 + $0x3f0] sm:$0xff]
      %v2365 = vld [vmem:[#allocation2 + $0x3f8] sm:$0xff]
      %v2366 = vld [vmem:[#allocation2 + $0x400] sm:$0xff]
      %v2367 = vld [vmem:[#allocation2 + $0x408] sm:$0xff]
      %v2368 = vld [vmem:[#allocation2 + $0x410] sm:$0xf]
      %v2369 = vld [vmem:[#allocation2 + $0x414] sm:$0xff]
      %v2370 = vld [vmem:[#allocation2 + $0x41c] sm:$0xff]
      %v2371 = vld [vmem:[#allocation2 + $0x424] sm:$0xff]
      %v2372 = vld [vmem:[#allocation2 + $0x42c] sm:$0xff]
      %v2373 = vld [vmem:[#allocation2 + $0x434] sm:$0xf]
      %v2374 = vld [vmem:[#allocation2 + $0x438] sm:$0xff]
      %v2375 = vld [vmem:[#allocation2 + $0x440] sm:$0xff]
      %v2376 = vld [vmem:[#allocation2 + $0x448] sm:$0xff]
      %v2377 = vld [vmem:[#allocation2 + $0x450] sm:$0xff]
      %v2378 = vld [vmem:[#allocation2 + $0x458] sm:$0xf]
      %v2379 = vld [vmem:[#allocation2 + $0x45c] sm:$0xff]
      %v2380 = vld [vmem:[#allocation2 + $0x464] sm:$0xff]
      %v2381 = vld [vmem:[#allocation2 + $0x46c] sm:$0xff]
      %v2382 = vld [vmem:[#allocation2 + $0x474] sm:$0xff]
      %v2383 = vld [vmem:[#allocation2 + $0x47c] sm:$0xf]
      %v2384 = vld [vmem:[#allocation2 + $0x480] sm:$0xff]
      %v2385 = vld [vmem:[#allocation2 + $0x488] sm:$0xff]
      %v2386 = vld [vmem:[#allocation2 + $0x490] sm:$0xff]
      %v2387 = vld [vmem:[#allocation2 + $0x498] sm:$0xff]
      %v2388 = vld [vmem:[#allocation2 + $0x4a0] sm:$0xf]
      %v2389 = vld [vmem:[#allocation2 + $0x4a4] sm:$0xff]
      %v2390 = vld [vmem:[#allocation2 + $0x4ac] sm:$0xff]
      %v2391 = vld [vmem:[#allocation2 + $0x4b4] sm:$0xff]
      %v2392 = vld [vmem:[#allocation2 + $0x4bc] sm:$0xff]
      %v2393 = vld [vmem:[#allocation2 + $0x4c4] sm:$0xf]
      %v2394 = vld [vmem:[#allocation2 + $0x4c8] sm:$0xff]
      %v2395 = vld [vmem:[#allocation2 + $0x4d0] sm:$0xff]
      %v2396 = vld [vmem:[#allocation2 + $0x4d8] sm:$0xff]
      %v2397 = vld [vmem:[#allocation2 + $0x4e0] sm:$0xff]
      %v2398 = vld [vmem:[#allocation2 + $0x4e8] sm:$0xf]
      %v2399 = vld [vmem:[#allocation2 + $0x4ec] sm:$0x77]
      %v2400 = vld [vmem:[#allocation2 + $0x4f4] sm:$0x77]
      %v2401 = vld [vmem:[#allocation2 + $0x4fc] sm:$0x77]
      %v2402 = vld [vmem:[#allocation2 + $0x504] sm:$0x77]
      %v2403 = vld [vmem:[#allocation2 + $0x50c] sm:$0x7]
      %v2404 = vld [vmem:[%s1] sm:$0xf]
      %v2405 = vld [vmem:[%s1 + $0x4] sm:$0xf]
      %v2406 = vld [vmem:[%s1 + $0x8] sm:$0xf]
      %v2407 = vld [vmem:[%s1 + $0xc] sm:$0xf]
      %v2408 = vld [vmem:[%s1 + $0x10] sm:$0xf]
      %v2409 = vld [vmem:[%s1 + $0x14] sm:$0xf]
      %v2410 = vld [vmem:[%s1 + $0x18] sm:$0xf]
      %v2411 = vld [vmem:[%s1 + $0x1c] sm:$0xf]
      %v2412 = vld [vmem:[%s1 + $0x20] sm:$0xf]
      %v2413 = vld [vmem:[%s1 + $0x24] sm:$0xf]
      %v2414 = vld [vmem:[%s1 + $0x28] sm:$0xf]
      %v2415 = vld [vmem:[%s1 + $0x2c] sm:$0xf]
      %v2416 = vld [vmem:[%s1 + $0x30] sm:$0xf]
      %v2417 = vld [vmem:[%s1 + $0x34] sm:$0xf]
      %v2418 = vld [vmem:[%s1 + $0x38] sm:$0xf]
      %v2419 = vld [vmem:[%s1 + $0x3c] sm:$0xf]
      %v2420 = vld [vmem:[%s1 + $0x40] sm:$0xf]
      %v2421 = vld [vmem:[%s1 + $0x44] sm:$0xf]
      %v2422 = vld [vmem:[%s1 + $0x48] sm:$0xf]
      %v2423 = vld [vmem:[%s1 + $0x4c] sm:$0xf]
      %v2424 = vld [vmem:[%s1 + $0x50] sm:$0xf]
      %v2425 = vld [vmem:[%s1 + $0x54] sm:$0xf]
      %v2426 = vld [vmem:[%s1 + $0x58] sm:$0xf]
      %v2427 = vld [vmem:[%s1 + $0x5c] sm:$0xf]
      %v2428 = vld [vmem:[%s1 + $0x60] sm:$0xf]
      %v2429 = vld [vmem:[%s1 + $0x64] sm:$0xf]
      %v2430 = vld [vmem:[%s1 + $0x68] sm:$0xf]
      %v2431 = vld [vmem:[%s1 + $0x6c] sm:$0xf]
      %v2432 = vld [vmem:[%s1 + $0x70] sm:$0xf]
      %v2433 = vld [vmem:[%s1 + $0x74] sm:$0xf]
      %v2434 = vld [vmem:[%s1 + $0x78] sm:$0xf]
      %v2435 = vld [vmem:[%s1 + $0x7c] sm:$0xf]
      %v2436 = vld [vmem:[%s1 + $0x80] sm:$0xf]
      %v2437 = vld [vmem:[%s1 + $0x84] sm:$0xf]
      %v2438 = vld [vmem:[%s1 + $0x88] sm:$0xf]
      %v2439 = vld [vmem:[%s1 + $0x8c] sm:$0xf]
      %v2440 = vld [vmem:[%s1 + $0x90] sm:$0xf]
      %v2441 = vld [vmem:[%s1 + $0x94] sm:$0xf]
      %v2442 = vld [vmem:[%s1 + $0x98] sm:$0xf]
      %v2443 = vld [vmem:[%s1 + $0x9c] sm:$0xf]
      %v2444 = vld [vmem:[%s1 + $0xa0] sm:$0xf]
      %v2445 = vld [vmem:[%s1 + $0xa4] sm:$0xf]
      %v2446 = vld [vmem:[%s1 + $0xa8] sm:$0xf]
      %v2447 = vld [vmem:[%s1 + $0xac] sm:$0xf]
      %v2448 = vld [vmem:[%s1 + $0xb0] sm:$0xf]
      %v2449 = vld [vmem:[%s1 + $0xb4] sm:$0xf]
      %v2450 = vld [vmem:[%s1 + $0xb8] sm:$0xf]
      %v2451 = vld [vmem:[%s1 + $0xbc] sm:$0xf]
      %v2452 = vld [vmem:[%s1 + $0xc0] sm:$0xf]
      %v2453 = vld [vmem:[%s1 + $0xc4] sm:$0xf]
      %v2454 = vld [vmem:[%s1 + $0xc8] sm:$0xf]
      %v2455 = vld [vmem:[%s1 + $0xcc] sm:$0xf]
      %v2456 = vld [vmem:[%s1 + $0xd0] sm:$0xf]
      %v2457 = vld [vmem:[%s1 + $0xd4] sm:$0xf]
      %v2458 = vld [vmem:[%s1 + $0xd8] sm:$0xf]
      %v2459 = vld [vmem:[%s1 + $0xdc] sm:$0xf]
      %v2460 = vld [vmem:[%s1 + $0xe0] sm:$0xf]
      %v2461 = vld [vmem:[%s1 + $0xe4] sm:$0xf]
      %v2462 = vld [vmem:[%s1 + $0xe8] sm:$0xf]
      %v2463 = vld [vmem:[%s1 + $0xec] sm:$0xf]
      %v2464 = vld [vmem:[%s1 + $0xf0] sm:$0xf]
      %v2465 = vld [vmem:[%s1 + $0xf4] sm:$0xf]
      %v2466 = vld [vmem:[%s1 + $0xf8] sm:$0xf]
      %v2467 = vld [vmem:[%s1 + $0xfc] sm:$0xf]
      %v2468 = vld [vmem:[%s1 + $0x100] sm:$0xf]
      %v2469 = vld [vmem:[%s1 + $0x104] sm:$0xf]
      %v2470 = vld [vmem:[%s1 + $0x108] sm:$0xf]
      %v2471 = vld [vmem:[%s1 + $0x10c] sm:$0xf]
      %v2472 = vld [vmem:[%s1 + $0x110] sm:$0xf]
      %v2473 = vld [vmem:[%s1 + $0x114] sm:$0xf]
      %v2474 = vld [vmem:[%s1 + $0x118] sm:$0xf]
      %v2475 = vld [vmem:[%s1 + $0x11c] sm:$0xf]
      %v2476 = vld [vmem:[%s1 + $0x120] sm:$0xf]
      %v2477 = vld [vmem:[%s1 + $0x124] sm:$0xf]
      %v2478 = vld [vmem:[%s1 + $0x128] sm:$0xf]
      %v2479 = vld [vmem:[%s1 + $0x12c] sm:$0xf]
      %v2480 = vld [vmem:[%s1 + $0x130] sm:$0xf]
      %v2481 = vld [vmem:[%s1 + $0x134] sm:$0xf]
      %v2482 = vld [vmem:[%s1 + $0x138] sm:$0xf]
      %v2483 = vld [vmem:[%s1 + $0x13c] sm:$0xf]
      %v2484 = vld [vmem:[%s1 + $0x140] sm:$0xf]
      %v2485 = vld [vmem:[%s1 + $0x144] sm:$0xf]
      %v2486 = vld [vmem:[%s1 + $0x148] sm:$0xf]
      %v2487 = vld [vmem:[%s1 + $0x14c] sm:$0xf]
      %v2488 = vld [vmem:[%s1 + $0x150] sm:$0xf]
      %v2489 = vld [vmem:[%s1 + $0x154] sm:$0xf]
      %v2490 = vld [vmem:[%s1 + $0x158] sm:$0xf]
      %v2491 = vld [vmem:[%s1 + $0x15c] sm:$0xf]
      %v2492 = vld [vmem:[%s1 + $0x160] sm:$0xf]
      %v2493 = vld [vmem:[%s1 + $0x164] sm:$0xf]
      %v2494 = vld [vmem:[%s1 + $0x168] sm:$0xf]
      %v2495 = vld [vmem:[%s1 + $0x16c] sm:$0xf]
      %v2496 = vld [vmem:[%s1 + $0x170] sm:$0xf]
      %v2497 = vld [vmem:[%s1 + $0x174] sm:$0xf]
      %v2498 = vld [vmem:[%s1 + $0x178] sm:$0xf]
      %v2499 = vld [vmem:[%s1 + $0x17c] sm:$0xf]
      %v2500 = vld [vmem:[%s1 + $0x180] sm:$0xf]
      %v2501 = vld [vmem:[%s1 + $0x184] sm:$0xf]
      %v2502 = vld [vmem:[%s1 + $0x188] sm:$0xf]
      %v2503 = vld [vmem:[%s1 + $0x18c] sm:$0xf]
      %v2504 = vld [vmem:[%s1 + $0x190] sm:$0xf]
      %v2505 = vld [vmem:[%s1 + $0x194] sm:$0xf]
      %v2506 = vld [vmem:[%s1 + $0x198] sm:$0xf]
      %v2507 = vld [vmem:[%s1 + $0x19c] sm:$0xf]
      %v2508 = vld [vmem:[%s1 + $0x1a0] sm:$0xf]
      %v2509 = vld [vmem:[%s1 + $0x1a4] sm:$0xf]
      %v2510 = vld [vmem:[%s1 + $0x1a8] sm:$0xf]
      %v2511 = vld [vmem:[%s1 + $0x1ac] sm:$0xf]
      %v2512 = vld [vmem:[%s1 + $0x1b0] sm:$0xf]
      %v2513 = vld [vmem:[%s1 + $0x1b4] sm:$0xf]
      %v2514 = vld [vmem:[%s1 + $0x1b8] sm:$0xf]
      %v2515 = vld [vmem:[%s1 + $0x1bc] sm:$0xf]
      %v2516 = vld [vmem:[%s1 + $0x1c0] sm:$0xf]
      %v2517 = vld [vmem:[%s1 + $0x1c4] sm:$0xf]
      %v2518 = vld [vmem:[%s1 + $0x1c8] sm:$0xf]
      %v2519 = vld [vmem:[%s1 + $0x1cc] sm:$0xf]
      %v2520 = vld [vmem:[%s1 + $0x1d0] sm:$0xf]
      %v2521 = vld [vmem:[%s1 + $0x1d4] sm:$0xf]
      %v2522 = vld [vmem:[%s1 + $0x1d8] sm:$0xf]
      %v2523 = vld [vmem:[%s1 + $0x1dc] sm:$0xf]
      %v2524 = vld [vmem:[%s1 + $0x1e0] sm:$0xf]
      %v2525 = vld [vmem:[%s1 + $0x1e4] sm:$0xf]
      %v2526 = vld [vmem:[%s1 + $0x1e8] sm:$0xf]
      %v2527 = vld [vmem:[%s1 + $0x1ec] sm:$0xf]
      %v2528 = vld [vmem:[%s1 + $0x1f0] sm:$0xf]
      %v2529 = vld [vmem:[%s1 + $0x1f4] sm:$0xf]
      %v2530 = vld [vmem:[%s1 + $0x1f8] sm:$0xf]
      %v2531 = vld [vmem:[%s1 + $0x1fc] sm:$0xf]
      %v2532 = vld [vmem:[%s1 + $0x200] sm:$0xf]
      %v2533 = vld [vmem:[%s1 + $0x204] sm:$0xf]
      %v2534 = vld [vmem:[%s1 + $0x208] sm:$0xf]
      %v2535 = vld [vmem:[%s1 + $0x20c] sm:$0xf]
      %v2536 = vld [vmem:[%s1 + $0x210] sm:$0xf]
      %v2537 = vld [vmem:[%s1 + $0x214] sm:$0xf]
      %v2538 = vld [vmem:[%s1 + $0x218] sm:$0xf]
      %v2539 = vld [vmem:[%s1 + $0x21c] sm:$0xf]
      %v2540 = vld [vmem:[%s1 + $0x220] sm:$0xf]
      %v2541 = vld [vmem:[%s1 + $0x224] sm:$0xf]
      %v2542 = vld [vmem:[%s1 + $0x228] sm:$0xf]
      %v2543 = vld [vmem:[%s1 + $0x22c] sm:$0xf]
      %v2544 = vld [vmem:[%s1 + $0x230] sm:$0xf]
      %v2545 = vld [vmem:[%s1 + $0x234] sm:$0xf]
      %v2546 = vld [vmem:[%s1 + $0x238] sm:$0xf]
      %v2547 = vld [vmem:[%s1 + $0x23c] sm:$0xf]
      %v2728 = vunpack.c.l.b16 %v2224
      %v2729 = vunpack.c.h.b16 %v2224
      %v2730 = vunpack.c.l.b16 %v2225
      %v2731 = vunpack.c.h.b16 %v2225
      %v2732 = vunpack.c.l.b16 %v2226
      %v2733 = vunpack.c.h.b16 %v2226
      %v2734 = vunpack.c.l.b16 %v2227
      %v2735 = vunpack.c.h.b16 %v2227
      %v2736 = vunpack.c.l.b16 %v2228
      %v2737 = vunpack.c.l.b16 %v2229
      %v2738 = vunpack.c.h.b16 %v2229
      %v2739 = vunpack.c.l.b16 %v2230
      %v2740 = vunpack.c.h.b16 %v2230
      %v2741 = vunpack.c.l.b16 %v2231
      %v2742 = vunpack.c.h.b16 %v2231
      %v2743 = vunpack.c.l.b16 %v2232
      %v2744 = vunpack.c.h.b16 %v2232
      %v2745 = vunpack.c.l.b16 %v2233
      %v2746 = vunpack.c.l.b16 %v2234
      %v2747 = vunpack.c.h.b16 %v2234
      %v2748 = vunpack.c.l.b16 %v2235
      %v2749 = vunpack.c.h.b16 %v2235
      %v2750 = vunpack.c.l.b16 %v2236
      %v2751 = vunpack.c.h.b16 %v2236
      %v2752 = vunpack.c.l.b16 %v2237
      %v2753 = vunpack.c.h.b16 %v2237
      %v2754 = vunpack.c.l.b16 %v2238
      %v2755 = vunpack.c.l.b16 %v2239
      %v2756 = vunpack.c.h.b16 %v2239
      %v2757 = vunpack.c.l.b16 %v2240
      %v2758 = vunpack.c.h.b16 %v2240
      %v2759 = vunpack.c.l.b16 %v2241
      %v2760 = vunpack.c.h.b16 %v2241
      %v2761 = vunpack.c.l.b16 %v2242
      %v2762 = vunpack.c.h.b16 %v2242
      %v2763 = vunpack.c.l.b16 %v2243
      %v2764 = vunpack.c.l.b16 %v2244
      %v2765 = vunpack.c.h.b16 %v2244
      %v2766 = vunpack.c.l.b16 %v2245
      %v2767 = vunpack.c.h.b16 %v2245
      %v2768 = vunpack.c.l.b16 %v2246
      %v2769 = vunpack.c.h.b16 %v2246
      %v2770 = vunpack.c.l.b16 %v2247
      %v2771 = vunpack.c.h.b16 %v2247
      %v2772 = vunpack.c.l.b16 %v2248
      %v2773 = vunpack.c.l.b16 %v2249
      %v2774 = vunpack.c.h.b16 %v2249
      %v2775 = vunpack.c.l.b16 %v2250
      %v2776 = vunpack.c.h.b16 %v2250
      %v2777 = vunpack.c.l.b16 %v2251
      %v2778 = vunpack.c.h.b16 %v2251
      %v2779 = vunpack.c.l.b16 %v2252
      %v2780 = vunpack.c.h.b16 %v2252
      %v2781 = vunpack.c.l.b16 %v2253
      %v2782 = vunpack.c.l.b16 %v2254
      %v2783 = vunpack.c.h.b16 %v2254
      %v2784 = vunpack.c.l.b16 %v2255
      %v2785 = vunpack.c.h.b16 %v2255
      %v2786 = vunpack.c.l.b16 %v2256
      %v2787 = vunpack.c.h.b16 %v2256
      %v2788 = vunpack.c.l.b16 %v2257
      %v2789 = vunpack.c.h.b16 %v2257
      %v2790 = vunpack.c.l.b16 %v2258
      %v2791 = vunpack.c.l.b16 %v2259
      %v2792 = vunpack.c.h.b16 %v2259
      %v2793 = vunpack.c.l.b16 %v2260
      %v2794 = vunpack.c.h.b16 %v2260
      %v2795 = vunpack.c.l.b16 %v2261
      %v2796 = vunpack.c.h.b16 %v2261
      %v2797 = vunpack.c.l.b16 %v2262
      %v2798 = vunpack.c.h.b16 %v2262
      %v2799 = vunpack.c.l.b16 %v2263
      %v2800 = vunpack.c.l.b16 %v2264
      %v2801 = vunpack.c.h.b16 %v2264
      %v2802 = vunpack.c.l.b16 %v2265
      %v2803 = vunpack.c.h.b16 %v2265
      %v2804 = vunpack.c.l.b16 %v2266
      %v2805 = vunpack.c.h.b16 %v2266
      %v2806 = vunpack.c.l.b16 %v2267
      %v2807 = vunpack.c.h.b16 %v2267
      %v2808 = vunpack.c.l.b16 %v2268
      %v2809 = vunpack.c.l.b16 %v2269
      %v2810 = vunpack.c.h.b16 %v2269
      %v2811 = vunpack.c.l.b16 %v2270
      %v2812 = vunpack.c.h.b16 %v2270
      %v2813 = vunpack.c.l.b16 %v2271
      %v2814 = vunpack.c.h.b16 %v2271
      %v2815 = vunpack.c.l.b16 %v2272
      %v2816 = vunpack.c.h.b16 %v2272
      %v2817 = vunpack.c.l.b16 %v2273
      %v2818 = vunpack.c.l.b16 %v2274
      %v2819 = vunpack.c.h.b16 %v2274
      %v2820 = vunpack.c.l.b16 %v2275
      %v2821 = vunpack.c.h.b16 %v2275
      %v2822 = vunpack.c.l.b16 %v2276
      %v2823 = vunpack.c.h.b16 %v2276
      %v2824 = vunpack.c.l.b16 %v2277
      %v2825 = vunpack.c.h.b16 %v2277
      %v2826 = vunpack.c.l.b16 %v2278
      %v2827 = vunpack.c.l.b16 %v2279
      %v2828 = vunpack.c.h.b16 %v2279
      %v2829 = vunpack.c.l.b16 %v2280
      %v2830 = vunpack.c.h.b16 %v2280
      %v2831 = vunpack.c.l.b16 %v2281
      %v2832 = vunpack.c.h.b16 %v2281
      %v2833 = vunpack.c.l.b16 %v2282
      %v2834 = vunpack.c.h.b16 %v2282
      %v2835 = vunpack.c.l.b16 %v2283
      %v2836 = vunpack.c.l.b16 %v2284
      %v2837 = vunpack.c.h.b16 %v2284
      %v2838 = vunpack.c.l.b16 %v2285
      %v2839 = vunpack.c.h.b16 %v2285
      %v2840 = vunpack.c.l.b16 %v2286
      %v2841 = vunpack.c.h.b16 %v2286
      %v2842 = vunpack.c.l.b16 %v2287
      %v2843 = vunpack.c.h.b16 %v2287
      %v2844 = vunpack.c.l.b16 %v2288
      %v2845 = vunpack.c.l.b16 %v2289
      %v2846 = vunpack.c.h.b16 %v2289
      %v2847 = vunpack.c.l.b16 %v2290
      %v2848 = vunpack.c.h.b16 %v2290
      %v2849 = vunpack.c.l.b16 %v2291
      %v2850 = vunpack.c.h.b16 %v2291
      %v2851 = vunpack.c.l.b16 %v2292
      %v2852 = vunpack.c.h.b16 %v2292
      %v2853 = vunpack.c.l.b16 %v2293
      %v2854 = vunpack.c.l.b16 %v2294
      %v2855 = vunpack.c.h.b16 %v2294
      %v2856 = vunpack.c.l.b16 %v2295
      %v2857 = vunpack.c.h.b16 %v2295
      %v2858 = vunpack.c.l.b16 %v2296
      %v2859 = vunpack.c.h.b16 %v2296
      %v2860 = vunpack.c.l.b16 %v2297
      %v2861 = vunpack.c.h.b16 %v2297
      %v2862 = vunpack.c.l.b16 %v2298
      %v2863 = vunpack.c.l.b16 %v2299
      %v2864 = vunpack.c.h.b16 %v2299
      %v2865 = vunpack.c.l.b16 %v2300
      %v2866 = vunpack.c.h.b16 %v2300
      %v2867 = vunpack.c.l.b16 %v2301
      %v2868 = vunpack.c.h.b16 %v2301
      %v2869 = vunpack.c.l.b16 %v2302
      %v2870 = vunpack.c.h.b16 %v2302
      %v2871 = vunpack.c.l.b16 %v2303
      %v2872 = vunpack.c.l.b16 %v2304
      %v2873 = vunpack.c.h.b16 %v2304
      %v2874 = vunpack.c.l.b16 %v2305
      %v2875 = vunpack.c.h.b16 %v2305
      %v2876 = vunpack.c.l.b16 %v2306
      %v2877 = vunpack.c.h.b16 %v2306
      %v2878 = vunpack.c.l.b16 %v2307
      %v2879 = vunpack.c.h.b16 %v2307
      %v2880 = vunpack.c.l.b16 %v2308
      %v2881 = vunpack.c.l.b16 %v2309
      %v2882 = vunpack.c.h.b16 %v2309
      %v2883 = vunpack.c.l.b16 %v2310
      %v2884 = vunpack.c.h.b16 %v2310
      %v2885 = vunpack.c.l.b16 %v2311
      %v2886 = vunpack.c.h.b16 %v2311
      %v2887 = vunpack.c.l.b16 %v2312
      %v2888 = vunpack.c.h.b16 %v2312
      %v2889 = vunpack.c.l.b16 %v2313
      %v2890 = vunpack.c.l.b16 %v2314
      %v2891 = vunpack.c.h.b16 %v2314
      %v2892 = vunpack.c.l.b16 %v2315
      %v2893 = vunpack.c.h.b16 %v2315
      %v2894 = vunpack.c.l.b16 %v2316
      %v2895 = vunpack.c.h.b16 %v2316
      %v2896 = vunpack.c.l.b16 %v2317
      %v2897 = vunpack.c.h.b16 %v2317
      %v2898 = vunpack.c.l.b16 %v2318
      %v2899 = vunpack.c.l.b16 %v2319
      %v2900 = vunpack.c.h.b16 %v2319
      %v2901 = vunpack.c.l.b16 %v2320
      %v2902 = vunpack.c.h.b16 %v2320
      %v2903 = vunpack.c.l.b16 %v2321
      %v2904 = vunpack.c.h.b16 %v2321
      %v2905 = vunpack.c.l.b16 %v2322
      %v2906 = vunpack.c.h.b16 %v2322
      %v2907 = vunpack.c.l.b16 %v2323
      %v2908 = vunpack.c.l.b16 %v2324
      %v2909 = vunpack.c.h.b16 %v2324
      %v2910 = vunpack.c.l.b16 %v2325
      %v2911 = vunpack.c.h.b16 %v2325
      %v2912 = vunpack.c.l.b16 %v2326
      %v2913 = vunpack.c.h.b16 %v2326
      %v2914 = vunpack.c.l.b16 %v2327
      %v2915 = vunpack.c.h.b16 %v2327
      %v2916 = vunpack.c.l.b16 %v2328
      %v2917 = vunpack.c.l.b16 %v2329
      %v2918 = vunpack.c.h.b16 %v2329
      %v2919 = vunpack.c.l.b16 %v2330
      %v2920 = vunpack.c.h.b16 %v2330
      %v2921 = vunpack.c.l.b16 %v2331
      %v2922 = vunpack.c.h.b16 %v2331
      %v2923 = vunpack.c.l.b16 %v2332
      %v2924 = vunpack.c.h.b16 %v2332
      %v2925 = vunpack.c.l.b16 %v2333
      %v2926 = vunpack.c.l.b16 %v2334
      %v2927 = vunpack.c.h.b16 %v2334
      %v2928 = vunpack.c.l.b16 %v2335
      %v2929 = vunpack.c.h.b16 %v2335
      %v2930 = vunpack.c.l.b16 %v2336
      %v2931 = vunpack.c.h.b16 %v2336
      %v2932 = vunpack.c.l.b16 %v2337
      %v2933 = vunpack.c.h.b16 %v2337
      %v2934 = vunpack.c.l.b16 %v2338
      %v2935 = vunpack.c.l.b16 %v2339
      %v2936 = vunpack.c.h.b16 %v2339
      %v2937 = vunpack.c.l.b16 %v2340
      %v2938 = vunpack.c.h.b16 %v2340
      %v2939 = vunpack.c.l.b16 %v2341
      %v2940 = vunpack.c.h.b16 %v2341
      %v2941 = vunpack.c.l.b16 %v2342
      %v2942 = vunpack.c.h.b16 %v2342
      %v2943 = vunpack.c.l.b16 %v2343
      %v2944 = vunpack.c.l.b16 %v2344
      %v2945 = vunpack.c.h.b16 %v2344
      %v2946 = vunpack.c.l.b16 %v2345
      %v2947 = vunpack.c.h.b16 %v2345
      %v2948 = vunpack.c.l.b16 %v2346
      %v2949 = vunpack.c.h.b16 %v2346
      %v2950 = vunpack.c.l.b16 %v2347
      %v2951 = vunpack.c.h.b16 %v2347
      %v2952 = vunpack.c.l.b16 %v2348
      %v2953 = vunpack.c.l.b16 %v2349
      %v2954 = vunpack.c.h.b16 %v2349
      %v2955 = vunpack.c.l.b16 %v2350
      %v2956 = vunpack.c.h.b16 %v2350
      %v2957 = vunpack.c.l.b16 %v2351
      %v2958 = vunpack.c.h.b16 %v2351
      %v2959 = vunpack.c.l.b16 %v2352
      %v2960 = vunpack.c.h.b16 %v2352
      %v2961 = vunpack.c.l.b16 %v2353
      %v2962 = vunpack.c.l.b16 %v2354
      %v2963 = vunpack.c.h.b16 %v2354
      %v2964 = vunpack.c.l.b16 %v2355
      %v2965 = vunpack.c.h.b16 %v2355
      %v2966 = vunpack.c.l.b16 %v2356
      %v2967 = vunpack.c.h.b16 %v2356
      %v2968 = vunpack.c.l.b16 %v2357
      %v2969 = vunpack.c.h.b16 %v2357
      %v2970 = vunpack.c.l.b16 %v2358
      %v2971 = vunpack.c.l.b16 %v2359
      %v2972 = vunpack.c.h.b16 %v2359
      %v2973 = vunpack.c.l.b16 %v2360
      %v2974 = vunpack.c.h.b16 %v2360
      %v2975 = vunpack.c.l.b16 %v2361
      %v2976 = vunpack.c.h.b16 %v2361
      %v2977 = vunpack.c.l.b16 %v2362
      %v2978 = vunpack.c.h.b16 %v2362
      %v2979 = vunpack.c.l.b16 %v2363
      %v2980 = vunpack.c.l.b16 %v2364
      %v2981 = vunpack.c.h.b16 %v2364
      %v2982 = vunpack.c.l.b16 %v2365
      %v2983 = vunpack.c.h.b16 %v2365
      %v2984 = vunpack.c.l.b16 %v2366
      %v2985 = vunpack.c.h.b16 %v2366
      %v2986 = vunpack.c.l.b16 %v2367
      %v2987 = vunpack.c.h.b16 %v2367
      %v2988 = vunpack.c.l.b16 %v2368
      %v2989 = vunpack.c.l.b16 %v2369
      %v2990 = vunpack.c.h.b16 %v2369
      %v2991 = vunpack.c.l.b16 %v2370
      %v2992 = vunpack.c.h.b16 %v2370
      %v2993 = vunpack.c.l.b16 %v2371
      %v2994 = vunpack.c.h.b16 %v2371
      %v2995 = vunpack.c.l.b16 %v2372
      %v2996 = vunpack.c.h.b16 %v2372
      %v2997 = vunpack.c.l.b16 %v2373
      %v2998 = vunpack.c.l.b16 %v2374
      %v2999 = vunpack.c.h.b16 %v2374
      %v3000 = vunpack.c.l.b16 %v2375
      %v3001 = vunpack.c.h.b16 %v2375
      %v3002 = vunpack.c.l.b16 %v2376
      %v3003 = vunpack.c.h.b16 %v2376
      %v3004 = vunpack.c.l.b16 %v2377
      %v3005 = vunpack.c.h.b16 %v2377
      %v3006 = vunpack.c.l.b16 %v2378
      %v3007 = vunpack.c.l.b16 %v2379
      %v3008 = vunpack.c.h.b16 %v2379
      %v3009 = vunpack.c.l.b16 %v2380
      %v3010 = vunpack.c.h.b16 %v2380
      %v3011 = vunpack.c.l.b16 %v2381
      %v3012 = vunpack.c.h.b16 %v2381
      %v3013 = vunpack.c.l.b16 %v2382
      %v3014 = vunpack.c.h.b16 %v2382
      %v3015 = vunpack.c.l.b16 %v2383
      %v3016 = vunpack.c.l.b16 %v2384
      %v3017 = vunpack.c.h.b16 %v2384
      %v3018 = vunpack.c.l.b16 %v2385
      %v3019 = vunpack.c.h.b16 %v2385
      %v3020 = vunpack.c.l.b16 %v2386
      %v3021 = vunpack.c.h.b16 %v2386
      %v3022 = vunpack.c.l.b16 %v2387
      %v3023 = vunpack.c.h.b16 %v2387
      %v3024 = vunpack.c.l.b16 %v2388
      %v3025 = vunpack.c.l.b16 %v2389
      %v3026 = vunpack.c.h.b16 %v2389
      %v3027 = vunpack.c.l.b16 %v2390
      %v3028 = vunpack.c.h.b16 %v2390
      %v3029 = vunpack.c.l.b16 %v2391
      %v3030 = vunpack.c.h.b16 %v2391
      %v3031 = vunpack.c.l.b16 %v2392
      %v3032 = vunpack.c.h.b16 %v2392
      %v3033 = vunpack.c.l.b16 %v2393
      %v3034 = vunpack.c.l.b16 %v2394
      %v3035 = vunpack.c.h.b16 %v2394
      %v3036 = vunpack.c.l.b16 %v2395
      %v3037 = vunpack.c.h.b16 %v2395
      %v3038 = vunpack.c.l.b16 %v2396
      %v3039 = vunpack.c.h.b16 %v2396
      %v3040 = vunpack.c.l.b16 %v2397
      %v3041 = vunpack.c.h.b16 %v2397
      %v3042 = vunpack.c.l.b16 %v2398
      %v3043 = vunpack.c.l.b16 %v2399
      %v3044 = vunpack.c.h.b16 %v2399
      %v3045 = vunpack.c.l.b16 %v2400
      %v3046 = vunpack.c.h.b16 %v2400
      %v3047 = vunpack.c.l.b16 %v2401
      %v3048 = vunpack.c.h.b16 %v2401
      %v3049 = vunpack.c.l.b16 %v2402
      %v3050 = vunpack.c.h.b16 %v2402
      %v3051 = vunpack.c.l.b16 %v2403
      %v3052 = vpack.c.b16 %v2737, %v2728
      %v3053 = vpack.c.b16 %v2738, %v2729
      %v3054 = vpack.c.b16 %v2739, %v2730
      %v3055 = vpack.c.b16 %v2740, %v2731
      %v3056 = vpack.c.b16 %v2741, %v2732
      %v3057 = vpack.c.b16 %v2742, %v2733
      %v3058 = vpack.c.b16 %v2743, %v2734
      %v3059 = vpack.c.b16 %v2744, %v2735
      %v3060 = vpack.c.b16 %v2745, %v2736
      %v3061 = vpack.c.b16 %v2755, %v2746
      %v3062 = vpack.c.b16 %v2756, %v2747
      %v3063 = vpack.c.b16 %v2757, %v2748
      %v3064 = vpack.c.b16 %v2758, %v2749
      %v3065 = vpack.c.b16 %v2759, %v2750
      %v3066 = vpack.c.b16 %v2760, %v2751
      %v3067 = vpack.c.b16 %v2761, %v2752
      %v3068 = vpack.c.b16 %v2762, %v2753
      %v3069 = vpack.c.b16 %v2763, %v2754
      %v3070 = vpack.c.b16 %v2773, %v2764
      %v3071 = vpack.c.b16 %v2774, %v2765
      %v3072 = vpack.c.b16 %v2775, %v2766
      %v3073 = vpack.c.b16 %v2776, %v2767
      %v3074 = vpack.c.b16 %v2777, %v2768
      %v3075 = vpack.c.b16 %v2778, %v2769
      %v3076 = vpack.c.b16 %v2779, %v2770
      %v3077 = vpack.c.b16 %v2780, %v2771
      %v3078 = vpack.c.b16 %v2781, %v2772
      %v3079 = vpack.c.b16 %v2791, %v2782
      %v3080 = vpack.c.b16 %v2792, %v2783
      %v3081 = vpack.c.b16 %v2793, %v2784
      %v3082 = vpack.c.b16 %v2794, %v2785
      %v3083 = vpack.c.b16 %v2795, %v2786
      %v3084 = vpack.c.b16 %v2796, %v2787
      %v3085 = vpack.c.b16 %v2797, %v2788
      %v3086 = vpack.c.b16 %v2798, %v2789
      %v3087 = vpack.c.b16 %v2799, %v2790
      %v3088 = vpack.c.b16 %v2809, %v2800
      %v3089 = vpack.c.b16 %v2810, %v2801
      %v3090 = vpack.c.b16 %v2811, %v2802
      %v3091 = vpack.c.b16 %v2812, %v2803
      %v3092 = vpack.c.b16 %v2813, %v2804
      %v3093 = vpack.c.b16 %v2814, %v2805
      %v3094 = vpack.c.b16 %v2815, %v2806
      %v3095 = vpack.c.b16 %v2816, %v2807
      %v3096 = vpack.c.b16 %v2817, %v2808
      %v3097 = vpack.c.b16 %v2827, %v2818
      %v3098 = vpack.c.b16 %v2828, %v2819
      %v3099 = vpack.c.b16 %v2829, %v2820
      %v3100 = vpack.c.b16 %v2830, %v2821
      %v3101 = vpack.c.b16 %v2831, %v2822
      %v3102 = vpack.c.b16 %v2832, %v2823
      %v3103 = vpack.c.b16 %v2833, %v2824
      %v3104 = vpack.c.b16 %v2834, %v2825
      %v3105 = vpack.c.b16 %v2835, %v2826
      %v3106 = vpack.c.b16 %v2845, %v2836
      %v3107 = vpack.c.b16 %v2846, %v2837
      %v3108 = vpack.c.b16 %v2847, %v2838
      %v3109 = vpack.c.b16 %v2848, %v2839
      %v3110 = vpack.c.b16 %v2849, %v2840
      %v3111 = vpack.c.b16 %v2850, %v2841
      %v3112 = vpack.c.b16 %v2851, %v2842
      %v3113 = vpack.c.b16 %v2852, %v2843
      %v3114 = vpack.c.b16 %v2853, %v2844
      %v3115 = vpack.c.b16 %v2863, %v2854
      %v3116 = vpack.c.b16 %v2864, %v2855
      %v3117 = vpack.c.b16 %v2865, %v2856
      %v3118 = vpack.c.b16 %v2866, %v2857
      %v3119 = vpack.c.b16 %v2867, %v2858
      %v3120 = vpack.c.b16 %v2868, %v2859
      %v3121 = vpack.c.b16 %v2869, %v2860
      %v3122 = vpack.c.b16 %v2870, %v2861
      %v3123 = vpack.c.b16 %v2871, %v2862
      %v3124 = vpack.c.b16 %v2881, %v2872
      %v3125 = vpack.c.b16 %v2882, %v2873
      %v3126 = vpack.c.b16 %v2883, %v2874
      %v3127 = vpack.c.b16 %v2884, %v2875
      %v3128 = vpack.c.b16 %v2885, %v2876
      %v3129 = vpack.c.b16 %v2886, %v2877
      %v3130 = vpack.c.b16 %v2887, %v2878
      %v3131 = vpack.c.b16 %v2888, %v2879
      %v3132 = vpack.c.b16 %v2889, %v2880
      %v3133 = vpack.c.b16 %v2899, %v2890
      %v3134 = vpack.c.b16 %v2900, %v2891
      %v3135 = vpack.c.b16 %v2901, %v2892
      %v3136 = vpack.c.b16 %v2902, %v2893
      %v3137 = vpack.c.b16 %v2903, %v2894
      %v3138 = vpack.c.b16 %v2904, %v2895
      %v3139 = vpack.c.b16 %v2905, %v2896
      %v3140 = vpack.c.b16 %v2906, %v2897
      %v3141 = vpack.c.b16 %v2907, %v2898
      %v3142 = vpack.c.b16 %v2917, %v2908
      %v3143 = vpack.c.b16 %v2918, %v2909
      %v3144 = vpack.c.b16 %v2919, %v2910
      %v3145 = vpack.c.b16 %v2920, %v2911
      %v3146 = vpack.c.b16 %v2921, %v2912
      %v3147 = vpack.c.b16 %v2922, %v2913
      %v3148 = vpack.c.b16 %v2923, %v2914
      %v3149 = vpack.c.b16 %v2924, %v2915
      %v3150 = vpack.c.b16 %v2925, %v2916
      %v3151 = vpack.c.b16 %v2935, %v2926
      %v3152 = vpack.c.b16 %v2936, %v2927
      %v3153 = vpack.c.b16 %v2937, %v2928
      %v3154 = vpack.c.b16 %v2938, %v2929
      %v3155 = vpack.c.b16 %v2939, %v2930
      %v3156 = vpack.c.b16 %v2940, %v2931
      %v3157 = vpack.c.b16 %v2941, %v2932
      %v3158 = vpack.c.b16 %v2942, %v2933
      %v3159 = vpack.c.b16 %v2943, %v2934
      %v3160 = vpack.c.b16 %v2953, %v2944
      %v3161 = vpack.c.b16 %v2954, %v2945
      %v3162 = vpack.c.b16 %v2955, %v2946
      %v3163 = vpack.c.b16 %v2956, %v2947
      %v3164 = vpack.c.b16 %v2957, %v2948
      %v3165 = vpack.c.b16 %v2958, %v2949
      %v3166 = vpack.c.b16 %v2959, %v2950
      %v3167 = vpack.c.b16 %v2960, %v2951
      %v3168 = vpack.c.b16 %v2961, %v2952
      %v3169 = vpack.c.b16 %v2971, %v2962
      %v3170 = vpack.c.b16 %v2972, %v2963
      %v3171 = vpack.c.b16 %v2973, %v2964
      %v3172 = vpack.c.b16 %v2974, %v2965
      %v3173 = vpack.c.b16 %v2975, %v2966
      %v3174 = vpack.c.b16 %v2976, %v2967
      %v3175 = vpack.c.b16 %v2977, %v2968
      %v3176 = vpack.c.b16 %v2978, %v2969
      %v3177 = vpack.c.b16 %v2979, %v2970
      %v3178 = vpack.c.b16 %v2989, %v2980
      %v3179 = vpack.c.b16 %v2990, %v2981
      %v3180 = vpack.c.b16 %v2991, %v2982
      %v3181 = vpack.c.b16 %v2992, %v2983
      %v3182 = vpack.c.b16 %v2993, %v2984
      %v3183 = vpack.c.b16 %v2994, %v2985
      %v3184 = vpack.c.b16 %v2995, %v2986
      %v3185 = vpack.c.b16 %v2996, %v2987
      %v3186 = vpack.c.b16 %v2997, %v2988
      %v3187 = vpack.c.b16 %v3007, %v2998
      %v3188 = vpack.c.b16 %v3008, %v2999
      %v3189 = vpack.c.b16 %v3009, %v3000
      %v3190 = vpack.c.b16 %v3010, %v3001
      %v3191 = vpack.c.b16 %v3011, %v3002
      %v3192 = vpack.c.b16 %v3012, %v3003
      %v3193 = vpack.c.b16 %v3013, %v3004
      %v3194 = vpack.c.b16 %v3014, %v3005
      %v3195 = vpack.c.b16 %v3015, %v3006
      %v3196 = vpack.c.b16 %v3025, %v3016
      %v3197 = vpack.c.b16 %v3026, %v3017
      %v3198 = vpack.c.b16 %v3027, %v3018
      %v3199 = vpack.c.b16 %v3028, %v3019
      %v3200 = vpack.c.b16 %v3029, %v3020
      %v3201 = vpack.c.b16 %v3030, %v3021
      %v3202 = vpack.c.b16 %v3031, %v3022
      %v3203 = vpack.c.b16 %v3032, %v3023
      %v3204 = vpack.c.b16 %v3033, %v3024
      %v3205 = vpack.c.b16 %v3043, %v3034
      %v3206 = vpack.c.b16 %v3044, %v3035
      %v3207 = vpack.c.b16 %v3045, %v3036
      %v3208 = vpack.c.b16 %v3046, %v3037
      %v3209 = vpack.c.b16 %v3047, %v3038
      %v3210 = vpack.c.b16 %v3048, %v3039
      %v3211 = vpack.c.b16 %v3049, %v3040
      %v3212 = vpack.c.b16 %v3050, %v3041
      %v3213 = vpack.c.b16 %v3051, %v3042
      %v3520 = vunpack.c.l.b16 %v2404
      %v3521 = vunpack.c.l.b16 %v2405
      %v3522 = vunpack.c.l.b16 %v2406
      %v3523 = vunpack.c.l.b16 %v2407
      %v3524 = vunpack.c.l.b16 %v2408
      %v3525 = vunpack.c.l.b16 %v2409
      %v3526 = vunpack.c.l.b16 %v2410
      %v3527 = vunpack.c.l.b16 %v2411
      %v3528 = vunpack.c.l.b16 %v2412
      %v3529 = vunpack.c.l.b16 %v2413
      %v3530 = vunpack.c.l.b16 %v2414
      %v3531 = vunpack.c.l.b16 %v2415
      %v3532 = vunpack.c.l.b16 %v2416
      %v3533 = vunpack.c.l.b16 %v2417
      %v3534 = vunpack.c.l.b16 %v2418
      %v3535 = vunpack.c.l.b16 %v2419
      %v3536 = vunpack.c.l.b16 %v2420
      %v3537 = vunpack.c.l.b16 %v2421
      %v3538 = vunpack.c.l.b16 %v2422
      %v3539 = vunpack.c.l.b16 %v2423
      %v3540 = vunpack.c.l.b16 %v2424
      %v3541 = vunpack.c.l.b16 %v2425
      %v3542 = vunpack.c.l.b16 %v2426
      %v3543 = vunpack.c.l.b16 %v2427
      %v3544 = vunpack.c.l.b16 %v2428
      %v3545 = vunpack.c.l.b16 %v2429
      %v3546 = vunpack.c.l.b16 %v2430
      %v3547 = vunpack.c.l.b16 %v2431
      %v3548 = vunpack.c.l.b16 %v2432
      %v3549 = vunpack.c.l.b16 %v2433
      %v3550 = vunpack.c.l.b16 %v2434
      %v3551 = vunpack.c.l.b16 %v2435
      %v3552 = vunpack.c.l.b16 %v2436
      %v3553 = vunpack.c.l.b16 %v2437
      %v3554 = vunpack.c.l.b16 %v2438
      %v3555 = vunpack.c.l.b16 %v2439
      %v3556 = vunpack.c.l.b16 %v2440
      %v3557 = vunpack.c.l.b16 %v2441
      %v3558 = vunpack.c.l.b16 %v2442
      %v3559 = vunpack.c.l.b16 %v2443
      %v3560 = vunpack.c.l.b16 %v2444
      %v3561 = vunpack.c.l.b16 %v2445
      %v3562 = vunpack.c.l.b16 %v2446
      %v3563 = vunpack.c.l.b16 %v2447
      %v3564 = vunpack.c.l.b16 %v2448
      %v3565 = vunpack.c.l.b16 %v2449
      %v3566 = vunpack.c.l.b16 %v2450
      %v3567 = vunpack.c.l.b16 %v2451
      %v3568 = vunpack.c.l.b16 %v2452
      %v3569 = vunpack.c.l.b16 %v2453
      %v3570 = vunpack.c.l.b16 %v2454
      %v3571 = vunpack.c.l.b16 %v2455
      %v3572 = vunpack.c.l.b16 %v2456
      %v3573 = vunpack.c.l.b16 %v2457
      %v3574 = vunpack.c.l.b16 %v2458
      %v3575 = vunpack.c.l.b16 %v2459
      %v3576 = vunpack.c.l.b16 %v2460
      %v3577 = vunpack.c.l.b16 %v2461
      %v3578 = vunpack.c.l.b16 %v2462
      %v3579 = vunpack.c.l.b16 %v2463
      %v3580 = vunpack.c.l.b16 %v2464
      %v3581 = vunpack.c.l.b16 %v2465
      %v3582 = vunpack.c.l.b16 %v2466
      %v3583 = vunpack.c.l.b16 %v2467
      %v3584 = vunpack.c.l.b16 %v2468
      %v3585 = vunpack.c.l.b16 %v2469
      %v3586 = vunpack.c.l.b16 %v2470
      %v3587 = vunpack.c.l.b16 %v2471
      %v3588 = vunpack.c.l.b16 %v2472
      %v3589 = vunpack.c.l.b16 %v2473
      %v3590 = vunpack.c.l.b16 %v2474
      %v3591 = vunpack.c.l.b16 %v2475
      %v3592 = vunpack.c.l.b16 %v2476
      %v3593 = vunpack.c.l.b16 %v2477
      %v3594 = vunpack.c.l.b16 %v2478
      %v3595 = vunpack.c.l.b16 %v2479
      %v3596 = vunpack.c.l.b16 %v2480
      %v3597 = vunpack.c.l.b16 %v2481
      %v3598 = vunpack.c.l.b16 %v2482
      %v3599 = vunpack.c.l.b16 %v2483
      %v3600 = vunpack.c.l.b16 %v2484
      %v3601 = vunpack.c.l.b16 %v2485
      %v3602 = vunpack.c.l.b16 %v2486
      %v3603 = vunpack.c.l.b16 %v2487
      %v3604 = vunpack.c.l.b16 %v2488
      %v3605 = vunpack.c.l.b16 %v2489
      %v3606 = vunpack.c.l.b16 %v2490
      %v3607 = vunpack.c.l.b16 %v2491
      %v3608 = vunpack.c.l.b16 %v2492
      %v3609 = vunpack.c.l.b16 %v2493
      %v3610 = vunpack.c.l.b16 %v2494
      %v3611 = vunpack.c.l.b16 %v2495
      %v3612 = vunpack.c.l.b16 %v2496
      %v3613 = vunpack.c.l.b16 %v2497
      %v3614 = vunpack.c.l.b16 %v2498
      %v3615 = vunpack.c.l.b16 %v2499
      %v3616 = vunpack.c.l.b16 %v2500
      %v3617 = vunpack.c.l.b16 %v2501
      %v3618 = vunpack.c.l.b16 %v2502
      %v3619 = vunpack.c.l.b16 %v2503
      %v3620 = vunpack.c.l.b16 %v2504
      %v3621 = vunpack.c.l.b16 %v2505
      %v3622 = vunpack.c.l.b16 %v2506
      %v3623 = vunpack.c.l.b16 %v2507
      %v3624 = vunpack.c.l.b16 %v2508
      %v3625 = vunpack.c.l.b16 %v2509
      %v3626 = vunpack.c.l.b16 %v2510
      %v3627 = vunpack.c.l.b16 %v2511
      %v3628 = vunpack.c.l.b16 %v2512
      %v3629 = vunpack.c.l.b16 %v2513
      %v3630 = vunpack.c.l.b16 %v2514
      %v3631 = vunpack.c.l.b16 %v2515
      %v3632 = vunpack.c.l.b16 %v2516
      %v3633 = vunpack.c.l.b16 %v2517
      %v3634 = vunpack.c.l.b16 %v2518
      %v3635 = vunpack.c.l.b16 %v2519
      %v3636 = vunpack.c.l.b16 %v2520
      %v3637 = vunpack.c.l.b16 %v2521
      %v3638 = vunpack.c.l.b16 %v2522
      %v3639 = vunpack.c.l.b16 %v2523
      %v3640 = vunpack.c.l.b16 %v2524
      %v3641 = vunpack.c.l.b16 %v2525
      %v3642 = vunpack.c.l.b16 %v2526
      %v3643 = vunpack.c.l.b16 %v2527
      %v3644 = vunpack.c.l.b16 %v2528
      %v3645 = vunpack.c.l.b16 %v2529
      %v3646 = vunpack.c.l.b16 %v2530
      %v3647 = vunpack.c.l.b16 %v2531
      %v3648 = vunpack.c.l.b16 %v2532
      %v3649 = vunpack.c.l.b16 %v2533
      %v3650 = vunpack.c.l.b16 %v2534
      %v3651 = vunpack.c.l.b16 %v2535
      %v3652 = vunpack.c.l.b16 %v2536
      %v3653 = vunpack.c.l.b16 %v2537
      %v3654 = vunpack.c.l.b16 %v2538
      %v3655 = vunpack.c.l.b16 %v2539
      %v3656 = vunpack.c.l.b16 %v2540
      %v3657 = vunpack.c.l.b16 %v2541
      %v3658 = vunpack.c.l.b16 %v2542
      %v3659 = vunpack.c.l.b16 %v2543
      %v3660 = vunpack.c.l.b16 %v2544
      %v3661 = vunpack.c.l.b16 %v2545
      %v3662 = vunpack.c.l.b16 %v2546
      %v3663 = vunpack.c.l.b16 %v2547
      %v3664 = vpack.c.b16 %v3521, %v3520
      %v3665 = vpack.c.b16 %v3523, %v3522
      %v3666 = vpack.c.b16 %v3525, %v3524
      %v3667 = vpack.c.b16 %v3527, %v3526
      %v3668 = vpack.c.b16 %v3529, %v3528
      %v3669 = vpack.c.b16 %v3531, %v3530
      %v3670 = vpack.c.b16 %v3533, %v3532
      %v3671 = vpack.c.b16 %v3535, %v3534
      %v3672 = vpack.c.b16 %v3537, %v3536
      %v3673 = vpack.c.b16 %v3539, %v3538
      %v3674 = vpack.c.b16 %v3541, %v3540
      %v3675 = vpack.c.b16 %v3543, %v3542
      %v3676 = vpack.c.b16 %v3545, %v3544
      %v3677 = vpack.c.b16 %v3547, %v3546
      %v3678 = vpack.c.b16 %v3549, %v3548
      %v3679 = vpack.c.b16 %v3551, %v3550
      %v3680 = vpack.c.b16 %v3553, %v3552
      %v3681 = vpack.c.b16 %v3555, %v3554
      %v3682 = vpack.c.b16 %v3557, %v3556
      %v3683 = vpack.c.b16 %v3559, %v3558
      %v3684 = vpack.c.b16 %v3561, %v3560
      %v3685 = vpack.c.b16 %v3563, %v3562
      %v3686 = vpack.c.b16 %v3565, %v3564
      %v3687 = vpack.c.b16 %v3567, %v3566
      %v3688 = vpack.c.b16 %v3569, %v3568
      %v3689 = vpack.c.b16 %v3571, %v3570
      %v3690 = vpack.c.b16 %v3573, %v3572
      %v3691 = vpack.c.b16 %v3575, %v3574
      %v3692 = vpack.c.b16 %v3577, %v3576
      %v3693 = vpack.c.b16 %v3579, %v3578
      %v3694 = vpack.c.b16 %v3581, %v3580
      %v3695 = vpack.c.b16 %v3583, %v3582
      %v3696 = vpack.c.b16 %v3585, %v3584
      %v3697 = vpack.c.b16 %v3587, %v3586
      %v3698 = vpack.c.b16 %v3589, %v3588
      %v3699 = vpack.c.b16 %v3591, %v3590
      %v3700 = vpack.c.b16 %v3593, %v3592
      %v3701 = vpack.c.b16 %v3595, %v3594
      %v3702 = vpack.c.b16 %v3597, %v3596
      %v3703 = vpack.c.b16 %v3599, %v3598
      %v3704 = vpack.c.b16 %v3601, %v3600
      %v3705 = vpack.c.b16 %v3603, %v3602
      %v3706 = vpack.c.b16 %v3605, %v3604
      %v3707 = vpack.c.b16 %v3607, %v3606
      %v3708 = vpack.c.b16 %v3609, %v3608
      %v3709 = vpack.c.b16 %v3611, %v3610
      %v3710 = vpack.c.b16 %v3613, %v3612
      %v3711 = vpack.c.b16 %v3615, %v3614
      %v3712 = vpack.c.b16 %v3617, %v3616
      %v3713 = vpack.c.b16 %v3619, %v3618
      %v3714 = vpack.c.b16 %v3621, %v3620
      %v3715 = vpack.c.b16 %v3623, %v3622
      %v3716 = vpack.c.b16 %v3625, %v3624
      %v3717 = vpack.c.b16 %v3627, %v3626
      %v3718 = vpack.c.b16 %v3629, %v3628
      %v3719 = vpack.c.b16 %v3631, %v3630
      %v3720 = vpack.c.b16 %v3633, %v3632
      %v3721 = vpack.c.b16 %v3635, %v3634
      %v3722 = vpack.c.b16 %v3637, %v3636
      %v3723 = vpack.c.b16 %v3639, %v3638
      %v3724 = vpack.c.b16 %v3641, %v3640
      %v3725 = vpack.c.b16 %v3643, %v3642
      %v3726 = vpack.c.b16 %v3645, %v3644
      %v3727 = vpack.c.b16 %v3647, %v3646
      %v3728 = vpack.c.b16 %v3649, %v3648
      %v3729 = vpack.c.b16 %v3651, %v3650
      %v3730 = vpack.c.b16 %v3653, %v3652
      %v3731 = vpack.c.b16 %v3655, %v3654
      %v3732 = vpack.c.b16 %v3657, %v3656
      %v3733 = vpack.c.b16 %v3659, %v3658
      %v3734 = vpack.c.b16 %v3661, %v3660
      %v3735 = vpack.c.b16 %v3663, %v3662
      %3808 = vmatprep.subr.bf16.mxu0 0
      %3809 = vmatpush1.bf16.msra.mxu0 %v3664
      %3810 = vmatprep.subr.bf16.mxu0 0
      %3811 = vmatpush1.bf16.msra.mxu0 %v3665
      %3812 = vmatprep.subr.bf16.mxu0 0
      %3813 = vmatpush1.bf16.msra.mxu0 %v3666
      %3814 = vmatprep.subr.bf16.mxu0 0
      %3815 = vmatpush1.bf16.msra.mxu0 %v3667
      %3816 = vmatprep.subr.bf16.mxu0 0
      %3817 = vmatpush1.bf16.msra.mxu0 %v3668
      %3818 = vmatprep.subr.bf16.mxu0 0
      %3819 = vmatpush1.bf16.msra.mxu0 %v3669
      %3820 = vmatprep.subr.bf16.mxu0 0
      %3821 = vmatpush1.bf16.msra.mxu0 %v3670
      %3822 = vmatprep.subr.bf16.mxu0 0
      %3823 = vmatpush1.bf16.msra.mxu0 %v3671
      %3824 = vmatprep.subr.bf16.mxu0 0
      %3825 = vmatpush1.bf16.msra.mxu0 %v3672
      %3826 = vmatprep.subr.bf16.mxu0 0
      %3827 = vmatpush1.bf16.msra.mxu0 %v3673
      %3828 = vmatprep.subr.bf16.mxu0 0
      %3829 = vmatpush1.bf16.msra.mxu0 %v3674
      %3830 = vmatprep.subr.bf16.mxu0 0
      %3831 = vmatpush1.bf16.msra.mxu0 %v3675
      %3832 = vmatprep.subr.bf16.mxu0 0
      %3833 = vmatpush1.bf16.msra.mxu0 %v3676
      %3834 = vmatprep.subr.bf16.mxu0 0
      %3835 = vmatpush1.bf16.msra.mxu0 %v3677
      %3836 = vmatprep.subr.bf16.mxu0 0
      %3837 = vmatpush1.bf16.msra.mxu0 %v3678
      %3838 = vmatprep.subr.bf16.mxu0 0
      %3839 = vmatpush1.bf16.msra.mxu0 %v3679
      %3840 = vmatprep.mubr.bf16.mxu0 %v3053
      %3841 = vmatmul.mubr.bf16.gmra.mrb[0].mxu0 %v3052
      %v3842 = vpop.f32.mrb[0].mxu0
      %v3843 = vadd.f32 0.0, %v3842
      %v3844 = vpop.f32.mrb[0].mxu0
      %v3845 = vpop.f32.mrb[0].mxu0
      %v3846 = vadd.f32 0.0, %v3845
      %v3847 = vpop.f32.mrb[0].mxu0
      %3848 = vmatprep.mubr.bf16.mxu0 %v3062
      %3849 = vmatmul.mubr.bf16.gmra.mrb[0].mxu0 %v3061
      %v3850 = vpop.f32.mrb[0].mxu0
      %v3851 = vadd.f32 0.0, %v3850
      %v3852 = vpop.f32.mrb[0].mxu0
      %v3853 = vpop.f32.mrb[0].mxu0
      %v3854 = vadd.f32 0.0, %v3853
      %v3855 = vpop.f32.mrb[0].mxu0
      %3856 = vmatprep.mubr.bf16.mxu0 %v3071
      %3857 = vmatmul.mubr.bf16.gmra.mrb[0].mxu0 %v3070
      %v3858 = vpop.f32.mrb[0].mxu0
      %v3859 = vadd.f32 0.0, %v3858
      %v3860 = vpop.f32.mrb[0].mxu0
      %v3861 = vpop.f32.mrb[0].mxu0
      %v3862 = vadd.f32 0.0, %v3861
      %v3863 = vpop.f32.mrb[0].mxu0
      %3864 = vmatprep.mubr.bf16.mxu0 %v3080
      %3865 = vmatmul.mubr.bf16.gmra.mrb[0].mxu0 %v3079
      %v3866 = vpop.f32.mrb[0].mxu0
      %v3867 = vadd.f32 0.0, %v3866
      %v3868 = vpop.f32.mrb[0].mxu0
      %v3869 = vpop.f32.mrb[0].mxu0
      %v3870 = vadd.f32 0.0, %v3869
      %v3871 = vpop.f32.mrb[0].mxu0
      %3872 = vmatprep.mubr.bf16.mxu0 %v3089
      %3873 = vmatmul.mubr.bf16.gmra.mrb[0].mxu0 %v3088
      %v3874 = vpop.f32.mrb[0].mxu0
      %v3875 = vadd.f32 0.0, %v3874
      %v3876 = vpop.f32.mrb[0].mxu0
      %v3877 = vpop.f32.mrb[0].mxu0
      %v3878 = vadd.f32 0.0, %v3877
      %v3879 = vpop.f32.mrb[0].mxu0
      %3880 = vmatprep.mubr.bf16.mxu0 %v3098
      %3881 = vmatmul.mubr.bf16.gmra.mrb[0].mxu0 %v3097
      %v3882 = vpop.f32.mrb[0].mxu0
      %v3883 = vadd.f32 0.0, %v3882
      %v3884 = vpop.f32.mrb[0].mxu0
      %v3885 = vpop.f32.mrb[0].mxu0
      %v3886 = vadd.f32 0.0, %v3885
      %v3887 = vpop.f32.mrb[0].mxu0
      %3888 = vmatprep.mubr.bf16.mxu0 %v3107
      %3889 = vmatmul.mubr.bf16.gmra.mrb[0].mxu0 %v3106
      %v3890 = vpop.f32.mrb[0].mxu0
      %v3891 = vadd.f32 0.0, %v3890
      %v3892 = vpop.f32.mrb[0].mxu0
      %v3893 = vpop.f32.mrb[0].mxu0
      %v3894 = vadd.f32 0.0, %v3893
      %v3895 = vpop.f32.mrb[0].mxu0
      %3896 = vmatprep.mubr.bf16.mxu0 %v3116
      %3897 = vmatmul.mubr.bf16.gmra.mrb[0].mxu0 %v3115
      %v3898 = vpop.f32.mrb[0].mxu0
      %v3899 = vadd.f32 0.0, %v3898
      %v3900 = vpop.f32.mrb[0].mxu0
      %v3901 = vpop.f32.mrb[0].mxu0
      %v3902 = vadd.f32 0.0, %v3901
      %v3903 = vpop.f32.mrb[0].mxu0
      %3904 = vmatprep.mubr.bf16.mxu0 %v3125
      %3905 = vmatmul.mubr.bf16.gmra.mrb[0].mxu0 %v3124
      %v3906 = vpop.f32.mrb[0].mxu0
      %v3907 = vadd.f32 0.0, %v3906
      %v3908 = vpop.f32.mrb[0].mxu0
      %v3909 = vpop.f32.mrb[0].mxu0
      %v3910 = vadd.f32 0.0, %v3909
      %v3911 = vpop.f32.mrb[0].mxu0
      %3912 = vmatprep.mubr.bf16.mxu0 %v3134
      %3913 = vmatmul.mubr.bf16.gmra.mrb[0].mxu0 %v3133
      %v3914 = vpop.f32.mrb[0].mxu0
      %v3915 = vadd.f32 0.0, %v3914
      %v3916 = vpop.f32.mrb[0].mxu0
      %v3917 = vpop.f32.mrb[0].mxu0
      %v3918 = vadd.f32 0.0, %v3917
      %v3919 = vpop.f32.mrb[0].mxu0
      %3920 = vmatprep.mubr.bf16.mxu0 %v3143
      %3921 = vmatmul.mubr.bf16.gmra.mrb[0].mxu0 %v3142
      %v3922 = vpop.f32.mrb[0].mxu0
      %v3923 = vadd.f32 0.0, %v3922
      %v3924 = vpop.f32.mrb[0].mxu0
      %v3925 = vpop.f32.mrb[0].mxu0
      %v3926 = vadd.f32 0.0, %v3925
      %v3927 = vpop.f32.mrb[0].mxu0
      %3928 = vmatprep.mubr.bf16.mxu0 %v3152
      %3929 = vmatmul.mubr.bf16.gmra.mrb[0].mxu0 %v3151
      %v3930 = vpop.f32.mrb[0].mxu0
      %v3931 = vadd.f32 0.0, %v3930
      %v3932 = vpop.f32.mrb[0].mxu0
      %v3933 = vpop.f32.mrb[0].mxu0
      %v3934 = vadd.f32 0.0, %v3933
      %v3935 = vpop.f32.mrb[0].mxu0
      %3936 = vmatprep.mubr.bf16.mxu0 %v3161
      %3937 = vmatmul.mubr.bf16.gmra.mrb[0].mxu0 %v3160
      %v3938 = vpop.f32.mrb[0].mxu0
      %v3939 = vadd.f32 0.0, %v3938
      %v3940 = vpop.f32.mrb[0].mxu0
      %v3941 = vpop.f32.mrb[0].mxu0
      %v3942 = vadd.f32 0.0, %v3941
      %v3943 = vpop.f32.mrb[0].mxu0
      %3944 = vmatprep.mubr.bf16.mxu0 %v3170
      %3945 = vmatmul.mubr.bf16.gmra.mrb[0].mxu0 %v3169
      %v3946 = vpop.f32.mrb[0].mxu0
      %v3947 = vadd.f32 0.0, %v3946
      %v3948 = vpop.f32.mrb[0].mxu0
      %v3949 = vpop.f32.mrb[0].mxu0
      %v3950 = vadd.f32 0.0, %v3949
      %v3951 = vpop.f32.mrb[0].mxu0
      %3952 = vmatprep.mubr.bf16.mxu0 %v3179
      %3953 = vmatmul.mubr.bf16.gmra.mrb[0].mxu0 %v3178
      %v3954 = vpop.f32.mrb[0].mxu0
      %v3955 = vadd.f32 0.0, %v3954
      %v3956 = vpop.f32.mrb[0].mxu0
      %v3957 = vpop.f32.mrb[0].mxu0
      %v3958 = vadd.f32 0.0, %v3957
      %v3959 = vpop.f32.mrb[0].mxu0
      %3960 = vmatprep.mubr.bf16.mxu0 %v3188
      %3961 = vmatmul.mubr.bf16.gmra.mrb[0].mxu0 %v3187
      %v3962 = vpop.f32.mrb[0].mxu0
      %v3963 = vadd.f32 0.0, %v3962
      %v3964 = vpop.f32.mrb[0].mxu0
      %v3965 = vpop.f32.mrb[0].mxu0
      %v3966 = vadd.f32 0.0, %v3965
      %v3967 = vpop.f32.mrb[0].mxu0
      %3968 = vmatprep.mubr.bf16.mxu0 %v3197
      %3969 = vmatmul.mubr.bf16.gmra.mrb[0].mxu0 %v3196
      %v3970 = vpop.f32.mrb[0].mxu0
      %v3971 = vadd.f32 0.0, %v3970
      %v3972 = vpop.f32.mrb[0].mxu0
      %v3973 = vpop.f32.mrb[0].mxu0
      %v3974 = vadd.f32 0.0, %v3973
      %v3975 = vpop.f32.mrb[0].mxu0
      %3976 = vmatprep.mubr.bf16.mxu0 %v3206
      %3977 = vmatmul.mubr.bf16.gmra.mrb[0].mxu0 %v3205
      %v3978 = vpop.f32.mrb[0].mxu0
      %v3979 = vadd.f32 0.0, %v3978
      %v3980 = vpop.f32.mrb[0].mxu0
      %v3981 = vpop.f32.mrb[0].mxu0
      %v3982 = vadd.f32 0.0, %v3981
      %v3983 = vpop.f32.mrb[0].mxu0
      %3984 = vdwg.mxu0
      %3985 = vmatprep.subr.bf16.mxu0 0
      %3986 = vmatpush1.bf16.msra.mxu0 %v3680
      %3987 = vmatprep.subr.bf16.mxu0 0
      %3988 = vmatpush1.bf16.msra.mxu0 %v3681
      %3989 = vmatprep.subr.bf16.mxu0 0
      %3990 = vmatpush1.bf16.msra.mxu0 %v3682
      %3991 = vmatprep.subr.bf16.mxu0 0
      %3992 = vmatpush1.bf16.msra.mxu0 %v3683
      %3993 = vmatprep.subr.bf16.mxu0 0
      %3994 = vmatpush1.bf16.msra.mxu0 %v3684
      %3995 = vmatprep.subr.bf16.mxu0 0
      %3996 = vmatpush1.bf16.msra.mxu0 %v3685
      %3997 = vmatprep.subr.bf16.mxu0 0
      %3998 = vmatpush1.bf16.msra.mxu0 %v3686
      %3999 = vmatprep.subr.bf16.mxu0 0
      %4000 = vmatpush1.bf16.msra.mxu0 %v3687
      %4001 = vmatprep.subr.bf16.mxu0 0
      %4002 = vmatpush1.bf16.msra.mxu0 %v3688
      %4003 = vmatprep.subr.bf16.mxu0 0
      %4004 = vmatpush1.bf16.msra.mxu0 %v3689
      %4005 = vmatprep.subr.bf16.mxu0 0
      %4006 = vmatpush1.bf16.msra.mxu0 %v3690
      %4007 = vmatprep.subr.bf16.mxu0 0
      %4008 = vmatpush1.bf16.msra.mxu0 %v3691
      %4009 = vmatprep.subr.bf16.mxu0 0
      %4010 = vmatpush1.bf16.msra.mxu0 %v3692
      %4011 = vmatprep.subr.bf16.mxu0 0
      %4012 = vmatpush1.bf16.msra.mxu0 %v3693
      %4013 = vmatprep.subr.bf16.mxu0 0
      %4014 = vmatpush1.bf16.msra.mxu0 %v3694
      %4015 = vmatprep.subr.bf16.mxu0 0
      %4016 = vmatpush1.bf16.msra.mxu0 %v3695
      %4017 = vmatprep.mubr.bf16.mxu0 %v3055
      %4018 = vmatmul.mubr.bf16.gmra.mrb[0].mxu0 %v3054
      %v4019 = vpop.f32.mrb[0].mxu0
      %v4020 = vadd.f32 %v3843, %v4019
      %v4021 = vpop.f32.mrb[0].mxu0
      %v4022 = vpop.f32.mrb[0].mxu0
      %v4023 = vadd.f32 %v3846, %v4022
      %v4024 = vpop.f32.mrb[0].mxu0
      %4025 = vmatprep.mubr.bf16.mxu0 %v3064
      %4026 = vmatmul.mubr.bf16.gmra.mrb[0].mxu0 %v3063
      %v4027 = vpop.f32.mrb[0].mxu0
      %v4028 = vadd.f32 %v3851, %v4027
      %v4029 = vpop.f32.mrb[0].mxu0
      %v4030 = vpop.f32.mrb[0].mxu0
      %v4031 = vadd.f32 %v3854, %v4030
      %v4032 = vpop.f32.mrb[0].mxu0
      %4033 = vmatprep.mubr.bf16.mxu0 %v3073
      %4034 = vmatmul.mubr.bf16.gmra.mrb[0].mxu0 %v3072
      %v4035 = vpop.f32.mrb[0].mxu0
      %v4036 = vadd.f32 %v3859, %v4035
      %v4037 = vpop.f32.mrb[0].mxu0
      %v4038 = vpop.f32.mrb[0].mxu0
      %v4039 = vadd.f32 %v3862, %v4038
      %v4040 = vpop.f32.mrb[0].mxu0
      %4041 = vmatprep.mubr.bf16.mxu0 %v3082
      %4042 = vmatmul.mubr.bf16.gmra.mrb[0].mxu0 %v3081
      %v4043 = vpop.f32.mrb[0].mxu0
      %v4044 = vadd.f32 %v3867, %v4043
      %v4045 = vpop.f32.mrb[0].mxu0
      %v4046 = vpop.f32.mrb[0].mxu0
      %v4047 = vadd.f32 %v3870, %v4046
      %v4048 = vpop.f32.mrb[0].mxu0
      %4049 = vmatprep.mubr.bf16.mxu0 %v3091
      %4050 = vmatmul.mubr.bf16.gmra.mrb[0].mxu0 %v3090
      %v4051 = vpop.f32.mrb[0].mxu0
      %v4052 = vadd.f32 %v3875, %v4051
      %v4053 = vpop.f32.mrb[0].mxu0
      %v4054 = vpop.f32.mrb[0].mxu0
      %v4055 = vadd.f32 %v3878, %v4054
      %v4056 = vpop.f32.mrb[0].mxu0
      %4057 = vmatprep.mubr.bf16.mxu0 %v3100
      %4058 = vmatmul.mubr.bf16.gmra.mrb[0].mxu0 %v3099
      %v4059 = vpop.f32.mrb[0].mxu0
      %v4060 = vadd.f32 %v3883, %v4059
      %v4061 = vpop.f32.mrb[0].mxu0
      %v4062 = vpop.f32.mrb[0].mxu0
      %v4063 = vadd.f32 %v3886, %v4062
      %v4064 = vpop.f32.mrb[0].mxu0
      %4065 = vmatprep.mubr.bf16.mxu0 %v3109
      %4066 = vmatmul.mubr.bf16.gmra.mrb[0].mxu0 %v3108
      %v4067 = vpop.f32.mrb[0].mxu0
      %v4068 = vadd.f32 %v3891, %v4067
      %v4069 = vpop.f32.mrb[0].mxu0
      %v4070 = vpop.f32.mrb[0].mxu0
      %v4071 = vadd.f32 %v3894, %v4070
      %v4072 = vpop.f32.mrb[0].mxu0
      %4073 = vmatprep.mubr.bf16.mxu0 %v3118
      %4074 = vmatmul.mubr.bf16.gmra.mrb[0].mxu0 %v3117
      %v4075 = vpop.f32.mrb[0].mxu0
      %v4076 = vadd.f32 %v3899, %v4075
      %v4077 = vpop.f32.mrb[0].mxu0
      %v4078 = vpop.f32.mrb[0].mxu0
      %v4079 = vadd.f32 %v3902, %v4078
      %v4080 = vpop.f32.mrb[0].mxu0
      %4081 = vmatprep.mubr.bf16.mxu0 %v3127
      %4082 = vmatmul.mubr.bf16.gmra.mrb[0].mxu0 %v3126
      %v4083 = vpop.f32.mrb[0].mxu0
      %v4084 = vadd.f32 %v3907, %v4083
      %v4085 = vpop.f32.mrb[0].mxu0
      %v4086 = vpop.f32.mrb[0].mxu0
      %v4087 = vadd.f32 %v3910, %v4086
      %v4088 = vpop.f32.mrb[0].mxu0
      %4089 = vmatprep.mubr.bf16.mxu0 %v3136
      %4090 = vmatmul.mubr.bf16.gmra.mrb[0].mxu0 %v3135
      %v4091 = vpop.f32.mrb[0].mxu0
      %v4092 = vadd.f32 %v3915, %v4091
      %v4093 = vpop.f32.mrb[0].mxu0
      %v4094 = vpop.f32.mrb[0].mxu0
      %v4095 = vadd.f32 %v3918, %v4094
      %v4096 = vpop.f32.mrb[0].mxu0
      %4097 = vmatprep.mubr.bf16.mxu0 %v3145
      %4098 = vmatmul.mubr.bf16.gmra.mrb[0].mxu0 %v3144
      %v4099 = vpop.f32.mrb[0].mxu0
      %v4100 = vadd.f32 %v3923, %v4099
      %v4101 = vpop.f32.mrb[0].mxu0
      %v4102 = vpop.f32.mrb[0].mxu0
      %v4103 = vadd.f32 %v3926, %v4102
      %v4104 = vpop.f32.mrb[0].mxu0
      %4105 = vmatprep.mubr.bf16.mxu0 %v3154
      %4106 = vmatmul.mubr.bf16.gmra.mrb[0].mxu0 %v3153
      %v4107 = vpop.f32.mrb[0].mxu0
      %v4108 = vadd.f32 %v3931, %v4107
      %v4109 = vpop.f32.mrb[0].mxu0
      %v4110 = vpop.f32.mrb[0].mxu0
      %v4111 = vadd.f32 %v3934, %v4110
      %v4112 = vpop.f32.mrb[0].mxu0
      %4113 = vmatprep.mubr.bf16.mxu0 %v3163
      %4114 = vmatmul.mubr.bf16.gmra.mrb[0].mxu0 %v3162
      %v4115 = vpop.f32.mrb[0].mxu0
      %v4116 = vadd.f32 %v3939, %v4115
      %v4117 = vpop.f32.mrb[0].mxu0
      %v4118 = vpop.f32.mrb[0].mxu0
      %v4119 = vadd.f32 %v3942, %v4118
      %v4120 = vpop.f32.mrb[0].mxu0
      %4121 = vmatprep.mubr.bf16.mxu0 %v3172
      %4122 = vmatmul.mubr.bf16.gmra.mrb[0].mxu0 %v3171
      %v4123 = vpop.f32.mrb[0].mxu0
      %v4124 = vadd.f32 %v3947, %v4123
      %v4125 = vpop.f32.mrb[0].mxu0
      %v4126 = vpop.f32.mrb[0].mxu0
      %v4127 = vadd.f32 %v3950, %v4126
      %v4128 = vpop.f32.mrb[0].mxu0
      %4129 = vmatprep.mubr.bf16.mxu0 %v3181
      %4130 = vmatmul.mubr.bf16.gmra.mrb[0].mxu0 %v3180
      %v4131 = vpop.f32.mrb[0].mxu0
      %v4132 = vadd.f32 %v3955, %v4131
      %v4133 = vpop.f32.mrb[0].mxu0
      %v4134 = vpop.f32.mrb[0].mxu0
      %v4135 = vadd.f32 %v3958, %v4134
      %v4136 = vpop.f32.mrb[0].mxu0
      %4137 = vmatprep.mubr.bf16.mxu0 %v3190
      %4138 = vmatmul.mubr.bf16.gmra.mrb[0].mxu0 %v3189
      %v4139 = vpop.f32.mrb[0].mxu0
      %v4140 = vadd.f32 %v3963, %v4139
      %v4141 = vpop.f32.mrb[0].mxu0
      %v4142 = vpop.f32.mrb[0].mxu0
      %v4143 = vadd.f32 %v3966, %v4142
      %v4144 = vpop.f32.mrb[0].mxu0
      %4145 = vmatprep.mubr.bf16.mxu0 %v3199
      %4146 = vmatmul.mubr.bf16.gmra.mrb[0].mxu0 %v3198
      %v4147 = vpop.f32.mrb[0].mxu0
      %v4148 = vadd.f32 %v3971, %v4147
      %v4149 = vpop.f32.mrb[0].mxu0
      %v4150 = vpop.f32.mrb[0].mxu0
      %v4151 = vadd.f32 %v3974, %v4150
      %v4152 = vpop.f32.mrb[0].mxu0
      %4153 = vmatprep.mubr.bf16.mxu0 %v3208
      %4154 = vmatmul.mubr.bf16.gmra.mrb[0].mxu0 %v3207
      %v4155 = vpop.f32.mrb[0].mxu0
      %v4156 = vadd.f32 %v3979, %v4155
      %v4157 = vpop.f32.mrb[0].mxu0
      %v4158 = vpop.f32.mrb[0].mxu0
      %v4159 = vadd.f32 %v3982, %v4158
      %v4160 = vpop.f32.mrb[0].mxu0
      %4161 = vdwg.mxu0
      %4162 = vmatprep.subr.bf16.mxu0 0
      %4163 = vmatpush1.bf16.msra.mxu0 %v3696
      %4164 = vmatprep.subr.bf16.mxu0 0
      %4165 = vmatpush1.bf16.msra.mxu0 %v3697
      %4166 = vmatprep.subr.bf16.mxu0 0
      %4167 = vmatpush1.bf16.msra.mxu0 %v3698
      %4168 = vmatprep.subr.bf16.mxu0 0
      %4169 = vmatpush1.bf16.msra.mxu0 %v3699
      %4170 = vmatprep.subr.bf16.mxu0 0
      %4171 = vmatpush1.bf16.msra.mxu0 %v3700
      %4172 = vmatprep.subr.bf16.mxu0 0
      %4173 = vmatpush1.bf16.msra.mxu0 %v3701
      %4174 = vmatprep.subr.bf16.mxu0 0
      %4175 = vmatpush1.bf16.msra.mxu0 %v3702
      %4176 = vmatprep.subr.bf16.mxu0 0
      %4177 = vmatpush1.bf16.msra.mxu0 %v3703
      %4178 = vmatprep.subr.bf16.mxu0 0
      %4179 = vmatpush1.bf16.msra.mxu0 %v3704
      %4180 = vmatprep.subr.bf16.mxu0 0
      %4181 = vmatpush1.bf16.msra.mxu0 %v3705
      %4182 = vmatprep.subr.bf16.mxu0 0
      %4183 = vmatpush1.bf16.msra.mxu0 %v3706
      %4184 = vmatprep.subr.bf16.mxu0 0
      %4185 = vmatpush1.bf16.msra.mxu0 %v3707
      %4186 = vmatprep.subr.bf16.mxu0 0
      %4187 = vmatpush1.bf16.msra.mxu0 %v3708
      %4188 = vmatprep.subr.bf16.mxu0 0
      %4189 = vmatpush1.bf16.msra.mxu0 %v3709
      %4190 = vmatprep.subr.bf16.mxu0 0
      %4191 = vmatpush1.bf16.msra.mxu0 %v3710
      %4192 = vmatprep.subr.bf16.mxu0 0
      %4193 = vmatpush1.bf16.msra.mxu0 %v3711
      %4194 = vmatprep.mubr.bf16.mxu0 %v3057
      %4195 = vmatmul.mubr.bf16.gmra.mrb[0].mxu0 %v3056
      %v4196 = vpop.f32.mrb[0].mxu0
      %v4197 = vadd.f32 %v4020, %v4196
      %v4198 = vpop.f32.mrb[0].mxu0
      %v4199 = vpop.f32.mrb[0].mxu0
      %v4200 = vadd.f32 %v4023, %v4199
      %v4201 = vpop.f32.mrb[0].mxu0
      %4202 = vmatprep.mubr.bf16.mxu0 %v3066
      %4203 = vmatmul.mubr.bf16.gmra.mrb[0].mxu0 %v3065
      %v4204 = vpop.f32.mrb[0].mxu0
      %v4205 = vadd.f32 %v4028, %v4204
      %v4206 = vpop.f32.mrb[0].mxu0
      %v4207 = vpop.f32.mrb[0].mxu0
      %v4208 = vadd.f32 %v4031, %v4207
      %v4209 = vpop.f32.mrb[0].mxu0
      %4210 = vmatprep.mubr.bf16.mxu0 %v3075
      %4211 = vmatmul.mubr.bf16.gmra.mrb[0].mxu0 %v3074
      %v4212 = vpop.f32.mrb[0].mxu0
      %v4213 = vadd.f32 %v4036, %v4212
      %v4214 = vpop.f32.mrb[0].mxu0
      %v4215 = vpop.f32.mrb[0].mxu0
      %v4216 = vadd.f32 %v4039, %v4215
      %v4217 = vpop.f32.mrb[0].mxu0
      %4218 = vmatprep.mubr.bf16.mxu0 %v3084
      %4219 = vmatmul.mubr.bf16.gmra.mrb[0].mxu0 %v3083
      %v4220 = vpop.f32.mrb[0].mxu0
      %v4221 = vadd.f32 %v4044, %v4220
      %v4222 = vpop.f32.mrb[0].mxu0
      %v4223 = vpop.f32.mrb[0].mxu0
      %v4224 = vadd.f32 %v4047, %v4223
      %v4225 = vpop.f32.mrb[0].mxu0
      %4226 = vmatprep.mubr.bf16.mxu0 %v3093
      %4227 = vmatmul.mubr.bf16.gmra.mrb[0].mxu0 %v3092
      %v4228 = vpop.f32.mrb[0].mxu0
      %v4229 = vadd.f32 %v4052, %v4228
      %v4230 = vpop.f32.mrb[0].mxu0
      %v4231 = vpop.f32.mrb[0].mxu0
      %v4232 = vadd.f32 %v4055, %v4231
      %v4233 = vpop.f32.mrb[0].mxu0
      %4234 = vmatprep.mubr.bf16.mxu0 %v3102
      %4235 = vmatmul.mubr.bf16.gmra.mrb[0].mxu0 %v3101
      %v4236 = vpop.f32.mrb[0].mxu0
      %v4237 = vadd.f32 %v4060, %v4236
      %v4238 = vpop.f32.mrb[0].mxu0
      %v4239 = vpop.f32.mrb[0].mxu0
      %v4240 = vadd.f32 %v4063, %v4239
      %v4241 = vpop.f32.mrb[0].mxu0
      %4242 = vmatprep.mubr.bf16.mxu0 %v3111
      %4243 = vmatmul.mubr.bf16.gmra.mrb[0].mxu0 %v3110
      %v4244 = vpop.f32.mrb[0].mxu0
      %v4245 = vadd.f32 %v4068, %v4244
      %v4246 = vpop.f32.mrb[0].mxu0
      %v4247 = vpop.f32.mrb[0].mxu0
      %v4248 = vadd.f32 %v4071, %v4247
      %v4249 = vpop.f32.mrb[0].mxu0
      %4250 = vmatprep.mubr.bf16.mxu0 %v3120
      %4251 = vmatmul.mubr.bf16.gmra.mrb[0].mxu0 %v3119
      %v4252 = vpop.f32.mrb[0].mxu0
      %v4253 = vadd.f32 %v4076, %v4252
      %v4254 = vpop.f32.mrb[0].mxu0
      %v4255 = vpop.f32.mrb[0].mxu0
      %v4256 = vadd.f32 %v4079, %v4255
      %v4257 = vpop.f32.mrb[0].mxu0
      %4258 = vmatprep.mubr.bf16.mxu0 %v3129
      %4259 = vmatmul.mubr.bf16.gmra.mrb[0].mxu0 %v3128
      %v4260 = vpop.f32.mrb[0].mxu0
      %v4261 = vadd.f32 %v4084, %v4260
      %v4262 = vpop.f32.mrb[0].mxu0
      %v4263 = vpop.f32.mrb[0].mxu0
      %v4264 = vadd.f32 %v4087, %v4263
      %v4265 = vpop.f32.mrb[0].mxu0
      %4266 = vmatprep.mubr.bf16.mxu0 %v3138
      %4267 = vmatmul.mubr.bf16.gmra.mrb[0].mxu0 %v3137
      %v4268 = vpop.f32.mrb[0].mxu0
      %v4269 = vadd.f32 %v4092, %v4268
      %v4270 = vpop.f32.mrb[0].mxu0
      %v4271 = vpop.f32.mrb[0].mxu0
      %v4272 = vadd.f32 %v4095, %v4271
      %v4273 = vpop.f32.mrb[0].mxu0
      %4274 = vmatprep.mubr.bf16.mxu0 %v3147
      %4275 = vmatmul.mubr.bf16.gmra.mrb[0].mxu0 %v3146
      %v4276 = vpop.f32.mrb[0].mxu0
      %v4277 = vadd.f32 %v4100, %v4276
      %v4278 = vpop.f32.mrb[0].mxu0
      %v4279 = vpop.f32.mrb[0].mxu0
      %v4280 = vadd.f32 %v4103, %v4279
      %v4281 = vpop.f32.mrb[0].mxu0
      %4282 = vmatprep.mubr.bf16.mxu0 %v3156
      %4283 = vmatmul.mubr.bf16.gmra.mrb[0].mxu0 %v3155
      %v4284 = vpop.f32.mrb[0].mxu0
      %v4285 = vadd.f32 %v4108, %v4284
      %v4286 = vpop.f32.mrb[0].mxu0
      %v4287 = vpop.f32.mrb[0].mxu0
      %v4288 = vadd.f32 %v4111, %v4287
      %v4289 = vpop.f32.mrb[0].mxu0
      %4290 = vmatprep.mubr.bf16.mxu0 %v3165
      %4291 = vmatmul.mubr.bf16.gmra.mrb[0].mxu0 %v3164
      %v4292 = vpop.f32.mrb[0].mxu0
      %v4293 = vadd.f32 %v4116, %v4292
      %v4294 = vpop.f32.mrb[0].mxu0
      %v4295 = vpop.f32.mrb[0].mxu0
      %v4296 = vadd.f32 %v4119, %v4295
      %v4297 = vpop.f32.mrb[0].mxu0
      %4298 = vmatprep.mubr.bf16.mxu0 %v3174
      %4299 = vmatmul.mubr.bf16.gmra.mrb[0].mxu0 %v3173
      %v4300 = vpop.f32.mrb[0].mxu0
      %v4301 = vadd.f32 %v4124, %v4300
      %v4302 = vpop.f32.mrb[0].mxu0
      %v4303 = vpop.f32.mrb[0].mxu0
      %v4304 = vadd.f32 %v4127, %v4303
      %v4305 = vpop.f32.mrb[0].mxu0
      %4306 = vmatprep.mubr.bf16.mxu0 %v3183
      %4307 = vmatmul.mubr.bf16.gmra.mrb[0].mxu0 %v3182
      %v4308 = vpop.f32.mrb[0].mxu0
      %v4309 = vadd.f32 %v4132, %v4308
      %v4310 = vpop.f32.mrb[0].mxu0
      %v4311 = vpop.f32.mrb[0].mxu0
      %v4312 = vadd.f32 %v4135, %v4311
      %v4313 = vpop.f32.mrb[0].mxu0
      %4314 = vmatprep.mubr.bf16.mxu0 %v3192
      %4315 = vmatmul.mubr.bf16.gmra.mrb[0].mxu0 %v3191
      %v4316 = vpop.f32.mrb[0].mxu0
      %v4317 = vadd.f32 %v4140, %v4316
      %v4318 = vpop.f32.mrb[0].mxu0
      %v4319 = vpop.f32.mrb[0].mxu0
      %v4320 = vadd.f32 %v4143, %v4319
      %v4321 = vpop.f32.mrb[0].mxu0
      %4322 = vmatprep.mubr.bf16.mxu0 %v3201
      %4323 = vmatmul.mubr.bf16.gmra.mrb[0].mxu0 %v3200
      %v4324 = vpop.f32.mrb[0].mxu0
      %v4325 = vadd.f32 %v4148, %v4324
      %v4326 = vpop.f32.mrb[0].mxu0
      %v4327 = vpop.f32.mrb[0].mxu0
      %v4328 = vadd.f32 %v4151, %v4327
      %v4329 = vpop.f32.mrb[0].mxu0
      %4330 = vmatprep.mubr.bf16.mxu0 %v3210
      %4331 = vmatmul.mubr.bf16.gmra.mrb[0].mxu0 %v3209
      %v4332 = vpop.f32.mrb[0].mxu0
      %v4333 = vadd.f32 %v4156, %v4332
      %v4334 = vpop.f32.mrb[0].mxu0
      %v4335 = vpop.f32.mrb[0].mxu0
      %v4336 = vadd.f32 %v4159, %v4335
      %v4337 = vpop.f32.mrb[0].mxu0
      %4338 = vdwg.mxu0
      %4339 = vmatprep.subr.bf16.mxu0 0
      %4340 = vmatpush1.bf16.msra.mxu0 %v3712
      %4341 = vmatprep.subr.bf16.mxu0 0
      %4342 = vmatpush1.bf16.msra.mxu0 %v3713
      %4343 = vmatprep.subr.bf16.mxu0 0
      %4344 = vmatpush1.bf16.msra.mxu0 %v3714
      %4345 = vmatprep.subr.bf16.mxu0 0
      %4346 = vmatpush1.bf16.msra.mxu0 %v3715
      %4347 = vmatprep.subr.bf16.mxu0 0
      %4348 = vmatpush1.bf16.msra.mxu0 %v3716
      %4349 = vmatprep.subr.bf16.mxu0 0
      %4350 = vmatpush1.bf16.msra.mxu0 %v3717
      %4351 = vmatprep.subr.bf16.mxu0 0
      %4352 = vmatpush1.bf16.msra.mxu0 %v3718
      %4353 = vmatprep.subr.bf16.mxu0 0
      %4354 = vmatpush1.bf16.msra.mxu0 %v3719
      %4355 = vmatprep.subr.bf16.mxu0 0
      %4356 = vmatpush1.bf16.msra.mxu0 %v3720
      %4357 = vmatprep.subr.bf16.mxu0 0
      %4358 = vmatpush1.bf16.msra.mxu0 %v3721
      %4359 = vmatprep.subr.bf16.mxu0 0
      %4360 = vmatpush1.bf16.msra.mxu0 %v3722
      %4361 = vmatprep.subr.bf16.mxu0 0
      %4362 = vmatpush1.bf16.msra.mxu0 %v3723
      %4363 = vmatprep.subr.bf16.mxu0 0
      %4364 = vmatpush1.bf16.msra.mxu0 %v3724
      %4365 = vmatprep.subr.bf16.mxu0 0
      %4366 = vmatpush1.bf16.msra.mxu0 %v3725
      %4367 = vmatprep.subr.bf16.mxu0 0
      %4368 = vmatpush1.bf16.msra.mxu0 %v3726
      %4369 = vmatprep.subr.bf16.mxu0 0
      %4370 = vmatpush1.bf16.msra.mxu0 %v3727
      %4371 = vmatprep.mubr.bf16.mxu0 %v3059
      %4372 = vmatmul.mubr.bf16.gmra.mrb[0].mxu0 %v3058
      %v4373 = vpop.f32.mrb[0].mxu0
      %v4374 = vadd.f32 %v4197, %v4373
      %v4375 = vpop.f32.mrb[0].mxu0
      %v4376 = vpop.f32.mrb[0].mxu0
      %v4377 = vadd.f32 %v4200, %v4376
      %v4378 = vpop.f32.mrb[0].mxu0
      %4379 = vmatprep.mubr.bf16.mxu0 %v3068
      %4380 = vmatmul.mubr.bf16.gmra.mrb[0].mxu0 %v3067
      %v4381 = vpop.f32.mrb[0].mxu0
      %v4382 = vadd.f32 %v4205, %v4381
      %v4383 = vpop.f32.mrb[0].mxu0
      %v4384 = vpop.f32.mrb[0].mxu0
      %v4385 = vadd.f32 %v4208, %v4384
      %v4386 = vpop.f32.mrb[0].mxu0
      %4387 = vmatprep.mubr.bf16.mxu0 %v3077
      %4388 = vmatmul.mubr.bf16.gmra.mrb[0].mxu0 %v3076
      %v4389 = vpop.f32.mrb[0].mxu0
      %v4390 = vadd.f32 %v4213, %v4389
      %v4391 = vpop.f32.mrb[0].mxu0
      %v4392 = vpop.f32.mrb[0].mxu0
      %v4393 = vadd.f32 %v4216, %v4392
      %v4394 = vpop.f32.mrb[0].mxu0
      %4395 = vmatprep.mubr.bf16.mxu0 %v3086
      %4396 = vmatmul.mubr.bf16.gmra.mrb[0].mxu0 %v3085
      %v4397 = vpop.f32.mrb[0].mxu0
      %v4398 = vadd.f32 %v4221, %v4397
      %v4399 = vpop.f32.mrb[0].mxu0
      %v4400 = vpop.f32.mrb[0].mxu0
      %v4401 = vadd.f32 %v4224, %v4400
      %v4402 = vpop.f32.mrb[0].mxu0
      %4403 = vmatprep.mubr.bf16.mxu0 %v3095
      %4404 = vmatmul.mubr.bf16.gmra.mrb[0].mxu0 %v3094
      %v4405 = vpop.f32.mrb[0].mxu0
      %v4406 = vadd.f32 %v4229, %v4405
      %v4407 = vpop.f32.mrb[0].mxu0
      %v4408 = vpop.f32.mrb[0].mxu0
      %v4409 = vadd.f32 %v4232, %v4408
      %v4410 = vpop.f32.mrb[0].mxu0
      %4411 = vmatprep.mubr.bf16.mxu0 %v3104
      %4412 = vmatmul.mubr.bf16.gmra.mrb[0].mxu0 %v3103
      %v4413 = vpop.f32.mrb[0].mxu0
      %v4414 = vadd.f32 %v4237, %v4413
      %v4415 = vpop.f32.mrb[0].mxu0
      %v4416 = vpop.f32.mrb[0].mxu0
      %v4417 = vadd.f32 %v4240, %v4416
      %v4418 = vpop.f32.mrb[0].mxu0
      %4419 = vmatprep.mubr.bf16.mxu0 %v3113
      %4420 = vmatmul.mubr.bf16.gmra.mrb[0].mxu0 %v3112
      %v4421 = vpop.f32.mrb[0].mxu0
      %v4422 = vadd.f32 %v4245, %v4421
      %v4423 = vpop.f32.mrb[0].mxu0
      %v4424 = vpop.f32.mrb[0].mxu0
      %v4425 = vadd.f32 %v4248, %v4424
      %v4426 = vpop.f32.mrb[0].mxu0
      %4427 = vmatprep.mubr.bf16.mxu0 %v3122
      %4428 = vmatmul.mubr.bf16.gmra.mrb[0].mxu0 %v3121
      %v4429 = vpop.f32.mrb[0].mxu0
      %v4430 = vadd.f32 %v4253, %v4429
      %v4431 = vpop.f32.mrb[0].mxu0
      %v4432 = vpop.f32.mrb[0].mxu0
      %v4433 = vadd.f32 %v4256, %v4432
      %v4434 = vpop.f32.mrb[0].mxu0
      %4435 = vmatprep.mubr.bf16.mxu0 %v3131
      %4436 = vmatmul.mubr.bf16.gmra.mrb[0].mxu0 %v3130
      %v4437 = vpop.f32.mrb[0].mxu0
      %v4438 = vadd.f32 %v4261, %v4437
      %v4439 = vpop.f32.mrb[0].mxu0
      %v4440 = vpop.f32.mrb[0].mxu0
      %v4441 = vadd.f32 %v4264, %v4440
      %v4442 = vpop.f32.mrb[0].mxu0
      %4443 = vmatprep.mubr.bf16.mxu0 %v3140
      %4444 = vmatmul.mubr.bf16.gmra.mrb[0].mxu0 %v3139
      %v4445 = vpop.f32.mrb[0].mxu0
      %v4446 = vadd.f32 %v4269, %v4445
      %v4447 = vpop.f32.mrb[0].mxu0
      %v4448 = vpop.f32.mrb[0].mxu0
      %v4449 = vadd.f32 %v4272, %v4448
      %v4450 = vpop.f32.mrb[0].mxu0
      %4451 = vmatprep.mubr.bf16.mxu0 %v3149
      %4452 = vmatmul.mubr.bf16.gmra.mrb[0].mxu0 %v3148
      %v4453 = vpop.f32.mrb[0].mxu0
      %v4454 = vadd.f32 %v4277, %v4453
      %v4455 = vpop.f32.mrb[0].mxu0
      %v4456 = vpop.f32.mrb[0].mxu0
      %v4457 = vadd.f32 %v4280, %v4456
      %v4458 = vpop.f32.mrb[0].mxu0
      %4459 = vmatprep.mubr.bf16.mxu0 %v3158
      %4460 = vmatmul.mubr.bf16.gmra.mrb[0].mxu0 %v3157
      %v4461 = vpop.f32.mrb[0].mxu0
      %v4462 = vadd.f32 %v4285, %v4461
      %v4463 = vpop.f32.mrb[0].mxu0
      %v4464 = vpop.f32.mrb[0].mxu0
      %v4465 = vadd.f32 %v4288, %v4464
      %v4466 = vpop.f32.mrb[0].mxu0
      %4467 = vmatprep.mubr.bf16.mxu0 %v3167
      %4468 = vmatmul.mubr.bf16.gmra.mrb[0].mxu0 %v3166
      %v4469 = vpop.f32.mrb[0].mxu0
      %v4470 = vadd.f32 %v4293, %v4469
      %v4471 = vpop.f32.mrb[0].mxu0
      %v4472 = vpop.f32.mrb[0].mxu0
      %v4473 = vadd.f32 %v4296, %v4472
      %v4474 = vpop.f32.mrb[0].mxu0
      %4475 = vmatprep.mubr.bf16.mxu0 %v3176
      %4476 = vmatmul.mubr.bf16.gmra.mrb[0].mxu0 %v3175
      %v4477 = vpop.f32.mrb[0].mxu0
      %v4478 = vadd.f32 %v4301, %v4477
      %v4479 = vpop.f32.mrb[0].mxu0
      %v4480 = vpop.f32.mrb[0].mxu0
      %v4481 = vadd.f32 %v4304, %v4480
      %v4482 = vpop.f32.mrb[0].mxu0
      %4483 = vmatprep.mubr.bf16.mxu0 %v3185
      %4484 = vmatmul.mubr.bf16.gmra.mrb[0].mxu0 %v3184
      %v4485 = vpop.f32.mrb[0].mxu0
      %v4486 = vadd.f32 %v4309, %v4485
      %v4487 = vpop.f32.mrb[0].mxu0
      %v4488 = vpop.f32.mrb[0].mxu0
      %v4489 = vadd.f32 %v4312, %v4488
      %v4490 = vpop.f32.mrb[0].mxu0
      %4491 = vmatprep.mubr.bf16.mxu0 %v3194
      %4492 = vmatmul.mubr.bf16.gmra.mrb[0].mxu0 %v3193
      %v4493 = vpop.f32.mrb[0].mxu0
      %v4494 = vadd.f32 %v4317, %v4493
      %v4495 = vpop.f32.mrb[0].mxu0
      %v4496 = vpop.f32.mrb[0].mxu0
      %v4497 = vadd.f32 %v4320, %v4496
      %v4498 = vpop.f32.mrb[0].mxu0
      %4499 = vmatprep.mubr.bf16.mxu0 %v3203
      %4500 = vmatmul.mubr.bf16.gmra.mrb[0].mxu0 %v3202
      %v4501 = vpop.f32.mrb[0].mxu0
      %v4502 = vadd.f32 %v4325, %v4501
      %v4503 = vpop.f32.mrb[0].mxu0
      %v4504 = vpop.f32.mrb[0].mxu0
      %v4505 = vadd.f32 %v4328, %v4504
      %v4506 = vpop.f32.mrb[0].mxu0
      %4507 = vmatprep.mubr.bf16.mxu0 %v3212
      %4508 = vmatmul.mubr.bf16.gmra.mrb[0].mxu0 %v3211
      %v4509 = vpop.f32.mrb[0].mxu0
      %v4510 = vadd.f32 %v4333, %v4509
      %v4511 = vpop.f32.mrb[0].mxu0
      %v4512 = vpop.f32.mrb[0].mxu0
      %v4513 = vadd.f32 %v4336, %v4512
      %v4514 = vpop.f32.mrb[0].mxu0
      %4515 = vdwg.mxu0
      %4516 = vmatprep.subr.bf16.mxu0 0
      %4517 = vmatpush1.bf16.msra.mxu0 %v3728
      %4518 = vmatprep.subr.bf16.mxu0 0
      %4519 = vmatpush1.bf16.msra.mxu0 %v3729
      %4520 = vmatprep.subr.bf16.mxu0 0
      %4521 = vmatpush1.bf16.msra.mxu0 %v3730
      %4522 = vmatprep.subr.bf16.mxu0 0
      %4523 = vmatpush1.bf16.msra.mxu0 %v3731
      %4524 = vmatprep.subr.bf16.mxu0 0
      %4525 = vmatpush1.bf16.msra.mxu0 %v3732
      %4526 = vmatprep.subr.bf16.mxu0 0
      %4527 = vmatpush1.bf16.msra.mxu0 %v3733
      %4528 = vmatprep.subr.bf16.mxu0 0
      %4529 = vmatpush1.bf16.msra.mxu0 %v3734
      %4530 = vmatprep.subr.bf16.mxu0 0
      %4531 = vmatpush1.bf16.msra.mxu0 %v3735
      %4532 = vmatprep.subr.bf16.mxu0 0
      %4533 = vmatpush1.bf16.msra.mxu0 0
      %4534 = vmatprep.subr.bf16.mxu0 0
      %4535 = vmatpush1.bf16.msra.mxu0 0
      %4536 = vmatprep.subr.bf16.mxu0 0
      %4537 = vmatpush1.bf16.msra.mxu0 0
      %4538 = vmatprep.subr.bf16.mxu0 0
      %4539 = vmatpush1.bf16.msra.mxu0 0
      %4540 = vmatprep.subr.bf16.mxu0 0
      %4541 = vmatpush1.bf16.msra.mxu0 0
      %4542 = vmatprep.subr.bf16.mxu0 0
      %4543 = vmatpush1.bf16.msra.mxu0 0
      %4544 = vmatprep.subr.bf16.mxu0 0
      %4545 = vmatpush1.bf16.msra.mxu0 0
      %4546 = vmatprep.subr.bf16.mxu0 0
      %4547 = vmatpush1.bf16.msra.mxu0 0
      %4548 = vmatprep.mubr.bf16.mxu0 0
      %4549 = vmatmul.mubr.bf16.gmra.mrb[0].mxu0 %v3060
      %v4550 = vpop.f32.mrb[0].mxu0
      %v4551 = vadd.f32 %v4374, %v4550
      %v4552 = vpop.f32.mrb[0].mxu0
      %v4553 = vpop.f32.mrb[0].mxu0
      %v4554 = vadd.f32 %v4377, %v4553
      %v4555 = vpop.f32.mrb[0].mxu0
      %4556 = vmatprep.mubr.bf16.mxu0 0
      %4557 = vmatmul.mubr.bf16.gmra.mrb[0].mxu0 %v3069
      %v4558 = vpop.f32.mrb[0].mxu0
      %v4559 = vadd.f32 %v4382, %v4558
      %v4560 = vpop.f32.mrb[0].mxu0
      %v4561 = vpop.f32.mrb[0].mxu0
      %v4562 = vadd.f32 %v4385, %v4561
      %v4563 = vpop.f32.mrb[0].mxu0
      %4564 = vmatprep.mubr.bf16.mxu0 0
      %4565 = vmatmul.mubr.bf16.gmra.mrb[0].mxu0 %v3078
      %v4566 = vpop.f32.mrb[0].mxu0
      %v4567 = vadd.f32 %v4390, %v4566
      %v4568 = vpop.f32.mrb[0].mxu0
      %v4569 = vpop.f32.mrb[0].mxu0
      %v4570 = vadd.f32 %v4393, %v4569
      %v4571 = vpop.f32.mrb[0].mxu0
      %4572 = vmatprep.mubr.bf16.mxu0 0
      %4573 = vmatmul.mubr.bf16.gmra.mrb[0].mxu0 %v3087
      %v4574 = vpop.f32.mrb[0].mxu0
      %v4575 = vadd.f32 %v4398, %v4574
      %v4576 = vpop.f32.mrb[0].mxu0
      %v4577 = vpop.f32.mrb[0].mxu0
      %v4578 = vadd.f32 %v4401, %v4577
      %v4579 = vpop.f32.mrb[0].mxu0
      %4580 = vmatprep.mubr.bf16.mxu0 0
      %4581 = vmatmul.mubr.bf16.gmra.mrb[0].mxu0 %v3096
      %v4582 = vpop.f32.mrb[0].mxu0
      %v4583 = vadd.f32 %v4406, %v4582
      %v4584 = vpop.f32.mrb[0].mxu0
      %v4585 = vpop.f32.mrb[0].mxu0
      %v4586 = vadd.f32 %v4409, %v4585
      %v4587 = vpop.f32.mrb[0].mxu0
      %4588 = vmatprep.mubr.bf16.mxu0 0
      %4589 = vmatmul.mubr.bf16.gmra.mrb[0].mxu0 %v3105
      %v4590 = vpop.f32.mrb[0].mxu0
      %v4591 = vadd.f32 %v4414, %v4590
      %v4592 = vpop.f32.mrb[0].mxu0
      %v4593 = vpop.f32.mrb[0].mxu0
      %v4594 = vadd.f32 %v4417, %v4593
      %v4595 = vpop.f32.mrb[0].mxu0
      %4596 = vmatprep.mubr.bf16.mxu0 0
      %4597 = vmatmul.mubr.bf16.gmra.mrb[0].mxu0 %v3114
      %v4598 = vpop.f32.mrb[0].mxu0
      %v4599 = vadd.f32 %v4422, %v4598
      %v4600 = vpop.f32.mrb[0].mxu0
      %v4601 = vpop.f32.mrb[0].mxu0
      %v4602 = vadd.f32 %v4425, %v4601
      %v4603 = vpop.f32.mrb[0].mxu0
      %4604 = vmatprep.mubr.bf16.mxu0 0
      %4605 = vmatmul.mubr.bf16.gmra.mrb[0].mxu0 %v3123
      %v4606 = vpop.f32.mrb[0].mxu0
      %v4607 = vadd.f32 %v4430, %v4606
      %v4608 = vpop.f32.mrb[0].mxu0
      %v4609 = vpop.f32.mrb[0].mxu0
      %v4610 = vadd.f32 %v4433, %v4609
      %v4611 = vpop.f32.mrb[0].mxu0
      %4612 = vmatprep.mubr.bf16.mxu0 0
      %4613 = vmatmul.mubr.bf16.gmra.mrb[0].mxu0 %v3132
      %v4614 = vpop.f32.mrb[0].mxu0
      %v4615 = vadd.f32 %v4438, %v4614
      %v4616 = vpop.f32.mrb[0].mxu0
      %v4617 = vpop.f32.mrb[0].mxu0
      %v4618 = vadd.f32 %v4441, %v4617
      %v4619 = vpop.f32.mrb[0].mxu0
      %4620 = vmatprep.mubr.bf16.mxu0 0
      %4621 = vmatmul.mubr.bf16.gmra.mrb[0].mxu0 %v3141
      %v4622 = vpop.f32.mrb[0].mxu0
      %v4623 = vadd.f32 %v4446, %v4622
      %v4624 = vpop.f32.mrb[0].mxu0
      %v4625 = vpop.f32.mrb[0].mxu0
      %v4626 = vadd.f32 %v4449, %v4625
      %v4627 = vpop.f32.mrb[0].mxu0
      %4628 = vmatprep.mubr.bf16.mxu0 0
      %4629 = vmatmul.mubr.bf16.gmra.mrb[0].mxu0 %v3150
      %v4630 = vpop.f32.mrb[0].mxu0
      %v4631 = vadd.f32 %v4454, %v4630
      %v4632 = vpop.f32.mrb[0].mxu0
      %v4633 = vpop.f32.mrb[0].mxu0
      %v4634 = vadd.f32 %v4457, %v4633
      %v4635 = vpop.f32.mrb[0].mxu0
      %4636 = vmatprep.mubr.bf16.mxu0 0
      %4637 = vmatmul.mubr.bf16.gmra.mrb[0].mxu0 %v3159
      %v4638 = vpop.f32.mrb[0].mxu0
      %v4639 = vadd.f32 %v4462, %v4638
      %v4640 = vpop.f32.mrb[0].mxu0
      %v4641 = vpop.f32.mrb[0].mxu0
      %v4642 = vadd.f32 %v4465, %v4641
      %v4643 = vpop.f32.mrb[0].mxu0
      %4644 = vmatprep.mubr.bf16.mxu0 0
      %4645 = vmatmul.mubr.bf16.gmra.mrb[0].mxu0 %v3168
      %v4646 = vpop.f32.mrb[0].mxu0
      %v4647 = vadd.f32 %v4470, %v4646
      %v4648 = vpop.f32.mrb[0].mxu0
      %v4649 = vpop.f32.mrb[0].mxu0
      %v4650 = vadd.f32 %v4473, %v4649
      %v4651 = vpop.f32.mrb[0].mxu0
      %4652 = vmatprep.mubr.bf16.mxu0 0
      %4653 = vmatmul.mubr.bf16.gmra.mrb[0].mxu0 %v3177
      %v4654 = vpop.f32.mrb[0].mxu0
      %v4655 = vadd.f32 %v4478, %v4654
      %v4656 = vpop.f32.mrb[0].mxu0
      %v4657 = vpop.f32.mrb[0].mxu0
      %v4658 = vadd.f32 %v4481, %v4657
      %v4659 = vpop.f32.mrb[0].mxu0
      %4660 = vmatprep.mubr.bf16.mxu0 0
      %4661 = vmatmul.mubr.bf16.gmra.mrb[0].mxu0 %v3186
      %v4662 = vpop.f32.mrb[0].mxu0
      %v4663 = vadd.f32 %v4486, %v4662
      %v4664 = vpop.f32.mrb[0].mxu0
      %v4665 = vpop.f32.mrb[0].mxu0
      %v4666 = vadd.f32 %v4489, %v4665
      %v4667 = vpop.f32.mrb[0].mxu0
      %4668 = vmatprep.mubr.bf16.mxu0 0
      %4669 = vmatmul.mubr.bf16.gmra.mrb[0].mxu0 %v3195
      %v4670 = vpop.f32.mrb[0].mxu0
      %v4671 = vadd.f32 %v4494, %v4670
      %v4672 = vpop.f32.mrb[0].mxu0
      %v4673 = vpop.f32.mrb[0].mxu0
      %v4674 = vadd.f32 %v4497, %v4673
      %v4675 = vpop.f32.mrb[0].mxu0
      %4676 = vmatprep.mubr.bf16.mxu0 0
      %4677 = vmatmul.mubr.bf16.gmra.mrb[0].mxu0 %v3204
      %v4678 = vpop.f32.mrb[0].mxu0
      %v4679 = vadd.f32 %v4502, %v4678
      %v4680 = vpop.f32.mrb[0].mxu0
      %v4681 = vpop.f32.mrb[0].mxu0
      %v4682 = vadd.f32 %v4505, %v4681
      %v4683 = vpop.f32.mrb[0].mxu0
      %4684 = vmatprep.mubr.bf16.mxu0 0
      %4685 = vmatmul.mubr.bf16.gmra.mrb[0].mxu0 %v3213
      %v4686 = vpop.f32.mrb[0].mxu0
      %v4687 = vadd.f32 %v4510, %v4686
      %v4688 = vpop.f32.mrb[0].mxu0
      %v4689 = vpop.f32.mrb[0].mxu0
      %v4690 = vadd.f32 %v4513, %v4689
      %v4691 = vpop.f32.mrb[0].mxu0
      %4692 = vdwg.mxu0
      %v4693 = vld [vmem:[%s2] sm:$0x1]
      %v4695 = vlaneseq
      %v4696 = vshrl.u32 %v4695, 7
      %v4697 = vsub.s32 0, %v4696
      %v4698 = vrot.slane %v4693, %v4697
      %v4700 = vmul.f32 %v4551, %v4698
      %v4701 = vmul.f32 %v4554, %v4698
      %v4702 = vmul.f32 %v4559, %v4698
      %v4703 = vmul.f32 %v4562, %v4698
      %v4704 = vmul.f32 %v4567, %v4698
      %v4705 = vmul.f32 %v4570, %v4698
      %v4706 = vmul.f32 %v4575, %v4698
      %v4707 = vmul.f32 %v4578, %v4698
      %v4708 = vmul.f32 %v4583, %v4698
      %v4709 = vmul.f32 %v4586, %v4698
      %v4710 = vmul.f32 %v4591, %v4698
      %v4711 = vmul.f32 %v4594, %v4698
      %v4712 = vmul.f32 %v4599, %v4698
      %v4713 = vmul.f32 %v4602, %v4698
      %v4714 = vmul.f32 %v4607, %v4698
      %v4715 = vmul.f32 %v4610, %v4698
      %v4716 = vmul.f32 %v4615, %v4698
      %v4717 = vmul.f32 %v4618, %v4698
      %v4718 = vmul.f32 %v4623, %v4698
      %v4719 = vmul.f32 %v4626, %v4698
      %v4720 = vmul.f32 %v4631, %v4698
      %v4721 = vmul.f32 %v4634, %v4698
      %v4722 = vmul.f32 %v4639, %v4698
      %v4723 = vmul.f32 %v4642, %v4698
      %v4724 = vmul.f32 %v4647, %v4698
      %v4725 = vmul.f32 %v4650, %v4698
      %v4726 = vmul.f32 %v4655, %v4698
      %v4727 = vmul.f32 %v4658, %v4698
      %v4728 = vmul.f32 %v4663, %v4698
      %v4729 = vmul.f32 %v4666, %v4698
      %v4730 = vmul.f32 %v4671, %v4698
      %v4731 = vmul.f32 %v4674, %v4698
      %v4732 = vmul.f32 %v4679, %v4698
      %v4733 = vmul.f32 %v4682, %v4698
      %v4734 = vmul.f32 %v4687, %v4698
      %v4735 = vmul.f32 %v4690, %v4698
      %v4736 = vld [vmem:[%s3] sm:$0x1]
      %v4738 = vlaneseq
      %v4739 = vshrl.u32 %v4738, 7
      %v4740 = vsub.s32 0, %v4739
      %v4741 = vrot.slane %v4736, %v4740
      %v4743 = vadd.f32 %v4700, %v4741
      %v4744 = vadd.f32 %v4701, %v4741
      %v4745 = vadd.f32 %v4702, %v4741
      %v4746 = vadd.f32 %v4703, %v4741
      %v4747 = vadd.f32 %v4704, %v4741
      %v4748 = vadd.f32 %v4705, %v4741
      %v4749 = vadd.f32 %v4706, %v4741
      %v4750 = vadd.f32 %v4707, %v4741
      %v4751 = vadd.f32 %v4708, %v4741
      %v4752 = vadd.f32 %v4709, %v4741
      %v4753 = vadd.f32 %v4710, %v4741
      %v4754 = vadd.f32 %v4711, %v4741
      %v4755 = vadd.f32 %v4712, %v4741
      %v4756 = vadd.f32 %v4713, %v4741
      %v4757 = vadd.f32 %v4714, %v4741
      %v4758 = vadd.f32 %v4715, %v4741
      %v4759 = vadd.f32 %v4716, %v4741
      %v4760 = vadd.f32 %v4717, %v4741
      %v4761 = vadd.f32 %v4718, %v4741
      %v4762 = vadd.f32 %v4719, %v4741
      %v4763 = vadd.f32 %v4720, %v4741
      %v4764 = vadd.f32 %v4721, %v4741
      %v4765 = vadd.f32 %v4722, %v4741
      %v4766 = vadd.f32 %v4723, %v4741
      %v4767 = vadd.f32 %v4724, %v4741
      %v4768 = vadd.f32 %v4725, %v4741
      %v4769 = vadd.f32 %v4726, %v4741
      %v4770 = vadd.f32 %v4727, %v4741
      %v4771 = vadd.f32 %v4728, %v4741
      %v4772 = vadd.f32 %v4729, %v4741
      %v4773 = vadd.f32 %v4730, %v4741
      %v4774 = vadd.f32 %v4731, %v4741
      %v4775 = vadd.f32 %v4732, %v4741
      %v4776 = vadd.f32 %v4733, %v4741
      %v4777 = vadd.f32 %v4734, %v4741
      %v4778 = vadd.f32 %v4735, %v4741
      %v4779 = vmax.f32 %v4743, 0.0
      %v4780 = vmax.f32 %v4744, 0.0
      %v4781 = vmax.f32 %v4745, 0.0
      %v4782 = vmax.f32 %v4746, 0.0
      %v4783 = vmax.f32 %v4747, 0.0
      %v4784 = vmax.f32 %v4748, 0.0
      %v4785 = vmax.f32 %v4749, 0.0
      %v4786 = vmax.f32 %v4750, 0.0
      %v4787 = vmax.f32 %v4751, 0.0
      %v4788 = vmax.f32 %v4752, 0.0
      %v4789 = vmax.f32 %v4753, 0.0
      %v4790 = vmax.f32 %v4754, 0.0
      %v4791 = vmax.f32 %v4755, 0.0
      %v4792 = vmax.f32 %v4756, 0.0
      %v4793 = vmax.f32 %v4757, 0.0
      %v4794 = vmax.f32 %v4758, 0.0
      %v4795 = vmax.f32 %v4759, 0.0
      %v4796 = vmax.f32 %v4760, 0.0
      %v4797 = vmax.f32 %v4761, 0.0
      %v4798 = vmax.f32 %v4762, 0.0
      %v4799 = vmax.f32 %v4763, 0.0
      %v4800 = vmax.f32 %v4764, 0.0
      %v4801 = vmax.f32 %v4765, 0.0
      %v4802 = vmax.f32 %v4766, 0.0
      %v4803 = vmax.f32 %v4767, 0.0
      %v4804 = vmax.f32 %v4768, 0.0
      %v4805 = vmax.f32 %v4769, 0.0
      %v4806 = vmax.f32 %v4770, 0.0
      %v4807 = vmax.f32 %v4771, 0.0
      %v4808 = vmax.f32 %v4772, 0.0
      %v4809 = vmax.f32 %v4773, 0.0
      %v4810 = vmax.f32 %v4774, 0.0
      %v4811 = vmax.f32 %v4775, 0.0
      %v4812 = vmax.f32 %v4776, 0.0
      %v4813 = vmax.f32 %v4777, 0.0
      %v4814 = vmax.f32 %v4778, 0.0
      %4815 = vst [vmem:[#allocation3] sm:$0xf] 0
      %4816 = vst [vmem:[#allocation3 + $0x4] sm:$0xf] 0
      %4817 = vst [vmem:[#allocation3 + $0x8] sm:$0xf] 0
      %4818 = vst [vmem:[#allocation3 + $0xc] sm:$0xf] 0
      %4819 = vst [vmem:[#allocation3 + $0x10] sm:$0xf] 0
      %4820 = vst [vmem:[#allocation3 + $0x14] sm:$0xf] 0
      %4821 = vst [vmem:[#allocation3 + $0x18] sm:$0xf] 0
      %4822 = vst [vmem:[#allocation3 + $0x1c] sm:$0xf] 0
      %4823 = vst [vmem:[#allocation3 + $0x20] sm:$0xf] 0
      %4824 = vst [vmem:[#allocation3 + $0x24] sm:$0xf] 0
      %4825 = vst [vmem:[#allocation3 + $0x28] sm:$0xf] 0
      %4826 = vst [vmem:[#allocation3 + $0x2c] sm:$0xf] 0
      %4827 = vst [vmem:[#allocation3 + $0x30] sm:$0xf] 0
      %4828 = vst [vmem:[#allocation3 + $0x34] sm:$0xf] 0
      %4829 = vst [vmem:[#allocation3 + $0x38] sm:$0xf] 0
      %4830 = vst [vmem:[#allocation3 + $0x3c] sm:$0xf] 0
      %4831 = vst [vmem:[#allocation3 + $0x40] sm:$0xf] 0
      %4832 = vst [vmem:[#allocation3 + $0x44] sm:$0xf] 0
      %4833 = vst [vmem:[#allocation3 + $0x48] sm:$0xf] 0
      %4834 = vst [vmem:[#allocation3 + $0x4c] sm:$0xf] 0
      %4835 = vst [vmem:[#allocation3 + $0x50] sm:$0xf] 0
      %4836 = vst [vmem:[#allocation3 + $0x54] sm:$0xf] 0
      %4837 = vst [vmem:[#allocation3 + $0x58] sm:$0xf] 0
      %4838 = vst [vmem:[#allocation3 + $0x5c] sm:$0xf] 0
      %4839 = vst [vmem:[#allocation3 + $0x60] sm:$0xf] 0
      %4840 = vst [vmem:[#allocation3 + $0x64] sm:$0xf] 0
      %4841 = vst [vmem:[#allocation3 + $0x68] sm:$0xf] 0
      %4842 = vst [vmem:[#allocation3 + $0x6c] sm:$0xf] 0
      %4843 = vst [vmem:[#allocation3 + $0x70] sm:$0xf] 0
      %4844 = vst [vmem:[#allocation3 + $0x74] sm:$0xf] 0
      %4845 = vst [vmem:[#allocation3 + $0x78] sm:$0xf] 0
      %4846 = vst [vmem:[#allocation3 + $0x7c] sm:$0xf] 0
      %4847 = vst [vmem:[#allocation3 + $0x80] sm:$0xf] 0
      %4848 = vst [vmem:[#allocation3 + $0x84] sm:$0xf] 0
      %4849 = vst [vmem:[#allocation3 + $0x88] sm:$0xf] 0
      %4850 = vst [vmem:[#allocation3 + $0x8c] sm:$0xf] 0
      %4851 = vst [vmem:[#allocation3 + $0x90] sm:$0xf] 0
      %4852 = vst [vmem:[#allocation3 + $0x94] sm:$0xf] 0
      %4853 = vst [vmem:[#allocation3 + $0x98] sm:$0xf] 0
      %4854 = vst [vmem:[#allocation3 + $0x9c] sm:$0xf] 0
      %4855 = vst [vmem:[#allocation3 + $0xa0] sm:$0x3] 0
      %v4856 = vpack.c.bf16 %v4780, %v4779
      %v4857 = vpack.c.bf16 %v4782, %v4781
      %v4858 = vpack.c.bf16 %v4784, %v4783
      %v4859 = vpack.c.bf16 %v4786, %v4785
      %v4860 = vpack.c.bf16 %v4788, %v4787
      %v4861 = vpack.c.bf16 %v4790, %v4789
      %v4862 = vpack.c.bf16 %v4792, %v4791
      %v4863 = vpack.c.bf16 %v4794, %v4793
      %v4864 = vpack.c.bf16 %v4796, %v4795
      %v4865 = vpack.c.bf16 %v4798, %v4797
      %v4866 = vpack.c.bf16 %v4800, %v4799
      %v4867 = vpack.c.bf16 %v4802, %v4801
      %v4868 = vpack.c.bf16 %v4804, %v4803
      %v4869 = vpack.c.bf16 %v4806, %v4805
      %v4870 = vpack.c.bf16 %v4808, %v4807
      %v4871 = vpack.c.bf16 %v4810, %v4809
      %v4872 = vpack.c.bf16 %v4812, %v4811
      %v4873 = vpack.c.bf16 %v4814, %v4813
      %v4892 = vunpack.c.l.b16 %v4856
      %v4893 = vunpack.c.h.b16 %v4856
      %v4894 = vunpack.c.l.b16 %v4857
      %v4895 = vunpack.c.h.b16 %v4857
      %v4896 = vunpack.c.l.b16 %v4858
      %v4897 = vunpack.c.h.b16 %v4858
      %v4898 = vunpack.c.l.b16 %v4859
      %v4899 = vunpack.c.h.b16 %v4859
      %v4900 = vunpack.c.l.b16 %v4860
      %v4901 = vunpack.c.h.b16 %v4860
      %v4902 = vunpack.c.l.b16 %v4861
      %v4903 = vunpack.c.h.b16 %v4861
      %v4904 = vunpack.c.l.b16 %v4862
      %v4905 = vunpack.c.h.b16 %v4862
      %v4906 = vunpack.c.l.b16 %v4863
      %v4907 = vunpack.c.h.b16 %v4863
      %v4908 = vunpack.c.l.b16 %v4864
      %v4909 = vunpack.c.h.b16 %v4864
      %v4910 = vunpack.c.l.b16 %v4865
      %v4911 = vunpack.c.h.b16 %v4865
      %v4912 = vunpack.c.l.b16 %v4866
      %v4913 = vunpack.c.h.b16 %v4866
      %v4914 = vunpack.c.l.b16 %v4867
      %v4915 = vunpack.c.h.b16 %v4867
      %v4916 = vunpack.c.l.b16 %v4868
      %v4917 = vunpack.c.h.b16 %v4868
      %v4918 = vunpack.c.l.b16 %v4869
      %v4919 = vunpack.c.h.b16 %v4869
      %v4920 = vunpack.c.l.b16 %v4870
      %v4921 = vunpack.c.h.b16 %v4870
      %v4922 = vunpack.c.l.b16 %v4871
      %v4923 = vunpack.c.h.b16 %v4871
      %v4924 = vunpack.c.l.b16 %v4872
      %v4925 = vunpack.c.h.b16 %v4872
      %v4926 = vunpack.c.l.b16 %v4873
      %v4927 = vunpack.c.h.b16 %v4873
      %v4928 = vpack.c.b16 %v4892, %v4892
      %v4929 = vpack.c.b16 %v4893, %v4893
      %v4930 = vpack.c.b16 %v4894, %v4894
      %v4931 = vpack.c.b16 %v4895, %v4895
      %v4932 = vpack.c.b16 %v4896, %v4896
      %v4933 = vpack.c.b16 %v4897, %v4897
      %v4934 = vpack.c.b16 %v4898, %v4898
      %v4935 = vpack.c.b16 %v4899, %v4899
      %v4936 = vpack.c.b16 %v4900, %v4900
      %v4937 = vpack.c.b16 %v4901, %v4901
      %v4938 = vpack.c.b16 %v4902, %v4902
      %v4939 = vpack.c.b16 %v4903, %v4903
      %v4940 = vpack.c.b16 %v4904, %v4904
      %v4941 = vpack.c.b16 %v4905, %v4905
      %v4942 = vpack.c.b16 %v4906, %v4906
      %v4943 = vpack.c.b16 %v4907, %v4907
      %v4944 = vpack.c.b16 %v4908, %v4908
      %v4945 = vpack.c.b16 %v4909, %v4909
      %v4946 = vpack.c.b16 %v4910, %v4910
      %v4947 = vpack.c.b16 %v4911, %v4911
      %v4948 = vpack.c.b16 %v4912, %v4912
      %v4949 = vpack.c.b16 %v4913, %v4913
      %v4950 = vpack.c.b16 %v4914, %v4914
      %v4951 = vpack.c.b16 %v4915, %v4915
      %v4952 = vpack.c.b16 %v4916, %v4916
      %v4953 = vpack.c.b16 %v4917, %v4917
      %v4954 = vpack.c.b16 %v4918, %v4918
      %v4955 = vpack.c.b16 %v4919, %v4919
      %v4956 = vpack.c.b16 %v4920, %v4920
      %v4957 = vpack.c.b16 %v4921, %v4921
      %v4958 = vpack.c.b16 %v4922, %v4922
      %v4959 = vpack.c.b16 %v4923, %v4923
      %v4960 = vpack.c.b16 %v4924, %v4924
      %v4961 = vpack.c.b16 %v4925, %v4925
      %v4962 = vpack.c.b16 %v4926, %v4926
      %v4963 = vpack.c.b16 %v4927, %v4927
      %vm4964 = vsmask.f32 1280
      %vm4965 = vsmask.f32 5392
      %vm4966 = vmor %vm4964, %vm4965
      %v4968 = vshrl.u32 %v4928, 16
      %v4970 = vrot.slane %v4968, 6
      %v4971 = vshll.u32 %v4928, 16
      %v4973 = vrot.slane %v4971, 7
      %v4974 = vor.u32 %v4970, %v4973
      %v4975 = vrot.slane %v4974, 4
      %v4977 = vshrl.u32 %v4929, 16
      %v4979 = vrot.slane %v4977, 6
      %v4980 = vshll.u32 %v4929, 16
      %v4982 = vrot.slane %v4980, 7
      %v4983 = vor.u32 %v4979, %v4982
      %v4984 = vsel %vm4966, %v4975, %v4983
      %v4985 = vrot.slane %v4983, 4
      %v4987 = vshrl.u32 %v4930, 16
      %v4989 = vrot.slane %v4987, 6
      %v4990 = vshll.u32 %v4930, 16
      %v4992 = vrot.slane %v4990, 7
      %v4993 = vor.u32 %v4989, %v4992
      %v4994 = vsel %vm4966, %v4985, %v4993
      %v4995 = vrot.slane %v4993, 4
      %v4997 = vshrl.u32 %v4931, 16
      %v4999 = vrot.slane %v4997, 6
      %v5000 = vshll.u32 %v4931, 16
      %v5002 = vrot.slane %v5000, 7
      %v5003 = vor.u32 %v4999, %v5002
      %v5004 = vsel %vm4966, %v4995, %v5003
      %v5005 = vrot.slane %v5003, 4
      %v5007 = vshrl.u32 %v4932, 16
      %v5009 = vrot.slane %v5007, 6
      %v5010 = vshll.u32 %v4932, 16
      %v5012 = vrot.slane %v5010, 7
      %v5013 = vor.u32 %v5009, %v5012
      %v5014 = vsel %vm4966, %v5005, %v5013
      %v5015 = vrot.slane %v5013, 4
      %v5017 = vshrl.u32 %v4933, 16
      %v5019 = vrot.slane %v5017, 6
      %v5020 = vshll.u32 %v4933, 16
      %v5022 = vrot.slane %v5020, 7
      %v5023 = vor.u32 %v5019, %v5022
      %v5024 = vsel %vm4966, %v5015, %v5023
      %v5025 = vrot.slane %v5023, 4
      %v5027 = vshrl.u32 %v4934, 16
      %v5029 = vrot.slane %v5027, 6
      %v5030 = vshll.u32 %v4934, 16
      %v5032 = vrot.slane %v5030, 7
      %v5033 = vor.u32 %v5029, %v5032
      %v5034 = vsel %vm4966, %v5025, %v5033
      %v5035 = vrot.slane %v5033, 4
      %v5037 = vshrl.u32 %v4935, 16
      %v5039 = vrot.slane %v5037, 6
      %v5040 = vshll.u32 %v4935, 16
      %v5042 = vrot.slane %v5040, 7
      %v5043 = vor.u32 %v5039, %v5042
      %v5044 = vsel %vm4966, %v5035, %v5043
      %v5045 = vrot.slane %v5043, 4
      %v5047 = vshrl.u32 %v4936, 16
      %v5049 = vrot.slane %v5047, 6
      %v5050 = vshll.u32 %v4936, 16
      %v5052 = vrot.slane %v5050, 7
      %v5053 = vor.u32 %v5049, %v5052
      %v5054 = vsel %vm4966, %v5045, %v5053
      %v5055 = vrot.slane %v5053, 4
      %v5057 = vshrl.u32 %v4937, 16
      %v5059 = vrot.slane %v5057, 6
      %v5060 = vshll.u32 %v4937, 16
      %v5062 = vrot.slane %v5060, 7
      %v5063 = vor.u32 %v5059, %v5062
      %v5064 = vsel %vm4966, %v5055, %v5063
      %v5065 = vrot.slane %v5063, 4
      %v5067 = vshrl.u32 %v4938, 16
      %v5069 = vrot.slane %v5067, 6
      %v5070 = vshll.u32 %v4938, 16
      %v5072 = vrot.slane %v5070, 7
      %v5073 = vor.u32 %v5069, %v5072
      %v5074 = vsel %vm4966, %v5065, %v5073
      %v5075 = vrot.slane %v5073, 4
      %v5077 = vshrl.u32 %v4939, 16
      %v5079 = vrot.slane %v5077, 6
      %v5080 = vshll.u32 %v4939, 16
      %v5082 = vrot.slane %v5080, 7
      %v5083 = vor.u32 %v5079, %v5082
      %v5084 = vsel %vm4966, %v5075, %v5083
      %v5085 = vrot.slane %v5083, 4
      %v5087 = vshrl.u32 %v4940, 16
      %v5089 = vrot.slane %v5087, 6
      %v5090 = vshll.u32 %v4940, 16
      %v5092 = vrot.slane %v5090, 7
      %v5093 = vor.u32 %v5089, %v5092
      %v5094 = vsel %vm4966, %v5085, %v5093
      %v5095 = vrot.slane %v5093, 4
      %v5097 = vshrl.u32 %v4941, 16
      %v5099 = vrot.slane %v5097, 6
      %v5100 = vshll.u32 %v4941, 16
      %v5102 = vrot.slane %v5100, 7
      %v5103 = vor.u32 %v5099, %v5102
      %v5104 = vsel %vm4966, %v5095, %v5103
      %v5105 = vrot.slane %v5103, 4
      %v5107 = vshrl.u32 %v4942, 16
      %v5109 = vrot.slane %v5107, 6
      %v5110 = vshll.u32 %v4942, 16
      %v5112 = vrot.slane %v5110, 7
      %v5113 = vor.u32 %v5109, %v5112
      %v5114 = vsel %vm4966, %v5105, %v5113
      %v5115 = vrot.slane %v5113, 4
      %v5117 = vshrl.u32 %v4943, 16
      %v5119 = vrot.slane %v5117, 6
      %v5120 = vshll.u32 %v4943, 16
      %v5122 = vrot.slane %v5120, 7
      %v5123 = vor.u32 %v5119, %v5122
      %v5124 = vsel %vm4966, %v5115, %v5123
      %v5125 = vrot.slane %v5123, 4
      %v5127 = vshrl.u32 %v4944, 16
      %v5129 = vrot.slane %v5127, 6
      %v5130 = vshll.u32 %v4944, 16
      %v5132 = vrot.slane %v5130, 7
      %v5133 = vor.u32 %v5129, %v5132
      %v5134 = vsel %vm4966, %v5125, %v5133
      %v5135 = vrot.slane %v5133, 4
      %v5137 = vshrl.u32 %v4945, 16
      %v5139 = vrot.slane %v5137, 6
      %v5140 = vshll.u32 %v4945, 16
      %v5142 = vrot.slane %v5140, 7
      %v5143 = vor.u32 %v5139, %v5142
      %v5144 = vsel %vm4966, %v5135, %v5143
      %v5145 = vrot.slane %v5143, 4
      %v5147 = vshrl.u32 %v4946, 16
      %v5149 = vrot.slane %v5147, 6
      %v5150 = vshll.u32 %v4946, 16
      %v5152 = vrot.slane %v5150, 7
      %v5153 = vor.u32 %v5149, %v5152
      %v5154 = vsel %vm4966, %v5145, %v5153
      %v5155 = vrot.slane %v5153, 4
      %v5157 = vshrl.u32 %v4947, 16
      %v5159 = vrot.slane %v5157, 6
      %v5160 = vshll.u32 %v4947, 16
      %v5162 = vrot.slane %v5160, 7
      %v5163 = vor.u32 %v5159, %v5162
      %v5164 = vsel %vm4966, %v5155, %v5163
      %v5165 = vrot.slane %v5163, 4
      %v5167 = vshrl.u32 %v4948, 16
      %v5169 = vrot.slane %v5167, 6
      %v5170 = vshll.u32 %v4948, 16
      %v5172 = vrot.slane %v5170, 7
      %v5173 = vor.u32 %v5169, %v5172
      %v5174 = vsel %vm4966, %v5165, %v5173
      %v5175 = vrot.slane %v5173, 4
      %v5177 = vshrl.u32 %v4949, 16
      %v5179 = vrot.slane %v5177, 6
      %v5180 = vshll.u32 %v4949, 16
      %v5182 = vrot.slane %v5180, 7
      %v5183 = vor.u32 %v5179, %v5182
      %v5184 = vsel %vm4966, %v5175, %v5183
      %v5185 = vrot.slane %v5183, 4
      %v5187 = vshrl.u32 %v4950, 16
      %v5189 = vrot.slane %v5187, 6
      %v5190 = vshll.u32 %v4950, 16
      %v5192 = vrot.slane %v5190, 7
      %v5193 = vor.u32 %v5189, %v5192
      %v5194 = vsel %vm4966, %v5185, %v5193
      %v5195 = vrot.slane %v5193, 4
      %v5197 = vshrl.u32 %v4951, 16
      %v5199 = vrot.slane %v5197, 6
      %v5200 = vshll.u32 %v4951, 16
      %v5202 = vrot.slane %v5200, 7
      %v5203 = vor.u32 %v5199, %v5202
      %v5204 = vsel %vm4966, %v5195, %v5203
      %v5205 = vrot.slane %v5203, 4
      %v5207 = vshrl.u32 %v4952, 16
      %v5209 = vrot.slane %v5207, 6
      %v5210 = vshll.u32 %v4952, 16
      %v5212 = vrot.slane %v5210, 7
      %v5213 = vor.u32 %v5209, %v5212
      %v5214 = vsel %vm4966, %v5205, %v5213
      %v5215 = vrot.slane %v5213, 4
      %v5217 = vshrl.u32 %v4953, 16
      %v5219 = vrot.slane %v5217, 6
      %v5220 = vshll.u32 %v4953, 16
      %v5222 = vrot.slane %v5220, 7
      %v5223 = vor.u32 %v5219, %v5222
      %v5224 = vsel %vm4966, %v5215, %v5223
      %v5225 = vrot.slane %v5223, 4
      %v5227 = vshrl.u32 %v4954, 16
      %v5229 = vrot.slane %v5227, 6
      %v5230 = vshll.u32 %v4954, 16
      %v5232 = vrot.slane %v5230, 7
      %v5233 = vor.u32 %v5229, %v5232
      %v5234 = vsel %vm4966, %v5225, %v5233
      %v5235 = vrot.slane %v5233, 4
      %v5237 = vshrl.u32 %v4955, 16
      %v5239 = vrot.slane %v5237, 6
      %v5240 = vshll.u32 %v4955, 16
      %v5242 = vrot.slane %v5240, 7
      %v5243 = vor.u32 %v5239, %v5242
      %v5244 = vsel %vm4966, %v5235, %v5243
      %v5245 = vrot.slane %v5243, 4
      %v5247 = vshrl.u32 %v4956, 16
      %v5249 = vrot.slane %v5247, 6
      %v5250 = vshll.u32 %v4956, 16
      %v5252 = vrot.slane %v5250, 7
      %v5253 = vor.u32 %v5249, %v5252
      %v5254 = vsel %vm4966, %v5245, %v5253
      %v5255 = vrot.slane %v5253, 4
      %v5257 = vshrl.u32 %v4957, 16
      %v5259 = vrot.slane %v5257, 6
      %v5260 = vshll.u32 %v4957, 16
      %v5262 = vrot.slane %v5260, 7
      %v5263 = vor.u32 %v5259, %v5262
      %v5264 = vsel %vm4966, %v5255, %v5263
      %v5265 = vrot.slane %v5263, 4
      %v5267 = vshrl.u32 %v4958, 16
      %v5269 = vrot.slane %v5267, 6
      %v5270 = vshll.u32 %v4958, 16
      %v5272 = vrot.slane %v5270, 7
      %v5273 = vor.u32 %v5269, %v5272
      %v5274 = vsel %vm4966, %v5265, %v5273
      %v5275 = vrot.slane %v5273, 4
      %v5277 = vshrl.u32 %v4959, 16
      %v5279 = vrot.slane %v5277, 6
      %v5280 = vshll.u32 %v4959, 16
      %v5282 = vrot.slane %v5280, 7
      %v5283 = vor.u32 %v5279, %v5282
      %v5284 = vsel %vm4966, %v5275, %v5283
      %v5285 = vrot.slane %v5283, 4
      %v5287 = vshrl.u32 %v4960, 16
      %v5289 = vrot.slane %v5287, 6
      %v5290 = vshll.u32 %v4960, 16
      %v5292 = vrot.slane %v5290, 7
      %v5293 = vor.u32 %v5289, %v5292
      %v5294 = vsel %vm4966, %v5285, %v5293
      %v5295 = vrot.slane %v5293, 4
      %v5297 = vshrl.u32 %v4961, 16
      %v5299 = vrot.slane %v5297, 6
      %v5300 = vshll.u32 %v4961, 16
      %v5302 = vrot.slane %v5300, 7
      %v5303 = vor.u32 %v5299, %v5302
      %v5304 = vsel %vm4966, %v5295, %v5303
      %v5305 = vrot.slane %v5303, 4
      %v5307 = vshrl.u32 %v4962, 16
      %v5309 = vrot.slane %v5307, 6
      %v5310 = vshll.u32 %v4962, 16
      %v5312 = vrot.slane %v5310, 7
      %v5313 = vor.u32 %v5309, %v5312
      %v5314 = vsel %vm4966, %v5305, %v5313
      %v5315 = vrot.slane %v5313, 4
      %v5317 = vshrl.u32 %v4963, 16
      %v5319 = vrot.slane %v5317, 6
      %v5320 = vshll.u32 %v4963, 16
      %v5322 = vrot.slane %v5320, 7
      %v5323 = vor.u32 %v5319, %v5322
      %v5324 = vsel %vm4966, %v5315, %v5323
      %v5325 = vrot.slane %v5319, 4
      %vm5363 = vcmask 1043457
      %vm5364 = vsmask.f32 7942
      %vm5365 = vmand %vm5363, %vm5364
      %v5366 = vld [vmem:[#allocation3 + $0x8] sm:$0xe]
      %v5367 = vsel %vm5365, %v4974, %v5366
      %5368 = vst [vmem:[#allocation3 + $0x8] sm:$0xe] %v5367
      %5369 = vst [vmem:[#allocation3 + $0xc] sm:$0xf] %v4984
      %5370 = vst [vmem:[#allocation3 + $0x10] sm:$0xf] %v4994
      %5371 = vst [vmem:[#allocation3 + $0x14] sm:$0xf] %v5004
      %5372 = vst [vmem:[#allocation3 + $0x18] sm:$0xf] %v5014
      %5373 = vst [vmem:[#allocation3 + $0x1c] sm:$0xf] %v5024
      %5374 = vst [vmem:[#allocation3 + $0x20] sm:$0xf] %v5034
      %5375 = vst [vmem:[#allocation3 + $0x24] sm:$0xf] %v5044
      %5376 = vst [vmem:[#allocation3 + $0x28] sm:$0xf] %v5054
      %5377 = vst [vmem:[#allocation3 + $0x2c] sm:$0xf] %v5064
      %5378 = vst [vmem:[#allocation3 + $0x30] sm:$0xf] %v5074
      %5379 = vst [vmem:[#allocation3 + $0x34] sm:$0xf] %v5084
      %5380 = vst [vmem:[#allocation3 + $0x38] sm:$0xf] %v5094
      %5381 = vst [vmem:[#allocation3 + $0x3c] sm:$0xf] %v5104
      %5382 = vst [vmem:[#allocation3 + $0x40] sm:$0xf] %v5114
      %5383 = vst [vmem:[#allocation3 + $0x44] sm:$0xf] %v5124
      %5384 = vst [vmem:[#allocation3 + $0x48] sm:$0xf] %v5134
      %5385 = vst [vmem:[#allocation3 + $0x4c] sm:$0xf] %v5144
      %5386 = vst [vmem:[#allocation3 + $0x50] sm:$0xf] %v5154
      %5387 = vst [vmem:[#allocation3 + $0x54] sm:$0xf] %v5164
      %5388 = vst [vmem:[#allocation3 + $0x58] sm:$0xf] %v5174
      %5389 = vst [vmem:[#allocation3 + $0x5c] sm:$0xf] %v5184
      %5390 = vst [vmem:[#allocation3 + $0x60] sm:$0xf] %v5194
      %5391 = vst [vmem:[#allocation3 + $0x64] sm:$0xf] %v5204
      %5392 = vst [vmem:[#allocation3 + $0x68] sm:$0xf] %v5214
      %5393 = vst [vmem:[#allocation3 + $0x6c] sm:$0xf] %v5224
      %5394 = vst [vmem:[#allocation3 + $0x70] sm:$0xf] %v5234
      %5395 = vst [vmem:[#allocation3 + $0x74] sm:$0xf] %v5244
      %5396 = vst [vmem:[#allocation3 + $0x78] sm:$0xf] %v5254
      %5397 = vst [vmem:[#allocation3 + $0x7c] sm:$0xf] %v5264
      %5398 = vst [vmem:[#allocation3 + $0x80] sm:$0xf] %v5274
      %5399 = vst [vmem:[#allocation3 + $0x84] sm:$0xf] %v5284
      %5400 = vst [vmem:[#allocation3 + $0x88] sm:$0xf] %v5294
      %5401 = vst [vmem:[#allocation3 + $0x8c] sm:$0xf] %v5304
      %5402 = vst [vmem:[#allocation3 + $0x90] sm:$0xf] %v5314
      %5403 = vst [vmem:[#allocation3 + $0x94] sm:$0xf] %v5324
      %vm5404 = vcmask 1040384
      %vm5405 = vsmask.f32 256
      %vm5406 = vmand %vm5404, %vm5405
      %v5407 = vld [vmem:[#allocation3 + $0x98] sm:$0x1]
      %v5408 = vsel %vm5406, %v5325, %v5407
      %5409 = vst [vmem:[#allocation3 + $0x98] sm:$0x1] %v5408
      %vm5410 = vcmask 1041409
      %vm5411 = vmand %vm5410, %vm4964
      %v5412 = vld [vmem:[#allocation3 + $0x8] sm:$0x2]
      %v5413 = vsel %vm5411, 0, %v5412
      %5414 = vst [vmem:[#allocation3 + $0x8] sm:$0x2] %v5413
      %vm5415 = vmand %vm5410, %vm5364
      %v5416 = vld [vmem:[#allocation3 + $0x10] sm:$0x2]
      %v5417 = vsel %vm5415, 0, %v5416
      %5418 = vst [vmem:[#allocation3 + $0x10] sm:$0x2] %v5417
      %vm5419 = vcmask 1042434
      %vm5420 = vsmask.f32 2304
      %vm5421 = vmand %vm5419, %vm5420
      %v5422 = vld [vmem:[#allocation3 + $0x10] sm:$0x4]
      %v5423 = vsel %vm5421, 0, %v5422
      %5424 = vst [vmem:[#allocation3 + $0x10] sm:$0x4] %v5423
      %vm5425 = vsmask.f32 7946
      %vm5426 = vmand %vm5419, %vm5425
      %v5427 = vld [vmem:[#allocation3 + $0x18] sm:$0x4]
      %v5428 = vsel %vm5426, 0, %v5427
      %5429 = vst [vmem:[#allocation3 + $0x18] sm:$0x4] %v5428
      %vm5430 = vcmask 1043459
      %vm5431 = vsmask.f32 3328
      %vm5432 = vmand %vm5430, %vm5431
      %v5433 = vld [vmem:[#allocation3 + $0x18] sm:$0x8]
      %v5434 = vsel %vm5432, 0, %v5433
      %5435 = vst [vmem:[#allocation3 + $0x18] sm:$0x8] %v5434
      %vm5436 = vsmask.f32 7950
      %vm5437 = vmand %vm5430, %vm5436
      %v5438 = vld [vmem:[#allocation3 + $0x20] sm:$0x8]
      %v5439 = vsel %vm5437, 0, %v5438
      %5440 = vst [vmem:[#allocation3 + $0x20] sm:$0x8] %v5439
      %v5441 = vld [vmem:[#allocation3 + $0x24] sm:$0x1]
      %v5442 = vsel %vm5406, 0, %v5441
      %5443 = vst [vmem:[#allocation3 + $0x24] sm:$0x1] %v5442
      %vm5444 = vsmask.f32 7938
      %vm5445 = vmand %vm5404, %vm5444
      %v5446 = vld [vmem:[#allocation3 + $0x2c] sm:$0x1]
      %v5447 = vsel %vm5445, 0, %v5446
      %5448 = vst [vmem:[#allocation3 + $0x2c] sm:$0x1] %v5447
      %v5449 = vld [vmem:[#allocation3 + $0x2c] sm:$0x2]
      %v5450 = vsel %vm5411, 0, %v5449
      %5451 = vst [vmem:[#allocation3 + $0x2c] sm:$0x2] %v5450
      %v5452 = vld [vmem:[#allocation3 + $0x34] sm:$0x2]
      %v5453 = vsel %vm5415, 0, %v5452
      %5454 = vst [vmem:[#allocation3 + $0x34] sm:$0x2] %v5453
      %v5455 = vld [vmem:[#allocation3 + $0x34] sm:$0x4]
      %v5456 = vsel %vm5421, 0, %v5455
      %5457 = vst [vmem:[#allocation3 + $0x34] sm:$0x4] %v5456
      %v5458 = vld [vmem:[#allocation3 + $0x3c] sm:$0x4]
      %v5459 = vsel %vm5426, 0, %v5458
      %5460 = vst [vmem:[#allocation3 + $0x3c] sm:$0x4] %v5459
      %v5461 = vld [vmem:[#allocation3 + $0x3c] sm:$0x8]
      %v5462 = vsel %vm5432, 0, %v5461
      %5463 = vst [vmem:[#allocation3 + $0x3c] sm:$0x8] %v5462
      %v5464 = vld [vmem:[#allocation3 + $0x44] sm:$0x8]
      %v5465 = vsel %vm5437, 0, %v5464
      %5466 = vst [vmem:[#allocation3 + $0x44] sm:$0x8] %v5465
      %v5467 = vld [vmem:[#allocation3 + $0x48] sm:$0x1]
      %v5468 = vsel %vm5406, 0, %v5467
      %5469 = vst [vmem:[#allocation3 + $0x48] sm:$0x1] %v5468
      %v5470 = vld [vmem:[#allocation3 + $0x50] sm:$0x1]
      %v5471 = vsel %vm5445, 0, %v5470
      %5472 = vst [vmem:[#allocation3 + $0x50] sm:$0x1] %v5471
      %v5473 = vld [vmem:[#allocation3 + $0x50] sm:$0x2]
      %v5474 = vsel %vm5411, 0, %v5473
      %5475 = vst [vmem:[#allocation3 + $0x50] sm:$0x2] %v5474
      %v5476 = vld [vmem:[#allocation3 + $0x58] sm:$0x2]
      %v5477 = vsel %vm5415, 0, %v5476
      %5478 = vst [vmem:[#allocation3 + $0x58] sm:$0x2] %v5477
      %v5479 = vld [vmem:[#allocation3 + $0x58] sm:$0x4]
      %v5480 = vsel %vm5421, 0, %v5479
      %5481 = vst [vmem:[#allocation3 + $0x58] sm:$0x4] %v5480
      %v5482 = vld [vmem:[#allocation3 + $0x60] sm:$0x4]
      %v5483 = vsel %vm5426, 0, %v5482
      %5484 = vst [vmem:[#allocation3 + $0x60] sm:$0x4] %v5483
      %v5485 = vld [vmem:[#allocation3 + $0x60] sm:$0x8]
      %v5486 = vsel %vm5432, 0, %v5485
      %5487 = vst [vmem:[#allocation3 + $0x60] sm:$0x8] %v5486
      %v5488 = vld [vmem:[#allocation3 + $0x68] sm:$0x8]
      %v5489 = vsel %vm5437, 0, %v5488
      %5490 = vst [vmem:[#allocation3 + $0x68] sm:$0x8] %v5489
      %v5491 = vld [vmem:[#allocation3 + $0x6c] sm:$0x1]
      %v5492 = vsel %vm5406, 0, %v5491
      %5493 = vst [vmem:[#allocation3 + $0x6c] sm:$0x1] %v5492
      %v5494 = vld [vmem:[#allocation3 + $0x74] sm:$0x1]
      %v5495 = vsel %vm5445, 0, %v5494
      %5496 = vst [vmem:[#allocation3 + $0x74] sm:$0x1] %v5495
      %v5497 = vld [vmem:[#allocation3 + $0x74] sm:$0x2]
      %v5498 = vsel %vm5411, 0, %v5497
      %5499 = vst [vmem:[#allocation3 + $0x74] sm:$0x2] %v5498
      %v5500 = vld [vmem:[#allocation3 + $0x7c] sm:$0x2]
      %v5501 = vsel %vm5415, 0, %v5500
      %5502 = vst [vmem:[#allocation3 + $0x7c] sm:$0x2] %v5501
      %v5503 = vld [vmem:[#allocation3 + $0x7c] sm:$0x4]
      %v5504 = vsel %vm5421, 0, %v5503
      %5505 = vst [vmem:[#allocation3 + $0x7c] sm:$0x4] %v5504
      %v5506 = vld [vmem:[#allocation3 + $0x84] sm:$0x4]
      %v5507 = vsel %vm5426, 0, %v5506
      %5508 = vst [vmem:[#allocation3 + $0x84] sm:$0x4] %v5507
      %v5509 = vld [vmem:[#allocation3 + $0x84] sm:$0x8]
      %v5510 = vsel %vm5432, 0, %v5509
      %5511 = vst [vmem:[#allocation3 + $0x84] sm:$0x8] %v5510
      %v5512 = vld [vmem:[#allocation3 + $0x8c] sm:$0x8]
      %v5513 = vsel %vm5437, 0, %v5512
      %5514 = vst [vmem:[#allocation3 + $0x8c] sm:$0x8] %v5513
      %v5515 = vld [vmem:[#allocation3 + $0x90] sm:$0x1]
      %v5516 = vsel %vm5406, 0, %v5515
      %5517 = vst [vmem:[#allocation3 + $0x90] sm:$0x1] %v5516
      %v5518 = vld [vmem:[#allocation3 + $0x98] sm:$0x1]
      %v5519 = vsel %vm5445, 0, %v5518
      %5520 = vst [vmem:[#allocation3 + $0x98] sm:$0x1] %v5519
      %v5521 = vld [vmem:[#allocation3] sm:$0xf]
      %v5522 = vld [vmem:[#allocation3 + $0x4] sm:$0xf]
      %v5523 = vld [vmem:[#allocation3 + $0x8] sm:$0xf]
      %v5524 = vld [vmem:[#allocation3 + $0xc] sm:$0xf]
      %v5525 = vld [vmem:[#allocation3 + $0x10] sm:$0xf]
      %v5526 = vld [vmem:[#allocation3 + $0x14] sm:$0xf]
      %v5527 = vld [vmem:[#allocation3 + $0x18] sm:$0xf]
      %v5528 = vld [vmem:[#allocation3 + $0x1c] sm:$0xf]
      %v5529 = vld [vmem:[#allocation3 + $0x20] sm:$0xf]
      %v5530 = vld [vmem:[#allocation3 + $0x24] sm:$0xf]
      %v5531 = vld [vmem:[#allocation3 + $0x28] sm:$0xf]
      %v5532 = vld [vmem:[#allocation3 + $0x2c] sm:$0xf]
      %v5533 = vld [vmem:[#allocation3 + $0x30] sm:$0xf]
      %v5534 = vld [vmem:[#allocation3 + $0x34] sm:$0xf]
      %v5535 = vld [vmem:[#allocation3 + $0x38] sm:$0xf]
      %v5536 = vld [vmem:[#allocation3 + $0x3c] sm:$0xf]
      %v5537 = vld [vmem:[#allocation3 + $0x40] sm:$0xf]
      %v5538 = vld [vmem:[#allocation3 + $0x44] sm:$0xf]
      %v5539 = vld [vmem:[#allocation3 + $0x48] sm:$0xf]
      %v5540 = vld [vmem:[#allocation3 + $0x4c] sm:$0xf]
      %v5541 = vld [vmem:[#allocation3 + $0x50] sm:$0xf]
      %v5542 = vld [vmem:[#allocation3 + $0x54] sm:$0xf]
      %v5543 = vld [vmem:[#allocation3 + $0x58] sm:$0xf]
      %v5544 = vld [vmem:[#allocation3 + $0x5c] sm:$0xf]
      %v5545 = vld [vmem:[#allocation3 + $0x60] sm:$0xf]
      %v5546 = vld [vmem:[#allocation3 + $0x64] sm:$0xf]
      %v5547 = vld [vmem:[#allocation3 + $0x68] sm:$0xf]
      %v5548 = vld [vmem:[#allocation3 + $0x6c] sm:$0xf]
      %v5549 = vld [vmem:[#allocation3 + $0x70] sm:$0xf]
      %v5550 = vld [vmem:[#allocation3 + $0x74] sm:$0xf]
      %v5551 = vld [vmem:[#allocation3 + $0x78] sm:$0xf]
      %v5552 = vld [vmem:[#allocation3 + $0x7c] sm:$0xf]
      %v5553 = vld [vmem:[#allocation3 + $0x80] sm:$0xf]
      %v5554 = vld [vmem:[#allocation3 + $0x84] sm:$0xf]
      %v5555 = vld [vmem:[#allocation3 + $0x88] sm:$0xf]
      %v5556 = vld [vmem:[#allocation3 + $0x8c] sm:$0x7]
      %5557 = vst [vmem:[#allocation2] sm:$0xf] %v5521
      %5558 = vst [vmem:[#allocation2 + $0x24] sm:$0xf] %v5522
      %5559 = vst [vmem:[#allocation2 + $0x48] sm:$0xf] %v5523
      %5560 = vst [vmem:[#allocation2 + $0x6c] sm:$0xf] %v5524
      %5561 = vst [vmem:[#allocation2 + $0x90] sm:$0xf] %v5525
      %5562 = vst [vmem:[#allocation2 + $0xb4] sm:$0xf] %v5526
      %5563 = vst [vmem:[#allocation2 + $0xd8] sm:$0xf] %v5527
      %5564 = vst [vmem:[#allocation2 + $0xfc] sm:$0xf] %v5528
      %5565 = vst [vmem:[#allocation2 + $0x120] sm:$0xf] %v5529
      %5566 = vst [vmem:[#allocation2 + $0x144] sm:$0xf] %v5530
      %5567 = vst [vmem:[#allocation2 + $0x168] sm:$0xf] %v5531
      %5568 = vst [vmem:[#allocation2 + $0x18c] sm:$0xf] %v5532
      %5569 = vst [vmem:[#allocation2 + $0x1b0] sm:$0xf] %v5533
      %5570 = vst [vmem:[#allocation2 + $0x1d4] sm:$0xf] %v5534
      %5571 = vst [vmem:[#allocation2 + $0x1f8] sm:$0xf] %v5535
      %5572 = vst [vmem:[#allocation2 + $0x21c] sm:$0xf] %v5536
      %5573 = vst [vmem:[#allocation2 + $0x240] sm:$0xf] %v5537
      %5574 = vst [vmem:[#allocation2 + $0x264] sm:$0xf] %v5538
      %5575 = vst [vmem:[#allocation2 + $0x288] sm:$0xf] %v5539
      %5576 = vst [vmem:[#allocation2 + $0x2ac] sm:$0xf] %v5540
      %5577 = vst [vmem:[#allocation2 + $0x2d0] sm:$0xf] %v5541
      %5578 = vst [vmem:[#allocation2 + $0x2f4] sm:$0xf] %v5542
      %5579 = vst [vmem:[#allocation2 + $0x318] sm:$0xf] %v5543
      %5580 = vst [vmem:[#allocation2 + $0x33c] sm:$0xf] %v5544
      %5581 = vst [vmem:[#allocation2 + $0x360] sm:$0xf] %v5545
      %5582 = vst [vmem:[#allocation2 + $0x384] sm:$0xf] %v5546
      %5583 = vst [vmem:[#allocation2 + $0x3a8] sm:$0xf] %v5547
      %5584 = vst [vmem:[#allocation2 + $0x3cc] sm:$0xf] %v5548
      %5585 = vst [vmem:[#allocation2 + $0x3f0] sm:$0xf] %v5549
      %5586 = vst [vmem:[#allocation2 + $0x414] sm:$0xf] %v5550
      %5587 = vst [vmem:[#allocation2 + $0x438] sm:$0xf] %v5551
      %5588 = vst [vmem:[#allocation2 + $0x45c] sm:$0xf] %v5552
      %5589 = vst [vmem:[#allocation2 + $0x480] sm:$0xf] %v5553
      %5590 = vst [vmem:[#allocation2 + $0x4a4] sm:$0xf] %v5554
      %5591 = vst [vmem:[#allocation2 + $0x4c8] sm:$0xf] %v5555
      %5592 = vst [vmem:[#allocation2 + $0x4ec] sm:$0x7] %v5556
      %v5593 = vld [vmem:[#allocation3] sm:$0xf]
      %v5594 = vld [vmem:[#allocation3 + $0x4] sm:$0xf]
      %v5595 = vld [vmem:[#allocation3 + $0x8] sm:$0xf]
      %v5596 = vld [vmem:[#allocation3 + $0xc] sm:$0xf]
      %v5597 = vld [vmem:[#allocation3 + $0x10] sm:$0xf]
      %v5598 = vld [vmem:[#allocation3 + $0x14] sm:$0xf]
      %v5599 = vld [vmem:[#allocation3 + $0x18] sm:$0xf]
      %v5600 = vld [vmem:[#allocation3 + $0x1c] sm:$0xf]
      %v5601 = vld [vmem:[#allocation3 + $0x20] sm:$0xf]
      %v5602 = vld [vmem:[#allocation3 + $0x24] sm:$0xf]
      %v5603 = vld [vmem:[#allocation3 + $0x28] sm:$0xf]
      %v5604 = vld [vmem:[#allocation3 + $0x2c] sm:$0xf]
      %v5605 = vld [vmem:[#allocation3 + $0x30] sm:$0xf]
      %v5606 = vld [vmem:[#allocation3 + $0x34] sm:$0xf]
      %v5607 = vld [vmem:[#allocation3 + $0x38] sm:$0xf]
      %v5608 = vld [vmem:[#allocation3 + $0x3c] sm:$0xf]
      %v5609 = vld [vmem:[#allocation3 + $0x40] sm:$0xf]
      %v5610 = vld [vmem:[#allocation3 + $0x44] sm:$0xf]
      %v5611 = vld [vmem:[#allocation3 + $0x48] sm:$0xf]
      %v5612 = vld [vmem:[#allocation3 + $0x4c] sm:$0xf]
      %v5613 = vld [vmem:[#allocation3 + $0x50] sm:$0xf]
      %v5614 = vld [vmem:[#allocation3 + $0x54] sm:$0xf]
      %v5615 = vld [vmem:[#allocation3 + $0x58] sm:$0xf]
      %v5616 = vld [vmem:[#allocation3 + $0x5c] sm:$0xf]
      %v5617 = vld [vmem:[#allocation3 + $0x60] sm:$0xf]
      %v5618 = vld [vmem:[#allocation3 + $0x64] sm:$0xf]
      %v5619 = vld [vmem:[#allocation3 + $0x68] sm:$0xf]
      %v5620 = vld [vmem:[#allocation3 + $0x6c] sm:$0xf]
      %v5621 = vld [vmem:[#allocation3 + $0x70] sm:$0xf]
      %v5622 = vld [vmem:[#allocation3 + $0x74] sm:$0xf]
      %v5623 = vld [vmem:[#allocation3 + $0x78] sm:$0xf]
      %v5624 = vld [vmem:[#allocation3 + $0x7c] sm:$0xf]
      %v5625 = vld [vmem:[#allocation3 + $0x80] sm:$0xf]
      %v5626 = vld [vmem:[#allocation3 + $0x84] sm:$0xf]
      %v5627 = vld [vmem:[#allocation3 + $0x88] sm:$0xf]
      %v5628 = vld [vmem:[#allocation3 + $0x8c] sm:$0xf]
      %vm5629 = vsmask.f32 7440
      %vm5630 = vmor %vm5431, %vm5629
      %v5632 = vshrl.u32 %v5593, 16
      %v5634 = vrot.slane %v5632, 4
      %v5635 = vshll.u32 %v5593, 16
      %v5637 = vrot.slane %v5635, 5
      %v5638 = vor.u32 %v5634, %v5637
      %v5639 = vrot.slane %v5638, 4
      %v5641 = vshll.u32 %v5594, 16
      %v5643 = vrot.slane %v5641, 5
      %v5644 = vsel %vm5630, %v5639, %v5643
      %v5645 = vshrl.u32 %v5594, 16
      %v5647 = vrot.slane %v5645, 4
      %v5648 = vor.u32 %v5647, %v5643
      %v5649 = vrot.slane %v5648, 4
      %v5651 = vshll.u32 %v5595, 16
      %v5653 = vrot.slane %v5651, 5
      %v5654 = vsel %vm5630, %v5649, %v5653
      %v5655 = vshrl.u32 %v5595, 16
      %v5657 = vrot.slane %v5655, 4
      %v5658 = vor.u32 %v5657, %v5653
      %v5659 = vrot.slane %v5658, 4
      %v5661 = vshll.u32 %v5596, 16
      %v5663 = vrot.slane %v5661, 5
      %v5664 = vsel %vm5630, %v5659, %v5663
      %v5665 = vshrl.u32 %v5596, 16
      %v5667 = vrot.slane %v5665, 4
      %v5668 = vor.u32 %v5667, %v5663
      %v5669 = vrot.slane %v5668, 4
      %v5671 = vshll.u32 %v5597, 16
      %v5673 = vrot.slane %v5671, 5
      %v5674 = vsel %vm5630, %v5669, %v5673
      %v5675 = vshrl.u32 %v5597, 16
      %v5677 = vrot.slane %v5675, 4
      %v5678 = vor.u32 %v5677, %v5673
      %v5679 = vrot.slane %v5678, 4
      %v5681 = vshll.u32 %v5598, 16
      %v5683 = vrot.slane %v5681, 5
      %v5684 = vsel %vm5630, %v5679, %v5683
      %v5685 = vshrl.u32 %v5598, 16
      %v5687 = vrot.slane %v5685, 4
      %v5688 = vor.u32 %v5687, %v5683
      %v5689 = vrot.slane %v5688, 4
      %v5691 = vshll.u32 %v5599, 16
      %v5693 = vrot.slane %v5691, 5
      %v5694 = vsel %vm5630, %v5689, %v5693
      %v5695 = vshrl.u32 %v5599, 16
      %v5697 = vrot.slane %v5695, 4
      %v5698 = vor.u32 %v5697, %v5693
      %v5699 = vrot.slane %v5698, 4
      %v5701 = vshll.u32 %v5600, 16
      %v5703 = vrot.slane %v5701, 5
      %v5704 = vsel %vm5630, %v5699, %v5703
      %v5705 = vshrl.u32 %v5600, 16
      %v5707 = vrot.slane %v5705, 4
      %v5708 = vor.u32 %v5707, %v5703
      %v5709 = vrot.slane %v5708, 4
      %v5711 = vshll.u32 %v5601, 16
      %v5713 = vrot.slane %v5711, 5
      %v5714 = vsel %vm5630, %v5709, %v5713
      %v5715 = vshrl.u32 %v5601, 16
      %v5717 = vrot.slane %v5715, 4
      %v5718 = vor.u32 %v5717, %v5713
      %v5719 = vrot.slane %v5718, 4
      %v5721 = vshll.u32 %v5602, 16
      %v5723 = vrot.slane %v5721, 5
      %v5724 = vsel %vm5630, %v5719, %v5723
      %v5725 = vshrl.u32 %v5602, 16
      %v5727 = vrot.slane %v5725, 4
      %v5728 = vor.u32 %v5727, %v5723
      %v5729 = vrot.slane %v5728, 4
      %v5731 = vshll.u32 %v5603, 16
      %v5733 = vrot.slane %v5731, 5
      %v5734 = vsel %vm5630, %v5729, %v5733
      %v5735 = vshrl.u32 %v5603, 16
      %v5737 = vrot.slane %v5735, 4
      %v5738 = vor.u32 %v5737, %v5733
      %v5739 = vrot.slane %v5738, 4
      %v5741 = vshll.u32 %v5604, 16
      %v5743 = vrot.slane %v5741, 5
      %v5744 = vsel %vm5630, %v5739, %v5743
      %v5745 = vshrl.u32 %v5604, 16
      %v5747 = vrot.slane %v5745, 4
      %v5748 = vor.u32 %v5747, %v5743
      %v5749 = vrot.slane %v5748, 4
      %v5751 = vshll.u32 %v5605, 16
      %v5753 = vrot.slane %v5751, 5
      %v5754 = vsel %vm5630, %v5749, %v5753
      %v5755 = vshrl.u32 %v5605, 16
      %v5757 = vrot.slane %v5755, 4
      %v5758 = vor.u32 %v5757, %v5753
      %v5759 = vrot.slane %v5758, 4
      %v5761 = vshll.u32 %v5606, 16
      %v5763 = vrot.slane %v5761, 5
      %v5764 = vsel %vm5630, %v5759, %v5763
      %v5765 = vshrl.u32 %v5606, 16
      %v5767 = vrot.slane %v5765, 4
      %v5768 = vor.u32 %v5767, %v5763
      %v5769 = vrot.slane %v5768, 4
      %v5771 = vshll.u32 %v5607, 16
      %v5773 = vrot.slane %v5771, 5
      %v5774 = vsel %vm5630, %v5769, %v5773
      %v5775 = vshrl.u32 %v5607, 16
      %v5777 = vrot.slane %v5775, 4
      %v5778 = vor.u32 %v5777, %v5773
      %v5779 = vrot.slane %v5778, 4
      %v5781 = vshll.u32 %v5608, 16
      %v5783 = vrot.slane %v5781, 5
      %v5784 = vsel %vm5630, %v5779, %v5783
      %v5785 = vshrl.u32 %v5608, 16
      %v5787 = vrot.slane %v5785, 4
      %v5788 = vor.u32 %v5787, %v5783
      %v5789 = vrot.slane %v5788, 4
      %v5791 = vshll.u32 %v5609, 16
      %v5793 = vrot.slane %v5791, 5
      %v5794 = vsel %vm5630, %v5789, %v5793
      %v5795 = vshrl.u32 %v5609, 16
      %v5797 = vrot.slane %v5795, 4
      %v5798 = vor.u32 %v5797, %v5793
      %v5799 = vrot.slane %v5798, 4
      %v5801 = vshll.u32 %v5610, 16
      %v5803 = vrot.slane %v5801, 5
      %v5804 = vsel %vm5630, %v5799, %v5803
      %v5805 = vshrl.u32 %v5610, 16
      %v5807 = vrot.slane %v5805, 4
      %v5808 = vor.u32 %v5807, %v5803
      %v5809 = vrot.slane %v5808, 4
      %v5811 = vshll.u32 %v5611, 16
      %v5813 = vrot.slane %v5811, 5
      %v5814 = vsel %vm5630, %v5809, %v5813
      %v5815 = vshrl.u32 %v5611, 16
      %v5817 = vrot.slane %v5815, 4
      %v5818 = vor.u32 %v5817, %v5813
      %v5819 = vrot.slane %v5818, 4
      %v5821 = vshll.u32 %v5612, 16
      %v5823 = vrot.slane %v5821, 5
      %v5824 = vsel %vm5630, %v5819, %v5823
      %v5825 = vshrl.u32 %v5612, 16
      %v5827 = vrot.slane %v5825, 4
      %v5828 = vor.u32 %v5827, %v5823
      %v5829 = vrot.slane %v5828, 4
      %v5831 = vshll.u32 %v5613, 16
      %v5833 = vrot.slane %v5831, 5
      %v5834 = vsel %vm5630, %v5829, %v5833
      %v5835 = vshrl.u32 %v5613, 16
      %v5837 = vrot.slane %v5835, 4
      %v5838 = vor.u32 %v5837, %v5833
      %v5839 = vrot.slane %v5838, 4
      %v5841 = vshll.u32 %v5614, 16
      %v5843 = vrot.slane %v5841, 5
      %v5844 = vsel %vm5630, %v5839, %v5843
      %v5845 = vshrl.u32 %v5614, 16
      %v5847 = vrot.slane %v5845, 4
      %v5848 = vor.u32 %v5847, %v5843
      %v5849 = vrot.slane %v5848, 4
      %v5851 = vshll.u32 %v5615, 16
      %v5853 = vrot.slane %v5851, 5
      %v5854 = vsel %vm5630, %v5849, %v5853
      %v5855 = vshrl.u32 %v5615, 16
      %v5857 = vrot.slane %v5855, 4
      %v5858 = vor.u32 %v5857, %v5853
      %v5859 = vrot.slane %v5858, 4
      %v5861 = vshll.u32 %v5616, 16
      %v5863 = vrot.slane %v5861, 5
      %v5864 = vsel %vm5630, %v5859, %v5863
      %v5865 = vshrl.u32 %v5616, 16
      %v5867 = vrot.slane %v5865, 4
      %v5868 = vor.u32 %v5867, %v5863
      %v5869 = vrot.slane %v5868, 4
      %v5871 = vshll.u32 %v5617, 16
      %v5873 = vrot.slane %v5871, 5
      %v5874 = vsel %vm5630, %v5869, %v5873
      %v5875 = vshrl.u32 %v5617, 16
      %v5877 = vrot.slane %v5875, 4
      %v5878 = vor.u32 %v5877, %v5873
      %v5879 = vrot.slane %v5878, 4
      %v5881 = vshll.u32 %v5618, 16
      %v5883 = vrot.slane %v5881, 5
      %v5884 = vsel %vm5630, %v5879, %v5883
      %v5885 = vshrl.u32 %v5618, 16
      %v5887 = vrot.slane %v5885, 4
      %v5888 = vor.u32 %v5887, %v5883
      %v5889 = vrot.slane %v5888, 4
      %v5891 = vshll.u32 %v5619, 16
      %v5893 = vrot.slane %v5891, 5
      %v5894 = vsel %vm5630, %v5889, %v5893
      %v5895 = vshrl.u32 %v5619, 16
      %v5897 = vrot.slane %v5895, 4
      %v5898 = vor.u32 %v5897, %v5893
      %v5899 = vrot.slane %v5898, 4
      %v5901 = vshll.u32 %v5620, 16
      %v5903 = vrot.slane %v5901, 5
      %v5904 = vsel %vm5630, %v5899, %v5903
      %v5905 = vshrl.u32 %v5620, 16
      %v5907 = vrot.slane %v5905, 4
      %v5908 = vor.u32 %v5907, %v5903
      %v5909 = vrot.slane %v5908, 4
      %v5911 = vshll.u32 %v5621, 16
      %v5913 = vrot.slane %v5911, 5
      %v5914 = vsel %vm5630, %v5909, %v5913
      %v5915 = vshrl.u32 %v5621, 16
      %v5917 = vrot.slane %v5915, 4
      %v5918 = vor.u32 %v5917, %v5913
      %v5919 = vrot.slane %v5918, 4
      %v5921 = vshll.u32 %v5622, 16
      %v5923 = vrot.slane %v5921, 5
      %v5924 = vsel %vm5630, %v5919, %v5923
      %v5925 = vshrl.u32 %v5622, 16
      %v5927 = vrot.slane %v5925, 4
      %v5928 = vor.u32 %v5927, %v5923
      %v5929 = vrot.slane %v5928, 4
      %v5931 = vshll.u32 %v5623, 16
      %v5933 = vrot.slane %v5931, 5
      %v5934 = vsel %vm5630, %v5929, %v5933
      %v5935 = vshrl.u32 %v5623, 16
      %v5937 = vrot.slane %v5935, 4
      %v5938 = vor.u32 %v5937, %v5933
      %v5939 = vrot.slane %v5938, 4
      %v5941 = vshll.u32 %v5624, 16
      %v5943 = vrot.slane %v5941, 5
      %v5944 = vsel %vm5630, %v5939, %v5943
      %v5945 = vshrl.u32 %v5624, 16
      %v5947 = vrot.slane %v5945, 4
      %v5948 = vor.u32 %v5947, %v5943
      %v5949 = vrot.slane %v5948, 4
      %v5951 = vshll.u32 %v5625, 16
      %v5953 = vrot.slane %v5951, 5
      %v5954 = vsel %vm5630, %v5949, %v5953
      %v5955 = vshrl.u32 %v5625, 16
      %v5957 = vrot.slane %v5955, 4
      %v5958 = vor.u32 %v5957, %v5953
      %v5959 = vrot.slane %v5958, 4
      %v5961 = vshll.u32 %v5626, 16
      %v5963 = vrot.slane %v5961, 5
      %v5964 = vsel %vm5630, %v5959, %v5963
      %v5965 = vshrl.u32 %v5626, 16
      %v5967 = vrot.slane %v5965, 4
      %v5968 = vor.u32 %v5967, %v5963
      %v5969 = vrot.slane %v5968, 4
      %v5971 = vshll.u32 %v5627, 16
      %v5973 = vrot.slane %v5971, 5
      %v5974 = vsel %vm5630, %v5969, %v5973
      %v5975 = vshrl.u32 %v5627, 16
      %v5977 = vrot.slane %v5975, 4
      %v5978 = vor.u32 %v5977, %v5973
      %v5979 = vrot.slane %v5978, 4
      %v5981 = vshll.u32 %v5628, 16
      %v5983 = vrot.slane %v5981, 5
      %v5984 = vsel %vm5630, %v5979, %v5983
      %v5985 = vshrl.u32 %v5628, 16
      %v5987 = vrot.slane %v5985, 4
      %v5988 = vor.u32 %v5987, %v5983
      %v5989 = vrot.slane %v5988, 4
      %6026 = vst [vmem:[#allocation2 + $0x4] sm:$0xf] %v5644
      %6027 = vst [vmem:[#allocation2 + $0x28] sm:$0xf] %v5654
      %6028 = vst [vmem:[#allocation2 + $0x4c] sm:$0xf] %v5664
      %6029 = vst [vmem:[#allocation2 + $0x70] sm:$0xf] %v5674
      %6030 = vst [vmem:[#allocation2 + $0x94] sm:$0xf] %v5684
      %6031 = vst [vmem:[#allocation2 + $0xb8] sm:$0xf] %v5694
      %6032 = vst [vmem:[#allocation2 + $0xdc] sm:$0xf] %v5704
      %6033 = vst [vmem:[#allocation2 + $0x100] sm:$0xf] %v5714
      %6034 = vst [vmem:[#allocation2 + $0x124] sm:$0xf] %v5724
      %6035 = vst [vmem:[#allocation2 + $0x148] sm:$0xf] %v5734
      %6036 = vst [vmem:[#allocation2 + $0x16c] sm:$0xf] %v5744
      %6037 = vst [vmem:[#allocation2 + $0x190] sm:$0xf] %v5754
      %6038 = vst [vmem:[#allocation2 + $0x1b4] sm:$0xf] %v5764
      %6039 = vst [vmem:[#allocation2 + $0x1d8] sm:$0xf] %v5774
      %6040 = vst [vmem:[#allocation2 + $0x1fc] sm:$0xf] %v5784
      %6041 = vst [vmem:[#allocation2 + $0x220] sm:$0xf] %v5794
      %6042 = vst [vmem:[#allocation2 + $0x244] sm:$0xf] %v5804
      %6043 = vst [vmem:[#allocation2 + $0x268] sm:$0xf] %v5814
      %6044 = vst [vmem:[#allocation2 + $0x28c] sm:$0xf] %v5824
      %6045 = vst [vmem:[#allocation2 + $0x2b0] sm:$0xf] %v5834
      %6046 = vst [vmem:[#allocation2 + $0x2d4] sm:$0xf] %v5844
      %6047 = vst [vmem:[#allocation2 + $0x2f8] sm:$0xf] %v5854
      %6048 = vst [vmem:[#allocation2 + $0x31c] sm:$0xf] %v5864
      %6049 = vst [vmem:[#allocation2 + $0x340] sm:$0xf] %v5874
      %6050 = vst [vmem:[#allocation2 + $0x364] sm:$0xf] %v5884
      %6051 = vst [vmem:[#allocation2 + $0x388] sm:$0xf] %v5894
      %6052 = vst [vmem:[#allocation2 + $0x3ac] sm:$0xf] %v5904
      %6053 = vst [vmem:[#allocation2 + $0x3d0] sm:$0xf] %v5914
      %6054 = vst [vmem:[#allocation2 + $0x3f4] sm:$0xf] %v5924
      %6055 = vst [vmem:[#allocation2 + $0x418] sm:$0xf] %v5934
      %6056 = vst [vmem:[#allocation2 + $0x43c] sm:$0xf] %v5944
      %6057 = vst [vmem:[#allocation2 + $0x460] sm:$0xf] %v5954
      %6058 = vst [vmem:[#allocation2 + $0x484] sm:$0xf] %v5964
      %6059 = vst [vmem:[#allocation2 + $0x4a8] sm:$0xf] %v5974
      %6060 = vst [vmem:[#allocation2 + $0x4cc] sm:$0xf] %v5984
      %6061 = vst [vmem:[#allocation2 + $0x4f0] sm:$0x7] %v5989
      %v6062 = vld [vmem:[#allocation3] sm:$0xe]
      %v6063 = vld [vmem:[#allocation3 + $0x4] sm:$0xf]
      %v6064 = vld [vmem:[#allocation3 + $0x8] sm:$0xf]
      %v6065 = vld [vmem:[#allocation3 + $0xc] sm:$0xf]
      %v6066 = vld [vmem:[#allocation3 + $0x10] sm:$0xf]
      %v6067 = vld [vmem:[#allocation3 + $0x14] sm:$0xf]
      %v6068 = vld [vmem:[#allocation3 + $0x18] sm:$0xf]
      %v6069 = vld [vmem:[#allocation3 + $0x1c] sm:$0xf]
      %v6070 = vld [vmem:[#allocation3 + $0x20] sm:$0xf]
      %v6071 = vld [vmem:[#allocation3 + $0x24] sm:$0xf]
      %v6072 = vld [vmem:[#allocation3 + $0x28] sm:$0xf]
      %v6073 = vld [vmem:[#allocation3 + $0x2c] sm:$0xf]
      %v6074 = vld [vmem:[#allocation3 + $0x30] sm:$0xf]
      %v6075 = vld [vmem:[#allocation3 + $0x34] sm:$0xf]
      %v6076 = vld [vmem:[#allocation3 + $0x38] sm:$0xf]
      %v6077 = vld [vmem:[#allocation3 + $0x3c] sm:$0xf]
      %v6078 = vld [vmem:[#allocation3 + $0x40] sm:$0xf]
      %v6079 = vld [vmem:[#allocation3 + $0x44] sm:$0xf]
      %v6080 = vld [vmem:[#allocation3 + $0x48] sm:$0xf]
      %v6081 = vld [vmem:[#allocation3 + $0x4c] sm:$0xf]
      %v6082 = vld [vmem:[#allocation3 + $0x50] sm:$0xf]
      %v6083 = vld [vmem:[#allocation3 + $0x54] sm:$0xf]
      %v6084 = vld [vmem:[#allocation3 + $0x58] sm:$0xf]
      %v6085 = vld [vmem:[#allocation3 + $0x5c] sm:$0xf]
      %v6086 = vld [vmem:[#allocation3 + $0x60] sm:$0xf]
      %v6087 = vld [vmem:[#allocation3 + $0x64] sm:$0xf]
      %v6088 = vld [vmem:[#allocation3 + $0x68] sm:$0xf]
      %v6089 = vld [vmem:[#allocation3 + $0x6c] sm:$0xf]
      %v6090 = vld [vmem:[#allocation3 + $0x70] sm:$0xf]
      %v6091 = vld [vmem:[#allocation3 + $0x74] sm:$0xf]
      %v6092 = vld [vmem:[#allocation3 + $0x78] sm:$0xf]
      %v6093 = vld [vmem:[#allocation3 + $0x7c] sm:$0xf]
      %v6094 = vld [vmem:[#allocation3 + $0x80] sm:$0xf]
      %v6095 = vld [vmem:[#allocation3 + $0x84] sm:$0xf]
      %v6096 = vld [vmem:[#allocation3 + $0x88] sm:$0xf]
      %v6097 = vld [vmem:[#allocation3 + $0x8c] sm:$0xf]
      %vm6134 = vcmask 1042432
      %vm6135 = vcmask 1046532
      %vm6136 = vmor %vm6134, %vm6135
      %v6137 = vrot.slane %v6062, 5
      %v6138 = vrot.slane %v6137, 4
      %v6139 = vrot.slane %v6063, 5
      %v6140 = vsel %vm6136, %v6138, %v6139
      %v6141 = vrot.slane %v6139, 4
      %v6142 = vrot.slane %v6064, 5
      %v6143 = vsel %vm6136, %v6141, %v6142
      %v6144 = vrot.slane %v6142, 4
      %v6145 = vrot.slane %v6065, 5
      %v6146 = vsel %vm6136, %v6144, %v6145
      %v6147 = vrot.slane %v6145, 4
      %v6148 = vrot.slane %v6066, 5
      %v6149 = vsel %vm6136, %v6147, %v6148
      %v6150 = vrot.slane %v6148, 4
      %v6151 = vrot.slane %v6067, 5
      %v6152 = vsel %vm6136, %v6150, %v6151
      %v6153 = vrot.slane %v6151, 4
      %v6154 = vrot.slane %v6068, 5
      %v6155 = vsel %vm6136, %v6153, %v6154
      %v6156 = vrot.slane %v6154, 4
      %v6157 = vrot.slane %v6069, 5
      %v6158 = vsel %vm6136, %v6156, %v6157
      %v6159 = vrot.slane %v6157, 4
      %v6160 = vrot.slane %v6070, 5
      %v6161 = vsel %vm6136, %v6159, %v6160
      %v6162 = vrot.slane %v6160, 4
      %v6163 = vrot.slane %v6071, 5
      %v6164 = vsel %vm6136, %v6162, %v6163
      %v6165 = vrot.slane %v6163, 4
      %v6166 = vrot.slane %v6072, 5
      %v6167 = vsel %vm6136, %v6165, %v6166
      %v6168 = vrot.slane %v6166, 4
      %v6169 = vrot.slane %v6073, 5
      %v6170 = vsel %vm6136, %v6168, %v6169
      %v6171 = vrot.slane %v6169, 4
      %v6172 = vrot.slane %v6074, 5
      %v6173 = vsel %vm6136, %v6171, %v6172
      %v6174 = vrot.slane %v6172, 4
      %v6175 = vrot.slane %v6075, 5
      %v6176 = vsel %vm6136, %v6174, %v6175
      %v6177 = vrot.slane %v6175, 4
      %v6178 = vrot.slane %v6076, 5
      %v6179 = vsel %vm6136, %v6177, %v6178
      %v6180 = vrot.slane %v6178, 4
      %v6181 = vrot.slane %v6077, 5
      %v6182 = vsel %vm6136, %v6180, %v6181
      %v6183 = vrot.slane %v6181, 4
      %v6184 = vrot.slane %v6078, 5
      %v6185 = vsel %vm6136, %v6183, %v6184
      %v6186 = vrot.slane %v6184, 4
      %v6187 = vrot.slane %v6079, 5
      %v6188 = vsel %vm6136, %v6186, %v6187
      %v6189 = vrot.slane %v6187, 4
      %v6190 = vrot.slane %v6080, 5
      %v6191 = vsel %vm6136, %v6189, %v6190
      %v6192 = vrot.slane %v6190, 4
      %v6193 = vrot.slane %v6081, 5
      %v6194 = vsel %vm6136, %v6192, %v6193
      %v6195 = vrot.slane %v6193, 4
      %v6196 = vrot.slane %v6082, 5
      %v6197 = vsel %vm6136, %v6195, %v6196
      %v6198 = vrot.slane %v6196, 4
      %v6199 = vrot.slane %v6083, 5
      %v6200 = vsel %vm6136, %v6198, %v6199
      %v6201 = vrot.slane %v6199, 4
      %v6202 = vrot.slane %v6084, 5
      %v6203 = vsel %vm6136, %v6201, %v6202
      %v6204 = vrot.slane %v6202, 4
      %v6205 = vrot.slane %v6085, 5
      %v6206 = vsel %vm6136, %v6204, %v6205
      %v6207 = vrot.slane %v6205, 4
      %v6208 = vrot.slane %v6086, 5
      %v6209 = vsel %vm6136, %v6207, %v6208
      %v6210 = vrot.slane %v6208, 4
      %v6211 = vrot.slane %v6087, 5
      %v6212 = vsel %vm6136, %v6210, %v6211
      %v6213 = vrot.slane %v6211, 4
      %v6214 = vrot.slane %v6088, 5
      %v6215 = vsel %vm6136, %v6213, %v6214
      %v6216 = vrot.slane %v6214, 4
      %v6217 = vrot.slane %v6089, 5
      %v6218 = vsel %vm6136, %v6216, %v6217
      %v6219 = vrot.slane %v6217, 4
      %v6220 = vrot.slane %v6090, 5
      %v6221 = vsel %vm6136, %v6219, %v6220
      %v6222 = vrot.slane %v6220, 4
      %v6223 = vrot.slane %v6091, 5
      %v6224 = vsel %vm6136, %v6222, %v6223
      %v6225 = vrot.slane %v6223, 4
      %v6226 = vrot.slane %v6092, 5
      %v6227 = vsel %vm6136, %v6225, %v6226
      %v6228 = vrot.slane %v6226, 4
      %v6229 = vrot.slane %v6093, 5
      %v6230 = vsel %vm6136, %v6228, %v6229
      %v6231 = vrot.slane %v6229, 4
      %v6232 = vrot.slane %v6094, 5
      %v6233 = vsel %vm6136, %v6231, %v6232
      %v6234 = vrot.slane %v6232, 4
      %v6235 = vrot.slane %v6095, 5
      %v6236 = vsel %vm6136, %v6234, %v6235
      %v6237 = vrot.slane %v6235, 4
      %v6238 = vrot.slane %v6096, 5
      %v6239 = vsel %vm6136, %v6237, %v6238
      %v6240 = vrot.slane %v6238, 4
      %v6241 = vrot.slane %v6097, 5
      %v6242 = vsel %vm6136, %v6240, %v6241
      %v6243 = vrot.slane %v6241, 4
      %6280 = vst [vmem:[#allocation2 + $0x8] sm:$0xf] %v6140
      %6281 = vst [vmem:[#allocation2 + $0x2c] sm:$0xf] %v6143
      %6282 = vst [vmem:[#allocation2 + $0x50] sm:$0xf] %v6146
      %6283 = vst [vmem:[#allocation2 + $0x74] sm:$0xf] %v6149
      %6284 = vst [vmem:[#allocation2 + $0x98] sm:$0xf] %v6152
      %6285 = vst [vmem:[#allocation2 + $0xbc] sm:$0xf] %v6155
      %6286 = vst [vmem:[#allocation2 + $0xe0] sm:$0xf] %v6158
      %6287 = vst [vmem:[#allocation2 + $0x104] sm:$0xf] %v6161
      %6288 = vst [vmem:[#allocation2 + $0x128] sm:$0xf] %v6164
      %6289 = vst [vmem:[#allocation2 + $0x14c] sm:$0xf] %v6167
      %6290 = vst [vmem:[#allocation2 + $0x170] sm:$0xf] %v6170
      %6291 = vst [vmem:[#allocation2 + $0x194] sm:$0xf] %v6173
      %6292 = vst [vmem:[#allocation2 + $0x1b8] sm:$0xf] %v6176
      %6293 = vst [vmem:[#allocation2 + $0x1dc] sm:$0xf] %v6179
      %6294 = vst [vmem:[#allocation2 + $0x200] sm:$0xf] %v6182
      %6295 = vst [vmem:[#allocation2 + $0x224] sm:$0xf] %v6185
      %6296 = vst [vmem:[#allocation2 + $0x248] sm:$0xf] %v6188
      %6297 = vst [vmem:[#allocation2 + $0x26c] sm:$0xf] %v6191
      %6298 = vst [vmem:[#allocation2 + $0x290] sm:$0xf] %v6194
      %6299 = vst [vmem:[#allocation2 + $0x2b4] sm:$0xf] %v6197
      %6300 = vst [vmem:[#allocation2 + $0x2d8] sm:$0xf] %v6200
      %6301 = vst [vmem:[#allocation2 + $0x2fc] sm:$0xf] %v6203
      %6302 = vst [vmem:[#allocation2 + $0x320] sm:$0xf] %v6206
      %6303 = vst [vmem:[#allocation2 + $0x344] sm:$0xf] %v6209
      %6304 = vst [vmem:[#allocation2 + $0x368] sm:$0xf] %v6212
      %6305 = vst [vmem:[#allocation2 + $0x38c] sm:$0xf] %v6215
      %6306 = vst [vmem:[#allocation2 + $0x3b0] sm:$0xf] %v6218
      %6307 = vst [vmem:[#allocation2 + $0x3d4] sm:$0xf] %v6221
      %6308 = vst [vmem:[#allocation2 + $0x3f8] sm:$0xf] %v6224
      %6309 = vst [vmem:[#allocation2 + $0x41c] sm:$0xf] %v6227
      %6310 = vst [vmem:[#allocation2 + $0x440] sm:$0xf] %v6230
      %6311 = vst [vmem:[#allocation2 + $0x464] sm:$0xf] %v6233
      %6312 = vst [vmem:[#allocation2 + $0x488] sm:$0xf] %v6236
      %6313 = vst [vmem:[#allocation2 + $0x4ac] sm:$0xf] %v6239
      %6314 = vst [vmem:[#allocation2 + $0x4d0] sm:$0xf] %v6242
      %6315 = vst [vmem:[#allocation2 + $0x4f4] sm:$0x7] %v6243
      %v6316 = vld [vmem:[#allocation3 + $0x8] sm:$0xe]
      %v6317 = vld [vmem:[#allocation3 + $0xc] sm:$0xf]
      %v6318 = vld [vmem:[#allocation3 + $0x10] sm:$0xf]
      %v6319 = vld [vmem:[#allocation3 + $0x14] sm:$0xf]
      %v6320 = vld [vmem:[#allocation3 + $0x18] sm:$0xf]
      %v6321 = vld [vmem:[#allocation3 + $0x1c] sm:$0xf]
      %v6322 = vld [vmem:[#allocation3 + $0x20] sm:$0xf]
      %v6323 = vld [vmem:[#allocation3 + $0x24] sm:$0xf]
      %v6324 = vld [vmem:[#allocation3 + $0x28] sm:$0xf]
      %v6325 = vld [vmem:[#allocation3 + $0x2c] sm:$0xf]
      %v6326 = vld [vmem:[#allocation3 + $0x30] sm:$0xf]
      %v6327 = vld [vmem:[#allocation3 + $0x34] sm:$0xf]
      %v6328 = vld [vmem:[#allocation3 + $0x38] sm:$0xf]
      %v6329 = vld [vmem:[#allocation3 + $0x3c] sm:$0xf]
      %v6330 = vld [vmem:[#allocation3 + $0x40] sm:$0xf]
      %v6331 = vld [vmem:[#allocation3 + $0x44] sm:$0xf]
      %v6332 = vld [vmem:[#allocation3 + $0x48] sm:$0xf]
      %v6333 = vld [vmem:[#allocation3 + $0x4c] sm:$0xf]
      %v6334 = vld [vmem:[#allocation3 + $0x50] sm:$0xf]
      %v6335 = vld [vmem:[#allocation3 + $0x54] sm:$0xf]
      %v6336 = vld [vmem:[#allocation3 + $0x58] sm:$0xf]
      %v6337 = vld [vmem:[#allocation3 + $0x5c] sm:$0xf]
      %v6338 = vld [vmem:[#allocation3 + $0x60] sm:$0xf]
      %v6339 = vld [vmem:[#allocation3 + $0x64] sm:$0xf]
      %v6340 = vld [vmem:[#allocation3 + $0x68] sm:$0xf]
      %v6341 = vld [vmem:[#allocation3 + $0x6c] sm:$0xf]
      %v6342 = vld [vmem:[#allocation3 + $0x70] sm:$0xf]
      %v6343 = vld [vmem:[#allocation3 + $0x74] sm:$0xf]
      %v6344 = vld [vmem:[#allocation3 + $0x78] sm:$0xf]
      %v6345 = vld [vmem:[#allocation3 + $0x7c] sm:$0xf]
      %v6346 = vld [vmem:[#allocation3 + $0x80] sm:$0xf]
      %v6347 = vld [vmem:[#allocation3 + $0x84] sm:$0xf]
      %v6348 = vld [vmem:[#allocation3 + $0x88] sm:$0xf]
      %v6349 = vld [vmem:[#allocation3 + $0x8c] sm:$0xf]
      %v6350 = vld [vmem:[#allocation3 + $0x90] sm:$0xf]
      %v6351 = vld [vmem:[#allocation3 + $0x94] sm:$0xf]
      %v6388 = vrot.slane %v6316, 5
      %v6389 = vrot.slane %v6388, 4
      %v6390 = vrot.slane %v6317, 5
      %v6391 = vsel %vm6136, %v6389, %v6390
      %v6392 = vrot.slane %v6390, 4
      %v6393 = vrot.slane %v6318, 5
      %v6394 = vsel %vm6136, %v6392, %v6393
      %v6395 = vrot.slane %v6393, 4
      %v6396 = vrot.slane %v6319, 5
      %v6397 = vsel %vm6136, %v6395, %v6396
      %v6398 = vrot.slane %v6396, 4
      %v6399 = vrot.slane %v6320, 5
      %v6400 = vsel %vm6136, %v6398, %v6399
      %v6401 = vrot.slane %v6399, 4
      %v6402 = vrot.slane %v6321, 5
      %v6403 = vsel %vm6136, %v6401, %v6402
      %v6404 = vrot.slane %v6402, 4
      %v6405 = vrot.slane %v6322, 5
      %v6406 = vsel %vm6136, %v6404, %v6405
      %v6407 = vrot.slane %v6405, 4
      %v6408 = vrot.slane %v6323, 5
      %v6409 = vsel %vm6136, %v6407, %v6408
      %v6410 = vrot.slane %v6408, 4
      %v6411 = vrot.slane %v6324, 5
      %v6412 = vsel %vm6136, %v6410, %v6411
      %v6413 = vrot.slane %v6411, 4
      %v6414 = vrot.slane %v6325, 5
      %v6415 = vsel %vm6136, %v6413, %v6414
      %v6416 = vrot.slane %v6414, 4
      %v6417 = vrot.slane %v6326, 5
      %v6418 = vsel %vm6136, %v6416, %v6417
      %v6419 = vrot.slane %v6417, 4
      %v6420 = vrot.slane %v6327, 5
      %v6421 = vsel %vm6136, %v6419, %v6420
      %v6422 = vrot.slane %v6420, 4
      %v6423 = vrot.slane %v6328, 5
      %v6424 = vsel %vm6136, %v6422, %v6423
      %v6425 = vrot.slane %v6423, 4
      %v6426 = vrot.slane %v6329, 5
      %v6427 = vsel %vm6136, %v6425, %v6426
      %v6428 = vrot.slane %v6426, 4
      %v6429 = vrot.slane %v6330, 5
      %v6430 = vsel %vm6136, %v6428, %v6429
      %v6431 = vrot.slane %v6429, 4
      %v6432 = vrot.slane %v6331, 5
      %v6433 = vsel %vm6136, %v6431, %v6432
      %v6434 = vrot.slane %v6432, 4
      %v6435 = vrot.slane %v6332, 5
      %v6436 = vsel %vm6136, %v6434, %v6435
      %v6437 = vrot.slane %v6435, 4
      %v6438 = vrot.slane %v6333, 5
      %v6439 = vsel %vm6136, %v6437, %v6438
      %v6440 = vrot.slane %v6438, 4
      %v6441 = vrot.slane %v6334, 5
      %v6442 = vsel %vm6136, %v6440, %v6441
      %v6443 = vrot.slane %v6441, 4
      %v6444 = vrot.slane %v6335, 5
      %v6445 = vsel %vm6136, %v6443, %v6444
      %v6446 = vrot.slane %v6444, 4
      %v6447 = vrot.slane %v6336, 5
      %v6448 = vsel %vm6136, %v6446, %v6447
      %v6449 = vrot.slane %v6447, 4
      %v6450 = vrot.slane %v6337, 5
      %v6451 = vsel %vm6136, %v6449, %v6450
      %v6452 = vrot.slane %v6450, 4
      %v6453 = vrot.slane %v6338, 5
      %v6454 = vsel %vm6136, %v6452, %v6453
      %v6455 = vrot.slane %v6453, 4
      %v6456 = vrot.slane %v6339, 5
      %v6457 = vsel %vm6136, %v6455, %v6456
      %v6458 = vrot.slane %v6456, 4
      %v6459 = vrot.slane %v6340, 5
      %v6460 = vsel %vm6136, %v6458, %v6459
      %v6461 = vrot.slane %v6459, 4
      %v6462 = vrot.slane %v6341, 5
      %v6463 = vsel %vm6136, %v6461, %v6462
      %v6464 = vrot.slane %v6462, 4
      %v6465 = vrot.slane %v6342, 5
      %v6466 = vsel %vm6136, %v6464, %v6465
      %v6467 = vrot.slane %v6465, 4
      %v6468 = vrot.slane %v6343, 5
      %v6469 = vsel %vm6136, %v6467, %v6468
      %v6470 = vrot.slane %v6468, 4
      %v6471 = vrot.slane %v6344, 5
      %v6472 = vsel %vm6136, %v6470, %v6471
      %v6473 = vrot.slane %v6471, 4
      %v6474 = vrot.slane %v6345, 5
      %v6475 = vsel %vm6136, %v6473, %v6474
      %v6476 = vrot.slane %v6474, 4
      %v6477 = vrot.slane %v6346, 5
      %v6478 = vsel %vm6136, %v6476, %v6477
      %v6479 = vrot.slane %v6477, 4
      %v6480 = vrot.slane %v6347, 5
      %v6481 = vsel %vm6136, %v6479, %v6480
      %v6482 = vrot.slane %v6480, 4
      %v6483 = vrot.slane %v6348, 5
      %v6484 = vsel %vm6136, %v6482, %v6483
      %v6485 = vrot.slane %v6483, 4
      %v6486 = vrot.slane %v6349, 5
      %v6487 = vsel %vm6136, %v6485, %v6486
      %v6488 = vrot.slane %v6486, 4
      %v6489 = vrot.slane %v6350, 5
      %v6490 = vsel %vm6136, %v6488, %v6489
      %v6491 = vrot.slane %v6489, 4
      %v6492 = vrot.slane %v6351, 5
      %v6493 = vsel %vm6136, %v6491, %v6492
      %v6494 = vrot.slane %v6492, 4
      %6531 = vst [vmem:[#allocation2 + $0xc] sm:$0xf] %v6391
      %6532 = vst [vmem:[#allocation2 + $0x30] sm:$0xf] %v6394
      %6533 = vst [vmem:[#allocation2 + $0x54] sm:$0xf] %v6397
      %6534 = vst [vmem:[#allocation2 + $0x78] sm:$0xf] %v6400
      %6535 = vst [vmem:[#allocation2 + $0x9c] sm:$0xf] %v6403
      %6536 = vst [vmem:[#allocation2 + $0xc0] sm:$0xf] %v6406
      %6537 = vst [vmem:[#allocation2 + $0xe4] sm:$0xf] %v6409
      %6538 = vst [vmem:[#allocation2 + $0x108] sm:$0xf] %v6412
      %6539 = vst [vmem:[#allocation2 + $0x12c] sm:$0xf] %v6415
      %6540 = vst [vmem:[#allocation2 + $0x150] sm:$0xf] %v6418
      %6541 = vst [vmem:[#allocation2 + $0x174] sm:$0xf] %v6421
      %6542 = vst [vmem:[#allocation2 + $0x198] sm:$0xf] %v6424
      %6543 = vst [vmem:[#allocation2 + $0x1bc] sm:$0xf] %v6427
      %6544 = vst [vmem:[#allocation2 + $0x1e0] sm:$0xf] %v6430
      %6545 = vst [vmem:[#allocation2 + $0x204] sm:$0xf] %v6433
      %6546 = vst [vmem:[#allocation2 + $0x228] sm:$0xf] %v6436
      %6547 = vst [vmem:[#allocation2 + $0x24c] sm:$0xf] %v6439
      %6548 = vst [vmem:[#allocation2 + $0x270] sm:$0xf] %v6442
      %6549 = vst [vmem:[#allocation2 + $0x294] sm:$0xf] %v6445
      %6550 = vst [vmem:[#allocation2 + $0x2b8] sm:$0xf] %v6448
      %6551 = vst [vmem:[#allocation2 + $0x2dc] sm:$0xf] %v6451
      %6552 = vst [vmem:[#allocation2 + $0x300] sm:$0xf] %v6454
      %6553 = vst [vmem:[#allocation2 + $0x324] sm:$0xf] %v6457
      %6554 = vst [vmem:[#allocation2 + $0x348] sm:$0xf] %v6460
      %6555 = vst [vmem:[#allocation2 + $0x36c] sm:$0xf] %v6463
      %6556 = vst [vmem:[#allocation2 + $0x390] sm:$0xf] %v6466
      %6557 = vst [vmem:[#allocation2 + $0x3b4] sm:$0xf] %v6469
      %6558 = vst [vmem:[#allocation2 + $0x3d8] sm:$0xf] %v6472
      %6559 = vst [vmem:[#allocation2 + $0x3fc] sm:$0xf] %v6475
      %6560 = vst [vmem:[#allocation2 + $0x420] sm:$0xf] %v6478
      %6561 = vst [vmem:[#allocation2 + $0x444] sm:$0xf] %v6481
      %6562 = vst [vmem:[#allocation2 + $0x468] sm:$0xf] %v6484
      %6563 = vst [vmem:[#allocation2 + $0x48c] sm:$0xf] %v6487
      %6564 = vst [vmem:[#allocation2 + $0x4b0] sm:$0xf] %v6490
      %6565 = vst [vmem:[#allocation2 + $0x4d4] sm:$0xf] %v6493
      %6566 = vst [vmem:[#allocation2 + $0x4f8] sm:$0x7] %v6494
      %v6567 = vld [vmem:[#allocation3 + $0x8] sm:$0xe]
      %v6568 = vld [vmem:[#allocation3 + $0xc] sm:$0xf]
      %v6569 = vld [vmem:[#allocation3 + $0x10] sm:$0xf]
      %v6570 = vld [vmem:[#allocation3 + $0x14] sm:$0xf]
      %v6571 = vld [vmem:[#allocation3 + $0x18] sm:$0xf]
      %v6572 = vld [vmem:[#allocation3 + $0x1c] sm:$0xf]
      %v6573 = vld [vmem:[#allocation3 + $0x20] sm:$0xf]
      %v6574 = vld [vmem:[#allocation3 + $0x24] sm:$0xf]
      %v6575 = vld [vmem:[#allocation3 + $0x28] sm:$0xf]
      %v6576 = vld [vmem:[#allocation3 + $0x2c] sm:$0xf]
      %v6577 = vld [vmem:[#allocation3 + $0x30] sm:$0xf]
      %v6578 = vld [vmem:[#allocation3 + $0x34] sm:$0xf]
      %v6579 = vld [vmem:[#allocation3 + $0x38] sm:$0xf]
      %v6580 = vld [vmem:[#allocation3 + $0x3c] sm:$0xf]
      %v6581 = vld [vmem:[#allocation3 + $0x40] sm:$0xf]
      %v6582 = vld [vmem:[#allocation3 + $0x44] sm:$0xf]
      %v6583 = vld [vmem:[#allocation3 + $0x48] sm:$0xf]
      %v6584 = vld [vmem:[#allocation3 + $0x4c] sm:$0xf]
      %v6585 = vld [vmem:[#allocation3 + $0x50] sm:$0xf]
      %v6586 = vld [vmem:[#allocation3 + $0x54] sm:$0xf]
      %v6587 = vld [vmem:[#allocation3 + $0x58] sm:$0xf]
      %v6588 = vld [vmem:[#allocation3 + $0x5c] sm:$0xf]
      %v6589 = vld [vmem:[#allocation3 + $0x60] sm:$0xf]
      %v6590 = vld [vmem:[#allocation3 + $0x64] sm:$0xf]
      %v6591 = vld [vmem:[#allocation3 + $0x68] sm:$0xf]
      %v6592 = vld [vmem:[#allocation3 + $0x6c] sm:$0xf]
      %v6593 = vld [vmem:[#allocation3 + $0x70] sm:$0xf]
      %v6594 = vld [vmem:[#allocation3 + $0x74] sm:$0xf]
      %v6595 = vld [vmem:[#allocation3 + $0x78] sm:$0xf]
      %v6596 = vld [vmem:[#allocation3 + $0x7c] sm:$0xf]
      %v6597 = vld [vmem:[#allocation3 + $0x80] sm:$0xf]
      %v6598 = vld [vmem:[#allocation3 + $0x84] sm:$0xf]
      %v6599 = vld [vmem:[#allocation3 + $0x88] sm:$0xf]
      %v6600 = vld [vmem:[#allocation3 + $0x8c] sm:$0xf]
      %v6601 = vld [vmem:[#allocation3 + $0x90] sm:$0xf]
      %v6602 = vld [vmem:[#allocation3 + $0x94] sm:$0xf]
      %v6603 = vld [vmem:[#allocation3 + $0x98] sm:$0x1]
      %vm6604 = vsmask.f32 6416
      %vm6605 = vmor %vm5420, %vm6604
      %v6607 = vshrl.u32 %v6567, 16
      %v6609 = vrot.slane %v6607, 5
      %v6610 = vshll.u32 %v6567, 16
      %v6612 = vrot.slane %v6610, 6
      %v6613 = vor.u32 %v6609, %v6612
      %v6614 = vrot.slane %v6613, 4
      %v6616 = vshrl.u32 %v6568, 16
      %v6618 = vrot.slane %v6616, 5
      %v6619 = vshll.u32 %v6568, 16
      %v6621 = vrot.slane %v6619, 6
      %v6622 = vor.u32 %v6618, %v6621
      %v6623 = vsel %vm6605, %v6614, %v6622
      %v6624 = vrot.slane %v6622, 4
      %v6626 = vshrl.u32 %v6569, 16
      %v6628 = vrot.slane %v6626, 5
      %v6629 = vshll.u32 %v6569, 16
      %v6631 = vrot.slane %v6629, 6
      %v6632 = vor.u32 %v6628, %v6631
      %v6633 = vsel %vm6605, %v6624, %v6632
      %v6634 = vrot.slane %v6632, 4
      %v6636 = vshrl.u32 %v6570, 16
      %v6638 = vrot.slane %v6636, 5
      %v6639 = vshll.u32 %v6570, 16
      %v6641 = vrot.slane %v6639, 6
      %v6642 = vor.u32 %v6638, %v6641
      %v6643 = vsel %vm6605, %v6634, %v6642
      %v6644 = vrot.slane %v6642, 4
      %v6646 = vshrl.u32 %v6571, 16
      %v6648 = vrot.slane %v6646, 5
      %v6649 = vshll.u32 %v6571, 16
      %v6651 = vrot.slane %v6649, 6
      %v6652 = vor.u32 %v6648, %v6651
      %v6653 = vsel %vm6605, %v6644, %v6652
      %v6654 = vrot.slane %v6652, 4
      %v6656 = vshrl.u32 %v6572, 16
      %v6658 = vrot.slane %v6656, 5
      %v6659 = vshll.u32 %v6572, 16
      %v6661 = vrot.slane %v6659, 6
      %v6662 = vor.u32 %v6658, %v6661
      %v6663 = vsel %vm6605, %v6654, %v6662
      %v6664 = vrot.slane %v6662, 4
      %v6666 = vshrl.u32 %v6573, 16
      %v6668 = vrot.slane %v6666, 5
      %v6669 = vshll.u32 %v6573, 16
      %v6671 = vrot.slane %v6669, 6
      %v6672 = vor.u32 %v6668, %v6671
      %v6673 = vsel %vm6605, %v6664, %v6672
      %v6674 = vrot.slane %v6672, 4
      %v6676 = vshrl.u32 %v6574, 16
      %v6678 = vrot.slane %v6676, 5
      %v6679 = vshll.u32 %v6574, 16
      %v6681 = vrot.slane %v6679, 6
      %v6682 = vor.u32 %v6678, %v6681
      %v6683 = vsel %vm6605, %v6674, %v6682
      %v6684 = vrot.slane %v6682, 4
      %v6686 = vshrl.u32 %v6575, 16
      %v6688 = vrot.slane %v6686, 5
      %v6689 = vshll.u32 %v6575, 16
      %v6691 = vrot.slane %v6689, 6
      %v6692 = vor.u32 %v6688, %v6691
      %v6693 = vsel %vm6605, %v6684, %v6692
      %v6694 = vrot.slane %v6692, 4
      %v6696 = vshrl.u32 %v6576, 16
      %v6698 = vrot.slane %v6696, 5
      %v6699 = vshll.u32 %v6576, 16
      %v6701 = vrot.slane %v6699, 6
      %v6702 = vor.u32 %v6698, %v6701
      %v6703 = vsel %vm6605, %v6694, %v6702
      %v6704 = vrot.slane %v6702, 4
      %v6706 = vshrl.u32 %v6577, 16
      %v6708 = vrot.slane %v6706, 5
      %v6709 = vshll.u32 %v6577, 16
      %v6711 = vrot.slane %v6709, 6
      %v6712 = vor.u32 %v6708, %v6711
      %v6713 = vsel %vm6605, %v6704, %v6712
      %v6714 = vrot.slane %v6712, 4
      %v6716 = vshrl.u32 %v6578, 16
      %v6718 = vrot.slane %v6716, 5
      %v6719 = vshll.u32 %v6578, 16
      %v6721 = vrot.slane %v6719, 6
      %v6722 = vor.u32 %v6718, %v6721
      %v6723 = vsel %vm6605, %v6714, %v6722
      %v6724 = vrot.slane %v6722, 4
      %v6726 = vshrl.u32 %v6579, 16
      %v6728 = vrot.slane %v6726, 5
      %v6729 = vshll.u32 %v6579, 16
      %v6731 = vrot.slane %v6729, 6
      %v6732 = vor.u32 %v6728, %v6731
      %v6733 = vsel %vm6605, %v6724, %v6732
      %v6734 = vrot.slane %v6732, 4
      %v6736 = vshrl.u32 %v6580, 16
      %v6738 = vrot.slane %v6736, 5
      %v6739 = vshll.u32 %v6580, 16
      %v6741 = vrot.slane %v6739, 6
      %v6742 = vor.u32 %v6738, %v6741
      %v6743 = vsel %vm6605, %v6734, %v6742
      %v6744 = vrot.slane %v6742, 4
      %v6746 = vshrl.u32 %v6581, 16
      %v6748 = vrot.slane %v6746, 5
      %v6749 = vshll.u32 %v6581, 16
      %v6751 = vrot.slane %v6749, 6
      %v6752 = vor.u32 %v6748, %v6751
      %v6753 = vsel %vm6605, %v6744, %v6752
      %v6754 = vrot.slane %v6752, 4
      %v6756 = vshrl.u32 %v6582, 16
      %v6758 = vrot.slane %v6756, 5
      %v6759 = vshll.u32 %v6582, 16
      %v6761 = vrot.slane %v6759, 6
      %v6762 = vor.u32 %v6758, %v6761
      %v6763 = vsel %vm6605, %v6754, %v6762
      %v6764 = vrot.slane %v6762, 4
      %v6766 = vshrl.u32 %v6583, 16
      %v6768 = vrot.slane %v6766, 5
      %v6769 = vshll.u32 %v6583, 16
      %v6771 = vrot.slane %v6769, 6
      %v6772 = vor.u32 %v6768, %v6771
      %v6773 = vsel %vm6605, %v6764, %v6772
      %v6774 = vrot.slane %v6772, 4
      %v6776 = vshrl.u32 %v6584, 16
      %v6778 = vrot.slane %v6776, 5
      %v6779 = vshll.u32 %v6584, 16
      %v6781 = vrot.slane %v6779, 6
      %v6782 = vor.u32 %v6778, %v6781
      %v6783 = vsel %vm6605, %v6774, %v6782
      %v6784 = vrot.slane %v6782, 4
      %v6786 = vshrl.u32 %v6585, 16
      %v6788 = vrot.slane %v6786, 5
      %v6789 = vshll.u32 %v6585, 16
      %v6791 = vrot.slane %v6789, 6
      %v6792 = vor.u32 %v6788, %v6791
      %v6793 = vsel %vm6605, %v6784, %v6792
      %v6794 = vrot.slane %v6792, 4
      %v6796 = vshrl.u32 %v6586, 16
      %v6798 = vrot.slane %v6796, 5
      %v6799 = vshll.u32 %v6586, 16
      %v6801 = vrot.slane %v6799, 6
      %v6802 = vor.u32 %v6798, %v6801
      %v6803 = vsel %vm6605, %v6794, %v6802
      %v6804 = vrot.slane %v6802, 4
      %v6806 = vshrl.u32 %v6587, 16
      %v6808 = vrot.slane %v6806, 5
      %v6809 = vshll.u32 %v6587, 16
      %v6811 = vrot.slane %v6809, 6
      %v6812 = vor.u32 %v6808, %v6811
      %v6813 = vsel %vm6605, %v6804, %v6812
      %v6814 = vrot.slane %v6812, 4
      %v6816 = vshrl.u32 %v6588, 16
      %v6818 = vrot.slane %v6816, 5
      %v6819 = vshll.u32 %v6588, 16
      %v6821 = vrot.slane %v6819, 6
      %v6822 = vor.u32 %v6818, %v6821
      %v6823 = vsel %vm6605, %v6814, %v6822
      %v6824 = vrot.slane %v6822, 4
      %v6826 = vshrl.u32 %v6589, 16
      %v6828 = vrot.slane %v6826, 5
      %v6829 = vshll.u32 %v6589, 16
      %v6831 = vrot.slane %v6829, 6
      %v6832 = vor.u32 %v6828, %v6831
      %v6833 = vsel %vm6605, %v6824, %v6832
      %v6834 = vrot.slane %v6832, 4
      %v6836 = vshrl.u32 %v6590, 16
      %v6838 = vrot.slane %v6836, 5
      %v6839 = vshll.u32 %v6590, 16
      %v6841 = vrot.slane %v6839, 6
      %v6842 = vor.u32 %v6838, %v6841
      %v6843 = vsel %vm6605, %v6834, %v6842
      %v6844 = vrot.slane %v6842, 4
      %v6846 = vshrl.u32 %v6591, 16
      %v6848 = vrot.slane %v6846, 5
      %v6849 = vshll.u32 %v6591, 16
      %v6851 = vrot.slane %v6849, 6
      %v6852 = vor.u32 %v6848, %v6851
      %v6853 = vsel %vm6605, %v6844, %v6852
      %v6854 = vrot.slane %v6852, 4
      %v6856 = vshrl.u32 %v6592, 16
      %v6858 = vrot.slane %v6856, 5
      %v6859 = vshll.u32 %v6592, 16
      %v6861 = vrot.slane %v6859, 6
      %v6862 = vor.u32 %v6858, %v6861
      %v6863 = vsel %vm6605, %v6854, %v6862
      %v6864 = vrot.slane %v6862, 4
      %v6866 = vshrl.u32 %v6593, 16
      %v6868 = vrot.slane %v6866, 5
      %v6869 = vshll.u32 %v6593, 16
      %v6871 = vrot.slane %v6869, 6
      %v6872 = vor.u32 %v6868, %v6871
      %v6873 = vsel %vm6605, %v6864, %v6872
      %v6874 = vrot.slane %v6872, 4
      %v6876 = vshrl.u32 %v6594, 16
      %v6878 = vrot.slane %v6876, 5
      %v6879 = vshll.u32 %v6594, 16
      %v6881 = vrot.slane %v6879, 6
      %v6882 = vor.u32 %v6878, %v6881
      %v6883 = vsel %vm6605, %v6874, %v6882
      %v6884 = vrot.slane %v6882, 4
      %v6886 = vshrl.u32 %v6595, 16
      %v6888 = vrot.slane %v6886, 5
      %v6889 = vshll.u32 %v6595, 16
      %v6891 = vrot.slane %v6889, 6
      %v6892 = vor.u32 %v6888, %v6891
      %v6893 = vsel %vm6605, %v6884, %v6892
      %v6894 = vrot.slane %v6892, 4
      %v6896 = vshrl.u32 %v6596, 16
      %v6898 = vrot.slane %v6896, 5
      %v6899 = vshll.u32 %v6596, 16
      %v6901 = vrot.slane %v6899, 6
      %v6902 = vor.u32 %v6898, %v6901
      %v6903 = vsel %vm6605, %v6894, %v6902
      %v6904 = vrot.slane %v6902, 4
      %v6906 = vshrl.u32 %v6597, 16
      %v6908 = vrot.slane %v6906, 5
      %v6909 = vshll.u32 %v6597, 16
      %v6911 = vrot.slane %v6909, 6
      %v6912 = vor.u32 %v6908, %v6911
      %v6913 = vsel %vm6605, %v6904, %v6912
      %v6914 = vrot.slane %v6912, 4
      %v6916 = vshrl.u32 %v6598, 16
      %v6918 = vrot.slane %v6916, 5
      %v6919 = vshll.u32 %v6598, 16
      %v6921 = vrot.slane %v6919, 6
      %v6922 = vor.u32 %v6918, %v6921
      %v6923 = vsel %vm6605, %v6914, %v6922
      %v6924 = vrot.slane %v6922, 4
      %v6926 = vshrl.u32 %v6599, 16
      %v6928 = vrot.slane %v6926, 5
      %v6929 = vshll.u32 %v6599, 16
      %v6931 = vrot.slane %v6929, 6
      %v6932 = vor.u32 %v6928, %v6931
      %v6933 = vsel %vm6605, %v6924, %v6932
      %v6934 = vrot.slane %v6932, 4
      %v6936 = vshrl.u32 %v6600, 16
      %v6938 = vrot.slane %v6936, 5
      %v6939 = vshll.u32 %v6600, 16
      %v6941 = vrot.slane %v6939, 6
      %v6942 = vor.u32 %v6938, %v6941
      %v6943 = vsel %vm6605, %v6934, %v6942
      %v6944 = vrot.slane %v6942, 4
      %v6946 = vshrl.u32 %v6601, 16
      %v6948 = vrot.slane %v6946, 5
      %v6949 = vshll.u32 %v6601, 16
      %v6951 = vrot.slane %v6949, 6
      %v6952 = vor.u32 %v6948, %v6951
      %v6953 = vsel %vm6605, %v6944, %v6952
      %v6954 = vrot.slane %v6952, 4
      %v6956 = vshrl.u32 %v6602, 16
      %v6958 = vrot.slane %v6956, 5
      %v6959 = vshll.u32 %v6602, 16
      %v6961 = vrot.slane %v6959, 6
      %v6962 = vor.u32 %v6958, %v6961
      %v6963 = vsel %vm6605, %v6954, %v6962
      %v6964 = vrot.slane %v6962, 4
      %v6966 = vshll.u32 %v6603, 16
      %v6968 = vrot.slane %v6966, 6
      %v6969 = vsel %vm6605, %v6964, %v6968
      %7006 = vst [vmem:[#allocation2 + $0x10] sm:$0xf] %v6623
      %7007 = vst [vmem:[#allocation2 + $0x34] sm:$0xf] %v6633
      %7008 = vst [vmem:[#allocation2 + $0x58] sm:$0xf] %v6643
      %7009 = vst [vmem:[#allocation2 + $0x7c] sm:$0xf] %v6653
      %7010 = vst [vmem:[#allocation2 + $0xa0] sm:$0xf] %v6663
      %7011 = vst [vmem:[#allocation2 + $0xc4] sm:$0xf] %v6673
      %7012 = vst [vmem:[#allocation2 + $0xe8] sm:$0xf] %v6683
      %7013 = vst [vmem:[#allocation2 + $0x10c] sm:$0xf] %v6693
      %7014 = vst [vmem:[#allocation2 + $0x130] sm:$0xf] %v6703
      %7015 = vst [vmem:[#allocation2 + $0x154] sm:$0xf] %v6713
      %7016 = vst [vmem:[#allocation2 + $0x178] sm:$0xf] %v6723
      %7017 = vst [vmem:[#allocation2 + $0x19c] sm:$0xf] %v6733
      %7018 = vst [vmem:[#allocation2 + $0x1c0] sm:$0xf] %v6743
      %7019 = vst [vmem:[#allocation2 + $0x1e4] sm:$0xf] %v6753
      %7020 = vst [vmem:[#allocation2 + $0x208] sm:$0xf] %v6763
      %7021 = vst [vmem:[#allocation2 + $0x22c] sm:$0xf] %v6773
      %7022 = vst [vmem:[#allocation2 + $0x250] sm:$0xf] %v6783
      %7023 = vst [vmem:[#allocation2 + $0x274] sm:$0xf] %v6793
      %7024 = vst [vmem:[#allocation2 + $0x298] sm:$0xf] %v6803
      %7025 = vst [vmem:[#allocation2 + $0x2bc] sm:$0xf] %v6813
      %7026 = vst [vmem:[#allocation2 + $0x2e0] sm:$0xf] %v6823
      %7027 = vst [vmem:[#allocation2 + $0x304] sm:$0xf] %v6833
      %7028 = vst [vmem:[#allocation2 + $0x328] sm:$0xf] %v6843
      %7029 = vst [vmem:[#allocation2 + $0x34c] sm:$0xf] %v6853
      %7030 = vst [vmem:[#allocation2 + $0x370] sm:$0xf] %v6863
      %7031 = vst [vmem:[#allocation2 + $0x394] sm:$0xf] %v6873
      %7032 = vst [vmem:[#allocation2 + $0x3b8] sm:$0xf] %v6883
      %7033 = vst [vmem:[#allocation2 + $0x3dc] sm:$0xf] %v6893
      %7034 = vst [vmem:[#allocation2 + $0x400] sm:$0xf] %v6903
      %7035 = vst [vmem:[#allocation2 + $0x424] sm:$0xf] %v6913
      %7036 = vst [vmem:[#allocation2 + $0x448] sm:$0xf] %v6923
      %7037 = vst [vmem:[#allocation2 + $0x46c] sm:$0xf] %v6933
      %7038 = vst [vmem:[#allocation2 + $0x490] sm:$0xf] %v6943
      %7039 = vst [vmem:[#allocation2 + $0x4b4] sm:$0xf] %v6953
      %7040 = vst [vmem:[#allocation2 + $0x4d8] sm:$0xf] %v6963
      %7041 = vst [vmem:[#allocation2 + $0x4fc] sm:$0x7] %v6969
      %v7042 = vld [vmem:[#allocation3 + $0x8] sm:$0xc]
      %v7043 = vld [vmem:[#allocation3 + $0xc] sm:$0xf]
      %v7044 = vld [vmem:[#allocation3 + $0x10] sm:$0xf]
      %v7045 = vld [vmem:[#allocation3 + $0x14] sm:$0xf]
      %v7046 = vld [vmem:[#allocation3 + $0x18] sm:$0xf]
      %v7047 = vld [vmem:[#allocation3 + $0x1c] sm:$0xf]
      %v7048 = vld [vmem:[#allocation3 + $0x20] sm:$0xf]
      %v7049 = vld [vmem:[#allocation3 + $0x24] sm:$0xf]
      %v7050 = vld [vmem:[#allocation3 + $0x28] sm:$0xf]
      %v7051 = vld [vmem:[#allocation3 + $0x2c] sm:$0xf]
      %v7052 = vld [vmem:[#allocation3 + $0x30] sm:$0xf]
      %v7053 = vld [vmem:[#allocation3 + $0x34] sm:$0xf]
      %v7054 = vld [vmem:[#allocation3 + $0x38] sm:$0xf]
      %v7055 = vld [vmem:[#allocation3 + $0x3c] sm:$0xf]
      %v7056 = vld [vmem:[#allocation3 + $0x40] sm:$0xf]
      %v7057 = vld [vmem:[#allocation3 + $0x44] sm:$0xf]
      %v7058 = vld [vmem:[#allocation3 + $0x48] sm:$0xf]
      %v7059 = vld [vmem:[#allocation3 + $0x4c] sm:$0xf]
      %v7060 = vld [vmem:[#allocation3 + $0x50] sm:$0xf]
      %v7061 = vld [vmem:[#allocation3 + $0x54] sm:$0xf]
      %v7062 = vld [vmem:[#allocation3 + $0x58] sm:$0xf]
      %v7063 = vld [vmem:[#allocation3 + $0x5c] sm:$0xf]
      %v7064 = vld [vmem:[#allocation3 + $0x60] sm:$0xf]
      %v7065 = vld [vmem:[#allocation3 + $0x64] sm:$0xf]
      %v7066 = vld [vmem:[#allocation3 + $0x68] sm:$0xf]
      %v7067 = vld [vmem:[#allocation3 + $0x6c] sm:$0xf]
      %v7068 = vld [vmem:[#allocation3 + $0x70] sm:$0xf]
      %v7069 = vld [vmem:[#allocation3 + $0x74] sm:$0xf]
      %v7070 = vld [vmem:[#allocation3 + $0x78] sm:$0xf]
      %v7071 = vld [vmem:[#allocation3 + $0x7c] sm:$0xf]
      %v7072 = vld [vmem:[#allocation3 + $0x80] sm:$0xf]
      %v7073 = vld [vmem:[#allocation3 + $0x84] sm:$0xf]
      %v7074 = vld [vmem:[#allocation3 + $0x88] sm:$0xf]
      %v7075 = vld [vmem:[#allocation3 + $0x8c] sm:$0xf]
      %v7076 = vld [vmem:[#allocation3 + $0x90] sm:$0xf]
      %v7077 = vld [vmem:[#allocation3 + $0x94] sm:$0xf]
      %v7078 = vld [vmem:[#allocation3 + $0x98] sm:$0x1]
      %vm7116 = vcmask 1041408
      %vm7117 = vcmask 1045508
      %vm7118 = vmor %vm7116, %vm7117
      %v7119 = vrot.slane %v7042, 6
      %v7120 = vrot.slane %v7119, 4
      %v7121 = vrot.slane %v7043, 6
      %v7122 = vsel %vm7118, %v7120, %v7121
      %v7123 = vrot.slane %v7121, 4
      %v7124 = vrot.slane %v7044, 6
      %v7125 = vsel %vm7118, %v7123, %v7124
      %v7126 = vrot.slane %v7124, 4
      %v7127 = vrot.slane %v7045, 6
      %v7128 = vsel %vm7118, %v7126, %v7127
      %v7129 = vrot.slane %v7127, 4
      %v7130 = vrot.slane %v7046, 6
      %v7131 = vsel %vm7118, %v7129, %v7130
      %v7132 = vrot.slane %v7130, 4
      %v7133 = vrot.slane %v7047, 6
      %v7134 = vsel %vm7118, %v7132, %v7133
      %v7135 = vrot.slane %v7133, 4
      %v7136 = vrot.slane %v7048, 6
      %v7137 = vsel %vm7118, %v7135, %v7136
      %v7138 = vrot.slane %v7136, 4
      %v7139 = vrot.slane %v7049, 6
      %v7140 = vsel %vm7118, %v7138, %v7139
      %v7141 = vrot.slane %v7139, 4
      %v7142 = vrot.slane %v7050, 6
      %v7143 = vsel %vm7118, %v7141, %v7142
      %v7144 = vrot.slane %v7142, 4
      %v7145 = vrot.slane %v7051, 6
      %v7146 = vsel %vm7118, %v7144, %v7145
      %v7147 = vrot.slane %v7145, 4
      %v7148 = vrot.slane %v7052, 6
      %v7149 = vsel %vm7118, %v7147, %v7148
      %v7150 = vrot.slane %v7148, 4
      %v7151 = vrot.slane %v7053, 6
      %v7152 = vsel %vm7118, %v7150, %v7151
      %v7153 = vrot.slane %v7151, 4
      %v7154 = vrot.slane %v7054, 6
      %v7155 = vsel %vm7118, %v7153, %v7154
      %v7156 = vrot.slane %v7154, 4
      %v7157 = vrot.slane %v7055, 6
      %v7158 = vsel %vm7118, %v7156, %v7157
      %v7159 = vrot.slane %v7157, 4
      %v7160 = vrot.slane %v7056, 6
      %v7161 = vsel %vm7118, %v7159, %v7160
      %v7162 = vrot.slane %v7160, 4
      %v7163 = vrot.slane %v7057, 6
      %v7164 = vsel %vm7118, %v7162, %v7163
      %v7165 = vrot.slane %v7163, 4
      %v7166 = vrot.slane %v7058, 6
      %v7167 = vsel %vm7118, %v7165, %v7166
      %v7168 = vrot.slane %v7166, 4
      %v7169 = vrot.slane %v7059, 6
      %v7170 = vsel %vm7118, %v7168, %v7169
      %v7171 = vrot.slane %v7169, 4
      %v7172 = vrot.slane %v7060, 6
      %v7173 = vsel %vm7118, %v7171, %v7172
      %v7174 = vrot.slane %v7172, 4
      %v7175 = vrot.slane %v7061, 6
      %v7176 = vsel %vm7118, %v7174, %v7175
      %v7177 = vrot.slane %v7175, 4
      %v7178 = vrot.slane %v7062, 6
      %v7179 = vsel %vm7118, %v7177, %v7178
      %v7180 = vrot.slane %v7178, 4
      %v7181 = vrot.slane %v7063, 6
      %v7182 = vsel %vm7118, %v7180, %v7181
      %v7183 = vrot.slane %v7181, 4
      %v7184 = vrot.slane %v7064, 6
      %v7185 = vsel %vm7118, %v7183, %v7184
      %v7186 = vrot.slane %v7184, 4
      %v7187 = vrot.slane %v7065, 6
      %v7188 = vsel %vm7118, %v7186, %v7187
      %v7189 = vrot.slane %v7187, 4
      %v7190 = vrot.slane %v7066, 6
      %v7191 = vsel %vm7118, %v7189, %v7190
      %v7192 = vrot.slane %v7190, 4
      %v7193 = vrot.slane %v7067, 6
      %v7194 = vsel %vm7118, %v7192, %v7193
      %v7195 = vrot.slane %v7193, 4
      %v7196 = vrot.slane %v7068, 6
      %v7197 = vsel %vm7118, %v7195, %v7196
      %v7198 = vrot.slane %v7196, 4
      %v7199 = vrot.slane %v7069, 6
      %v7200 = vsel %vm7118, %v7198, %v7199
      %v7201 = vrot.slane %v7199, 4
      %v7202 = vrot.slane %v7070, 6
      %v7203 = vsel %vm7118, %v7201, %v7202
      %v7204 = vrot.slane %v7202, 4
      %v7205 = vrot.slane %v7071, 6
      %v7206 = vsel %vm7118, %v7204, %v7205
      %v7207 = vrot.slane %v7205, 4
      %v7208 = vrot.slane %v7072, 6
      %v7209 = vsel %vm7118, %v7207, %v7208
      %v7210 = vrot.slane %v7208, 4
      %v7211 = vrot.slane %v7073, 6
      %v7212 = vsel %vm7118, %v7210, %v7211
      %v7213 = vrot.slane %v7211, 4
      %v7214 = vrot.slane %v7074, 6
      %v7215 = vsel %vm7118, %v7213, %v7214
      %v7216 = vrot.slane %v7214, 4
      %v7217 = vrot.slane %v7075, 6
      %v7218 = vsel %vm7118, %v7216, %v7217
      %v7219 = vrot.slane %v7217, 4
      %v7220 = vrot.slane %v7076, 6
      %v7221 = vsel %vm7118, %v7219, %v7220
      %v7222 = vrot.slane %v7220, 4
      %v7223 = vrot.slane %v7077, 6
      %v7224 = vsel %vm7118, %v7222, %v7223
      %v7225 = vrot.slane %v7223, 4
      %v7226 = vrot.slane %v7078, 6
      %v7227 = vsel %vm7118, %v7225, %v7226
      %7264 = vst [vmem:[#allocation2 + $0x14] sm:$0xf] %v7122
      %7265 = vst [vmem:[#allocation2 + $0x38] sm:$0xf] %v7125
      %7266 = vst [vmem:[#allocation2 + $0x5c] sm:$0xf] %v7128
      %7267 = vst [vmem:[#allocation2 + $0x80] sm:$0xf] %v7131
      %7268 = vst [vmem:[#allocation2 + $0xa4] sm:$0xf] %v7134
      %7269 = vst [vmem:[#allocation2 + $0xc8] sm:$0xf] %v7137
      %7270 = vst [vmem:[#allocation2 + $0xec] sm:$0xf] %v7140
      %7271 = vst [vmem:[#allocation2 + $0x110] sm:$0xf] %v7143
      %7272 = vst [vmem:[#allocation2 + $0x134] sm:$0xf] %v7146
      %7273 = vst [vmem:[#allocation2 + $0x158] sm:$0xf] %v7149
      %7274 = vst [vmem:[#allocation2 + $0x17c] sm:$0xf] %v7152
      %7275 = vst [vmem:[#allocation2 + $0x1a0] sm:$0xf] %v7155
      %7276 = vst [vmem:[#allocation2 + $0x1c4] sm:$0xf] %v7158
      %7277 = vst [vmem:[#allocation2 + $0x1e8] sm:$0xf] %v7161
      %7278 = vst [vmem:[#allocation2 + $0x20c] sm:$0xf] %v7164
      %7279 = vst [vmem:[#allocation2 + $0x230] sm:$0xf] %v7167
      %7280 = vst [vmem:[#allocation2 + $0x254] sm:$0xf] %v7170
      %7281 = vst [vmem:[#allocation2 + $0x278] sm:$0xf] %v7173
      %7282 = vst [vmem:[#allocation2 + $0x29c] sm:$0xf] %v7176
      %7283 = vst [vmem:[#allocation2 + $0x2c0] sm:$0xf] %v7179
      %7284 = vst [vmem:[#allocation2 + $0x2e4] sm:$0xf] %v7182
      %7285 = vst [vmem:[#allocation2 + $0x308] sm:$0xf] %v7185
      %7286 = vst [vmem:[#allocation2 + $0x32c] sm:$0xf] %v7188
      %7287 = vst [vmem:[#allocation2 + $0x350] sm:$0xf] %v7191
      %7288 = vst [vmem:[#allocation2 + $0x374] sm:$0xf] %v7194
      %7289 = vst [vmem:[#allocation2 + $0x398] sm:$0xf] %v7197
      %7290 = vst [vmem:[#allocation2 + $0x3bc] sm:$0xf] %v7200
      %7291 = vst [vmem:[#allocation2 + $0x3e0] sm:$0xf] %v7203
      %7292 = vst [vmem:[#allocation2 + $0x404] sm:$0xf] %v7206
      %7293 = vst [vmem:[#allocation2 + $0x428] sm:$0xf] %v7209
      %7294 = vst [vmem:[#allocation2 + $0x44c] sm:$0xf] %v7212
      %7295 = vst [vmem:[#allocation2 + $0x470] sm:$0xf] %v7215
      %7296 = vst [vmem:[#allocation2 + $0x494] sm:$0xf] %v7218
      %7297 = vst [vmem:[#allocation2 + $0x4b8] sm:$0xf] %v7221
      %7298 = vst [vmem:[#allocation2 + $0x4dc] sm:$0xf] %v7224
      %7299 = vst [vmem:[#allocation2 + $0x500] sm:$0x7] %v7227
      %v7300 = vld [vmem:[#allocation3 + $0x10] sm:$0xc]
      %v7301 = vld [vmem:[#allocation3 + $0x14] sm:$0xf]
      %v7302 = vld [vmem:[#allocation3 + $0x18] sm:$0xf]
      %v7303 = vld [vmem:[#allocation3 + $0x1c] sm:$0xf]
      %v7304 = vld [vmem:[#allocation3 + $0x20] sm:$0xf]
      %v7305 = vld [vmem:[#allocation3 + $0x24] sm:$0xf]
      %v7306 = vld [vmem:[#allocation3 + $0x28] sm:$0xf]
      %v7307 = vld [vmem:[#allocation3 + $0x2c] sm:$0xf]
      %v7308 = vld [vmem:[#allocation3 + $0x30] sm:$0xf]
      %v7309 = vld [vmem:[#allocation3 + $0x34] sm:$0xf]
      %v7310 = vld [vmem:[#allocation3 + $0x38] sm:$0xf]
      %v7311 = vld [vmem:[#allocation3 + $0x3c] sm:$0xf]
      %v7312 = vld [vmem:[#allocation3 + $0x40] sm:$0xf]
      %v7313 = vld [vmem:[#allocation3 + $0x44] sm:$0xf]
      %v7314 = vld [vmem:[#allocation3 + $0x48] sm:$0xf]
      %v7315 = vld [vmem:[#allocation3 + $0x4c] sm:$0xf]
      %v7316 = vld [vmem:[#allocation3 + $0x50] sm:$0xf]
      %v7317 = vld [vmem:[#allocation3 + $0x54] sm:$0xf]
      %v7318 = vld [vmem:[#allocation3 + $0x58] sm:$0xf]
      %v7319 = vld [vmem:[#allocation3 + $0x5c] sm:$0xf]
      %v7320 = vld [vmem:[#allocation3 + $0x60] sm:$0xf]
      %v7321 = vld [vmem:[#allocation3 + $0x64] sm:$0xf]
      %v7322 = vld [vmem:[#allocation3 + $0x68] sm:$0xf]
      %v7323 = vld [vmem:[#allocation3 + $0x6c] sm:$0xf]
      %v7324 = vld [vmem:[#allocation3 + $0x70] sm:$0xf]
      %v7325 = vld [vmem:[#allocation3 + $0x74] sm:$0xf]
      %v7326 = vld [vmem:[#allocation3 + $0x78] sm:$0xf]
      %v7327 = vld [vmem:[#allocation3 + $0x7c] sm:$0xf]
      %v7328 = vld [vmem:[#allocation3 + $0x80] sm:$0xf]
      %v7329 = vld [vmem:[#allocation3 + $0x84] sm:$0xf]
      %v7330 = vld [vmem:[#allocation3 + $0x88] sm:$0xf]
      %v7331 = vld [vmem:[#allocation3 + $0x8c] sm:$0xf]
      %v7332 = vld [vmem:[#allocation3 + $0x90] sm:$0xf]
      %v7333 = vld [vmem:[#allocation3 + $0x94] sm:$0xf]
      %v7334 = vld [vmem:[#allocation3 + $0x98] sm:$0xf]
      %v7335 = vld [vmem:[#allocation3 + $0x9c] sm:$0xf]
      %v7336 = vld [vmem:[#allocation3 + $0xa0] sm:$0x1]
      %v7374 = vrot.slane %v7300, 6
      %v7375 = vrot.slane %v7374, 4
      %v7376 = vrot.slane %v7301, 6
      %v7377 = vsel %vm7118, %v7375, %v7376
      %v7378 = vrot.slane %v7376, 4
      %v7379 = vrot.slane %v7302, 6
      %v7380 = vsel %vm7118, %v7378, %v7379
      %v7381 = vrot.slane %v7379, 4
      %v7382 = vrot.slane %v7303, 6
      %v7383 = vsel %vm7118, %v7381, %v7382
      %v7384 = vrot.slane %v7382, 4
      %v7385 = vrot.slane %v7304, 6
      %v7386 = vsel %vm7118, %v7384, %v7385
      %v7387 = vrot.slane %v7385, 4
      %v7388 = vrot.slane %v7305, 6
      %v7389 = vsel %vm7118, %v7387, %v7388
      %v7390 = vrot.slane %v7388, 4
      %v7391 = vrot.slane %v7306, 6
      %v7392 = vsel %vm7118, %v7390, %v7391
      %v7393 = vrot.slane %v7391, 4
      %v7394 = vrot.slane %v7307, 6
      %v7395 = vsel %vm7118, %v7393, %v7394
      %v7396 = vrot.slane %v7394, 4
      %v7397 = vrot.slane %v7308, 6
      %v7398 = vsel %vm7118, %v7396, %v7397
      %v7399 = vrot.slane %v7397, 4
      %v7400 = vrot.slane %v7309, 6
      %v7401 = vsel %vm7118, %v7399, %v7400
      %v7402 = vrot.slane %v7400, 4
      %v7403 = vrot.slane %v7310, 6
      %v7404 = vsel %vm7118, %v7402, %v7403
      %v7405 = vrot.slane %v7403, 4
      %v7406 = vrot.slane %v7311, 6
      %v7407 = vsel %vm7118, %v7405, %v7406
      %v7408 = vrot.slane %v7406, 4
      %v7409 = vrot.slane %v7312, 6
      %v7410 = vsel %vm7118, %v7408, %v7409
      %v7411 = vrot.slane %v7409, 4
      %v7412 = vrot.slane %v7313, 6
      %v7413 = vsel %vm7118, %v7411, %v7412
      %v7414 = vrot.slane %v7412, 4
      %v7415 = vrot.slane %v7314, 6
      %v7416 = vsel %vm7118, %v7414, %v7415
      %v7417 = vrot.slane %v7415, 4
      %v7418 = vrot.slane %v7315, 6
      %v7419 = vsel %vm7118, %v7417, %v7418
      %v7420 = vrot.slane %v7418, 4
      %v7421 = vrot.slane %v7316, 6
      %v7422 = vsel %vm7118, %v7420, %v7421
      %v7423 = vrot.slane %v7421, 4
      %v7424 = vrot.slane %v7317, 6
      %v7425 = vsel %vm7118, %v7423, %v7424
      %v7426 = vrot.slane %v7424, 4
      %v7427 = vrot.slane %v7318, 6
      %v7428 = vsel %vm7118, %v7426, %v7427
      %v7429 = vrot.slane %v7427, 4
      %v7430 = vrot.slane %v7319, 6
      %v7431 = vsel %vm7118, %v7429, %v7430
      %v7432 = vrot.slane %v7430, 4
      %v7433 = vrot.slane %v7320, 6
      %v7434 = vsel %vm7118, %v7432, %v7433
      %v7435 = vrot.slane %v7433, 4
      %v7436 = vrot.slane %v7321, 6
      %v7437 = vsel %vm7118, %v7435, %v7436
      %v7438 = vrot.slane %v7436, 4
      %v7439 = vrot.slane %v7322, 6
      %v7440 = vsel %vm7118, %v7438, %v7439
      %v7441 = vrot.slane %v7439, 4
      %v7442 = vrot.slane %v7323, 6
      %v7443 = vsel %vm7118, %v7441, %v7442
      %v7444 = vrot.slane %v7442, 4
      %v7445 = vrot.slane %v7324, 6
      %v7446 = vsel %vm7118, %v7444, %v7445
      %v7447 = vrot.slane %v7445, 4
      %v7448 = vrot.slane %v7325, 6
      %v7449 = vsel %vm7118, %v7447, %v7448
      %v7450 = vrot.slane %v7448, 4
      %v7451 = vrot.slane %v7326, 6
      %v7452 = vsel %vm7118, %v7450, %v7451
      %v7453 = vrot.slane %v7451, 4
      %v7454 = vrot.slane %v7327, 6
      %v7455 = vsel %vm7118, %v7453, %v7454
      %v7456 = vrot.slane %v7454, 4
      %v7457 = vrot.slane %v7328, 6
      %v7458 = vsel %vm7118, %v7456, %v7457
      %v7459 = vrot.slane %v7457, 4
      %v7460 = vrot.slane %v7329, 6
      %v7461 = vsel %vm7118, %v7459, %v7460
      %v7462 = vrot.slane %v7460, 4
      %v7463 = vrot.slane %v7330, 6
      %v7464 = vsel %vm7118, %v7462, %v7463
      %v7465 = vrot.slane %v7463, 4
      %v7466 = vrot.slane %v7331, 6
      %v7467 = vsel %vm7118, %v7465, %v7466
      %v7468 = vrot.slane %v7466, 4
      %v7469 = vrot.slane %v7332, 6
      %v7470 = vsel %vm7118, %v7468, %v7469
      %v7471 = vrot.slane %v7469, 4
      %v7472 = vrot.slane %v7333, 6
      %v7473 = vsel %vm7118, %v7471, %v7472
      %v7474 = vrot.slane %v7472, 4
      %v7475 = vrot.slane %v7334, 6
      %v7476 = vsel %vm7118, %v7474, %v7475
      %v7477 = vrot.slane %v7475, 4
      %v7478 = vrot.slane %v7335, 6
      %v7479 = vsel %vm7118, %v7477, %v7478
      %v7480 = vrot.slane %v7478, 4
      %v7481 = vrot.slane %v7336, 6
      %v7482 = vsel %vm7118, %v7480, %v7481
      %7519 = vst [vmem:[#allocation2 + $0x18] sm:$0xf] %v7377
      %7520 = vst [vmem:[#allocation2 + $0x3c] sm:$0xf] %v7380
      %7521 = vst [vmem:[#allocation2 + $0x60] sm:$0xf] %v7383
      %7522 = vst [vmem:[#allocation2 + $0x84] sm:$0xf] %v7386
      %7523 = vst [vmem:[#allocation2 + $0xa8] sm:$0xf] %v7389
      %7524 = vst [vmem:[#allocation2 + $0xcc] sm:$0xf] %v7392
      %7525 = vst [vmem:[#allocation2 + $0xf0] sm:$0xf] %v7395
      %7526 = vst [vmem:[#allocation2 + $0x114] sm:$0xf] %v7398
      %7527 = vst [vmem:[#allocation2 + $0x138] sm:$0xf] %v7401
      %7528 = vst [vmem:[#allocation2 + $0x15c] sm:$0xf] %v7404
      %7529 = vst [vmem:[#allocation2 + $0x180] sm:$0xf] %v7407
      %7530 = vst [vmem:[#allocation2 + $0x1a4] sm:$0xf] %v7410
      %7531 = vst [vmem:[#allocation2 + $0x1c8] sm:$0xf] %v7413
      %7532 = vst [vmem:[#allocation2 + $0x1ec] sm:$0xf] %v7416
      %7533 = vst [vmem:[#allocation2 + $0x210] sm:$0xf] %v7419
      %7534 = vst [vmem:[#allocation2 + $0x234] sm:$0xf] %v7422
      %7535 = vst [vmem:[#allocation2 + $0x258] sm:$0xf] %v7425
      %7536 = vst [vmem:[#allocation2 + $0x27c] sm:$0xf] %v7428
      %7537 = vst [vmem:[#allocation2 + $0x2a0] sm:$0xf] %v7431
      %7538 = vst [vmem:[#allocation2 + $0x2c4] sm:$0xf] %v7434
      %7539 = vst [vmem:[#allocation2 + $0x2e8] sm:$0xf] %v7437
      %7540 = vst [vmem:[#allocation2 + $0x30c] sm:$0xf] %v7440
      %7541 = vst [vmem:[#allocation2 + $0x330] sm:$0xf] %v7443
      %7542 = vst [vmem:[#allocation2 + $0x354] sm:$0xf] %v7446
      %7543 = vst [vmem:[#allocation2 + $0x378] sm:$0xf] %v7449
      %7544 = vst [vmem:[#allocation2 + $0x39c] sm:$0xf] %v7452
      %7545 = vst [vmem:[#allocation2 + $0x3c0] sm:$0xf] %v7455
      %7546 = vst [vmem:[#allocation2 + $0x3e4] sm:$0xf] %v7458
      %7547 = vst [vmem:[#allocation2 + $0x408] sm:$0xf] %v7461
      %7548 = vst [vmem:[#allocation2 + $0x42c] sm:$0xf] %v7464
      %7549 = vst [vmem:[#allocation2 + $0x450] sm:$0xf] %v7467
      %7550 = vst [vmem:[#allocation2 + $0x474] sm:$0xf] %v7470
      %7551 = vst [vmem:[#allocation2 + $0x498] sm:$0xf] %v7473
      %7552 = vst [vmem:[#allocation2 + $0x4bc] sm:$0xf] %v7476
      %7553 = vst [vmem:[#allocation2 + $0x4e0] sm:$0xf] %v7479
      %7554 = vst [vmem:[#allocation2 + $0x504] sm:$0x7] %v7482
      %v7555 = vld [vmem:[#allocation3 + $0x10] sm:$0xc]
      %v7556 = vld [vmem:[#allocation3 + $0x14] sm:$0xf]
      %v7557 = vld [vmem:[#allocation3 + $0x18] sm:$0xf]
      %v7558 = vld [vmem:[#allocation3 + $0x1c] sm:$0xf]
      %v7559 = vld [vmem:[#allocation3 + $0x20] sm:$0xf]
      %v7560 = vld [vmem:[#allocation3 + $0x24] sm:$0xf]
      %v7561 = vld [vmem:[#allocation3 + $0x28] sm:$0xf]
      %v7562 = vld [vmem:[#allocation3 + $0x2c] sm:$0xf]
      %v7563 = vld [vmem:[#allocation3 + $0x30] sm:$0xf]
      %v7564 = vld [vmem:[#allocation3 + $0x34] sm:$0xf]
      %v7565 = vld [vmem:[#allocation3 + $0x38] sm:$0xf]
      %v7566 = vld [vmem:[#allocation3 + $0x3c] sm:$0xf]
      %v7567 = vld [vmem:[#allocation3 + $0x40] sm:$0xf]
      %v7568 = vld [vmem:[#allocation3 + $0x44] sm:$0xf]
      %v7569 = vld [vmem:[#allocation3 + $0x48] sm:$0xf]
      %v7570 = vld [vmem:[#allocation3 + $0x4c] sm:$0xf]
      %v7571 = vld [vmem:[#allocation3 + $0x50] sm:$0xf]
      %v7572 = vld [vmem:[#allocation3 + $0x54] sm:$0xf]
      %v7573 = vld [vmem:[#allocation3 + $0x58] sm:$0xf]
      %v7574 = vld [vmem:[#allocation3 + $0x5c] sm:$0xf]
      %v7575 = vld [vmem:[#allocation3 + $0x60] sm:$0xf]
      %v7576 = vld [vmem:[#allocation3 + $0x64] sm:$0xf]
      %v7577 = vld [vmem:[#allocation3 + $0x68] sm:$0xf]
      %v7578 = vld [vmem:[#allocation3 + $0x6c] sm:$0xf]
      %v7579 = vld [vmem:[#allocation3 + $0x70] sm:$0xf]
      %v7580 = vld [vmem:[#allocation3 + $0x74] sm:$0xf]
      %v7581 = vld [vmem:[#allocation3 + $0x78] sm:$0xf]
      %v7582 = vld [vmem:[#allocation3 + $0x7c] sm:$0xf]
      %v7583 = vld [vmem:[#allocation3 + $0x80] sm:$0xf]
      %v7584 = vld [vmem:[#allocation3 + $0x84] sm:$0xf]
      %v7585 = vld [vmem:[#allocation3 + $0x88] sm:$0xf]
      %v7586 = vld [vmem:[#allocation3 + $0x8c] sm:$0xf]
      %v7587 = vld [vmem:[#allocation3 + $0x90] sm:$0xf]
      %v7588 = vld [vmem:[#allocation3 + $0x94] sm:$0xf]
      %v7589 = vld [vmem:[#allocation3 + $0x98] sm:$0xf]
      %v7590 = vld [vmem:[#allocation3 + $0x9c] sm:$0xf]
      %v7591 = vld [vmem:[#allocation3 + $0xa0] sm:$0x3]
      %v7593 = vshrl.u32 %v7555, 16
      %v7595 = vrot.slane %v7593, 6
      %v7596 = vshll.u32 %v7555, 16
      %v7598 = vrot.slane %v7596, 7
      %v7599 = vor.u32 %v7595, %v7598
      %v7600 = vrot.slane %v7599, 4
      %v7602 = vshrl.u32 %v7556, 16
      %v7604 = vrot.slane %v7602, 6
      %v7605 = vshll.u32 %v7556, 16
      %v7607 = vrot.slane %v7605, 7
      %v7608 = vor.u32 %v7604, %v7607
      %v7609 = vsel %vm4966, %v7600, %v7608
      %v7610 = vrot.slane %v7608, 4
      %v7612 = vshrl.u32 %v7557, 16
      %v7614 = vrot.slane %v7612, 6
      %v7615 = vshll.u32 %v7557, 16
      %v7617 = vrot.slane %v7615, 7
      %v7618 = vor.u32 %v7614, %v7617
      %v7619 = vsel %vm4966, %v7610, %v7618
      %v7620 = vrot.slane %v7618, 4
      %v7622 = vshrl.u32 %v7558, 16
      %v7624 = vrot.slane %v7622, 6
      %v7625 = vshll.u32 %v7558, 16
      %v7627 = vrot.slane %v7625, 7
      %v7628 = vor.u32 %v7624, %v7627
      %v7629 = vsel %vm4966, %v7620, %v7628
      %v7630 = vrot.slane %v7628, 4
      %v7632 = vshrl.u32 %v7559, 16
      %v7634 = vrot.slane %v7632, 6
      %v7635 = vshll.u32 %v7559, 16
      %v7637 = vrot.slane %v7635, 7
      %v7638 = vor.u32 %v7634, %v7637
      %v7639 = vsel %vm4966, %v7630, %v7638
      %v7640 = vrot.slane %v7638, 4
      %v7642 = vshrl.u32 %v7560, 16
      %v7644 = vrot.slane %v7642, 6
      %v7645 = vshll.u32 %v7560, 16
      %v7647 = vrot.slane %v7645, 7
      %v7648 = vor.u32 %v7644, %v7647
      %v7649 = vsel %vm4966, %v7640, %v7648
      %v7650 = vrot.slane %v7648, 4
      %v7652 = vshrl.u32 %v7561, 16
      %v7654 = vrot.slane %v7652, 6
      %v7655 = vshll.u32 %v7561, 16
      %v7657 = vrot.slane %v7655, 7
      %v7658 = vor.u32 %v7654, %v7657
      %v7659 = vsel %vm4966, %v7650, %v7658
      %v7660 = vrot.slane %v7658, 4
      %v7662 = vshrl.u32 %v7562, 16
      %v7664 = vrot.slane %v7662, 6
      %v7665 = vshll.u32 %v7562, 16
      %v7667 = vrot.slane %v7665, 7
      %v7668 = vor.u32 %v7664, %v7667
      %v7669 = vsel %vm4966, %v7660, %v7668
      %v7670 = vrot.slane %v7668, 4
      %v7672 = vshrl.u32 %v7563, 16
      %v7674 = vrot.slane %v7672, 6
      %v7675 = vshll.u32 %v7563, 16
      %v7677 = vrot.slane %v7675, 7
      %v7678 = vor.u32 %v7674, %v7677
      %v7679 = vsel %vm4966, %v7670, %v7678
      %v7680 = vrot.slane %v7678, 4
      %v7682 = vshrl.u32 %v7564, 16
      %v7684 = vrot.slane %v7682, 6
      %v7685 = vshll.u32 %v7564, 16
      %v7687 = vrot.slane %v7685, 7
      %v7688 = vor.u32 %v7684, %v7687
      %v7689 = vsel %vm4966, %v7680, %v7688
      %v7690 = vrot.slane %v7688, 4
      %v7692 = vshrl.u32 %v7565, 16
      %v7694 = vrot.slane %v7692, 6
      %v7695 = vshll.u32 %v7565, 16
      %v7697 = vrot.slane %v7695, 7
      %v7698 = vor.u32 %v7694, %v7697
      %v7699 = vsel %vm4966, %v7690, %v7698
      %v7700 = vrot.slane %v7698, 4
      %v7702 = vshrl.u32 %v7566, 16
      %v7704 = vrot.slane %v7702, 6
      %v7705 = vshll.u32 %v7566, 16
      %v7707 = vrot.slane %v7705, 7
      %v7708 = vor.u32 %v7704, %v7707
      %v7709 = vsel %vm4966, %v7700, %v7708
      %v7710 = vrot.slane %v7708, 4
      %v7712 = vshrl.u32 %v7567, 16
      %v7714 = vrot.slane %v7712, 6
      %v7715 = vshll.u32 %v7567, 16
      %v7717 = vrot.slane %v7715, 7
      %v7718 = vor.u32 %v7714, %v7717
      %v7719 = vsel %vm4966, %v7710, %v7718
      %v7720 = vrot.slane %v7718, 4
      %v7722 = vshrl.u32 %v7568, 16
      %v7724 = vrot.slane %v7722, 6
      %v7725 = vshll.u32 %v7568, 16
      %v7727 = vrot.slane %v7725, 7
      %v7728 = vor.u32 %v7724, %v7727
      %v7729 = vsel %vm4966, %v7720, %v7728
      %v7730 = vrot.slane %v7728, 4
      %v7732 = vshrl.u32 %v7569, 16
      %v7734 = vrot.slane %v7732, 6
      %v7735 = vshll.u32 %v7569, 16
      %v7737 = vrot.slane %v7735, 7
      %v7738 = vor.u32 %v7734, %v7737
      %v7739 = vsel %vm4966, %v7730, %v7738
      %v7740 = vrot.slane %v7738, 4
      %v7742 = vshrl.u32 %v7570, 16
      %v7744 = vrot.slane %v7742, 6
      %v7745 = vshll.u32 %v7570, 16
      %v7747 = vrot.slane %v7745, 7
      %v7748 = vor.u32 %v7744, %v7747
      %v7749 = vsel %vm4966, %v7740, %v7748
      %v7750 = vrot.slane %v7748, 4
      %v7752 = vshrl.u32 %v7571, 16
      %v7754 = vrot.slane %v7752, 6
      %v7755 = vshll.u32 %v7571, 16
      %v7757 = vrot.slane %v7755, 7
      %v7758 = vor.u32 %v7754, %v7757
      %v7759 = vsel %vm4966, %v7750, %v7758
      %v7760 = vrot.slane %v7758, 4
      %v7762 = vshrl.u32 %v7572, 16
      %v7764 = vrot.slane %v7762, 6
      %v7765 = vshll.u32 %v7572, 16
      %v7767 = vrot.slane %v7765, 7
      %v7768 = vor.u32 %v7764, %v7767
      %v7769 = vsel %vm4966, %v7760, %v7768
      %v7770 = vrot.slane %v7768, 4
      %v7772 = vshrl.u32 %v7573, 16
      %v7774 = vrot.slane %v7772, 6
      %v7775 = vshll.u32 %v7573, 16
      %v7777 = vrot.slane %v7775, 7
      %v7778 = vor.u32 %v7774, %v7777
      %v7779 = vsel %vm4966, %v7770, %v7778
      %v7780 = vrot.slane %v7778, 4
      %v7782 = vshrl.u32 %v7574, 16
      %v7784 = vrot.slane %v7782, 6
      %v7785 = vshll.u32 %v7574, 16
      %v7787 = vrot.slane %v7785, 7
      %v7788 = vor.u32 %v7784, %v7787
      %v7789 = vsel %vm4966, %v7780, %v7788
      %v7790 = vrot.slane %v7788, 4
      %v7792 = vshrl.u32 %v7575, 16
      %v7794 = vrot.slane %v7792, 6
      %v7795 = vshll.u32 %v7575, 16
      %v7797 = vrot.slane %v7795, 7
      %v7798 = vor.u32 %v7794, %v7797
      %v7799 = vsel %vm4966, %v7790, %v7798
      %v7800 = vrot.slane %v7798, 4
      %v7802 = vshrl.u32 %v7576, 16
      %v7804 = vrot.slane %v7802, 6
      %v7805 = vshll.u32 %v7576, 16
      %v7807 = vrot.slane %v7805, 7
      %v7808 = vor.u32 %v7804, %v7807
      %v7809 = vsel %vm4966, %v7800, %v7808
      %v7810 = vrot.slane %v7808, 4
      %v7812 = vshrl.u32 %v7577, 16
      %v7814 = vrot.slane %v7812, 6
      %v7815 = vshll.u32 %v7577, 16
      %v7817 = vrot.slane %v7815, 7
      %v7818 = vor.u32 %v7814, %v7817
      %v7819 = vsel %vm4966, %v7810, %v7818
      %v7820 = vrot.slane %v7818, 4
      %v7822 = vshrl.u32 %v7578, 16
      %v7824 = vrot.slane %v7822, 6
      %v7825 = vshll.u32 %v7578, 16
      %v7827 = vrot.slane %v7825, 7
      %v7828 = vor.u32 %v7824, %v7827
      %v7829 = vsel %vm4966, %v7820, %v7828
      %v7830 = vrot.slane %v7828, 4
      %v7832 = vshrl.u32 %v7579, 16
      %v7834 = vrot.slane %v7832, 6
      %v7835 = vshll.u32 %v7579, 16
      %v7837 = vrot.slane %v7835, 7
      %v7838 = vor.u32 %v7834, %v7837
      %v7839 = vsel %vm4966, %v7830, %v7838
      %v7840 = vrot.slane %v7838, 4
      %v7842 = vshrl.u32 %v7580, 16
      %v7844 = vrot.slane %v7842, 6
      %v7845 = vshll.u32 %v7580, 16
      %v7847 = vrot.slane %v7845, 7
      %v7848 = vor.u32 %v7844, %v7847
      %v7849 = vsel %vm4966, %v7840, %v7848
      %v7850 = vrot.slane %v7848, 4
      %v7852 = vshrl.u32 %v7581, 16
      %v7854 = vrot.slane %v7852, 6
      %v7855 = vshll.u32 %v7581, 16
      %v7857 = vrot.slane %v7855, 7
      %v7858 = vor.u32 %v7854, %v7857
      %v7859 = vsel %vm4966, %v7850, %v7858
      %v7860 = vrot.slane %v7858, 4
      %v7862 = vshrl.u32 %v7582, 16
      %v7864 = vrot.slane %v7862, 6
      %v7865 = vshll.u32 %v7582, 16
      %v7867 = vrot.slane %v7865, 7
      %v7868 = vor.u32 %v7864, %v7867
      %v7869 = vsel %vm4966, %v7860, %v7868
      %v7870 = vrot.slane %v7868, 4
      %v7872 = vshrl.u32 %v7583, 16
      %v7874 = vrot.slane %v7872, 6
      %v7875 = vshll.u32 %v7583, 16
      %v7877 = vrot.slane %v7875, 7
      %v7878 = vor.u32 %v7874, %v7877
      %v7879 = vsel %vm4966, %v7870, %v7878
      %v7880 = vrot.slane %v7878, 4
      %v7882 = vshrl.u32 %v7584, 16
      %v7884 = vrot.slane %v7882, 6
      %v7885 = vshll.u32 %v7584, 16
      %v7887 = vrot.slane %v7885, 7
      %v7888 = vor.u32 %v7884, %v7887
      %v7889 = vsel %vm4966, %v7880, %v7888
      %v7890 = vrot.slane %v7888, 4
      %v7892 = vshrl.u32 %v7585, 16
      %v7894 = vrot.slane %v7892, 6
      %v7895 = vshll.u32 %v7585, 16
      %v7897 = vrot.slane %v7895, 7
      %v7898 = vor.u32 %v7894, %v7897
      %v7899 = vsel %vm4966, %v7890, %v7898
      %v7900 = vrot.slane %v7898, 4
      %v7902 = vshrl.u32 %v7586, 16
      %v7904 = vrot.slane %v7902, 6
      %v7905 = vshll.u32 %v7586, 16
      %v7907 = vrot.slane %v7905, 7
      %v7908 = vor.u32 %v7904, %v7907
      %v7909 = vsel %vm4966, %v7900, %v7908
      %v7910 = vrot.slane %v7908, 4
      %v7912 = vshrl.u32 %v7587, 16
      %v7914 = vrot.slane %v7912, 6
      %v7915 = vshll.u32 %v7587, 16
      %v7917 = vrot.slane %v7915, 7
      %v7918 = vor.u32 %v7914, %v7917
      %v7919 = vsel %vm4966, %v7910, %v7918
      %v7920 = vrot.slane %v7918, 4
      %v7922 = vshrl.u32 %v7588, 16
      %v7924 = vrot.slane %v7922, 6
      %v7925 = vshll.u32 %v7588, 16
      %v7927 = vrot.slane %v7925, 7
      %v7928 = vor.u32 %v7924, %v7927
      %v7929 = vsel %vm4966, %v7920, %v7928
      %v7930 = vrot.slane %v7928, 4
      %v7932 = vshrl.u32 %v7589, 16
      %v7934 = vrot.slane %v7932, 6
      %v7935 = vshll.u32 %v7589, 16
      %v7937 = vrot.slane %v7935, 7
      %v7938 = vor.u32 %v7934, %v7937
      %v7939 = vsel %vm4966, %v7930, %v7938
      %v7940 = vrot.slane %v7938, 4
      %v7942 = vshrl.u32 %v7590, 16
      %v7944 = vrot.slane %v7942, 6
      %v7945 = vshll.u32 %v7590, 16
      %v7947 = vrot.slane %v7945, 7
      %v7948 = vor.u32 %v7944, %v7947
      %v7949 = vsel %vm4966, %v7940, %v7948
      %v7950 = vrot.slane %v7948, 4
      %v7952 = vshrl.u32 %v7591, 16
      %v7954 = vrot.slane %v7952, 6
      %v7955 = vshll.u32 %v7591, 16
      %v7957 = vrot.slane %v7955, 7
      %v7958 = vor.u32 %v7954, %v7957
      %v7959 = vsel %vm4966, %v7950, %v7958
      %7996 = vst [vmem:[#allocation2 + $0x1c] sm:$0xf] %v7609
      %7997 = vst [vmem:[#allocation2 + $0x40] sm:$0xf] %v7619
      %7998 = vst [vmem:[#allocation2 + $0x64] sm:$0xf] %v7629
      %7999 = vst [vmem:[#allocation2 + $0x88] sm:$0xf] %v7639
      %8000 = vst [vmem:[#allocation2 + $0xac] sm:$0xf] %v7649
      %8001 = vst [vmem:[#allocation2 + $0xd0] sm:$0xf] %v7659
      %8002 = vst [vmem:[#allocation2 + $0xf4] sm:$0xf] %v7669
      %8003 = vst [vmem:[#allocation2 + $0x118] sm:$0xf] %v7679
      %8004 = vst [vmem:[#allocation2 + $0x13c] sm:$0xf] %v7689
      %8005 = vst [vmem:[#allocation2 + $0x160] sm:$0xf] %v7699
      %8006 = vst [vmem:[#allocation2 + $0x184] sm:$0xf] %v7709
      %8007 = vst [vmem:[#allocation2 + $0x1a8] sm:$0xf] %v7719
      %8008 = vst [vmem:[#allocation2 + $0x1cc] sm:$0xf] %v7729
      %8009 = vst [vmem:[#allocation2 + $0x1f0] sm:$0xf] %v7739
      %8010 = vst [vmem:[#allocation2 + $0x214] sm:$0xf] %v7749
      %8011 = vst [vmem:[#allocation2 + $0x238] sm:$0xf] %v7759
      %8012 = vst [vmem:[#allocation2 + $0x25c] sm:$0xf] %v7769
      %8013 = vst [vmem:[#allocation2 + $0x280] sm:$0xf] %v7779
      %8014 = vst [vmem:[#allocation2 + $0x2a4] sm:$0xf] %v7789
      %8015 = vst [vmem:[#allocation2 + $0x2c8] sm:$0xf] %v7799
      %8016 = vst [vmem:[#allocation2 + $0x2ec] sm:$0xf] %v7809
      %8017 = vst [vmem:[#allocation2 + $0x310] sm:$0xf] %v7819
      %8018 = vst [vmem:[#allocation2 + $0x334] sm:$0xf] %v7829
      %8019 = vst [vmem:[#allocation2 + $0x358] sm:$0xf] %v7839
      %8020 = vst [vmem:[#allocation2 + $0x37c] sm:$0xf] %v7849
      %8021 = vst [vmem:[#allocation2 + $0x3a0] sm:$0xf] %v7859
      %8022 = vst [vmem:[#allocation2 + $0x3c4] sm:$0xf] %v7869
      %8023 = vst [vmem:[#allocation2 + $0x3e8] sm:$0xf] %v7879
      %8024 = vst [vmem:[#allocation2 + $0x40c] sm:$0xf] %v7889
      %8025 = vst [vmem:[#allocation2 + $0x430] sm:$0xf] %v7899
      %8026 = vst [vmem:[#allocation2 + $0x454] sm:$0xf] %v7909
      %8027 = vst [vmem:[#allocation2 + $0x478] sm:$0xf] %v7919
      %8028 = vst [vmem:[#allocation2 + $0x49c] sm:$0xf] %v7929
      %8029 = vst [vmem:[#allocation2 + $0x4c0] sm:$0xf] %v7939
      %8030 = vst [vmem:[#allocation2 + $0x4e4] sm:$0xf] %v7949
      %8031 = vst [vmem:[#allocation2 + $0x508] sm:$0x7] %v7959
      %v8032 = vld [vmem:[#allocation3 + $0x10] sm:$0x8]
      %v8033 = vld [vmem:[#allocation3 + $0x14] sm:$0xf]
      %v8034 = vld [vmem:[#allocation3 + $0x18] sm:$0xf]
      %v8035 = vld [vmem:[#allocation3 + $0x1c] sm:$0xf]
      %v8036 = vld [vmem:[#allocation3 + $0x20] sm:$0xf]
      %v8037 = vld [vmem:[#allocation3 + $0x24] sm:$0xf]
      %v8038 = vld [vmem:[#allocation3 + $0x28] sm:$0xf]
      %v8039 = vld [vmem:[#allocation3 + $0x2c] sm:$0xf]
      %v8040 = vld [vmem:[#allocation3 + $0x30] sm:$0xf]
      %v8041 = vld [vmem:[#allocation3 + $0x34] sm:$0xf]
      %v8042 = vld [vmem:[#allocation3 + $0x38] sm:$0xf]
      %v8043 = vld [vmem:[#allocation3 + $0x3c] sm:$0xf]
      %v8044 = vld [vmem:[#allocation3 + $0x40] sm:$0xf]
      %v8045 = vld [vmem:[#allocation3 + $0x44] sm:$0xf]
      %v8046 = vld [vmem:[#allocation3 + $0x48] sm:$0xf]
      %v8047 = vld [vmem:[#allocation3 + $0x4c] sm:$0xf]
      %v8048 = vld [vmem:[#allocation3 + $0x50] sm:$0xf]
      %v8049 = vld [vmem:[#allocation3 + $0x54] sm:$0xf]
      %v8050 = vld [vmem:[#allocation3 + $0x58] sm:$0xf]
      %v8051 = vld [vmem:[#allocation3 + $0x5c] sm:$0xf]
      %v8052 = vld [vmem:[#allocation3 + $0x60] sm:$0xf]
      %v8053 = vld [vmem:[#allocation3 + $0x64] sm:$0xf]
      %v8054 = vld [vmem:[#allocation3 + $0x68] sm:$0xf]
      %v8055 = vld [vmem:[#allocation3 + $0x6c] sm:$0xf]
      %v8056 = vld [vmem:[#allocation3 + $0x70] sm:$0xf]
      %v8057 = vld [vmem:[#allocation3 + $0x74] sm:$0xf]
      %v8058 = vld [vmem:[#allocation3 + $0x78] sm:$0xf]
      %v8059 = vld [vmem:[#allocation3 + $0x7c] sm:$0xf]
      %v8060 = vld [vmem:[#allocation3 + $0x80] sm:$0xf]
      %v8061 = vld [vmem:[#allocation3 + $0x84] sm:$0xf]
      %v8062 = vld [vmem:[#allocation3 + $0x88] sm:$0xf]
      %v8063 = vld [vmem:[#allocation3 + $0x8c] sm:$0xf]
      %v8064 = vld [vmem:[#allocation3 + $0x90] sm:$0xf]
      %v8065 = vld [vmem:[#allocation3 + $0x94] sm:$0xf]
      %v8066 = vld [vmem:[#allocation3 + $0x98] sm:$0xf]
      %v8067 = vld [vmem:[#allocation3 + $0x9c] sm:$0xf]
      %v8068 = vld [vmem:[#allocation3 + $0xa0] sm:$0x3]
      %vm8106 = vcmask 1044484
      %vm8107 = vmor %vm5404, %vm8106
      %v8108 = vrot.slane %v8032, 7
      %v8109 = vrot.slane %v8108, 4
      %v8110 = vrot.slane %v8033, 7
      %v8111 = vsel %vm8107, %v8109, %v8110
      %v8112 = vrot.slane %v8110, 4
      %v8113 = vrot.slane %v8034, 7
      %v8114 = vsel %vm8107, %v8112, %v8113
      %v8115 = vrot.slane %v8113, 4
      %v8116 = vrot.slane %v8035, 7
      %v8117 = vsel %vm8107, %v8115, %v8116
      %v8118 = vrot.slane %v8116, 4
      %v8119 = vrot.slane %v8036, 7
      %v8120 = vsel %vm8107, %v8118, %v8119
      %v8121 = vrot.slane %v8119, 4
      %v8122 = vrot.slane %v8037, 7
      %v8123 = vsel %vm8107, %v8121, %v8122
      %v8124 = vrot.slane %v8122, 4
      %v8125 = vrot.slane %v8038, 7
      %v8126 = vsel %vm8107, %v8124, %v8125
      %v8127 = vrot.slane %v8125, 4
      %v8128 = vrot.slane %v8039, 7
      %v8129 = vsel %vm8107, %v8127, %v8128
      %v8130 = vrot.slane %v8128, 4
      %v8131 = vrot.slane %v8040, 7
      %v8132 = vsel %vm8107, %v8130, %v8131
      %v8133 = vrot.slane %v8131, 4
      %v8134 = vrot.slane %v8041, 7
      %v8135 = vsel %vm8107, %v8133, %v8134
      %v8136 = vrot.slane %v8134, 4
      %v8137 = vrot.slane %v8042, 7
      %v8138 = vsel %vm8107, %v8136, %v8137
      %v8139 = vrot.slane %v8137, 4
      %v8140 = vrot.slane %v8043, 7
      %v8141 = vsel %vm8107, %v8139, %v8140
      %v8142 = vrot.slane %v8140, 4
      %v8143 = vrot.slane %v8044, 7
      %v8144 = vsel %vm8107, %v8142, %v8143
      %v8145 = vrot.slane %v8143, 4
      %v8146 = vrot.slane %v8045, 7
      %v8147 = vsel %vm8107, %v8145, %v8146
      %v8148 = vrot.slane %v8146, 4
      %v8149 = vrot.slane %v8046, 7
      %v8150 = vsel %vm8107, %v8148, %v8149
      %v8151 = vrot.slane %v8149, 4
      %v8152 = vrot.slane %v8047, 7
      %v8153 = vsel %vm8107, %v8151, %v8152
      %v8154 = vrot.slane %v8152, 4
      %v8155 = vrot.slane %v8048, 7
      %v8156 = vsel %vm8107, %v8154, %v8155
      %v8157 = vrot.slane %v8155, 4
      %v8158 = vrot.slane %v8049, 7
      %v8159 = vsel %vm8107, %v8157, %v8158
      %v8160 = vrot.slane %v8158, 4
      %v8161 = vrot.slane %v8050, 7
      %v8162 = vsel %vm8107, %v8160, %v8161
      %v8163 = vrot.slane %v8161, 4
      %v8164 = vrot.slane %v8051, 7
      %v8165 = vsel %vm8107, %v8163, %v8164
      %v8166 = vrot.slane %v8164, 4
      %v8167 = vrot.slane %v8052, 7
      %v8168 = vsel %vm8107, %v8166, %v8167
      %v8169 = vrot.slane %v8167, 4
      %v8170 = vrot.slane %v8053, 7
      %v8171 = vsel %vm8107, %v8169, %v8170
      %v8172 = vrot.slane %v8170, 4
      %v8173 = vrot.slane %v8054, 7
      %v8174 = vsel %vm8107, %v8172, %v8173
      %v8175 = vrot.slane %v8173, 4
      %v8176 = vrot.slane %v8055, 7
      %v8177 = vsel %vm8107, %v8175, %v8176
      %v8178 = vrot.slane %v8176, 4
      %v8179 = vrot.slane %v8056, 7
      %v8180 = vsel %vm8107, %v8178, %v8179
      %v8181 = vrot.slane %v8179, 4
      %v8182 = vrot.slane %v8057, 7
      %v8183 = vsel %vm8107, %v8181, %v8182
      %v8184 = vrot.slane %v8182, 4
      %v8185 = vrot.slane %v8058, 7
      %v8186 = vsel %vm8107, %v8184, %v8185
      %v8187 = vrot.slane %v8185, 4
      %v8188 = vrot.slane %v8059, 7
      %v8189 = vsel %vm8107, %v8187, %v8188
      %v8190 = vrot.slane %v8188, 4
      %v8191 = vrot.slane %v8060, 7
      %v8192 = vsel %vm8107, %v8190, %v8191
      %v8193 = vrot.slane %v8191, 4
      %v8194 = vrot.slane %v8061, 7
      %v8195 = vsel %vm8107, %v8193, %v8194
      %v8196 = vrot.slane %v8194, 4
      %v8197 = vrot.slane %v8062, 7
      %v8198 = vsel %vm8107, %v8196, %v8197
      %v8199 = vrot.slane %v8197, 4
      %v8200 = vrot.slane %v8063, 7
      %v8201 = vsel %vm8107, %v8199, %v8200
      %v8202 = vrot.slane %v8200, 4
      %v8203 = vrot.slane %v8064, 7
      %v8204 = vsel %vm8107, %v8202, %v8203
      %v8205 = vrot.slane %v8203, 4
      %v8206 = vrot.slane %v8065, 7
      %v8207 = vsel %vm8107, %v8205, %v8206
      %v8208 = vrot.slane %v8206, 4
      %v8209 = vrot.slane %v8066, 7
      %v8210 = vsel %vm8107, %v8208, %v8209
      %v8211 = vrot.slane %v8209, 4
      %v8212 = vrot.slane %v8067, 7
      %v8213 = vsel %vm8107, %v8211, %v8212
      %v8214 = vrot.slane %v8212, 4
      %v8215 = vrot.slane %v8068, 7
      %v8216 = vsel %vm8107, %v8214, %v8215
      %8253 = vst [vmem:[#allocation2 + $0x20] sm:$0xf] %v8111
      %8254 = vst [vmem:[#allocation2 + $0x44] sm:$0xf] %v8114
      %8255 = vst [vmem:[#allocation2 + $0x68] sm:$0xf] %v8117
      %8256 = vst [vmem:[#allocation2 + $0x8c] sm:$0xf] %v8120
      %8257 = vst [vmem:[#allocation2 + $0xb0] sm:$0xf] %v8123
      %8258 = vst [vmem:[#allocation2 + $0xd4] sm:$0xf] %v8126
      %8259 = vst [vmem:[#allocation2 + $0xf8] sm:$0xf] %v8129
      %8260 = vst [vmem:[#allocation2 + $0x11c] sm:$0xf] %v8132
      %8261 = vst [vmem:[#allocation2 + $0x140] sm:$0xf] %v8135
      %8262 = vst [vmem:[#allocation2 + $0x164] sm:$0xf] %v8138
      %8263 = vst [vmem:[#allocation2 + $0x188] sm:$0xf] %v8141
      %8264 = vst [vmem:[#allocation2 + $0x1ac] sm:$0xf] %v8144
      %8265 = vst [vmem:[#allocation2 + $0x1d0] sm:$0xf] %v8147
      %8266 = vst [vmem:[#allocation2 + $0x1f4] sm:$0xf] %v8150
      %8267 = vst [vmem:[#allocation2 + $0x218] sm:$0xf] %v8153
      %8268 = vst [vmem:[#allocation2 + $0x23c] sm:$0xf] %v8156
      %8269 = vst [vmem:[#allocation2 + $0x260] sm:$0xf] %v8159
      %8270 = vst [vmem:[#allocation2 + $0x284] sm:$0xf] %v8162
      %8271 = vst [vmem:[#allocation2 + $0x2a8] sm:$0xf] %v8165
      %8272 = vst [vmem:[#allocation2 + $0x2cc] sm:$0xf] %v8168
      %8273 = vst [vmem:[#allocation2 + $0x2f0] sm:$0xf] %v8171
      %8274 = vst [vmem:[#allocation2 + $0x314] sm:$0xf] %v8174
      %8275 = vst [vmem:[#allocation2 + $0x338] sm:$0xf] %v8177
      %8276 = vst [vmem:[#allocation2 + $0x35c] sm:$0xf] %v8180
      %8277 = vst [vmem:[#allocation2 + $0x380] sm:$0xf] %v8183
      %8278 = vst [vmem:[#allocation2 + $0x3a4] sm:$0xf] %v8186
      %8279 = vst [vmem:[#allocation2 + $0x3c8] sm:$0xf] %v8189
      %8280 = vst [vmem:[#allocation2 + $0x3ec] sm:$0xf] %v8192
      %8281 = vst [vmem:[#allocation2 + $0x410] sm:$0xf] %v8195
      %8282 = vst [vmem:[#allocation2 + $0x434] sm:$0xf] %v8198
      %8283 = vst [vmem:[#allocation2 + $0x458] sm:$0xf] %v8201
      %8284 = vst [vmem:[#allocation2 + $0x47c] sm:$0xf] %v8204
      %8285 = vst [vmem:[#allocation2 + $0x4a0] sm:$0xf] %v8207
      %8286 = vst [vmem:[#allocation2 + $0x4c4] sm:$0xf] %v8210
      %8287 = vst [vmem:[#allocation2 + $0x4e8] sm:$0xf] %v8213
      %8288 = vst [vmem:[#allocation2 + $0x50c] sm:$0x7] %v8216
      %v8289 = vld [vmem:[#allocation2] sm:$0xff]
      %v8290 = vld [vmem:[#allocation2 + $0x8] sm:$0xff]
      %v8291 = vld [vmem:[#allocation2 + $0x10] sm:$0xff]
      %v8292 = vld [vmem:[#allocation2 + $0x18] sm:$0xff]
      %v8293 = vld [vmem:[#allocation2 + $0x20] sm:$0xf]
      %v8294 = vld [vmem:[#allocation2 + $0x24] sm:$0xff]
      %v8295 = vld [vmem:[#allocation2 + $0x2c] sm:$0xff]
      %v8296 = vld [vmem:[#allocation2 + $0x34] sm:$0xff]
      %v8297 = vld [vmem:[#allocation2 + $0x3c] sm:$0xff]
      %v8298 = vld [vmem:[#allocation2 + $0x44] sm:$0xf]
      %v8299 = vld [vmem:[#allocation2 + $0x48] sm:$0xff]
      %v8300 = vld [vmem:[#allocation2 + $0x50] sm:$0xff]
      %v8301 = vld [vmem:[#allocation2 + $0x58] sm:$0xff]
      %v8302 = vld [vmem:[#allocation2 + $0x60] sm:$0xff]
      %v8303 = vld [vmem:[#allocation2 + $0x68] sm:$0xf]
      %v8304 = vld [vmem:[#allocation2 + $0x6c] sm:$0xff]
      %v8305 = vld [vmem:[#allocation2 + $0x74] sm:$0xff]
      %v8306 = vld [vmem:[#allocation2 + $0x7c] sm:$0xff]
      %v8307 = vld [vmem:[#allocation2 + $0x84] sm:$0xff]
      %v8308 = vld [vmem:[#allocation2 + $0x8c] sm:$0xf]
      %v8309 = vld [vmem:[#allocation2 + $0x90] sm:$0xff]
      %v8310 = vld [vmem:[#allocation2 + $0x98] sm:$0xff]
      %v8311 = vld [vmem:[#allocation2 + $0xa0] sm:$0xff]
      %v8312 = vld [vmem:[#allocation2 + $0xa8] sm:$0xff]
      %v8313 = vld [vmem:[#allocation2 + $0xb0] sm:$0xf]
      %v8314 = vld [vmem:[#allocation2 + $0xb4] sm:$0xff]
      %v8315 = vld [vmem:[#allocation2 + $0xbc] sm:$0xff]
      %v8316 = vld [vmem:[#allocation2 + $0xc4] sm:$0xff]
      %v8317 = vld [vmem:[#allocation2 + $0xcc] sm:$0xff]
      %v8318 = vld [vmem:[#allocation2 + $0xd4] sm:$0xf]
      %v8319 = vld [vmem:[#allocation2 + $0xd8] sm:$0xff]
      %v8320 = vld [vmem:[#allocation2 + $0xe0] sm:$0xff]
      %v8321 = vld [vmem:[#allocation2 + $0xe8] sm:$0xff]
      %v8322 = vld [vmem:[#allocation2 + $0xf0] sm:$0xff]
      %v8323 = vld [vmem:[#allocation2 + $0xf8] sm:$0xf]
      %v8324 = vld [vmem:[#allocation2 + $0xfc] sm:$0xff]
      %v8325 = vld [vmem:[#allocation2 + $0x104] sm:$0xff]
      %v8326 = vld [vmem:[#allocation2 + $0x10c] sm:$0xff]
      %v8327 = vld [vmem:[#allocation2 + $0x114] sm:$0xff]
      %v8328 = vld [vmem:[#allocation2 + $0x11c] sm:$0xf]
      %v8329 = vld [vmem:[#allocation2 + $0x120] sm:$0xff]
      %v8330 = vld [vmem:[#allocation2 + $0x128] sm:$0xff]
      %v8331 = vld [vmem:[#allocation2 + $0x130] sm:$0xff]
      %v8332 = vld [vmem:[#allocation2 + $0x138] sm:$0xff]
      %v8333 = vld [vmem:[#allocation2 + $0x140] sm:$0xf]
      %v8334 = vld [vmem:[#allocation2 + $0x144] sm:$0xff]
      %v8335 = vld [vmem:[#allocation2 + $0x14c] sm:$0xff]
      %v8336 = vld [vmem:[#allocation2 + $0x154] sm:$0xff]
      %v8337 = vld [vmem:[#allocation2 + $0x15c] sm:$0xff]
      %v8338 = vld [vmem:[#allocation2 + $0x164] sm:$0xf]
      %v8339 = vld [vmem:[#allocation2 + $0x168] sm:$0xff]
      %v8340 = vld [vmem:[#allocation2 + $0x170] sm:$0xff]
      %v8341 = vld [vmem:[#allocation2 + $0x178] sm:$0xff]
      %v8342 = vld [vmem:[#allocation2 + $0x180] sm:$0xff]
      %v8343 = vld [vmem:[#allocation2 + $0x188] sm:$0xf]
      %v8344 = vld [vmem:[#allocation2 + $0x18c] sm:$0xff]
      %v8345 = vld [vmem:[#allocation2 + $0x194] sm:$0xff]
      %v8346 = vld [vmem:[#allocation2 + $0x19c] sm:$0xff]
      %v8347 = vld [vmem:[#allocation2 + $0x1a4] sm:$0xff]
      %v8348 = vld [vmem:[#allocation2 + $0x1ac] sm:$0xf]
      %v8349 = vld [vmem:[#allocation2 + $0x1b0] sm:$0xff]
      %v8350 = vld [vmem:[#allocation2 + $0x1b8] sm:$0xff]
      %v8351 = vld [vmem:[#allocation2 + $0x1c0] sm:$0xff]
      %v8352 = vld [vmem:[#allocation2 + $0x1c8] sm:$0xff]
      %v8353 = vld [vmem:[#allocation2 + $0x1d0] sm:$0xf]
      %v8354 = vld [vmem:[#allocation2 + $0x1d4] sm:$0xff]
      %v8355 = vld [vmem:[#allocation2 + $0x1dc] sm:$0xff]
      %v8356 = vld [vmem:[#allocation2 + $0x1e4] sm:$0xff]
      %v8357 = vld [vmem:[#allocation2 + $0x1ec] sm:$0xff]
      %v8358 = vld [vmem:[#allocation2 + $0x1f4] sm:$0xf]
      %v8359 = vld [vmem:[#allocation2 + $0x1f8] sm:$0xff]
      %v8360 = vld [vmem:[#allocation2 + $0x200] sm:$0xff]
      %v8361 = vld [vmem:[#allocation2 + $0x208] sm:$0xff]
      %v8362 = vld [vmem:[#allocation2 + $0x210] sm:$0xff]
      %v8363 = vld [vmem:[#allocation2 + $0x218] sm:$0xf]
      %v8364 = vld [vmem:[#allocation2 + $0x21c] sm:$0xff]
      %v8365 = vld [vmem:[#allocation2 + $0x224] sm:$0xff]
      %v8366 = vld [vmem:[#allocation2 + $0x22c] sm:$0xff]
      %v8367 = vld [vmem:[#allocation2 + $0x234] sm:$0xff]
      %v8368 = vld [vmem:[#allocation2 + $0x23c] sm:$0xf]
      %v8369 = vld [vmem:[#allocation2 + $0x240] sm:$0xff]
      %v8370 = vld [vmem:[#allocation2 + $0x248] sm:$0xff]
      %v8371 = vld [vmem:[#allocation2 + $0x250] sm:$0xff]
      %v8372 = vld [vmem:[#allocation2 + $0x258] sm:$0xff]
      %v8373 = vld [vmem:[#allocation2 + $0x260] sm:$0xf]
      %v8374 = vld [vmem:[#allocation2 + $0x264] sm:$0xff]
      %v8375 = vld [vmem:[#allocation2 + $0x26c] sm:$0xff]
      %v8376 = vld [vmem:[#allocation2 + $0x274] sm:$0xff]
      %v8377 = vld [vmem:[#allocation2 + $0x27c] sm:$0xff]
      %v8378 = vld [vmem:[#allocation2 + $0x284] sm:$0xf]
      %v8379 = vld [vmem:[#allocation2 + $0x288] sm:$0xff]
      %v8380 = vld [vmem:[#allocation2 + $0x290] sm:$0xff]
      %v8381 = vld [vmem:[#allocation2 + $0x298] sm:$0xff]
      %v8382 = vld [vmem:[#allocation2 + $0x2a0] sm:$0xff]
      %v8383 = vld [vmem:[#allocation2 + $0x2a8] sm:$0xf]
      %v8384 = vld [vmem:[#allocation2 + $0x2ac] sm:$0xff]
      %v8385 = vld [vmem:[#allocation2 + $0x2b4] sm:$0xff]
      %v8386 = vld [vmem:[#allocation2 + $0x2bc] sm:$0xff]
      %v8387 = vld [vmem:[#allocation2 + $0x2c4] sm:$0xff]
      %v8388 = vld [vmem:[#allocation2 + $0x2cc] sm:$0xf]
      %v8389 = vld [vmem:[#allocation2 + $0x2d0] sm:$0xff]
      %v8390 = vld [vmem:[#allocation2 + $0x2d8] sm:$0xff]
      %v8391 = vld [vmem:[#allocation2 + $0x2e0] sm:$0xff]
      %v8392 = vld [vmem:[#allocation2 + $0x2e8] sm:$0xff]
      %v8393 = vld [vmem:[#allocation2 + $0x2f0] sm:$0xf]
      %v8394 = vld [vmem:[#allocation2 + $0x2f4] sm:$0xff]
      %v8395 = vld [vmem:[#allocation2 + $0x2fc] sm:$0xff]
      %v8396 = vld [vmem:[#allocation2 + $0x304] sm:$0xff]
      %v8397 = vld [vmem:[#allocation2 + $0x30c] sm:$0xff]
      %v8398 = vld [vmem:[#allocation2 + $0x314] sm:$0xf]
      %v8399 = vld [vmem:[#allocation2 + $0x318] sm:$0xff]
      %v8400 = vld [vmem:[#allocation2 + $0x320] sm:$0xff]
      %v8401 = vld [vmem:[#allocation2 + $0x328] sm:$0xff]
      %v8402 = vld [vmem:[#allocation2 + $0x330] sm:$0xff]
      %v8403 = vld [vmem:[#allocation2 + $0x338] sm:$0xf]
      %v8404 = vld [vmem:[#allocation2 + $0x33c] sm:$0xff]
      %v8405 = vld [vmem:[#allocation2 + $0x344] sm:$0xff]
      %v8406 = vld [vmem:[#allocation2 + $0x34c] sm:$0xff]
      %v8407 = vld [vmem:[#allocation2 + $0x354] sm:$0xff]
      %v8408 = vld [vmem:[#allocation2 + $0x35c] sm:$0xf]
      %v8409 = vld [vmem:[#allocation2 + $0x360] sm:$0xff]
      %v8410 = vld [vmem:[#allocation2 + $0x368] sm:$0xff]
      %v8411 = vld [vmem:[#allocation2 + $0x370] sm:$0xff]
      %v8412 = vld [vmem:[#allocation2 + $0x378] sm:$0xff]
      %v8413 = vld [vmem:[#allocation2 + $0x380] sm:$0xf]
      %v8414 = vld [vmem:[#allocation2 + $0x384] sm:$0xff]
      %v8415 = vld [vmem:[#allocation2 + $0x38c] sm:$0xff]
      %v8416 = vld [vmem:[#allocation2 + $0x394] sm:$0xff]
      %v8417 = vld [vmem:[#allocation2 + $0x39c] sm:$0xff]
      %v8418 = vld [vmem:[#allocation2 + $0x3a4] sm:$0xf]
      %v8419 = vld [vmem:[#allocation2 + $0x3a8] sm:$0xff]
      %v8420 = vld [vmem:[#allocation2 + $0x3b0] sm:$0xff]
      %v8421 = vld [vmem:[#allocation2 + $0x3b8] sm:$0xff]
      %v8422 = vld [vmem:[#allocation2 + $0x3c0] sm:$0xff]
      %v8423 = vld [vmem:[#allocation2 + $0x3c8] sm:$0xf]
      %v8424 = vld [vmem:[#allocation2 + $0x3cc] sm:$0xff]
      %v8425 = vld [vmem:[#allocation2 + $0x3d4] sm:$0xff]
      %v8426 = vld [vmem:[#allocation2 + $0x3dc] sm:$0xff]
      %v8427 = vld [vmem:[#allocation2 + $0x3e4] sm:$0xff]
      %v8428 = vld [vmem:[#allocation2 + $0x3ec] sm:$0xf]
      %v8429 = vld [vmem:[#allocation2 + $0x3f0] sm:$0xff]
      %v8430 = vld [vmem:[#allocation2 + $0x3f8] sm:$0xff]
      %v8431 = vld [vmem:[#allocation2 + $0x400] sm:$0xff]
      %v8432 = vld [vmem:[#allocation2 + $0x408] sm:$0xff]
      %v8433 = vld [vmem:[#allocation2 + $0x410] sm:$0xf]
      %v8434 = vld [vmem:[#allocation2 + $0x414] sm:$0xff]
      %v8435 = vld [vmem:[#allocation2 + $0x41c] sm:$0xff]
      %v8436 = vld [vmem:[#allocation2 + $0x424] sm:$0xff]
      %v8437 = vld [vmem:[#allocation2 + $0x42c] sm:$0xff]
      %v8438 = vld [vmem:[#allocation2 + $0x434] sm:$0xf]
      %v8439 = vld [vmem:[#allocation2 + $0x438] sm:$0xff]
      %v8440 = vld [vmem:[#allocation2 + $0x440] sm:$0xff]
      %v8441 = vld [vmem:[#allocation2 + $0x448] sm:$0xff]
      %v8442 = vld [vmem:[#allocation2 + $0x450] sm:$0xff]
      %v8443 = vld [vmem:[#allocation2 + $0x458] sm:$0xf]
      %v8444 = vld [vmem:[#allocation2 + $0x45c] sm:$0xff]
      %v8445 = vld [vmem:[#allocation2 + $0x464] sm:$0xff]
      %v8446 = vld [vmem:[#allocation2 + $0x46c] sm:$0xff]
      %v8447 = vld [vmem:[#allocation2 + $0x474] sm:$0xff]
      %v8448 = vld [vmem:[#allocation2 + $0x47c] sm:$0xf]
      %v8449 = vld [vmem:[#allocation2 + $0x480] sm:$0xff]
      %v8450 = vld [vmem:[#allocation2 + $0x488] sm:$0xff]
      %v8451 = vld [vmem:[#allocation2 + $0x490] sm:$0xff]
      %v8452 = vld [vmem:[#allocation2 + $0x498] sm:$0xff]
      %v8453 = vld [vmem:[#allocation2 + $0x4a0] sm:$0xf]
      %v8454 = vld [vmem:[#allocation2 + $0x4a4] sm:$0xff]
      %v8455 = vld [vmem:[#allocation2 + $0x4ac] sm:$0xff]
      %v8456 = vld [vmem:[#allocation2 + $0x4b4] sm:$0xff]
      %v8457 = vld [vmem:[#allocation2 + $0x4bc] sm:$0xff]
      %v8458 = vld [vmem:[#allocation2 + $0x4c4] sm:$0xf]
      %v8459 = vld [vmem:[#allocation2 + $0x4c8] sm:$0xff]
      %v8460 = vld [vmem:[#allocation2 + $0x4d0] sm:$0xff]
      %v8461 = vld [vmem:[#allocation2 + $0x4d8] sm:$0xff]
      %v8462 = vld [vmem:[#allocation2 + $0x4e0] sm:$0xff]
      %v8463 = vld [vmem:[#allocation2 + $0x4e8] sm:$0xf]
      %v8464 = vld [vmem:[#allocation2 + $0x4ec] sm:$0x77]
      %v8465 = vld [vmem:[#allocation2 + $0x4f4] sm:$0x77]
      %v8466 = vld [vmem:[#allocation2 + $0x4fc] sm:$0x77]
      %v8467 = vld [vmem:[#allocation2 + $0x504] sm:$0x77]
      %v8468 = vld [vmem:[#allocation2 + $0x50c] sm:$0x7]
      %v8469 = vld [vmem:[%s4] sm:$0xf]
      %v8470 = vld [vmem:[%s4 + $0x4] sm:$0xf]
      %v8471 = vld [vmem:[%s4 + $0x8] sm:$0xf]
      %v8472 = vld [vmem:[%s4 + $0xc] sm:$0xf]
      %v8473 = vld [vmem:[%s4 + $0x10] sm:$0xf]
      %v8474 = vld [vmem:[%s4 + $0x14] sm:$0xf]
      %v8475 = vld [vmem:[%s4 + $0x18] sm:$0xf]
      %v8476 = vld [vmem:[%s4 + $0x1c] sm:$0xf]
      %v8477 = vld [vmem:[%s4 + $0x20] sm:$0xf]
      %v8478 = vld [vmem:[%s4 + $0x24] sm:$0xf]
      %v8479 = vld [vmem:[%s4 + $0x28] sm:$0xf]
      %v8480 = vld [vmem:[%s4 + $0x2c] sm:$0xf]
      %v8481 = vld [vmem:[%s4 + $0x30] sm:$0xf]
      %v8482 = vld [vmem:[%s4 + $0x34] sm:$0xf]
      %v8483 = vld [vmem:[%s4 + $0x38] sm:$0xf]
      %v8484 = vld [vmem:[%s4 + $0x3c] sm:$0xf]
      %v8485 = vld [vmem:[%s4 + $0x40] sm:$0xf]
      %v8486 = vld [vmem:[%s4 + $0x44] sm:$0xf]
      %v8487 = vld [vmem:[%s4 + $0x48] sm:$0xf]
      %v8488 = vld [vmem:[%s4 + $0x4c] sm:$0xf]
      %v8489 = vld [vmem:[%s4 + $0x50] sm:$0xf]
      %v8490 = vld [vmem:[%s4 + $0x54] sm:$0xf]
      %v8491 = vld [vmem:[%s4 + $0x58] sm:$0xf]
      %v8492 = vld [vmem:[%s4 + $0x5c] sm:$0xf]
      %v8493 = vld [vmem:[%s4 + $0x60] sm:$0xf]
      %v8494 = vld [vmem:[%s4 + $0x64] sm:$0xf]
      %v8495 = vld [vmem:[%s4 + $0x68] sm:$0xf]
      %v8496 = vld [vmem:[%s4 + $0x6c] sm:$0xf]
      %v8497 = vld [vmem:[%s4 + $0x70] sm:$0xf]
      %v8498 = vld [vmem:[%s4 + $0x74] sm:$0xf]
      %v8499 = vld [vmem:[%s4 + $0x78] sm:$0xf]
      %v8500 = vld [vmem:[%s4 + $0x7c] sm:$0xf]
      %v8501 = vld [vmem:[%s4 + $0x80] sm:$0xf]
      %v8502 = vld [vmem:[%s4 + $0x84] sm:$0xf]
      %v8503 = vld [vmem:[%s4 + $0x88] sm:$0xf]
      %v8504 = vld [vmem:[%s4 + $0x8c] sm:$0xf]
      %v8505 = vld [vmem:[%s4 + $0x90] sm:$0xf]
      %v8506 = vld [vmem:[%s4 + $0x94] sm:$0xf]
      %v8507 = vld [vmem:[%s4 + $0x98] sm:$0xf]
      %v8508 = vld [vmem:[%s4 + $0x9c] sm:$0xf]
      %v8509 = vld [vmem:[%s4 + $0xa0] sm:$0xf]
      %v8510 = vld [vmem:[%s4 + $0xa4] sm:$0xf]
      %v8511 = vld [vmem:[%s4 + $0xa8] sm:$0xf]
      %v8512 = vld [vmem:[%s4 + $0xac] sm:$0xf]
      %v8513 = vld [vmem:[%s4 + $0xb0] sm:$0xf]
      %v8514 = vld [vmem:[%s4 + $0xb4] sm:$0xf]
      %v8515 = vld [vmem:[%s4 + $0xb8] sm:$0xf]
      %v8516 = vld [vmem:[%s4 + $0xbc] sm:$0xf]
      %v8517 = vld [vmem:[%s4 + $0xc0] sm:$0xf]
      %v8518 = vld [vmem:[%s4 + $0xc4] sm:$0xf]
      %v8519 = vld [vmem:[%s4 + $0xc8] sm:$0xf]
      %v8520 = vld [vmem:[%s4 + $0xcc] sm:$0xf]
      %v8521 = vld [vmem:[%s4 + $0xd0] sm:$0xf]
      %v8522 = vld [vmem:[%s4 + $0xd4] sm:$0xf]
      %v8523 = vld [vmem:[%s4 + $0xd8] sm:$0xf]
      %v8524 = vld [vmem:[%s4 + $0xdc] sm:$0xf]
      %v8525 = vld [vmem:[%s4 + $0xe0] sm:$0xf]
      %v8526 = vld [vmem:[%s4 + $0xe4] sm:$0xf]
      %v8527 = vld [vmem:[%s4 + $0xe8] sm:$0xf]
      %v8528 = vld [vmem:[%s4 + $0xec] sm:$0xf]
      %v8529 = vld [vmem:[%s4 + $0xf0] sm:$0xf]
      %v8530 = vld [vmem:[%s4 + $0xf4] sm:$0xf]
      %v8531 = vld [vmem:[%s4 + $0xf8] sm:$0xf]
      %v8532 = vld [vmem:[%s4 + $0xfc] sm:$0xf]
      %v8533 = vld [vmem:[%s4 + $0x100] sm:$0xf]
      %v8534 = vld [vmem:[%s4 + $0x104] sm:$0xf]
      %v8535 = vld [vmem:[%s4 + $0x108] sm:$0xf]
      %v8536 = vld [vmem:[%s4 + $0x10c] sm:$0xf]
      %v8537 = vld [vmem:[%s4 + $0x110] sm:$0xf]
      %v8538 = vld [vmem:[%s4 + $0x114] sm:$0xf]
      %v8539 = vld [vmem:[%s4 + $0x118] sm:$0xf]
      %v8540 = vld [vmem:[%s4 + $0x11c] sm:$0xf]
      %v8541 = vld [vmem:[%s4 + $0x120] sm:$0xf]
      %v8542 = vld [vmem:[%s4 + $0x124] sm:$0xf]
      %v8543 = vld [vmem:[%s4 + $0x128] sm:$0xf]
      %v8544 = vld [vmem:[%s4 + $0x12c] sm:$0xf]
      %v8545 = vld [vmem:[%s4 + $0x130] sm:$0xf]
      %v8546 = vld [vmem:[%s4 + $0x134] sm:$0xf]
      %v8547 = vld [vmem:[%s4 + $0x138] sm:$0xf]
      %v8548 = vld [vmem:[%s4 + $0x13c] sm:$0xf]
      %v8549 = vld [vmem:[%s4 + $0x140] sm:$0xf]
      %v8550 = vld [vmem:[%s4 + $0x144] sm:$0xf]
      %v8551 = vld [vmem:[%s4 + $0x148] sm:$0xf]
      %v8552 = vld [vmem:[%s4 + $0x14c] sm:$0xf]
      %v8553 = vld [vmem:[%s4 + $0x150] sm:$0xf]
      %v8554 = vld [vmem:[%s4 + $0x154] sm:$0xf]
      %v8555 = vld [vmem:[%s4 + $0x158] sm:$0xf]
      %v8556 = vld [vmem:[%s4 + $0x15c] sm:$0xf]
      %v8557 = vld [vmem:[%s4 + $0x160] sm:$0xf]
      %v8558 = vld [vmem:[%s4 + $0x164] sm:$0xf]
      %v8559 = vld [vmem:[%s4 + $0x168] sm:$0xf]
      %v8560 = vld [vmem:[%s4 + $0x16c] sm:$0xf]
      %v8561 = vld [vmem:[%s4 + $0x170] sm:$0xf]
      %v8562 = vld [vmem:[%s4 + $0x174] sm:$0xf]
      %v8563 = vld [vmem:[%s4 + $0x178] sm:$0xf]
      %v8564 = vld [vmem:[%s4 + $0x17c] sm:$0xf]
      %v8565 = vld [vmem:[%s4 + $0x180] sm:$0xf]
      %v8566 = vld [vmem:[%s4 + $0x184] sm:$0xf]
      %v8567 = vld [vmem:[%s4 + $0x188] sm:$0xf]
      %v8568 = vld [vmem:[%s4 + $0x18c] sm:$0xf]
      %v8569 = vld [vmem:[%s4 + $0x190] sm:$0xf]
      %v8570 = vld [vmem:[%s4 + $0x194] sm:$0xf]
      %v8571 = vld [vmem:[%s4 + $0x198] sm:$0xf]
      %v8572 = vld [vmem:[%s4 + $0x19c] sm:$0xf]
      %v8573 = vld [vmem:[%s4 + $0x1a0] sm:$0xf]
      %v8574 = vld [vmem:[%s4 + $0x1a4] sm:$0xf]
      %v8575 = vld [vmem:[%s4 + $0x1a8] sm:$0xf]
      %v8576 = vld [vmem:[%s4 + $0x1ac] sm:$0xf]
      %v8577 = vld [vmem:[%s4 + $0x1b0] sm:$0xf]
      %v8578 = vld [vmem:[%s4 + $0x1b4] sm:$0xf]
      %v8579 = vld [vmem:[%s4 + $0x1b8] sm:$0xf]
      %v8580 = vld [vmem:[%s4 + $0x1bc] sm:$0xf]
      %v8581 = vld [vmem:[%s4 + $0x1c0] sm:$0xf]
      %v8582 = vld [vmem:[%s4 + $0x1c4] sm:$0xf]
      %v8583 = vld [vmem:[%s4 + $0x1c8] sm:$0xf]
      %v8584 = vld [vmem:[%s4 + $0x1cc] sm:$0xf]
      %v8585 = vld [vmem:[%s4 + $0x1d0] sm:$0xf]
      %v8586 = vld [vmem:[%s4 + $0x1d4] sm:$0xf]
      %v8587 = vld [vmem:[%s4 + $0x1d8] sm:$0xf]
      %v8588 = vld [vmem:[%s4 + $0x1dc] sm:$0xf]
      %v8589 = vld [vmem:[%s4 + $0x1e0] sm:$0xf]
      %v8590 = vld [vmem:[%s4 + $0x1e4] sm:$0xf]
      %v8591 = vld [vmem:[%s4 + $0x1e8] sm:$0xf]
      %v8592 = vld [vmem:[%s4 + $0x1ec] sm:$0xf]
      %v8593 = vld [vmem:[%s4 + $0x1f0] sm:$0xf]
      %v8594 = vld [vmem:[%s4 + $0x1f4] sm:$0xf]
      %v8595 = vld [vmem:[%s4 + $0x1f8] sm:$0xf]
      %v8596 = vld [vmem:[%s4 + $0x1fc] sm:$0xf]
      %v8597 = vld [vmem:[%s4 + $0x200] sm:$0xf]
      %v8598 = vld [vmem:[%s4 + $0x204] sm:$0xf]
      %v8599 = vld [vmem:[%s4 + $0x208] sm:$0xf]
      %v8600 = vld [vmem:[%s4 + $0x20c] sm:$0xf]
      %v8601 = vld [vmem:[%s4 + $0x210] sm:$0xf]
      %v8602 = vld [vmem:[%s4 + $0x214] sm:$0xf]
      %v8603 = vld [vmem:[%s4 + $0x218] sm:$0xf]
      %v8604 = vld [vmem:[%s4 + $0x21c] sm:$0xf]
      %v8605 = vld [vmem:[%s4 + $0x220] sm:$0xf]
      %v8606 = vld [vmem:[%s4 + $0x224] sm:$0xf]
      %v8607 = vld [vmem:[%s4 + $0x228] sm:$0xf]
      %v8608 = vld [vmem:[%s4 + $0x22c] sm:$0xf]
      %v8609 = vld [vmem:[%s4 + $0x230] sm:$0xf]
      %v8610 = vld [vmem:[%s4 + $0x234] sm:$0xf]
      %v8611 = vld [vmem:[%s4 + $0x238] sm:$0xf]
      %v8612 = vld [vmem:[%s4 + $0x23c] sm:$0xf]
      %v8793 = vunpack.c.l.b16 %v8289
      %v8794 = vunpack.c.h.b16 %v8289
      %v8795 = vunpack.c.l.b16 %v8290
      %v8796 = vunpack.c.h.b16 %v8290
      %v8797 = vunpack.c.l.b16 %v8291
      %v8798 = vunpack.c.h.b16 %v8291
      %v8799 = vunpack.c.l.b16 %v8292
      %v8800 = vunpack.c.h.b16 %v8292
      %v8801 = vunpack.c.l.b16 %v8293
      %v8802 = vunpack.c.l.b16 %v8294
      %v8803 = vunpack.c.h.b16 %v8294
      %v8804 = vunpack.c.l.b16 %v8295
      %v8805 = vunpack.c.h.b16 %v8295
      %v8806 = vunpack.c.l.b16 %v8296
      %v8807 = vunpack.c.h.b16 %v8296
      %v8808 = vunpack.c.l.b16 %v8297
      %v8809 = vunpack.c.h.b16 %v8297
      %v8810 = vunpack.c.l.b16 %v8298
      %v8811 = vunpack.c.l.b16 %v8299
      %v8812 = vunpack.c.h.b16 %v8299
      %v8813 = vunpack.c.l.b16 %v8300
      %v8814 = vunpack.c.h.b16 %v8300
      %v8815 = vunpack.c.l.b16 %v8301
      %v8816 = vunpack.c.h.b16 %v8301
      %v8817 = vunpack.c.l.b16 %v8302
      %v8818 = vunpack.c.h.b16 %v8302
      %v8819 = vunpack.c.l.b16 %v8303
      %v8820 = vunpack.c.l.b16 %v8304
      %v8821 = vunpack.c.h.b16 %v8304
      %v8822 = vunpack.c.l.b16 %v8305
      %v8823 = vunpack.c.h.b16 %v8305
      %v8824 = vunpack.c.l.b16 %v8306
      %v8825 = vunpack.c.h.b16 %v8306
      %v8826 = vunpack.c.l.b16 %v8307
      %v8827 = vunpack.c.h.b16 %v8307
      %v8828 = vunpack.c.l.b16 %v8308
      %v8829 = vunpack.c.l.b16 %v8309
      %v8830 = vunpack.c.h.b16 %v8309
      %v8831 = vunpack.c.l.b16 %v8310
      %v8832 = vunpack.c.h.b16 %v8310
      %v8833 = vunpack.c.l.b16 %v8311
      %v8834 = vunpack.c.h.b16 %v8311
      %v8835 = vunpack.c.l.b16 %v8312
      %v8836 = vunpack.c.h.b16 %v8312
      %v8837 = vunpack.c.l.b16 %v8313
      %v8838 = vunpack.c.l.b16 %v8314
      %v8839 = vunpack.c.h.b16 %v8314
      %v8840 = vunpack.c.l.b16 %v8315
      %v8841 = vunpack.c.h.b16 %v8315
      %v8842 = vunpack.c.l.b16 %v8316
      %v8843 = vunpack.c.h.b16 %v8316
      %v8844 = vunpack.c.l.b16 %v8317
      %v8845 = vunpack.c.h.b16 %v8317
      %v8846 = vunpack.c.l.b16 %v8318
      %v8847 = vunpack.c.l.b16 %v8319
      %v8848 = vunpack.c.h.b16 %v8319
      %v8849 = vunpack.c.l.b16 %v8320
      %v8850 = vunpack.c.h.b16 %v8320
      %v8851 = vunpack.c.l.b16 %v8321
      %v8852 = vunpack.c.h.b16 %v8321
      %v8853 = vunpack.c.l.b16 %v8322
      %v8854 = vunpack.c.h.b16 %v8322
      %v8855 = vunpack.c.l.b16 %v8323
      %v8856 = vunpack.c.l.b16 %v8324
      %v8857 = vunpack.c.h.b16 %v8324
      %v8858 = vunpack.c.l.b16 %v8325
      %v8859 = vunpack.c.h.b16 %v8325
      %v8860 = vunpack.c.l.b16 %v8326
      %v8861 = vunpack.c.h.b16 %v8326
      %v8862 = vunpack.c.l.b16 %v8327
      %v8863 = vunpack.c.h.b16 %v8327
      %v8864 = vunpack.c.l.b16 %v8328
      %v8865 = vunpack.c.l.b16 %v8329
      %v8866 = vunpack.c.h.b16 %v8329
      %v8867 = vunpack.c.l.b16 %v8330
      %v8868 = vunpack.c.h.b16 %v8330
      %v8869 = vunpack.c.l.b16 %v8331
      %v8870 = vunpack.c.h.b16 %v8331
      %v8871 = vunpack.c.l.b16 %v8332
      %v8872 = vunpack.c.h.b16 %v8332
      %v8873 = vunpack.c.l.b16 %v8333
      %v8874 = vunpack.c.l.b16 %v8334
      %v8875 = vunpack.c.h.b16 %v8334
      %v8876 = vunpack.c.l.b16 %v8335
      %v8877 = vunpack.c.h.b16 %v8335
      %v8878 = vunpack.c.l.b16 %v8336
      %v8879 = vunpack.c.h.b16 %v8336
      %v8880 = vunpack.c.l.b16 %v8337
      %v8881 = vunpack.c.h.b16 %v8337
      %v8882 = vunpack.c.l.b16 %v8338
      %v8883 = vunpack.c.l.b16 %v8339
      %v8884 = vunpack.c.h.b16 %v8339
      %v8885 = vunpack.c.l.b16 %v8340
      %v8886 = vunpack.c.h.b16 %v8340
      %v8887 = vunpack.c.l.b16 %v8341
      %v8888 = vunpack.c.h.b16 %v8341
      %v8889 = vunpack.c.l.b16 %v8342
      %v8890 = vunpack.c.h.b16 %v8342
      %v8891 = vunpack.c.l.b16 %v8343
      %v8892 = vunpack.c.l.b16 %v8344
      %v8893 = vunpack.c.h.b16 %v8344
      %v8894 = vunpack.c.l.b16 %v8345
      %v8895 = vunpack.c.h.b16 %v8345
      %v8896 = vunpack.c.l.b16 %v8346
      %v8897 = vunpack.c.h.b16 %v8346
      %v8898 = vunpack.c.l.b16 %v8347
      %v8899 = vunpack.c.h.b16 %v8347
      %v8900 = vunpack.c.l.b16 %v8348
      %v8901 = vunpack.c.l.b16 %v8349
      %v8902 = vunpack.c.h.b16 %v8349
      %v8903 = vunpack.c.l.b16 %v8350
      %v8904 = vunpack.c.h.b16 %v8350
      %v8905 = vunpack.c.l.b16 %v8351
      %v8906 = vunpack.c.h.b16 %v8351
      %v8907 = vunpack.c.l.b16 %v8352
      %v8908 = vunpack.c.h.b16 %v8352
      %v8909 = vunpack.c.l.b16 %v8353
      %v8910 = vunpack.c.l.b16 %v8354
      %v8911 = vunpack.c.h.b16 %v8354
      %v8912 = vunpack.c.l.b16 %v8355
      %v8913 = vunpack.c.h.b16 %v8355
      %v8914 = vunpack.c.l.b16 %v8356
      %v8915 = vunpack.c.h.b16 %v8356
      %v8916 = vunpack.c.l.b16 %v8357
      %v8917 = vunpack.c.h.b16 %v8357
      %v8918 = vunpack.c.l.b16 %v8358
      %v8919 = vunpack.c.l.b16 %v8359
      %v8920 = vunpack.c.h.b16 %v8359
      %v8921 = vunpack.c.l.b16 %v8360
      %v8922 = vunpack.c.h.b16 %v8360
      %v8923 = vunpack.c.l.b16 %v8361
      %v8924 = vunpack.c.h.b16 %v8361
      %v8925 = vunpack.c.l.b16 %v8362
      %v8926 = vunpack.c.h.b16 %v8362
      %v8927 = vunpack.c.l.b16 %v8363
      %v8928 = vunpack.c.l.b16 %v8364
      %v8929 = vunpack.c.h.b16 %v8364
      %v8930 = vunpack.c.l.b16 %v8365
      %v8931 = vunpack.c.h.b16 %v8365
      %v8932 = vunpack.c.l.b16 %v8366
      %v8933 = vunpack.c.h.b16 %v8366
      %v8934 = vunpack.c.l.b16 %v8367
      %v8935 = vunpack.c.h.b16 %v8367
      %v8936 = vunpack.c.l.b16 %v8368
      %v8937 = vunpack.c.l.b16 %v8369
      %v8938 = vunpack.c.h.b16 %v8369
      %v8939 = vunpack.c.l.b16 %v8370
      %v8940 = vunpack.c.h.b16 %v8370
      %v8941 = vunpack.c.l.b16 %v8371
      %v8942 = vunpack.c.h.b16 %v8371
      %v8943 = vunpack.c.l.b16 %v8372
      %v8944 = vunpack.c.h.b16 %v8372
      %v8945 = vunpack.c.l.b16 %v8373
      %v8946 = vunpack.c.l.b16 %v8374
      %v8947 = vunpack.c.h.b16 %v8374
      %v8948 = vunpack.c.l.b16 %v8375
      %v8949 = vunpack.c.h.b16 %v8375
      %v8950 = vunpack.c.l.b16 %v8376
      %v8951 = vunpack.c.h.b16 %v8376
      %v8952 = vunpack.c.l.b16 %v8377
      %v8953 = vunpack.c.h.b16 %v8377
      %v8954 = vunpack.c.l.b16 %v8378
      %v8955 = vunpack.c.l.b16 %v8379
      %v8956 = vunpack.c.h.b16 %v8379
      %v8957 = vunpack.c.l.b16 %v8380
      %v8958 = vunpack.c.h.b16 %v8380
      %v8959 = vunpack.c.l.b16 %v8381
      %v8960 = vunpack.c.h.b16 %v8381
      %v8961 = vunpack.c.l.b16 %v8382
      %v8962 = vunpack.c.h.b16 %v8382
      %v8963 = vunpack.c.l.b16 %v8383
      %v8964 = vunpack.c.l.b16 %v8384
      %v8965 = vunpack.c.h.b16 %v8384
      %v8966 = vunpack.c.l.b16 %v8385
      %v8967 = vunpack.c.h.b16 %v8385
      %v8968 = vunpack.c.l.b16 %v8386
      %v8969 = vunpack.c.h.b16 %v8386
      %v8970 = vunpack.c.l.b16 %v8387
      %v8971 = vunpack.c.h.b16 %v8387
      %v8972 = vunpack.c.l.b16 %v8388
      %v8973 = vunpack.c.l.b16 %v8389
      %v8974 = vunpack.c.h.b16 %v8389
      %v8975 = vunpack.c.l.b16 %v8390
      %v8976 = vunpack.c.h.b16 %v8390
      %v8977 = vunpack.c.l.b16 %v8391
      %v8978 = vunpack.c.h.b16 %v8391
      %v8979 = vunpack.c.l.b16 %v8392
      %v8980 = vunpack.c.h.b16 %v8392
      %v8981 = vunpack.c.l.b16 %v8393
      %v8982 = vunpack.c.l.b16 %v8394
      %v8983 = vunpack.c.h.b16 %v8394
      %v8984 = vunpack.c.l.b16 %v8395
      %v8985 = vunpack.c.h.b16 %v8395
      %v8986 = vunpack.c.l.b16 %v8396
      %v8987 = vunpack.c.h.b16 %v8396
      %v8988 = vunpack.c.l.b16 %v8397
      %v8989 = vunpack.c.h.b16 %v8397
      %v8990 = vunpack.c.l.b16 %v8398
      %v8991 = vunpack.c.l.b16 %v8399
      %v8992 = vunpack.c.h.b16 %v8399
      %v8993 = vunpack.c.l.b16 %v8400
      %v8994 = vunpack.c.h.b16 %v8400
      %v8995 = vunpack.c.l.b16 %v8401
      %v8996 = vunpack.c.h.b16 %v8401
      %v8997 = vunpack.c.l.b16 %v8402
      %v8998 = vunpack.c.h.b16 %v8402
      %v8999 = vunpack.c.l.b16 %v8403
      %v9000 = vunpack.c.l.b16 %v8404
      %v9001 = vunpack.c.h.b16 %v8404
      %v9002 = vunpack.c.l.b16 %v8405
      %v9003 = vunpack.c.h.b16 %v8405
      %v9004 = vunpack.c.l.b16 %v8406
      %v9005 = vunpack.c.h.b16 %v8406
      %v9006 = vunpack.c.l.b16 %v8407
      %v9007 = vunpack.c.h.b16 %v8407
      %v9008 = vunpack.c.l.b16 %v8408
      %v9009 = vunpack.c.l.b16 %v8409
      %v9010 = vunpack.c.h.b16 %v8409
      %v9011 = vunpack.c.l.b16 %v8410
      %v9012 = vunpack.c.h.b16 %v8410
      %v9013 = vunpack.c.l.b16 %v8411
      %v9014 = vunpack.c.h.b16 %v8411
      %v9015 = vunpack.c.l.b16 %v8412
      %v9016 = vunpack.c.h.b16 %v8412
      %v9017 = vunpack.c.l.b16 %v8413
      %v9018 = vunpack.c.l.b16 %v8414
      %v9019 = vunpack.c.h.b16 %v8414
      %v9020 = vunpack.c.l.b16 %v8415
      %v9021 = vunpack.c.h.b16 %v8415
      %v9022 = vunpack.c.l.b16 %v8416
      %v9023 = vunpack.c.h.b16 %v8416
      %v9024 = vunpack.c.l.b16 %v8417
      %v9025 = vunpack.c.h.b16 %v8417
      %v9026 = vunpack.c.l.b16 %v8418
      %v9027 = vunpack.c.l.b16 %v8419
      %v9028 = vunpack.c.h.b16 %v8419
      %v9029 = vunpack.c.l.b16 %v8420
      %v9030 = vunpack.c.h.b16 %v8420
      %v9031 = vunpack.c.l.b16 %v8421
      %v9032 = vunpack.c.h.b16 %v8421
      %v9033 = vunpack.c.l.b16 %v8422
      %v9034 = vunpack.c.h.b16 %v8422
      %v9035 = vunpack.c.l.b16 %v8423
      %v9036 = vunpack.c.l.b16 %v8424
      %v9037 = vunpack.c.h.b16 %v8424
      %v9038 = vunpack.c.l.b16 %v8425
      %v9039 = vunpack.c.h.b16 %v8425
      %v9040 = vunpack.c.l.b16 %v8426
      %v9041 = vunpack.c.h.b16 %v8426
      %v9042 = vunpack.c.l.b16 %v8427
      %v9043 = vunpack.c.h.b16 %v8427
      %v9044 = vunpack.c.l.b16 %v8428
      %v9045 = vunpack.c.l.b16 %v8429
      %v9046 = vunpack.c.h.b16 %v8429
      %v9047 = vunpack.c.l.b16 %v8430
      %v9048 = vunpack.c.h.b16 %v8430
      %v9049 = vunpack.c.l.b16 %v8431
      %v9050 = vunpack.c.h.b16 %v8431
      %v9051 = vunpack.c.l.b16 %v8432
      %v9052 = vunpack.c.h.b16 %v8432
      %v9053 = vunpack.c.l.b16 %v8433
      %v9054 = vunpack.c.l.b16 %v8434
      %v9055 = vunpack.c.h.b16 %v8434
      %v9056 = vunpack.c.l.b16 %v8435
      %v9057 = vunpack.c.h.b16 %v8435
      %v9058 = vunpack.c.l.b16 %v8436
      %v9059 = vunpack.c.h.b16 %v8436
      %v9060 = vunpack.c.l.b16 %v8437
      %v9061 = vunpack.c.h.b16 %v8437
      %v9062 = vunpack.c.l.b16 %v8438
      %v9063 = vunpack.c.l.b16 %v8439
      %v9064 = vunpack.c.h.b16 %v8439
      %v9065 = vunpack.c.l.b16 %v8440
      %v9066 = vunpack.c.h.b16 %v8440
      %v9067 = vunpack.c.l.b16 %v8441
      %v9068 = vunpack.c.h.b16 %v8441
      %v9069 = vunpack.c.l.b16 %v8442
      %v9070 = vunpack.c.h.b16 %v8442
      %v9071 = vunpack.c.l.b16 %v8443
      %v9072 = vunpack.c.l.b16 %v8444
      %v9073 = vunpack.c.h.b16 %v8444
      %v9074 = vunpack.c.l.b16 %v8445
      %v9075 = vunpack.c.h.b16 %v8445
      %v9076 = vunpack.c.l.b16 %v8446
      %v9077 = vunpack.c.h.b16 %v8446
      %v9078 = vunpack.c.l.b16 %v8447
      %v9079 = vunpack.c.h.b16 %v8447
      %v9080 = vunpack.c.l.b16 %v8448
      %v9081 = vunpack.c.l.b16 %v8449
      %v9082 = vunpack.c.h.b16 %v8449
      %v9083 = vunpack.c.l.b16 %v8450
      %v9084 = vunpack.c.h.b16 %v8450
      %v9085 = vunpack.c.l.b16 %v8451
      %v9086 = vunpack.c.h.b16 %v8451
      %v9087 = vunpack.c.l.b16 %v8452
      %v9088 = vunpack.c.h.b16 %v8452
      %v9089 = vunpack.c.l.b16 %v8453
      %v9090 = vunpack.c.l.b16 %v8454
      %v9091 = vunpack.c.h.b16 %v8454
      %v9092 = vunpack.c.l.b16 %v8455
      %v9093 = vunpack.c.h.b16 %v8455
      %v9094 = vunpack.c.l.b16 %v8456
      %v9095 = vunpack.c.h.b16 %v8456
      %v9096 = vunpack.c.l.b16 %v8457
      %v9097 = vunpack.c.h.b16 %v8457
      %v9098 = vunpack.c.l.b16 %v8458
      %v9099 = vunpack.c.l.b16 %v8459
      %v9100 = vunpack.c.h.b16 %v8459
      %v9101 = vunpack.c.l.b16 %v8460
      %v9102 = vunpack.c.h.b16 %v8460
      %v9103 = vunpack.c.l.b16 %v8461
      %v9104 = vunpack.c.h.b16 %v8461
      %v9105 = vunpack.c.l.b16 %v8462
      %v9106 = vunpack.c.h.b16 %v8462
      %v9107 = vunpack.c.l.b16 %v8463
      %v9108 = vunpack.c.l.b16 %v8464
      %v9109 = vunpack.c.h.b16 %v8464
      %v9110 = vunpack.c.l.b16 %v8465
      %v9111 = vunpack.c.h.b16 %v8465
      %v9112 = vunpack.c.l.b16 %v8466
      %v9113 = vunpack.c.h.b16 %v8466
      %v9114 = vunpack.c.l.b16 %v8467
      %v9115 = vunpack.c.h.b16 %v8467
      %v9116 = vunpack.c.l.b16 %v8468
      %v9117 = vpack.c.b16 %v8802, %v8793
      %v9118 = vpack.c.b16 %v8803, %v8794
      %v9119 = vpack.c.b16 %v8804, %v8795
      %v9120 = vpack.c.b16 %v8805, %v8796
      %v9121 = vpack.c.b16 %v8806, %v8797
      %v9122 = vpack.c.b16 %v8807, %v8798
      %v9123 = vpack.c.b16 %v8808, %v8799
      %v9124 = vpack.c.b16 %v8809, %v8800
      %v9125 = vpack.c.b16 %v8810, %v8801
      %v9126 = vpack.c.b16 %v8820, %v8811
      %v9127 = vpack.c.b16 %v8821, %v8812
      %v9128 = vpack.c.b16 %v8822, %v8813
      %v9129 = vpack.c.b16 %v8823, %v8814
      %v9130 = vpack.c.b16 %v8824, %v8815
      %v9131 = vpack.c.b16 %v8825, %v8816
      %v9132 = vpack.c.b16 %v8826, %v8817
      %v9133 = vpack.c.b16 %v8827, %v8818
      %v9134 = vpack.c.b16 %v8828, %v8819
      %v9135 = vpack.c.b16 %v8838, %v8829
      %v9136 = vpack.c.b16 %v8839, %v8830
      %v9137 = vpack.c.b16 %v8840, %v8831
      %v9138 = vpack.c.b16 %v8841, %v8832
      %v9139 = vpack.c.b16 %v8842, %v8833
      %v9140 = vpack.c.b16 %v8843, %v8834
      %v9141 = vpack.c.b16 %v8844, %v8835
      %v9142 = vpack.c.b16 %v8845, %v8836
      %v9143 = vpack.c.b16 %v8846, %v8837
      %v9144 = vpack.c.b16 %v8856, %v8847
      %v9145 = vpack.c.b16 %v8857, %v8848
      %v9146 = vpack.c.b16 %v8858, %v8849
      %v9147 = vpack.c.b16 %v8859, %v8850
      %v9148 = vpack.c.b16 %v8860, %v8851
      %v9149 = vpack.c.b16 %v8861, %v8852
      %v9150 = vpack.c.b16 %v8862, %v8853
      %v9151 = vpack.c.b16 %v8863, %v8854
      %v9152 = vpack.c.b16 %v8864, %v8855
      %v9153 = vpack.c.b16 %v8874, %v8865
      %v9154 = vpack.c.b16 %v8875, %v8866
      %v9155 = vpack.c.b16 %v8876, %v8867
      %v9156 = vpack.c.b16 %v8877, %v8868
      %v9157 = vpack.c.b16 %v8878, %v8869
      %v9158 = vpack.c.b16 %v8879, %v8870
      %v9159 = vpack.c.b16 %v8880, %v8871
      %v9160 = vpack.c.b16 %v8881, %v8872
      %v9161 = vpack.c.b16 %v8882, %v8873
      %v9162 = vpack.c.b16 %v8892, %v8883
      %v9163 = vpack.c.b16 %v8893, %v8884
      %v9164 = vpack.c.b16 %v8894, %v8885
      %v9165 = vpack.c.b16 %v8895, %v8886
      %v9166 = vpack.c.b16 %v8896, %v8887
      %v9167 = vpack.c.b16 %v8897, %v8888
      %v9168 = vpack.c.b16 %v8898, %v8889
      %v9169 = vpack.c.b16 %v8899, %v8890
      %v9170 = vpack.c.b16 %v8900, %v8891
      %v9171 = vpack.c.b16 %v8910, %v8901
      %v9172 = vpack.c.b16 %v8911, %v8902
      %v9173 = vpack.c.b16 %v8912, %v8903
      %v9174 = vpack.c.b16 %v8913, %v8904
      %v9175 = vpack.c.b16 %v8914, %v8905
      %v9176 = vpack.c.b16 %v8915, %v8906
      %v9177 = vpack.c.b16 %v8916, %v8907
      %v9178 = vpack.c.b16 %v8917, %v8908
      %v9179 = vpack.c.b16 %v8918, %v8909
      %v9180 = vpack.c.b16 %v8928, %v8919
      %v9181 = vpack.c.b16 %v8929, %v8920
      %v9182 = vpack.c.b16 %v8930, %v8921
      %v9183 = vpack.c.b16 %v8931, %v8922
      %v9184 = vpack.c.b16 %v8932, %v8923
      %v9185 = vpack.c.b16 %v8933, %v8924
      %v9186 = vpack.c.b16 %v8934, %v8925
      %v9187 = vpack.c.b16 %v8935, %v8926
      %v9188 = vpack.c.b16 %v8936, %v8927
      %v9189 = vpack.c.b16 %v8946, %v8937
      %v9190 = vpack.c.b16 %v8947, %v8938
      %v9191 = vpack.c.b16 %v8948, %v8939
      %v9192 = vpack.c.b16 %v8949, %v8940
      %v9193 = vpack.c.b16 %v8950, %v8941
      %v9194 = vpack.c.b16 %v8951, %v8942
      %v9195 = vpack.c.b16 %v8952, %v8943
      %v9196 = vpack.c.b16 %v8953, %v8944
      %v9197 = vpack.c.b16 %v8954, %v8945
      %v9198 = vpack.c.b16 %v8964, %v8955
      %v9199 = vpack.c.b16 %v8965, %v8956
      %v9200 = vpack.c.b16 %v8966, %v8957
      %v9201 = vpack.c.b16 %v8967, %v8958
      %v9202 = vpack.c.b16 %v8968, %v8959
      %v9203 = vpack.c.b16 %v8969, %v8960
      %v9204 = vpack.c.b16 %v8970, %v8961
      %v9205 = vpack.c.b16 %v8971, %v8962
      %v9206 = vpack.c.b16 %v8972, %v8963
      %v9207 = vpack.c.b16 %v8982, %v8973
      %v9208 = vpack.c.b16 %v8983, %v8974
      %v9209 = vpack.c.b16 %v8984, %v8975
      %v9210 = vpack.c.b16 %v8985, %v8976
      %v9211 = vpack.c.b16 %v8986, %v8977
      %v9212 = vpack.c.b16 %v8987, %v8978
      %v9213 = vpack.c.b16 %v8988, %v8979
      %v9214 = vpack.c.b16 %v8989, %v8980
      %v9215 = vpack.c.b16 %v8990, %v8981
      %v9216 = vpack.c.b16 %v9000, %v8991
      %v9217 = vpack.c.b16 %v9001, %v8992
      %v9218 = vpack.c.b16 %v9002, %v8993
      %v9219 = vpack.c.b16 %v9003, %v8994
      %v9220 = vpack.c.b16 %v9004, %v8995
      %v9221 = vpack.c.b16 %v9005, %v8996
      %v9222 = vpack.c.b16 %v9006, %v8997
      %v9223 = vpack.c.b16 %v9007, %v8998
      %v9224 = vpack.c.b16 %v9008, %v8999
      %v9225 = vpack.c.b16 %v9018, %v9009
      %v9226 = vpack.c.b16 %v9019, %v9010
      %v9227 = vpack.c.b16 %v9020, %v9011
      %v9228 = vpack.c.b16 %v9021, %v9012
      %v9229 = vpack.c.b16 %v9022, %v9013
      %v9230 = vpack.c.b16 %v9023, %v9014
      %v9231 = vpack.c.b16 %v9024, %v9015
      %v9232 = vpack.c.b16 %v9025, %v9016
      %v9233 = vpack.c.b16 %v9026, %v9017
      %v9234 = vpack.c.b16 %v9036, %v9027
      %v9235 = vpack.c.b16 %v9037, %v9028
      %v9236 = vpack.c.b16 %v9038, %v9029
      %v9237 = vpack.c.b16 %v9039, %v9030
      %v9238 = vpack.c.b16 %v9040, %v9031
      %v9239 = vpack.c.b16 %v9041, %v9032
      %v9240 = vpack.c.b16 %v9042, %v9033
      %v9241 = vpack.c.b16 %v9043, %v9034
      %v9242 = vpack.c.b16 %v9044, %v9035
      %v9243 = vpack.c.b16 %v9054, %v9045
      %v9244 = vpack.c.b16 %v9055, %v9046
      %v9245 = vpack.c.b16 %v9056, %v9047
      %v9246 = vpack.c.b16 %v9057, %v9048
      %v9247 = vpack.c.b16 %v9058, %v9049
      %v9248 = vpack.c.b16 %v9059, %v9050
      %v9249 = vpack.c.b16 %v9060, %v9051
      %v9250 = vpack.c.b16 %v9061, %v9052
      %v9251 = vpack.c.b16 %v9062, %v9053
      %v9252 = vpack.c.b16 %v9072, %v9063
      %v9253 = vpack.c.b16 %v9073, %v9064
      %v9254 = vpack.c.b16 %v9074, %v9065
      %v9255 = vpack.c.b16 %v9075, %v9066
      %v9256 = vpack.c.b16 %v9076, %v9067
      %v9257 = vpack.c.b16 %v9077, %v9068
      %v9258 = vpack.c.b16 %v9078, %v9069
      %v9259 = vpack.c.b16 %v9079, %v9070
      %v9260 = vpack.c.b16 %v9080, %v9071
      %v9261 = vpack.c.b16 %v9090, %v9081
      %v9262 = vpack.c.b16 %v9091, %v9082
      %v9263 = vpack.c.b16 %v9092, %v9083
      %v9264 = vpack.c.b16 %v9093, %v9084
      %v9265 = vpack.c.b16 %v9094, %v9085
      %v9266 = vpack.c.b16 %v9095, %v9086
      %v9267 = vpack.c.b16 %v9096, %v9087
      %v9268 = vpack.c.b16 %v9097, %v9088
      %v9269 = vpack.c.b16 %v9098, %v9089
      %v9270 = vpack.c.b16 %v9108, %v9099
      %v9271 = vpack.c.b16 %v9109, %v9100
      %v9272 = vpack.c.b16 %v9110, %v9101
      %v9273 = vpack.c.b16 %v9111, %v9102
      %v9274 = vpack.c.b16 %v9112, %v9103
      %v9275 = vpack.c.b16 %v9113, %v9104
      %v9276 = vpack.c.b16 %v9114, %v9105
      %v9277 = vpack.c.b16 %v9115, %v9106
      %v9278 = vpack.c.b16 %v9116, %v9107
      %v9585 = vunpack.c.l.b16 %v8469
      %v9586 = vunpack.c.l.b16 %v8470
      %v9587 = vunpack.c.l.b16 %v8471
      %v9588 = vunpack.c.l.b16 %v8472
      %v9589 = vunpack.c.l.b16 %v8473
      %v9590 = vunpack.c.l.b16 %v8474
      %v9591 = vunpack.c.l.b16 %v8475
      %v9592 = vunpack.c.l.b16 %v8476
      %v9593 = vunpack.c.l.b16 %v8477
      %v9594 = vunpack.c.l.b16 %v8478
      %v9595 = vunpack.c.l.b16 %v8479
      %v9596 = vunpack.c.l.b16 %v8480
      %v9597 = vunpack.c.l.b16 %v8481
      %v9598 = vunpack.c.l.b16 %v8482
      %v9599 = vunpack.c.l.b16 %v8483
      %v9600 = vunpack.c.l.b16 %v8484
      %v9601 = vunpack.c.l.b16 %v8485
      %v9602 = vunpack.c.l.b16 %v8486
      %v9603 = vunpack.c.l.b16 %v8487
      %v9604 = vunpack.c.l.b16 %v8488
      %v9605 = vunpack.c.l.b16 %v8489
      %v9606 = vunpack.c.l.b16 %v8490
      %v9607 = vunpack.c.l.b16 %v8491
      %v9608 = vunpack.c.l.b16 %v8492
      %v9609 = vunpack.c.l.b16 %v8493
      %v9610 = vunpack.c.l.b16 %v8494
      %v9611 = vunpack.c.l.b16 %v8495
      %v9612 = vunpack.c.l.b16 %v8496
      %v9613 = vunpack.c.l.b16 %v8497
      %v9614 = vunpack.c.l.b16 %v8498
      %v9615 = vunpack.c.l.b16 %v8499
      %v9616 = vunpack.c.l.b16 %v8500
      %v9617 = vunpack.c.l.b16 %v8501
      %v9618 = vunpack.c.l.b16 %v8502
      %v9619 = vunpack.c.l.b16 %v8503
      %v9620 = vunpack.c.l.b16 %v8504
      %v9621 = vunpack.c.l.b16 %v8505
      %v9622 = vunpack.c.l.b16 %v8506
      %v9623 = vunpack.c.l.b16 %v8507
      %v9624 = vunpack.c.l.b16 %v8508
      %v9625 = vunpack.c.l.b16 %v8509
      %v9626 = vunpack.c.l.b16 %v8510
      %v9627 = vunpack.c.l.b16 %v8511
      %v9628 = vunpack.c.l.b16 %v8512
      %v9629 = vunpack.c.l.b16 %v8513
      %v9630 = vunpack.c.l.b16 %v8514
      %v9631 = vunpack.c.l.b16 %v8515
      %v9632 = vunpack.c.l.b16 %v8516
      %v9633 = vunpack.c.l.b16 %v8517
      %v9634 = vunpack.c.l.b16 %v8518
      %v9635 = vunpack.c.l.b16 %v8519
      %v9636 = vunpack.c.l.b16 %v8520
      %v9637 = vunpack.c.l.b16 %v8521
      %v9638 = vunpack.c.l.b16 %v8522
      %v9639 = vunpack.c.l.b16 %v8523
      %v9640 = vunpack.c.l.b16 %v8524
      %v9641 = vunpack.c.l.b16 %v8525
      %v9642 = vunpack.c.l.b16 %v8526
      %v9643 = vunpack.c.l.b16 %v8527
      %v9644 = vunpack.c.l.b16 %v8528
      %v9645 = vunpack.c.l.b16 %v8529
      %v9646 = vunpack.c.l.b16 %v8530
      %v9647 = vunpack.c.l.b16 %v8531
      %v9648 = vunpack.c.l.b16 %v8532
      %v9649 = vunpack.c.l.b16 %v8533
      %v9650 = vunpack.c.l.b16 %v8534
      %v9651 = vunpack.c.l.b16 %v8535
      %v9652 = vunpack.c.l.b16 %v8536
      %v9653 = vunpack.c.l.b16 %v8537
      %v9654 = vunpack.c.l.b16 %v8538
      %v9655 = vunpack.c.l.b16 %v8539
      %v9656 = vunpack.c.l.b16 %v8540
      %v9657 = vunpack.c.l.b16 %v8541
      %v9658 = vunpack.c.l.b16 %v8542
      %v9659 = vunpack.c.l.b16 %v8543
      %v9660 = vunpack.c.l.b16 %v8544
      %v9661 = vunpack.c.l.b16 %v8545
      %v9662 = vunpack.c.l.b16 %v8546
      %v9663 = vunpack.c.l.b16 %v8547
      %v9664 = vunpack.c.l.b16 %v8548
      %v9665 = vunpack.c.l.b16 %v8549
      %v9666 = vunpack.c.l.b16 %v8550
      %v9667 = vunpack.c.l.b16 %v8551
      %v9668 = vunpack.c.l.b16 %v8552
      %v9669 = vunpack.c.l.b16 %v8553
      %v9670 = vunpack.c.l.b16 %v8554
      %v9671 = vunpack.c.l.b16 %v8555
      %v9672 = vunpack.c.l.b16 %v8556
      %v9673 = vunpack.c.l.b16 %v8557
      %v9674 = vunpack.c.l.b16 %v8558
      %v9675 = vunpack.c.l.b16 %v8559
      %v9676 = vunpack.c.l.b16 %v8560
      %v9677 = vunpack.c.l.b16 %v8561
      %v9678 = vunpack.c.l.b16 %v8562
      %v9679 = vunpack.c.l.b16 %v8563
      %v9680 = vunpack.c.l.b16 %v8564
      %v9681 = vunpack.c.l.b16 %v8565
      %v9682 = vunpack.c.l.b16 %v8566
      %v9683 = vunpack.c.l.b16 %v8567
      %v9684 = vunpack.c.l.b16 %v8568
      %v9685 = vunpack.c.l.b16 %v8569
      %v9686 = vunpack.c.l.b16 %v8570
      %v9687 = vunpack.c.l.b16 %v8571
      %v9688 = vunpack.c.l.b16 %v8572
      %v9689 = vunpack.c.l.b16 %v8573
      %v9690 = vunpack.c.l.b16 %v8574
      %v9691 = vunpack.c.l.b16 %v8575
      %v9692 = vunpack.c.l.b16 %v8576
      %v9693 = vunpack.c.l.b16 %v8577
      %v9694 = vunpack.c.l.b16 %v8578
      %v9695 = vunpack.c.l.b16 %v8579
      %v9696 = vunpack.c.l.b16 %v8580
      %v9697 = vunpack.c.l.b16 %v8581
      %v9698 = vunpack.c.l.b16 %v8582
      %v9699 = vunpack.c.l.b16 %v8583
      %v9700 = vunpack.c.l.b16 %v8584
      %v9701 = vunpack.c.l.b16 %v8585
      %v9702 = vunpack.c.l.b16 %v8586
      %v9703 = vunpack.c.l.b16 %v8587
      %v9704 = vunpack.c.l.b16 %v8588
      %v9705 = vunpack.c.l.b16 %v8589
      %v9706 = vunpack.c.l.b16 %v8590
      %v9707 = vunpack.c.l.b16 %v8591
      %v9708 = vunpack.c.l.b16 %v8592
      %v9709 = vunpack.c.l.b16 %v8593
      %v9710 = vunpack.c.l.b16 %v8594
      %v9711 = vunpack.c.l.b16 %v8595
      %v9712 = vunpack.c.l.b16 %v8596
      %v9713 = vunpack.c.l.b16 %v8597
      %v9714 = vunpack.c.l.b16 %v8598
      %v9715 = vunpack.c.l.b16 %v8599
      %v9716 = vunpack.c.l.b16 %v8600
      %v9717 = vunpack.c.l.b16 %v8601
      %v9718 = vunpack.c.l.b16 %v8602
      %v9719 = vunpack.c.l.b16 %v8603
      %v9720 = vunpack.c.l.b16 %v8604
      %v9721 = vunpack.c.l.b16 %v8605
      %v9722 = vunpack.c.l.b16 %v8606
      %v9723 = vunpack.c.l.b16 %v8607
      %v9724 = vunpack.c.l.b16 %v8608
      %v9725 = vunpack.c.l.b16 %v8609
      %v9726 = vunpack.c.l.b16 %v8610
      %v9727 = vunpack.c.l.b16 %v8611
      %v9728 = vunpack.c.l.b16 %v8612
      %v9729 = vpack.c.b16 %v9586, %v9585
      %v9730 = vpack.c.b16 %v9588, %v9587
      %v9731 = vpack.c.b16 %v9590, %v9589
      %v9732 = vpack.c.b16 %v9592, %v9591
      %v9733 = vpack.c.b16 %v9594, %v9593
      %v9734 = vpack.c.b16 %v9596, %v9595
      %v9735 = vpack.c.b16 %v9598, %v9597
      %v9736 = vpack.c.b16 %v9600, %v9599
      %v9737 = vpack.c.b16 %v9602, %v9601
      %v9738 = vpack.c.b16 %v9604, %v9603
      %v9739 = vpack.c.b16 %v9606, %v9605
      %v9740 = vpack.c.b16 %v9608, %v9607
      %v9741 = vpack.c.b16 %v9610, %v9609
      %v9742 = vpack.c.b16 %v9612, %v9611
      %v9743 = vpack.c.b16 %v9614, %v9613
      %v9744 = vpack.c.b16 %v9616, %v9615
      %v9745 = vpack.c.b16 %v9618, %v9617
      %v9746 = vpack.c.b16 %v9620, %v9619
      %v9747 = vpack.c.b16 %v9622, %v9621
      %v9748 = vpack.c.b16 %v9624, %v9623
      %v9749 = vpack.c.b16 %v9626, %v9625
      %v9750 = vpack.c.b16 %v9628, %v9627
      %v9751 = vpack.c.b16 %v9630, %v9629
      %v9752 = vpack.c.b16 %v9632, %v9631
      %v9753 = vpack.c.b16 %v9634, %v9633
      %v9754 = vpack.c.b16 %v9636, %v9635
      %v9755 = vpack.c.b16 %v9638, %v9637
      %v9756 = vpack.c.b16 %v9640, %v9639
      %v9757 = vpack.c.b16 %v9642, %v9641
      %v9758 = vpack.c.b16 %v9644, %v9643
      %v9759 = vpack.c.b16 %v9646, %v9645
      %v9760 = vpack.c.b16 %v9648, %v9647
      %v9761 = vpack.c.b16 %v9650, %v9649
      %v9762 = vpack.c.b16 %v9652, %v9651
      %v9763 = vpack.c.b16 %v9654, %v9653
      %v9764 = vpack.c.b16 %v9656, %v9655
      %v9765 = vpack.c.b16 %v9658, %v9657
      %v9766 = vpack.c.b16 %v9660, %v9659
      %v9767 = vpack.c.b16 %v9662, %v9661
      %v9768 = vpack.c.b16 %v9664, %v9663
      %v9769 = vpack.c.b16 %v9666, %v9665
      %v9770 = vpack.c.b16 %v9668, %v9667
      %v9771 = vpack.c.b16 %v9670, %v9669
      %v9772 = vpack.c.b16 %v9672, %v9671
      %v9773 = vpack.c.b16 %v9674, %v9673
      %v9774 = vpack.c.b16 %v9676, %v9675
      %v9775 = vpack.c.b16 %v9678, %v9677
      %v9776 = vpack.c.b16 %v9680, %v9679
      %v9777 = vpack.c.b16 %v9682, %v9681
      %v9778 = vpack.c.b16 %v9684, %v9683
      %v9779 = vpack.c.b16 %v9686, %v9685
      %v9780 = vpack.c.b16 %v9688, %v9687
      %v9781 = vpack.c.b16 %v9690, %v9689
      %v9782 = vpack.c.b16 %v9692, %v9691
      %v9783 = vpack.c.b16 %v9694, %v9693
      %v9784 = vpack.c.b16 %v9696, %v9695
      %v9785 = vpack.c.b16 %v9698, %v9697
      %v9786 = vpack.c.b16 %v9700, %v9699
      %v9787 = vpack.c.b16 %v9702, %v9701
      %v9788 = vpack.c.b16 %v9704, %v9703
      %v9789 = vpack.c.b16 %v9706, %v9705
      %v9790 = vpack.c.b16 %v9708, %v9707
      %v9791 = vpack.c.b16 %v9710, %v9709
      %v9792 = vpack.c.b16 %v9712, %v9711
      %v9793 = vpack.c.b16 %v9714, %v9713
      %v9794 = vpack.c.b16 %v9716, %v9715
      %v9795 = vpack.c.b16 %v9718, %v9717
      %v9796 = vpack.c.b16 %v9720, %v9719
      %v9797 = vpack.c.b16 %v9722, %v9721
      %v9798 = vpack.c.b16 %v9724, %v9723
      %v9799 = vpack.c.b16 %v9726, %v9725
      %v9800 = vpack.c.b16 %v9728, %v9727
      %9873 = vmatprep.subr.bf16.mxu0 0
      %9874 = vmatpush1.bf16.msra.mxu0 %v9729
      %9875 = vmatprep.subr.bf16.mxu0 0
      %9876 = vmatpush1.bf16.msra.mxu0 %v9730
      %9877 = vmatprep.subr.bf16.mxu0 0
      %9878 = vmatpush1.bf16.msra.mxu0 %v9731
      %9879 = vmatprep.subr.bf16.mxu0 0
      %9880 = vmatpush1.bf16.msra.mxu0 %v9732
      %9881 = vmatprep.subr.bf16.mxu0 0
      %9882 = vmatpush1.bf16.msra.mxu0 %v9733
      %9883 = vmatprep.subr.bf16.mxu0 0
      %9884 = vmatpush1.bf16.msra.mxu0 %v9734
      %9885 = vmatprep.subr.bf16.mxu0 0
      %9886 = vmatpush1.bf16.msra.mxu0 %v9735
      %9887 = vmatprep.subr.bf16.mxu0 0
      %9888 = vmatpush1.bf16.msra.mxu0 %v9736
      %9889 = vmatprep.subr.bf16.mxu0 0
      %9890 = vmatpush1.bf16.msra.mxu0 %v9737
      %9891 = vmatprep.subr.bf16.mxu0 0
      %9892 = vmatpush1.bf16.msra.mxu0 %v9738
      %9893 = vmatprep.subr.bf16.mxu0 0
      %9894 = vmatpush1.bf16.msra.mxu0 %v9739
      %9895 = vmatprep.subr.bf16.mxu0 0
      %9896 = vmatpush1.bf16.msra.mxu0 %v9740
      %9897 = vmatprep.subr.bf16.mxu0 0
      %9898 = vmatpush1.bf16.msra.mxu0 %v9741
      %9899 = vmatprep.subr.bf16.mxu0 0
      %9900 = vmatpush1.bf16.msra.mxu0 %v9742
      %9901 = vmatprep.subr.bf16.mxu0 0
      %9902 = vmatpush1.bf16.msra.mxu0 %v9743
      %9903 = vmatprep.subr.bf16.mxu0 0
      %9904 = vmatpush1.bf16.msra.mxu0 %v9744
      %9905 = vmatprep.mubr.bf16.mxu0 %v9118
      %9906 = vmatmul.mubr.bf16.gmra.mrb[0].mxu0 %v9117
      %v9907 = vpop.f32.mrb[0].mxu0
      %v9908 = vadd.f32 0.0, %v9907
      %v9909 = vpop.f32.mrb[0].mxu0
      %v9910 = vpop.f32.mrb[0].mxu0
      %v9911 = vadd.f32 0.0, %v9910
      %v9912 = vpop.f32.mrb[0].mxu0
      %9913 = vmatprep.mubr.bf16.mxu0 %v9127
      %9914 = vmatmul.mubr.bf16.gmra.mrb[0].mxu0 %v9126
      %v9915 = vpop.f32.mrb[0].mxu0
      %v9916 = vadd.f32 0.0, %v9915
      %v9917 = vpop.f32.mrb[0].mxu0
      %v9918 = vpop.f32.mrb[0].mxu0
      %v9919 = vadd.f32 0.0, %v9918
      %v9920 = vpop.f32.mrb[0].mxu0
      %9921 = vmatprep.mubr.bf16.mxu0 %v9136
      %9922 = vmatmul.mubr.bf16.gmra.mrb[0].mxu0 %v9135
      %v9923 = vpop.f32.mrb[0].mxu0
      %v9924 = vadd.f32 0.0, %v9923
      %v9925 = vpop.f32.mrb[0].mxu0
      %v9926 = vpop.f32.mrb[0].mxu0
      %v9927 = vadd.f32 0.0, %v9926
      %v9928 = vpop.f32.mrb[0].mxu0
      %9929 = vmatprep.mubr.bf16.mxu0 %v9145
      %9930 = vmatmul.mubr.bf16.gmra.mrb[0].mxu0 %v9144
      %v9931 = vpop.f32.mrb[0].mxu0
      %v9932 = vadd.f32 0.0, %v9931
      %v9933 = vpop.f32.mrb[0].mxu0
      %v9934 = vpop.f32.mrb[0].mxu0
      %v9935 = vadd.f32 0.0, %v9934
      %v9936 = vpop.f32.mrb[0].mxu0
      %9937 = vmatprep.mubr.bf16.mxu0 %v9154
      %9938 = vmatmul.mubr.bf16.gmra.mrb[0].mxu0 %v9153
      %v9939 = vpop.f32.mrb[0].mxu0
      %v9940 = vadd.f32 0.0, %v9939
      %v9941 = vpop.f32.mrb[0].mxu0
      %v9942 = vpop.f32.mrb[0].mxu0
      %v9943 = vadd.f32 0.0, %v9942
      %v9944 = vpop.f32.mrb[0].mxu0
      %9945 = vmatprep.mubr.bf16.mxu0 %v9163
      %9946 = vmatmul.mubr.bf16.gmra.mrb[0].mxu0 %v9162
      %v9947 = vpop.f32.mrb[0].mxu0
      %v9948 = vadd.f32 0.0, %v9947
      %v9949 = vpop.f32.mrb[0].mxu0
      %v9950 = vpop.f32.mrb[0].mxu0
      %v9951 = vadd.f32 0.0, %v9950
      %v9952 = vpop.f32.mrb[0].mxu0
      %9953 = vmatprep.mubr.bf16.mxu0 %v9172
      %9954 = vmatmul.mubr.bf16.gmra.mrb[0].mxu0 %v9171
      %v9955 = vpop.f32.mrb[0].mxu0
      %v9956 = vadd.f32 0.0, %v9955
      %v9957 = vpop.f32.mrb[0].mxu0
      %v9958 = vpop.f32.mrb[0].mxu0
      %v9959 = vadd.f32 0.0, %v9958
      %v9960 = vpop.f32.mrb[0].mxu0
      %9961 = vmatprep.mubr.bf16.mxu0 %v9181
      %9962 = vmatmul.mubr.bf16.gmra.mrb[0].mxu0 %v9180
      %v9963 = vpop.f32.mrb[0].mxu0
      %v9964 = vadd.f32 0.0, %v9963
      %v9965 = vpop.f32.mrb[0].mxu0
      %v9966 = vpop.f32.mrb[0].mxu0
      %v9967 = vadd.f32 0.0, %v9966
      %v9968 = vpop.f32.mrb[0].mxu0
      %9969 = vmatprep.mubr.bf16.mxu0 %v9190
      %9970 = vmatmul.mubr.bf16.gmra.mrb[0].mxu0 %v9189
      %v9971 = vpop.f32.mrb[0].mxu0
      %v9972 = vadd.f32 0.0, %v9971
      %v9973 = vpop.f32.mrb[0].mxu0
      %v9974 = vpop.f32.mrb[0].mxu0
      %v9975 = vadd.f32 0.0, %v9974
      %v9976 = vpop.f32.mrb[0].mxu0
      %9977 = vmatprep.mubr.bf16.mxu0 %v9199
      %9978 = vmatmul.mubr.bf16.gmra.mrb[0].mxu0 %v9198
      %v9979 = vpop.f32.mrb[0].mxu0
      %v9980 = vadd.f32 0.0, %v9979
      %v9981 = vpop.f32.mrb[0].mxu0
      %v9982 = vpop.f32.mrb[0].mxu0
      %v9983 = vadd.f32 0.0, %v9982
      %v9984 = vpop.f32.mrb[0].mxu0
      %9985 = vmatprep.mubr.bf16.mxu0 %v9208
      %9986 = vmatmul.mubr.bf16.gmra.mrb[0].mxu0 %v9207
      %v9987 = vpop.f32.mrb[0].mxu0
      %v9988 = vadd.f32 0.0, %v9987
      %v9989 = vpop.f32.mrb[0].mxu0
      %v9990 = vpop.f32.mrb[0].mxu0
      %v9991 = vadd.f32 0.0, %v9990
      %v9992 = vpop.f32.mrb[0].mxu0
      %9993 = vmatprep.mubr.bf16.mxu0 %v9217
      %9994 = vmatmul.mubr.bf16.gmra.mrb[0].mxu0 %v9216
      %v9995 = vpop.f32.mrb[0].mxu0
      %v9996 = vadd.f32 0.0, %v9995
      %v9997 = vpop.f32.mrb[0].mxu0
      %v9998 = vpop.f32.mrb[0].mxu0
      %v9999 = vadd.f32 0.0, %v9998
      %v10000 = vpop.f32.mrb[0].mxu0
      %10001 = vmatprep.mubr.bf16.mxu0 %v9226
      %10002 = vmatmul.mubr.bf16.gmra.mrb[0].mxu0 %v9225
      %v10003 = vpop.f32.mrb[0].mxu0
      %v10004 = vadd.f32 0.0, %v10003
      %v10005 = vpop.f32.mrb[0].mxu0
      %v10006 = vpop.f32.mrb[0].mxu0
      %v10007 = vadd.f32 0.0, %v10006
      %v10008 = vpop.f32.mrb[0].mxu0
      %10009 = vmatprep.mubr.bf16.mxu0 %v9235
      %10010 = vmatmul.mubr.bf16.gmra.mrb[0].mxu0 %v9234
      %v10011 = vpop.f32.mrb[0].mxu0
      %v10012 = vadd.f32 0.0, %v10011
      %v10013 = vpop.f32.mrb[0].mxu0
      %v10014 = vpop.f32.mrb[0].mxu0
      %v10015 = vadd.f32 0.0, %v10014
      %v10016 = vpop.f32.mrb[0].mxu0
      %10017 = vmatprep.mubr.bf16.mxu0 %v9244
      %10018 = vmatmul.mubr.bf16.gmra.mrb[0].mxu0 %v9243
      %v10019 = vpop.f32.mrb[0].mxu0
      %v10020 = vadd.f32 0.0, %v10019
      %v10021 = vpop.f32.mrb[0].mxu0
      %v10022 = vpop.f32.mrb[0].mxu0
      %v10023 = vadd.f32 0.0, %v10022
      %v10024 = vpop.f32.mrb[0].mxu0
      %10025 = vmatprep.mubr.bf16.mxu0 %v9253
      %10026 = vmatmul.mubr.bf16.gmra.mrb[0].mxu0 %v9252
      %v10027 = vpop.f32.mrb[0].mxu0
      %v10028 = vadd.f32 0.0, %v10027
      %v10029 = vpop.f32.mrb[0].mxu0
      %v10030 = vpop.f32.mrb[0].mxu0
      %v10031 = vadd.f32 0.0, %v10030
      %v10032 = vpop.f32.mrb[0].mxu0
      %10033 = vmatprep.mubr.bf16.mxu0 %v9262
      %10034 = vmatmul.mubr.bf16.gmra.mrb[0].mxu0 %v9261
      %v10035 = vpop.f32.mrb[0].mxu0
      %v10036 = vadd.f32 0.0, %v10035
      %v10037 = vpop.f32.mrb[0].mxu0
      %v10038 = vpop.f32.mrb[0].mxu0
      %v10039 = vadd.f32 0.0, %v10038
      %v10040 = vpop.f32.mrb[0].mxu0
      %10041 = vmatprep.mubr.bf16.mxu0 %v9271
      %10042 = vmatmul.mubr.bf16.gmra.mrb[0].mxu0 %v9270
      %v10043 = vpop.f32.mrb[0].mxu0
      %v10044 = vadd.f32 0.0, %v10043
      %v10045 = vpop.f32.mrb[0].mxu0
      %v10046 = vpop.f32.mrb[0].mxu0
      %v10047 = vadd.f32 0.0, %v10046
      %v10048 = vpop.f32.mrb[0].mxu0
      %10049 = vdwg.mxu0
      %10050 = vmatprep.subr.bf16.mxu0 0
      %10051 = vmatpush1.bf16.msra.mxu0 %v9745
      %10052 = vmatprep.subr.bf16.mxu0 0
      %10053 = vmatpush1.bf16.msra.mxu0 %v9746
      %10054 = vmatprep.subr.bf16.mxu0 0
      %10055 = vmatpush1.bf16.msra.mxu0 %v9747
      %10056 = vmatprep.subr.bf16.mxu0 0
      %10057 = vmatpush1.bf16.msra.mxu0 %v9748
      %10058 = vmatprep.subr.bf16.mxu0 0
      %10059 = vmatpush1.bf16.msra.mxu0 %v9749
      %10060 = vmatprep.subr.bf16.mxu0 0
      %10061 = vmatpush1.bf16.msra.mxu0 %v9750
      %10062 = vmatprep.subr.bf16.mxu0 0
      %10063 = vmatpush1.bf16.msra.mxu0 %v9751
      %10064 = vmatprep.subr.bf16.mxu0 0
      %10065 = vmatpush1.bf16.msra.mxu0 %v9752
      %10066 = vmatprep.subr.bf16.mxu0 0
      %10067 = vmatpush1.bf16.msra.mxu0 %v9753
      %10068 = vmatprep.subr.bf16.mxu0 0
      %10069 = vmatpush1.bf16.msra.mxu0 %v9754
      %10070 = vmatprep.subr.bf16.mxu0 0
      %10071 = vmatpush1.bf16.msra.mxu0 %v9755
      %10072 = vmatprep.subr.bf16.mxu0 0
      %10073 = vmatpush1.bf16.msra.mxu0 %v9756
      %10074 = vmatprep.subr.bf16.mxu0 0
      %10075 = vmatpush1.bf16.msra.mxu0 %v9757
      %10076 = vmatprep.subr.bf16.mxu0 0
      %10077 = vmatpush1.bf16.msra.mxu0 %v9758
      %10078 = vmatprep.subr.bf16.mxu0 0
      %10079 = vmatpush1.bf16.msra.mxu0 %v9759
      %10080 = vmatprep.subr.bf16.mxu0 0
      %10081 = vmatpush1.bf16.msra.mxu0 %v9760
      %10082 = vmatprep.mubr.bf16.mxu0 %v9120
      %10083 = vmatmul.mubr.bf16.gmra.mrb[0].mxu0 %v9119
      %v10084 = vpop.f32.mrb[0].mxu0
      %v10085 = vadd.f32 %v9908, %v10084
      %v10086 = vpop.f32.mrb[0].mxu0
      %v10087 = vpop.f32.mrb[0].mxu0
      %v10088 = vadd.f32 %v9911, %v10087
      %v10089 = vpop.f32.mrb[0].mxu0
      %10090 = vmatprep.mubr.bf16.mxu0 %v9129
      %10091 = vmatmul.mubr.bf16.gmra.mrb[0].mxu0 %v9128
      %v10092 = vpop.f32.mrb[0].mxu0
      %v10093 = vadd.f32 %v9916, %v10092
      %v10094 = vpop.f32.mrb[0].mxu0
      %v10095 = vpop.f32.mrb[0].mxu0
      %v10096 = vadd.f32 %v9919, %v10095
      %v10097 = vpop.f32.mrb[0].mxu0
      %10098 = vmatprep.mubr.bf16.mxu0 %v9138
      %10099 = vmatmul.mubr.bf16.gmra.mrb[0].mxu0 %v9137
      %v10100 = vpop.f32.mrb[0].mxu0
      %v10101 = vadd.f32 %v9924, %v10100
      %v10102 = vpop.f32.mrb[0].mxu0
      %v10103 = vpop.f32.mrb[0].mxu0
      %v10104 = vadd.f32 %v9927, %v10103
      %v10105 = vpop.f32.mrb[0].mxu0
      %10106 = vmatprep.mubr.bf16.mxu0 %v9147
      %10107 = vmatmul.mubr.bf16.gmra.mrb[0].mxu0 %v9146
      %v10108 = vpop.f32.mrb[0].mxu0
      %v10109 = vadd.f32 %v9932, %v10108
      %v10110 = vpop.f32.mrb[0].mxu0
      %v10111 = vpop.f32.mrb[0].mxu0
      %v10112 = vadd.f32 %v9935, %v10111
      %v10113 = vpop.f32.mrb[0].mxu0
      %10114 = vmatprep.mubr.bf16.mxu0 %v9156
      %10115 = vmatmul.mubr.bf16.gmra.mrb[0].mxu0 %v9155
      %v10116 = vpop.f32.mrb[0].mxu0
      %v10117 = vadd.f32 %v9940, %v10116
      %v10118 = vpop.f32.mrb[0].mxu0
      %v10119 = vpop.f32.mrb[0].mxu0
      %v10120 = vadd.f32 %v9943, %v10119
      %v10121 = vpop.f32.mrb[0].mxu0
      %10122 = vmatprep.mubr.bf16.mxu0 %v9165
      %10123 = vmatmul.mubr.bf16.gmra.mrb[0].mxu0 %v9164
      %v10124 = vpop.f32.mrb[0].mxu0
      %v10125 = vadd.f32 %v9948, %v10124
      %v10126 = vpop.f32.mrb[0].mxu0
      %v10127 = vpop.f32.mrb[0].mxu0
      %v10128 = vadd.f32 %v9951, %v10127
      %v10129 = vpop.f32.mrb[0].mxu0
      %10130 = vmatprep.mubr.bf16.mxu0 %v9174
      %10131 = vmatmul.mubr.bf16.gmra.mrb[0].mxu0 %v9173
      %v10132 = vpop.f32.mrb[0].mxu0
      %v10133 = vadd.f32 %v9956, %v10132
      %v10134 = vpop.f32.mrb[0].mxu0
      %v10135 = vpop.f32.mrb[0].mxu0
      %v10136 = vadd.f32 %v9959, %v10135
      %v10137 = vpop.f32.mrb[0].mxu0
      %10138 = vmatprep.mubr.bf16.mxu0 %v9183
      %10139 = vmatmul.mubr.bf16.gmra.mrb[0].mxu0 %v9182
      %v10140 = vpop.f32.mrb[0].mxu0
      %v10141 = vadd.f32 %v9964, %v10140
      %v10142 = vpop.f32.mrb[0].mxu0
      %v10143 = vpop.f32.mrb[0].mxu0
      %v10144 = vadd.f32 %v9967, %v10143
      %v10145 = vpop.f32.mrb[0].mxu0
      %10146 = vmatprep.mubr.bf16.mxu0 %v9192
      %10147 = vmatmul.mubr.bf16.gmra.mrb[0].mxu0 %v9191
      %v10148 = vpop.f32.mrb[0].mxu0
      %v10149 = vadd.f32 %v9972, %v10148
      %v10150 = vpop.f32.mrb[0].mxu0
      %v10151 = vpop.f32.mrb[0].mxu0
      %v10152 = vadd.f32 %v9975, %v10151
      %v10153 = vpop.f32.mrb[0].mxu0
      %10154 = vmatprep.mubr.bf16.mxu0 %v9201
      %10155 = vmatmul.mubr.bf16.gmra.mrb[0].mxu0 %v9200
      %v10156 = vpop.f32.mrb[0].mxu0
      %v10157 = vadd.f32 %v9980, %v10156
      %v10158 = vpop.f32.mrb[0].mxu0
      %v10159 = vpop.f32.mrb[0].mxu0
      %v10160 = vadd.f32 %v9983, %v10159
      %v10161 = vpop.f32.mrb[0].mxu0
      %10162 = vmatprep.mubr.bf16.mxu0 %v9210
      %10163 = vmatmul.mubr.bf16.gmra.mrb[0].mxu0 %v9209
      %v10164 = vpop.f32.mrb[0].mxu0
      %v10165 = vadd.f32 %v9988, %v10164
      %v10166 = vpop.f32.mrb[0].mxu0
      %v10167 = vpop.f32.mrb[0].mxu0
      %v10168 = vadd.f32 %v9991, %v10167
      %v10169 = vpop.f32.mrb[0].mxu0
      %10170 = vmatprep.mubr.bf16.mxu0 %v9219
      %10171 = vmatmul.mubr.bf16.gmra.mrb[0].mxu0 %v9218
      %v10172 = vpop.f32.mrb[0].mxu0
      %v10173 = vadd.f32 %v9996, %v10172
      %v10174 = vpop.f32.mrb[0].mxu0
      %v10175 = vpop.f32.mrb[0].mxu0
      %v10176 = vadd.f32 %v9999, %v10175
      %v10177 = vpop.f32.mrb[0].mxu0
      %10178 = vmatprep.mubr.bf16.mxu0 %v9228
      %10179 = vmatmul.mubr.bf16.gmra.mrb[0].mxu0 %v9227
      %v10180 = vpop.f32.mrb[0].mxu0
      %v10181 = vadd.f32 %v10004, %v10180
      %v10182 = vpop.f32.mrb[0].mxu0
      %v10183 = vpop.f32.mrb[0].mxu0
      %v10184 = vadd.f32 %v10007, %v10183
      %v10185 = vpop.f32.mrb[0].mxu0
      %10186 = vmatprep.mubr.bf16.mxu0 %v9237
      %10187 = vmatmul.mubr.bf16.gmra.mrb[0].mxu0 %v9236
      %v10188 = vpop.f32.mrb[0].mxu0
      %v10189 = vadd.f32 %v10012, %v10188
      %v10190 = vpop.f32.mrb[0].mxu0
      %v10191 = vpop.f32.mrb[0].mxu0
      %v10192 = vadd.f32 %v10015, %v10191
      %v10193 = vpop.f32.mrb[0].mxu0
      %10194 = vmatprep.mubr.bf16.mxu0 %v9246
      %10195 = vmatmul.mubr.bf16.gmra.mrb[0].mxu0 %v9245
      %v10196 = vpop.f32.mrb[0].mxu0
      %v10197 = vadd.f32 %v10020, %v10196
      %v10198 = vpop.f32.mrb[0].mxu0
      %v10199 = vpop.f32.mrb[0].mxu0
      %v10200 = vadd.f32 %v10023, %v10199
      %v10201 = vpop.f32.mrb[0].mxu0
      %10202 = vmatprep.mubr.bf16.mxu0 %v9255
      %10203 = vmatmul.mubr.bf16.gmra.mrb[0].mxu0 %v9254
      %v10204 = vpop.f32.mrb[0].mxu0
      %v10205 = vadd.f32 %v10028, %v10204
      %v10206 = vpop.f32.mrb[0].mxu0
      %v10207 = vpop.f32.mrb[0].mxu0
      %v10208 = vadd.f32 %v10031, %v10207
      %v10209 = vpop.f32.mrb[0].mxu0
      %10210 = vmatprep.mubr.bf16.mxu0 %v9264
      %10211 = vmatmul.mubr.bf16.gmra.mrb[0].mxu0 %v9263
      %v10212 = vpop.f32.mrb[0].mxu0
      %v10213 = vadd.f32 %v10036, %v10212
      %v10214 = vpop.f32.mrb[0].mxu0
      %v10215 = vpop.f32.mrb[0].mxu0
      %v10216 = vadd.f32 %v10039, %v10215
      %v10217 = vpop.f32.mrb[0].mxu0
      %10218 = vmatprep.mubr.bf16.mxu0 %v9273
      %10219 = vmatmul.mubr.bf16.gmra.mrb[0].mxu0 %v9272
      %v10220 = vpop.f32.mrb[0].mxu0
      %v10221 = vadd.f32 %v10044, %v10220
      %v10222 = vpop.f32.mrb[0].mxu0
      %v10223 = vpop.f32.mrb[0].mxu0
      %v10224 = vadd.f32 %v10047, %v10223
      %v10225 = vpop.f32.mrb[0].mxu0
      %10226 = vdwg.mxu0
      %10227 = vmatprep.subr.bf16.mxu0 0
      %10228 = vmatpush1.bf16.msra.mxu0 %v9761
      %10229 = vmatprep.subr.bf16.mxu0 0
      %10230 = vmatpush1.bf16.msra.mxu0 %v9762
      %10231 = vmatprep.subr.bf16.mxu0 0
      %10232 = vmatpush1.bf16.msra.mxu0 %v9763
      %10233 = vmatprep.subr.bf16.mxu0 0
      %10234 = vmatpush1.bf16.msra.mxu0 %v9764
      %10235 = vmatprep.subr.bf16.mxu0 0
      %10236 = vmatpush1.bf16.msra.mxu0 %v9765
      %10237 = vmatprep.subr.bf16.mxu0 0
      %10238 = vmatpush1.bf16.msra.mxu0 %v9766
      %10239 = vmatprep.subr.bf16.mxu0 0
      %10240 = vmatpush1.bf16.msra.mxu0 %v9767
      %10241 = vmatprep.subr.bf16.mxu0 0
      %10242 = vmatpush1.bf16.msra.mxu0 %v9768
      %10243 = vmatprep.subr.bf16.mxu0 0
      %10244 = vmatpush1.bf16.msra.mxu0 %v9769
      %10245 = vmatprep.subr.bf16.mxu0 0
      %10246 = vmatpush1.bf16.msra.mxu0 %v9770
      %10247 = vmatprep.subr.bf16.mxu0 0
      %10248 = vmatpush1.bf16.msra.mxu0 %v9771
      %10249 = vmatprep.subr.bf16.mxu0 0
      %10250 = vmatpush1.bf16.msra.mxu0 %v9772
      %10251 = vmatprep.subr.bf16.mxu0 0
      %10252 = vmatpush1.bf16.msra.mxu0 %v9773
      %10253 = vmatprep.subr.bf16.mxu0 0
      %10254 = vmatpush1.bf16.msra.mxu0 %v9774
      %10255 = vmatprep.subr.bf16.mxu0 0
      %10256 = vmatpush1.bf16.msra.mxu0 %v9775
      %10257 = vmatprep.subr.bf16.mxu0 0
      %10258 = vmatpush1.bf16.msra.mxu0 %v9776
      %10259 = vmatprep.mubr.bf16.mxu0 %v9122
      %10260 = vmatmul.mubr.bf16.gmra.mrb[0].mxu0 %v9121
      %v10261 = vpop.f32.mrb[0].mxu0
      %v10262 = vadd.f32 %v10085, %v10261
      %v10263 = vpop.f32.mrb[0].mxu0
      %v10264 = vpop.f32.mrb[0].mxu0
      %v10265 = vadd.f32 %v10088, %v10264
      %v10266 = vpop.f32.mrb[0].mxu0
      %10267 = vmatprep.mubr.bf16.mxu0 %v9131
      %10268 = vmatmul.mubr.bf16.gmra.mrb[0].mxu0 %v9130
      %v10269 = vpop.f32.mrb[0].mxu0
      %v10270 = vadd.f32 %v10093, %v10269
      %v10271 = vpop.f32.mrb[0].mxu0
      %v10272 = vpop.f32.mrb[0].mxu0
      %v10273 = vadd.f32 %v10096, %v10272
      %v10274 = vpop.f32.mrb[0].mxu0
      %10275 = vmatprep.mubr.bf16.mxu0 %v9140
      %10276 = vmatmul.mubr.bf16.gmra.mrb[0].mxu0 %v9139
      %v10277 = vpop.f32.mrb[0].mxu0
      %v10278 = vadd.f32 %v10101, %v10277
      %v10279 = vpop.f32.mrb[0].mxu0
      %v10280 = vpop.f32.mrb[0].mxu0
      %v10281 = vadd.f32 %v10104, %v10280
      %v10282 = vpop.f32.mrb[0].mxu0
      %10283 = vmatprep.mubr.bf16.mxu0 %v9149
      %10284 = vmatmul.mubr.bf16.gmra.mrb[0].mxu0 %v9148
      %v10285 = vpop.f32.mrb[0].mxu0
      %v10286 = vadd.f32 %v10109, %v10285
      %v10287 = vpop.f32.mrb[0].mxu0
      %v10288 = vpop.f32.mrb[0].mxu0
      %v10289 = vadd.f32 %v10112, %v10288
      %v10290 = vpop.f32.mrb[0].mxu0
      %10291 = vmatprep.mubr.bf16.mxu0 %v9158
      %10292 = vmatmul.mubr.bf16.gmra.mrb[0].mxu0 %v9157
      %v10293 = vpop.f32.mrb[0].mxu0
      %v10294 = vadd.f32 %v10117, %v10293
      %v10295 = vpop.f32.mrb[0].mxu0
      %v10296 = vpop.f32.mrb[0].mxu0
      %v10297 = vadd.f32 %v10120, %v10296
      %v10298 = vpop.f32.mrb[0].mxu0
      %10299 = vmatprep.mubr.bf16.mxu0 %v9167
      %10300 = vmatmul.mubr.bf16.gmra.mrb[0].mxu0 %v9166
      %v10301 = vpop.f32.mrb[0].mxu0
      %v10302 = vadd.f32 %v10125, %v10301
      %v10303 = vpop.f32.mrb[0].mxu0
      %v10304 = vpop.f32.mrb[0].mxu0
      %v10305 = vadd.f32 %v10128, %v10304
      %v10306 = vpop.f32.mrb[0].mxu0
      %10307 = vmatprep.mubr.bf16.mxu0 %v9176
      %10308 = vmatmul.mubr.bf16.gmra.mrb[0].mxu0 %v9175
      %v10309 = vpop.f32.mrb[0].mxu0
      %v10310 = vadd.f32 %v10133, %v10309
      %v10311 = vpop.f32.mrb[0].mxu0
      %v10312 = vpop.f32.mrb[0].mxu0
      %v10313 = vadd.f32 %v10136, %v10312
      %v10314 = vpop.f32.mrb[0].mxu0
      %10315 = vmatprep.mubr.bf16.mxu0 %v9185
      %10316 = vmatmul.mubr.bf16.gmra.mrb[0].mxu0 %v9184
      %v10317 = vpop.f32.mrb[0].mxu0
      %v10318 = vadd.f32 %v10141, %v10317
      %v10319 = vpop.f32.mrb[0].mxu0
      %v10320 = vpop.f32.mrb[0].mxu0
      %v10321 = vadd.f32 %v10144, %v10320
      %v10322 = vpop.f32.mrb[0].mxu0
      %10323 = vmatprep.mubr.bf16.mxu0 %v9194
      %10324 = vmatmul.mubr.bf16.gmra.mrb[0].mxu0 %v9193
      %v10325 = vpop.f32.mrb[0].mxu0
      %v10326 = vadd.f32 %v10149, %v10325
      %v10327 = vpop.f32.mrb[0].mxu0
      %v10328 = vpop.f32.mrb[0].mxu0
      %v10329 = vadd.f32 %v10152, %v10328
      %v10330 = vpop.f32.mrb[0].mxu0
      %10331 = vmatprep.mubr.bf16.mxu0 %v9203
      %10332 = vmatmul.mubr.bf16.gmra.mrb[0].mxu0 %v9202
      %v10333 = vpop.f32.mrb[0].mxu0
      %v10334 = vadd.f32 %v10157, %v10333
      %v10335 = vpop.f32.mrb[0].mxu0
      %v10336 = vpop.f32.mrb[0].mxu0
      %v10337 = vadd.f32 %v10160, %v10336
      %v10338 = vpop.f32.mrb[0].mxu0
      %10339 = vmatprep.mubr.bf16.mxu0 %v9212
      %10340 = vmatmul.mubr.bf16.gmra.mrb[0].mxu0 %v9211
      %v10341 = vpop.f32.mrb[0].mxu0
      %v10342 = vadd.f32 %v10165, %v10341
      %v10343 = vpop.f32.mrb[0].mxu0
      %v10344 = vpop.f32.mrb[0].mxu0
      %v10345 = vadd.f32 %v10168, %v10344
      %v10346 = vpop.f32.mrb[0].mxu0
      %10347 = vmatprep.mubr.bf16.mxu0 %v9221
      %10348 = vmatmul.mubr.bf16.gmra.mrb[0].mxu0 %v9220
      %v10349 = vpop.f32.mrb[0].mxu0
      %v10350 = vadd.f32 %v10173, %v10349
      %v10351 = vpop.f32.mrb[0].mxu0
      %v10352 = vpop.f32.mrb[0].mxu0
      %v10353 = vadd.f32 %v10176, %v10352
      %v10354 = vpop.f32.mrb[0].mxu0
      %10355 = vmatprep.mubr.bf16.mxu0 %v9230
      %10356 = vmatmul.mubr.bf16.gmra.mrb[0].mxu0 %v9229
      %v10357 = vpop.f32.mrb[0].mxu0
      %v10358 = vadd.f32 %v10181, %v10357
      %v10359 = vpop.f32.mrb[0].mxu0
      %v10360 = vpop.f32.mrb[0].mxu0
      %v10361 = vadd.f32 %v10184, %v10360
      %v10362 = vpop.f32.mrb[0].mxu0
      %10363 = vmatprep.mubr.bf16.mxu0 %v9239
      %10364 = vmatmul.mubr.bf16.gmra.mrb[0].mxu0 %v9238
      %v10365 = vpop.f32.mrb[0].mxu0
      %v10366 = vadd.f32 %v10189, %v10365
      %v10367 = vpop.f32.mrb[0].mxu0
      %v10368 = vpop.f32.mrb[0].mxu0
      %v10369 = vadd.f32 %v10192, %v10368
      %v10370 = vpop.f32.mrb[0].mxu0
      %10371 = vmatprep.mubr.bf16.mxu0 %v9248
      %10372 = vmatmul.mubr.bf16.gmra.mrb[0].mxu0 %v9247
      %v10373 = vpop.f32.mrb[0].mxu0
      %v10374 = vadd.f32 %v10197, %v10373
      %v10375 = vpop.f32.mrb[0].mxu0
      %v10376 = vpop.f32.mrb[0].mxu0
      %v10377 = vadd.f32 %v10200, %v10376
      %v10378 = vpop.f32.mrb[0].mxu0
      %10379 = vmatprep.mubr.bf16.mxu0 %v9257
      %10380 = vmatmul.mubr.bf16.gmra.mrb[0].mxu0 %v9256
      %v10381 = vpop.f32.mrb[0].mxu0
      %v10382 = vadd.f32 %v10205, %v10381
      %v10383 = vpop.f32.mrb[0].mxu0
      %v10384 = vpop.f32.mrb[0].mxu0
      %v10385 = vadd.f32 %v10208, %v10384
      %v10386 = vpop.f32.mrb[0].mxu0
      %10387 = vmatprep.mubr.bf16.mxu0 %v9266
      %10388 = vmatmul.mubr.bf16.gmra.mrb[0].mxu0 %v9265
      %v10389 = vpop.f32.mrb[0].mxu0
      %v10390 = vadd.f32 %v10213, %v10389
      %v10391 = vpop.f32.mrb[0].mxu0
      %v10392 = vpop.f32.mrb[0].mxu0
      %v10393 = vadd.f32 %v10216, %v10392
      %v10394 = vpop.f32.mrb[0].mxu0
      %10395 = vmatprep.mubr.bf16.mxu0 %v9275
      %10396 = vmatmul.mubr.bf16.gmra.mrb[0].mxu0 %v9274
      %v10397 = vpop.f32.mrb[0].mxu0
      %v10398 = vadd.f32 %v10221, %v10397
      %v10399 = vpop.f32.mrb[0].mxu0
      %v10400 = vpop.f32.mrb[0].mxu0
      %v10401 = vadd.f32 %v10224, %v10400
      %v10402 = vpop.f32.mrb[0].mxu0
      %10403 = vdwg.mxu0
      %10404 = vmatprep.subr.bf16.mxu0 0
      %10405 = vmatpush1.bf16.msra.mxu0 %v9777
      %10406 = vmatprep.subr.bf16.mxu0 0
      %10407 = vmatpush1.bf16.msra.mxu0 %v9778
      %10408 = vmatprep.subr.bf16.mxu0 0
      %10409 = vmatpush1.bf16.msra.mxu0 %v9779
      %10410 = vmatprep.subr.bf16.mxu0 0
      %10411 = vmatpush1.bf16.msra.mxu0 %v9780
      %10412 = vmatprep.subr.bf16.mxu0 0
      %10413 = vmatpush1.bf16.msra.mxu0 %v9781
      %10414 = vmatprep.subr.bf16.mxu0 0
      %10415 = vmatpush1.bf16.msra.mxu0 %v9782
      %10416 = vmatprep.subr.bf16.mxu0 0
      %10417 = vmatpush1.bf16.msra.mxu0 %v9783
      %10418 = vmatprep.subr.bf16.mxu0 0
      %10419 = vmatpush1.bf16.msra.mxu0 %v9784
      %10420 = vmatprep.subr.bf16.mxu0 0
      %10421 = vmatpush1.bf16.msra.mxu0 %v9785
      %10422 = vmatprep.subr.bf16.mxu0 0
      %10423 = vmatpush1.bf16.msra.mxu0 %v9786
      %10424 = vmatprep.subr.bf16.mxu0 0
      %10425 = vmatpush1.bf16.msra.mxu0 %v9787
      %10426 = vmatprep.subr.bf16.mxu0 0
      %10427 = vmatpush1.bf16.msra.mxu0 %v9788
      %10428 = vmatprep.subr.bf16.mxu0 0
      %10429 = vmatpush1.bf16.msra.mxu0 %v9789
      %10430 = vmatprep.subr.bf16.mxu0 0
      %10431 = vmatpush1.bf16.msra.mxu0 %v9790
      %10432 = vmatprep.subr.bf16.mxu0 0
      %10433 = vmatpush1.bf16.msra.mxu0 %v9791
      %10434 = vmatprep.subr.bf16.mxu0 0
      %10435 = vmatpush1.bf16.msra.mxu0 %v9792
      %10436 = vmatprep.mubr.bf16.mxu0 %v9124
      %10437 = vmatmul.mubr.bf16.gmra.mrb[0].mxu0 %v9123
      %v10438 = vpop.f32.mrb[0].mxu0
      %v10439 = vadd.f32 %v10262, %v10438
      %v10440 = vpop.f32.mrb[0].mxu0
      %v10441 = vpop.f32.mrb[0].mxu0
      %v10442 = vadd.f32 %v10265, %v10441
      %v10443 = vpop.f32.mrb[0].mxu0
      %10444 = vmatprep.mubr.bf16.mxu0 %v9133
      %10445 = vmatmul.mubr.bf16.gmra.mrb[0].mxu0 %v9132
      %v10446 = vpop.f32.mrb[0].mxu0
      %v10447 = vadd.f32 %v10270, %v10446
      %v10448 = vpop.f32.mrb[0].mxu0
      %v10449 = vpop.f32.mrb[0].mxu0
      %v10450 = vadd.f32 %v10273, %v10449
      %v10451 = vpop.f32.mrb[0].mxu0
      %10452 = vmatprep.mubr.bf16.mxu0 %v9142
      %10453 = vmatmul.mubr.bf16.gmra.mrb[0].mxu0 %v9141
      %v10454 = vpop.f32.mrb[0].mxu0
      %v10455 = vadd.f32 %v10278, %v10454
      %v10456 = vpop.f32.mrb[0].mxu0
      %v10457 = vpop.f32.mrb[0].mxu0
      %v10458 = vadd.f32 %v10281, %v10457
      %v10459 = vpop.f32.mrb[0].mxu0
      %10460 = vmatprep.mubr.bf16.mxu0 %v9151
      %10461 = vmatmul.mubr.bf16.gmra.mrb[0].mxu0 %v9150
      %v10462 = vpop.f32.mrb[0].mxu0
      %v10463 = vadd.f32 %v10286, %v10462
      %v10464 = vpop.f32.mrb[0].mxu0
      %v10465 = vpop.f32.mrb[0].mxu0
      %v10466 = vadd.f32 %v10289, %v10465
      %v10467 = vpop.f32.mrb[0].mxu0
      %10468 = vmatprep.mubr.bf16.mxu0 %v9160
      %10469 = vmatmul.mubr.bf16.gmra.mrb[0].mxu0 %v9159
      %v10470 = vpop.f32.mrb[0].mxu0
      %v10471 = vadd.f32 %v10294, %v10470
      %v10472 = vpop.f32.mrb[0].mxu0
      %v10473 = vpop.f32.mrb[0].mxu0
      %v10474 = vadd.f32 %v10297, %v10473
      %v10475 = vpop.f32.mrb[0].mxu0
      %10476 = vmatprep.mubr.bf16.mxu0 %v9169
      %10477 = vmatmul.mubr.bf16.gmra.mrb[0].mxu0 %v9168
      %v10478 = vpop.f32.mrb[0].mxu0
      %v10479 = vadd.f32 %v10302, %v10478
      %v10480 = vpop.f32.mrb[0].mxu0
      %v10481 = vpop.f32.mrb[0].mxu0
      %v10482 = vadd.f32 %v10305, %v10481
      %v10483 = vpop.f32.mrb[0].mxu0
      %10484 = vmatprep.mubr.bf16.mxu0 %v9178
      %10485 = vmatmul.mubr.bf16.gmra.mrb[0].mxu0 %v9177
      %v10486 = vpop.f32.mrb[0].mxu0
      %v10487 = vadd.f32 %v10310, %v10486
      %v10488 = vpop.f32.mrb[0].mxu0
      %v10489 = vpop.f32.mrb[0].mxu0
      %v10490 = vadd.f32 %v10313, %v10489
      %v10491 = vpop.f32.mrb[0].mxu0
      %10492 = vmatprep.mubr.bf16.mxu0 %v9187
      %10493 = vmatmul.mubr.bf16.gmra.mrb[0].mxu0 %v9186
      %v10494 = vpop.f32.mrb[0].mxu0
      %v10495 = vadd.f32 %v10318, %v10494
      %v10496 = vpop.f32.mrb[0].mxu0
      %v10497 = vpop.f32.mrb[0].mxu0
      %v10498 = vadd.f32 %v10321, %v10497
      %v10499 = vpop.f32.mrb[0].mxu0
      %10500 = vmatprep.mubr.bf16.mxu0 %v9196
      %10501 = vmatmul.mubr.bf16.gmra.mrb[0].mxu0 %v9195
      %v10502 = vpop.f32.mrb[0].mxu0
      %v10503 = vadd.f32 %v10326, %v10502
      %v10504 = vpop.f32.mrb[0].mxu0
      %v10505 = vpop.f32.mrb[0].mxu0
      %v10506 = vadd.f32 %v10329, %v10505
      %v10507 = vpop.f32.mrb[0].mxu0
      %10508 = vmatprep.mubr.bf16.mxu0 %v9205
      %10509 = vmatmul.mubr.bf16.gmra.mrb[0].mxu0 %v9204
      %v10510 = vpop.f32.mrb[0].mxu0
      %v10511 = vadd.f32 %v10334, %v10510
      %v10512 = vpop.f32.mrb[0].mxu0
      %v10513 = vpop.f32.mrb[0].mxu0
      %v10514 = vadd.f32 %v10337, %v10513
      %v10515 = vpop.f32.mrb[0].mxu0
      %10516 = vmatprep.mubr.bf16.mxu0 %v9214
      %10517 = vmatmul.mubr.bf16.gmra.mrb[0].mxu0 %v9213
      %v10518 = vpop.f32.mrb[0].mxu0
      %v10519 = vadd.f32 %v10342, %v10518
      %v10520 = vpop.f32.mrb[0].mxu0
      %v10521 = vpop.f32.mrb[0].mxu0
      %v10522 = vadd.f32 %v10345, %v10521
      %v10523 = vpop.f32.mrb[0].mxu0
      %10524 = vmatprep.mubr.bf16.mxu0 %v9223
      %10525 = vmatmul.mubr.bf16.gmra.mrb[0].mxu0 %v9222
      %v10526 = vpop.f32.mrb[0].mxu0
      %v10527 = vadd.f32 %v10350, %v10526
      %v10528 = vpop.f32.mrb[0].mxu0
      %v10529 = vpop.f32.mrb[0].mxu0
      %v10530 = vadd.f32 %v10353, %v10529
      %v10531 = vpop.f32.mrb[0].mxu0
      %10532 = vmatprep.mubr.bf16.mxu0 %v9232
      %10533 = vmatmul.mubr.bf16.gmra.mrb[0].mxu0 %v9231
      %v10534 = vpop.f32.mrb[0].mxu0
      %v10535 = vadd.f32 %v10358, %v10534
      %v10536 = vpop.f32.mrb[0].mxu0
      %v10537 = vpop.f32.mrb[0].mxu0
      %v10538 = vadd.f32 %v10361, %v10537
      %v10539 = vpop.f32.mrb[0].mxu0
      %10540 = vmatprep.mubr.bf16.mxu0 %v9241
      %10541 = vmatmul.mubr.bf16.gmra.mrb[0].mxu0 %v9240
      %v10542 = vpop.f32.mrb[0].mxu0
      %v10543 = vadd.f32 %v10366, %v10542
      %v10544 = vpop.f32.mrb[0].mxu0
      %v10545 = vpop.f32.mrb[0].mxu0
      %v10546 = vadd.f32 %v10369, %v10545
      %v10547 = vpop.f32.mrb[0].mxu0
      %10548 = vmatprep.mubr.bf16.mxu0 %v9250
      %10549 = vmatmul.mubr.bf16.gmra.mrb[0].mxu0 %v9249
      %v10550 = vpop.f32.mrb[0].mxu0
      %v10551 = vadd.f32 %v10374, %v10550
      %v10552 = vpop.f32.mrb[0].mxu0
      %v10553 = vpop.f32.mrb[0].mxu0
      %v10554 = vadd.f32 %v10377, %v10553
      %v10555 = vpop.f32.mrb[0].mxu0
      %10556 = vmatprep.mubr.bf16.mxu0 %v9259
      %10557 = vmatmul.mubr.bf16.gmra.mrb[0].mxu0 %v9258
      %v10558 = vpop.f32.mrb[0].mxu0
      %v10559 = vadd.f32 %v10382, %v10558
      %v10560 = vpop.f32.mrb[0].mxu0
      %v10561 = vpop.f32.mrb[0].mxu0
      %v10562 = vadd.f32 %v10385, %v10561
      %v10563 = vpop.f32.mrb[0].mxu0
      %10564 = vmatprep.mubr.bf16.mxu0 %v9268
      %10565 = vmatmul.mubr.bf16.gmra.mrb[0].mxu0 %v9267
      %v10566 = vpop.f32.mrb[0].mxu0
      %v10567 = vadd.f32 %v10390, %v10566
      %v10568 = vpop.f32.mrb[0].mxu0
      %v10569 = vpop.f32.mrb[0].mxu0
      %v10570 = vadd.f32 %v10393, %v10569
      %v10571 = vpop.f32.mrb[0].mxu0
      %10572 = vmatprep.mubr.bf16.mxu0 %v9277
      %10573 = vmatmul.mubr.bf16.gmra.mrb[0].mxu0 %v9276
      %v10574 = vpop.f32.mrb[0].mxu0
      %v10575 = vadd.f32 %v10398, %v10574
      %v10576 = vpop.f32.mrb[0].mxu0
      %v10577 = vpop.f32.mrb[0].mxu0
      %v10578 = vadd.f32 %v10401, %v10577
      %v10579 = vpop.f32.mrb[0].mxu0
      %10580 = vdwg.mxu0
      %10581 = vmatprep.subr.bf16.mxu0 0
      %10582 = vmatpush1.bf16.msra.mxu0 %v9793
      %10583 = vmatprep.subr.bf16.mxu0 0
      %10584 = vmatpush1.bf16.msra.mxu0 %v9794
      %10585 = vmatprep.subr.bf16.mxu0 0
      %10586 = vmatpush1.bf16.msra.mxu0 %v9795
      %10587 = vmatprep.subr.bf16.mxu0 0
      %10588 = vmatpush1.bf16.msra.mxu0 %v9796
      %10589 = vmatprep.subr.bf16.mxu0 0
      %10590 = vmatpush1.bf16.msra.mxu0 %v9797
      %10591 = vmatprep.subr.bf16.mxu0 0
      %10592 = vmatpush1.bf16.msra.mxu0 %v9798
      %10593 = vmatprep.subr.bf16.mxu0 0
      %10594 = vmatpush1.bf16.msra.mxu0 %v9799
      %10595 = vmatprep.subr.bf16.mxu0 0
      %10596 = vmatpush1.bf16.msra.mxu0 %v9800
      %10597 = vmatprep.subr.bf16.mxu0 0
      %10598 = vmatpush1.bf16.msra.mxu0 0
      %10599 = vmatprep.subr.bf16.mxu0 0
      %10600 = vmatpush1.bf16.msra.mxu0 0
      %10601 = vmatprep.subr.bf16.mxu0 0
      %10602 = vmatpush1.bf16.msra.mxu0 0
      %10603 = vmatprep.subr.bf16.mxu0 0
      %10604 = vmatpush1.bf16.msra.mxu0 0
      %10605 = vmatprep.subr.bf16.mxu0 0
      %10606 = vmatpush1.bf16.msra.mxu0 0
      %10607 = vmatprep.subr.bf16.mxu0 0
      %10608 = vmatpush1.bf16.msra.mxu0 0
      %10609 = vmatprep.subr.bf16.mxu0 0
      %10610 = vmatpush1.bf16.msra.mxu0 0
      %10611 = vmatprep.subr.bf16.mxu0 0
      %10612 = vmatpush1.bf16.msra.mxu0 0
      %10613 = vmatprep.mubr.bf16.mxu0 0
      %10614 = vmatmul.mubr.bf16.gmra.mrb[0].mxu0 %v9125
      %v10615 = vpop.f32.mrb[0].mxu0
      %v10616 = vadd.f32 %v10439, %v10615
      %v10617 = vpop.f32.mrb[0].mxu0
      %v10618 = vpop.f32.mrb[0].mxu0
      %v10619 = vadd.f32 %v10442, %v10618
      %v10620 = vpop.f32.mrb[0].mxu0
      %10621 = vmatprep.mubr.bf16.mxu0 0
      %10622 = vmatmul.mubr.bf16.gmra.mrb[0].mxu0 %v9134
      %v10623 = vpop.f32.mrb[0].mxu0
      %v10624 = vadd.f32 %v10447, %v10623
      %v10625 = vpop.f32.mrb[0].mxu0
      %v10626 = vpop.f32.mrb[0].mxu0
      %v10627 = vadd.f32 %v10450, %v10626
      %v10628 = vpop.f32.mrb[0].mxu0
      %10629 = vmatprep.mubr.bf16.mxu0 0
      %10630 = vmatmul.mubr.bf16.gmra.mrb[0].mxu0 %v9143
      %v10631 = vpop.f32.mrb[0].mxu0
      %v10632 = vadd.f32 %v10455, %v10631
      %v10633 = vpop.f32.mrb[0].mxu0
      %v10634 = vpop.f32.mrb[0].mxu0
      %v10635 = vadd.f32 %v10458, %v10634
      %v10636 = vpop.f32.mrb[0].mxu0
      %10637 = vmatprep.mubr.bf16.mxu0 0
      %10638 = vmatmul.mubr.bf16.gmra.mrb[0].mxu0 %v9152
      %v10639 = vpop.f32.mrb[0].mxu0
      %v10640 = vadd.f32 %v10463, %v10639
      %v10641 = vpop.f32.mrb[0].mxu0
      %v10642 = vpop.f32.mrb[0].mxu0
      %v10643 = vadd.f32 %v10466, %v10642
      %v10644 = vpop.f32.mrb[0].mxu0
      %10645 = vmatprep.mubr.bf16.mxu0 0
      %10646 = vmatmul.mubr.bf16.gmra.mrb[0].mxu0 %v9161
      %v10647 = vpop.f32.mrb[0].mxu0
      %v10648 = vadd.f32 %v10471, %v10647
      %v10649 = vpop.f32.mrb[0].mxu0
      %v10650 = vpop.f32.mrb[0].mxu0
      %v10651 = vadd.f32 %v10474, %v10650
      %v10652 = vpop.f32.mrb[0].mxu0
      %10653 = vmatprep.mubr.bf16.mxu0 0
      %10654 = vmatmul.mubr.bf16.gmra.mrb[0].mxu0 %v9170
      %v10655 = vpop.f32.mrb[0].mxu0
      %v10656 = vadd.f32 %v10479, %v10655
      %v10657 = vpop.f32.mrb[0].mxu0
      %v10658 = vpop.f32.mrb[0].mxu0
      %v10659 = vadd.f32 %v10482, %v10658
      %v10660 = vpop.f32.mrb[0].mxu0
      %10661 = vmatprep.mubr.bf16.mxu0 0
      %10662 = vmatmul.mubr.bf16.gmra.mrb[0].mxu0 %v9179
      %v10663 = vpop.f32.mrb[0].mxu0
      %v10664 = vadd.f32 %v10487, %v10663
      %v10665 = vpop.f32.mrb[0].mxu0
      %v10666 = vpop.f32.mrb[0].mxu0
      %v10667 = vadd.f32 %v10490, %v10666
      %v10668 = vpop.f32.mrb[0].mxu0
      %10669 = vmatprep.mubr.bf16.mxu0 0
      %10670 = vmatmul.mubr.bf16.gmra.mrb[0].mxu0 %v9188
      %v10671 = vpop.f32.mrb[0].mxu0
      %v10672 = vadd.f32 %v10495, %v10671
      %v10673 = vpop.f32.mrb[0].mxu0
      %v10674 = vpop.f32.mrb[0].mxu0
      %v10675 = vadd.f32 %v10498, %v10674
      %v10676 = vpop.f32.mrb[0].mxu0
      %10677 = vmatprep.mubr.bf16.mxu0 0
      %10678 = vmatmul.mubr.bf16.gmra.mrb[0].mxu0 %v9197
      %v10679 = vpop.f32.mrb[0].mxu0
      %v10680 = vadd.f32 %v10503, %v10679
      %v10681 = vpop.f32.mrb[0].mxu0
      %v10682 = vpop.f32.mrb[0].mxu0
      %v10683 = vadd.f32 %v10506, %v10682
      %v10684 = vpop.f32.mrb[0].mxu0
      %10685 = vmatprep.mubr.bf16.mxu0 0
      %10686 = vmatmul.mubr.bf16.gmra.mrb[0].mxu0 %v9206
      %v10687 = vpop.f32.mrb[0].mxu0
      %v10688 = vadd.f32 %v10511, %v10687
      %v10689 = vpop.f32.mrb[0].mxu0
      %v10690 = vpop.f32.mrb[0].mxu0
      %v10691 = vadd.f32 %v10514, %v10690
      %v10692 = vpop.f32.mrb[0].mxu0
      %10693 = vmatprep.mubr.bf16.mxu0 0
      %10694 = vmatmul.mubr.bf16.gmra.mrb[0].mxu0 %v9215
      %v10695 = vpop.f32.mrb[0].mxu0
      %v10696 = vadd.f32 %v10519, %v10695
      %v10697 = vpop.f32.mrb[0].mxu0
      %v10698 = vpop.f32.mrb[0].mxu0
      %v10699 = vadd.f32 %v10522, %v10698
      %v10700 = vpop.f32.mrb[0].mxu0
      %10701 = vmatprep.mubr.bf16.mxu0 0
      %10702 = vmatmul.mubr.bf16.gmra.mrb[0].mxu0 %v9224
      %v10703 = vpop.f32.mrb[0].mxu0
      %v10704 = vadd.f32 %v10527, %v10703
      %v10705 = vpop.f32.mrb[0].mxu0
      %v10706 = vpop.f32.mrb[0].mxu0
      %v10707 = vadd.f32 %v10530, %v10706
      %v10708 = vpop.f32.mrb[0].mxu0
      %10709 = vmatprep.mubr.bf16.mxu0 0
      %10710 = vmatmul.mubr.bf16.gmra.mrb[0].mxu0 %v9233
      %v10711 = vpop.f32.mrb[0].mxu0
      %v10712 = vadd.f32 %v10535, %v10711
      %v10713 = vpop.f32.mrb[0].mxu0
      %v10714 = vpop.f32.mrb[0].mxu0
      %v10715 = vadd.f32 %v10538, %v10714
      %v10716 = vpop.f32.mrb[0].mxu0
      %10717 = vmatprep.mubr.bf16.mxu0 0
      %10718 = vmatmul.mubr.bf16.gmra.mrb[0].mxu0 %v9242
      %v10719 = vpop.f32.mrb[0].mxu0
      %v10720 = vadd.f32 %v10543, %v10719
      %v10721 = vpop.f32.mrb[0].mxu0
      %v10722 = vpop.f32.mrb[0].mxu0
      %v10723 = vadd.f32 %v10546, %v10722
      %v10724 = vpop.f32.mrb[0].mxu0
      %10725 = vmatprep.mubr.bf16.mxu0 0
      %10726 = vmatmul.mubr.bf16.gmra.mrb[0].mxu0 %v9251
      %v10727 = vpop.f32.mrb[0].mxu0
      %v10728 = vadd.f32 %v10551, %v10727
      %v10729 = vpop.f32.mrb[0].mxu0
      %v10730 = vpop.f32.mrb[0].mxu0
      %v10731 = vadd.f32 %v10554, %v10730
      %v10732 = vpop.f32.mrb[0].mxu0
      %10733 = vmatprep.mubr.bf16.mxu0 0
      %10734 = vmatmul.mubr.bf16.gmra.mrb[0].mxu0 %v9260
      %v10735 = vpop.f32.mrb[0].mxu0
      %v10736 = vadd.f32 %v10559, %v10735
      %v10737 = vpop.f32.mrb[0].mxu0
      %v10738 = vpop.f32.mrb[0].mxu0
      %v10739 = vadd.f32 %v10562, %v10738
      %v10740 = vpop.f32.mrb[0].mxu0
      %10741 = vmatprep.mubr.bf16.mxu0 0
      %10742 = vmatmul.mubr.bf16.gmra.mrb[0].mxu0 %v9269
      %v10743 = vpop.f32.mrb[0].mxu0
      %v10744 = vadd.f32 %v10567, %v10743
      %v10745 = vpop.f32.mrb[0].mxu0
      %v10746 = vpop.f32.mrb[0].mxu0
      %v10747 = vadd.f32 %v10570, %v10746
      %v10748 = vpop.f32.mrb[0].mxu0
      %10749 = vmatprep.mubr.bf16.mxu0 0
      %10750 = vmatmul.mubr.bf16.gmra.mrb[0].mxu0 %v9278
      %v10751 = vpop.f32.mrb[0].mxu0
      %v10752 = vadd.f32 %v10575, %v10751
      %v10753 = vpop.f32.mrb[0].mxu0
      %v10754 = vpop.f32.mrb[0].mxu0
      %v10755 = vadd.f32 %v10578, %v10754
      %v10756 = vpop.f32.mrb[0].mxu0
      %10757 = vdwg.mxu0
      %v10758 = vld [vmem:[%s5] sm:$0x1]
      %v10760 = vlaneseq
      %v10761 = vshrl.u32 %v10760, 7
      %v10762 = vsub.s32 0, %v10761
      %v10763 = vrot.slane %v10758, %v10762
      %v10765 = vmul.f32 %v10616, %v10763
      %v10766 = vmul.f32 %v10619, %v10763
      %v10767 = vmul.f32 %v10624, %v10763
      %v10768 = vmul.f32 %v10627, %v10763
      %v10769 = vmul.f32 %v10632, %v10763
      %v10770 = vmul.f32 %v10635, %v10763
      %v10771 = vmul.f32 %v10640, %v10763
      %v10772 = vmul.f32 %v10643, %v10763
      %v10773 = vmul.f32 %v10648, %v10763
      %v10774 = vmul.f32 %v10651, %v10763
      %v10775 = vmul.f32 %v10656, %v10763
      %v10776 = vmul.f32 %v10659, %v10763
      %v10777 = vmul.f32 %v10664, %v10763
      %v10778 = vmul.f32 %v10667, %v10763
      %v10779 = vmul.f32 %v10672, %v10763
      %v10780 = vmul.f32 %v10675, %v10763
      %v10781 = vmul.f32 %v10680, %v10763
      %v10782 = vmul.f32 %v10683, %v10763
      %v10783 = vmul.f32 %v10688, %v10763
      %v10784 = vmul.f32 %v10691, %v10763
      %v10785 = vmul.f32 %v10696, %v10763
      %v10786 = vmul.f32 %v10699, %v10763
      %v10787 = vmul.f32 %v10704, %v10763
      %v10788 = vmul.f32 %v10707, %v10763
      %v10789 = vmul.f32 %v10712, %v10763
      %v10790 = vmul.f32 %v10715, %v10763
      %v10791 = vmul.f32 %v10720, %v10763
      %v10792 = vmul.f32 %v10723, %v10763
      %v10793 = vmul.f32 %v10728, %v10763
      %v10794 = vmul.f32 %v10731, %v10763
      %v10795 = vmul.f32 %v10736, %v10763
      %v10796 = vmul.f32 %v10739, %v10763
      %v10797 = vmul.f32 %v10744, %v10763
      %v10798 = vmul.f32 %v10747, %v10763
      %v10799 = vmul.f32 %v10752, %v10763
      %v10800 = vmul.f32 %v10755, %v10763
      %v10801 = vld [vmem:[%s6] sm:$0x1]
      %v10803 = vlaneseq
      %v10804 = vshrl.u32 %v10803, 7
      %v10805 = vsub.s32 0, %v10804
      %v10806 = vrot.slane %v10801, %v10805
      %v10808 = vadd.f32 %v10765, %v10806
      %v10809 = vadd.f32 %v10766, %v10806
      %v10810 = vadd.f32 %v10767, %v10806
      %v10811 = vadd.f32 %v10768, %v10806
      %v10812 = vadd.f32 %v10769, %v10806
      %v10813 = vadd.f32 %v10770, %v10806
      %v10814 = vadd.f32 %v10771, %v10806
      %v10815 = vadd.f32 %v10772, %v10806
      %v10816 = vadd.f32 %v10773, %v10806
      %v10817 = vadd.f32 %v10774, %v10806
      %v10818 = vadd.f32 %v10775, %v10806
      %v10819 = vadd.f32 %v10776, %v10806
      %v10820 = vadd.f32 %v10777, %v10806
      %v10821 = vadd.f32 %v10778, %v10806
      %v10822 = vadd.f32 %v10779, %v10806
      %v10823 = vadd.f32 %v10780, %v10806
      %v10824 = vadd.f32 %v10781, %v10806
      %v10825 = vadd.f32 %v10782, %v10806
      %v10826 = vadd.f32 %v10783, %v10806
      %v10827 = vadd.f32 %v10784, %v10806
      %v10828 = vadd.f32 %v10785, %v10806
      %v10829 = vadd.f32 %v10786, %v10806
      %v10830 = vadd.f32 %v10787, %v10806
      %v10831 = vadd.f32 %v10788, %v10806
      %v10832 = vadd.f32 %v10789, %v10806
      %v10833 = vadd.f32 %v10790, %v10806
      %v10834 = vadd.f32 %v10791, %v10806
      %v10835 = vadd.f32 %v10792, %v10806
      %v10836 = vadd.f32 %v10793, %v10806
      %v10837 = vadd.f32 %v10794, %v10806
      %v10838 = vadd.f32 %v10795, %v10806
      %v10839 = vadd.f32 %v10796, %v10806
      %v10840 = vadd.f32 %v10797, %v10806
      %v10841 = vadd.f32 %v10798, %v10806
      %v10842 = vadd.f32 %v10799, %v10806
      %v10843 = vadd.f32 %v10800, %v10806
      %v10844 = vld [vmem:[%s273 + $0x13] sm:$0xff]
      %v10845 = vld [vmem:[%s273 + $0x1b] sm:$0xff]
      %v10846 = vld [vmem:[%s273 + $0x23] sm:$0xff]
      %v10847 = vld [vmem:[%s273 + $0x2b] sm:$0xff]
      %v10848 = vld [vmem:[%s273 + $0x33] sm:$0xff]
      %v10849 = vld [vmem:[%s273 + $0x3b] sm:$0xff]
      %v10850 = vld [vmem:[%s273 + $0x43] sm:$0xff]
      %v10851 = vld [vmem:[%s273 + $0x4b] sm:$0xff]
      %v10852 = vld [vmem:[%s273 + $0x53] sm:$0xff]
      %v10853 = vld [vmem:[%s273 + $0x5b] sm:$0xff]
      %v10854 = vld [vmem:[%s273 + $0x63] sm:$0xff]
      %v10855 = vld [vmem:[%s273 + $0x6b] sm:$0xff]
      %v10856 = vld [vmem:[%s273 + $0x73] sm:$0xff]
      %v10857 = vld [vmem:[%s273 + $0x7b] sm:$0xff]
      %v10858 = vld [vmem:[%s273 + $0x83] sm:$0xff]
      %v10859 = vld [vmem:[%s273 + $0x8b] sm:$0xff]
      %v10860 = vld [vmem:[%s273 + $0x93] sm:$0xff]
      %v10861 = vld [vmem:[%s273 + $0x9b] sm:$0xff]
      %v10862 = vld [vmem:[%s273 + $0xa3] sm:$0xff]
      %v10863 = vld [vmem:[%s273 + $0xab] sm:$0xff]
      %v10864 = vld [vmem:[%s273 + $0xb3] sm:$0xff]
      %v10865 = vld [vmem:[%s273 + $0xbb] sm:$0xff]
      %v10866 = vld [vmem:[%s273 + $0xc3] sm:$0xff]
      %v10867 = vld [vmem:[%s273 + $0xcb] sm:$0xff]
      %v10868 = vld [vmem:[%s273 + $0xd3] sm:$0xff]
      %v10869 = vld [vmem:[%s273 + $0xdb] sm:$0xff]
      %v10870 = vld [vmem:[%s273 + $0xe3] sm:$0xff]
      %v10871 = vld [vmem:[%s273 + $0xeb] sm:$0xff]
      %v10872 = vld [vmem:[%s273 + $0xf3] sm:$0xff]
      %v10873 = vld [vmem:[%s273 + $0xfb] sm:$0xff]
      %v10874 = vld [vmem:[%s273 + $0x103] sm:$0xff]
      %v10875 = vld [vmem:[%s273 + $0x10b] sm:$0xff]
      %v10876 = vld [vmem:[%s273 + $0x113] sm:$0xff]
      %v10877 = vld [vmem:[%s273 + $0x11b] sm:$0xff]
      %v10878 = vld [vmem:[%s273 + $0x123] sm:$0xff]
      %v10879 = vld [vmem:[%s273 + $0x12b] sm:$0x3f]
      %v10880 = vadd.f32 %v10808, %v10844
      %v10881 = vadd.f32 %v10809, %v10845
      %v10882 = vadd.f32 %v10810, %v10846
      %v10883 = vadd.f32 %v10811, %v10847
      %v10884 = vadd.f32 %v10812, %v10848
      %v10885 = vadd.f32 %v10813, %v10849
      %v10886 = vadd.f32 %v10814, %v10850
      %v10887 = vadd.f32 %v10815, %v10851
      %v10888 = vadd.f32 %v10816, %v10852
      %v10889 = vadd.f32 %v10817, %v10853
      %v10890 = vadd.f32 %v10818, %v10854
      %v10891 = vadd.f32 %v10819, %v10855
      %v10892 = vadd.f32 %v10820, %v10856
      %v10893 = vadd.f32 %v10821, %v10857
      %v10894 = vadd.f32 %v10822, %v10858
      %v10895 = vadd.f32 %v10823, %v10859
      %v10896 = vadd.f32 %v10824, %v10860
      %v10897 = vadd.f32 %v10825, %v10861
      %v10898 = vadd.f32 %v10826, %v10862
      %v10899 = vadd.f32 %v10827, %v10863
      %v10900 = vadd.f32 %v10828, %v10864
      %v10901 = vadd.f32 %v10829, %v10865
      %v10902 = vadd.f32 %v10830, %v10866
      %v10903 = vadd.f32 %v10831, %v10867
      %v10904 = vadd.f32 %v10832, %v10868
      %v10905 = vadd.f32 %v10833, %v10869
      %v10906 = vadd.f32 %v10834, %v10870
      %v10907 = vadd.f32 %v10835, %v10871
      %v10908 = vadd.f32 %v10836, %v10872
      %v10909 = vadd.f32 %v10837, %v10873
      %v10910 = vadd.f32 %v10838, %v10874
      %v10911 = vadd.f32 %v10839, %v10875
      %v10912 = vadd.f32 %v10840, %v10876
      %v10913 = vadd.f32 %v10841, %v10877
      %v10914 = vadd.f32 %v10842, %v10878
      %v10915 = vadd.f32 %v10843, %v10879
      %v10916 = vmax.f32 %v10880, 0.0
      %v10917 = vmax.f32 %v10881, 0.0
      %v10918 = vmax.f32 %v10882, 0.0
      %v10919 = vmax.f32 %v10883, 0.0
      %v10920 = vmax.f32 %v10884, 0.0
      %v10921 = vmax.f32 %v10885, 0.0
      %v10922 = vmax.f32 %v10886, 0.0
      %v10923 = vmax.f32 %v10887, 0.0
      %v10924 = vmax.f32 %v10888, 0.0
      %v10925 = vmax.f32 %v10889, 0.0
      %v10926 = vmax.f32 %v10890, 0.0
      %v10927 = vmax.f32 %v10891, 0.0
      %v10928 = vmax.f32 %v10892, 0.0
      %v10929 = vmax.f32 %v10893, 0.0
      %v10930 = vmax.f32 %v10894, 0.0
      %v10931 = vmax.f32 %v10895, 0.0
      %v10932 = vmax.f32 %v10896, 0.0
      %v10933 = vmax.f32 %v10897, 0.0
      %v10934 = vmax.f32 %v10898, 0.0
      %v10935 = vmax.f32 %v10899, 0.0
      %v10936 = vmax.f32 %v10900, 0.0
      %v10937 = vmax.f32 %v10901, 0.0
      %v10938 = vmax.f32 %v10902, 0.0
      %v10939 = vmax.f32 %v10903, 0.0
      %v10940 = vmax.f32 %v10904, 0.0
      %v10941 = vmax.f32 %v10905, 0.0
      %v10942 = vmax.f32 %v10906, 0.0
      %v10943 = vmax.f32 %v10907, 0.0
      %v10944 = vmax.f32 %v10908, 0.0
      %v10945 = vmax.f32 %v10909, 0.0
      %v10946 = vmax.f32 %v10910, 0.0
      %v10947 = vmax.f32 %v10911, 0.0
      %v10948 = vmax.f32 %v10912, 0.0
      %v10949 = vmax.f32 %v10913, 0.0
      %v10950 = vmax.f32 %v10914, 0.0
      %v10951 = vmax.f32 %v10915, 0.0
      %10952 = vst [vmem:[%s278] sm:$0xff] 0.0
      %10953 = vst [vmem:[%s278 + $0x8] sm:$0xff] 0.0
      %10954 = vst [vmem:[%s278 + $0x10] sm:$0xff] 0.0
      %10955 = vst [vmem:[%s278 + $0x18] sm:$0xff] 0.0
      %10956 = vst [vmem:[%s278 + $0x20] sm:$0xff] 0.0
      %10957 = vst [vmem:[%s278 + $0x28] sm:$0xff] 0.0
      %10958 = vst [vmem:[%s278 + $0x30] sm:$0xff] 0.0
      %10959 = vst [vmem:[%s278 + $0x38] sm:$0xff] 0.0
      %10960 = vst [vmem:[%s278 + $0x40] sm:$0xff] 0.0
      %10961 = vst [vmem:[%s278 + $0x48] sm:$0xff] 0.0
      %10962 = vst [vmem:[%s278 + $0x50] sm:$0xff] 0.0
      %10963 = vst [vmem:[%s278 + $0x58] sm:$0xff] 0.0
      %10964 = vst [vmem:[%s278 + $0x60] sm:$0xff] 0.0
      %10965 = vst [vmem:[%s278 + $0x68] sm:$0xff] 0.0
      %10966 = vst [vmem:[%s278 + $0x70] sm:$0xff] 0.0
      %10967 = vst [vmem:[%s278 + $0x78] sm:$0xff] 0.0
      %10968 = vst [vmem:[%s278 + $0x80] sm:$0xff] 0.0
      %10969 = vst [vmem:[%s278 + $0x88] sm:$0xff] 0.0
      %10970 = vst [vmem:[%s278 + $0x90] sm:$0xff] 0.0
      %10971 = vst [vmem:[%s278 + $0x98] sm:$0xff] 0.0
      %10972 = vst [vmem:[%s278 + $0xa0] sm:$0xff] 0.0
      %10973 = vst [vmem:[%s278 + $0xa8] sm:$0xff] 0.0
      %10974 = vst [vmem:[%s278 + $0xb0] sm:$0xff] 0.0
      %10975 = vst [vmem:[%s278 + $0xb8] sm:$0xff] 0.0
      %10976 = vst [vmem:[%s278 + $0xc0] sm:$0xff] 0.0
      %10977 = vst [vmem:[%s278 + $0xc8] sm:$0xff] 0.0
      %10978 = vst [vmem:[%s278 + $0xd0] sm:$0xff] 0.0
      %10979 = vst [vmem:[%s278 + $0xd8] sm:$0xff] 0.0
      %10980 = vst [vmem:[%s278 + $0xe0] sm:$0xff] 0.0
      %10981 = vst [vmem:[%s278 + $0xe8] sm:$0xff] 0.0
      %10982 = vst [vmem:[%s278 + $0xf0] sm:$0xff] 0.0
      %10983 = vst [vmem:[%s278 + $0xf8] sm:$0xff] 0.0
      %10984 = vst [vmem:[%s278 + $0x100] sm:$0xff] 0.0
      %10985 = vst [vmem:[%s278 + $0x108] sm:$0xff] 0.0
      %10986 = vst [vmem:[%s278 + $0x110] sm:$0xff] 0.0
      %10987 = vst [vmem:[%s278 + $0x118] sm:$0xff] 0.0
      %10988 = vst [vmem:[%s278 + $0x120] sm:$0xff] 0.0
      %10989 = vst [vmem:[%s278 + $0x128] sm:$0xff] 0.0
      %10990 = vst [vmem:[%s278 + $0x130] sm:$0xff] 0.0
      %10991 = vst [vmem:[%s278 + $0x138] sm:$0xff] 0.0
      %10992 = vst [vmem:[%s278 + $0x140] sm:$0xf] 0.0
      %10993 = vst [vmem:[%s278 + $0x13] sm:$0xff] %v10916
      %10994 = vst [vmem:[%s278 + $0x1b] sm:$0xff] %v10917
      %10995 = vst [vmem:[%s278 + $0x23] sm:$0xff] %v10918
      %10996 = vst [vmem:[%s278 + $0x2b] sm:$0xff] %v10919
      %10997 = vst [vmem:[%s278 + $0x33] sm:$0xff] %v10920
      %10998 = vst [vmem:[%s278 + $0x3b] sm:$0xff] %v10921
      %10999 = vst [vmem:[%s278 + $0x43] sm:$0xff] %v10922
      %11000 = vst [vmem:[%s278 + $0x4b] sm:$0xff] %v10923
      %11001 = vst [vmem:[%s278 + $0x53] sm:$0xff] %v10924
      %11002 = vst [vmem:[%s278 + $0x5b] sm:$0xff] %v10925
      %11003 = vst [vmem:[%s278 + $0x63] sm:$0xff] %v10926
      %11004 = vst [vmem:[%s278 + $0x6b] sm:$0xff] %v10927
      %11005 = vst [vmem:[%s278 + $0x73] sm:$0xff] %v10928
      %11006 = vst [vmem:[%s278 + $0x7b] sm:$0xff] %v10929
      %11007 = vst [vmem:[%s278 + $0x83] sm:$0xff] %v10930
      %11008 = vst [vmem:[%s278 + $0x8b] sm:$0xff] %v10931
      %11009 = vst [vmem:[%s278 + $0x93] sm:$0xff] %v10932
      %11010 = vst [vmem:[%s278 + $0x9b] sm:$0xff] %v10933
      %11011 = vst [vmem:[%s278 + $0xa3] sm:$0xff] %v10934
      %11012 = vst [vmem:[%s278 + $0xab] sm:$0xff] %v10935
      %11013 = vst [vmem:[%s278 + $0xb3] sm:$0xff] %v10936
      %11014 = vst [vmem:[%s278 + $0xbb] sm:$0xff] %v10937
      %11015 = vst [vmem:[%s278 + $0xc3] sm:$0xff] %v10938
      %11016 = vst [vmem:[%s278 + $0xcb] sm:$0xff] %v10939
      %11017 = vst [vmem:[%s278 + $0xd3] sm:$0xff] %v10940
      %11018 = vst [vmem:[%s278 + $0xdb] sm:$0xff] %v10941
      %11019 = vst [vmem:[%s278 + $0xe3] sm:$0xff] %v10942
      %11020 = vst [vmem:[%s278 + $0xeb] sm:$0xff] %v10943
      %11021 = vst [vmem:[%s278 + $0xf3] sm:$0xff] %v10944
      %11022 = vst [vmem:[%s278 + $0xfb] sm:$0xff] %v10945
      %11023 = vst [vmem:[%s278 + $0x103] sm:$0xff] %v10946
      %11024 = vst [vmem:[%s278 + $0x10b] sm:$0xff] %v10947
      %11025 = vst [vmem:[%s278 + $0x113] sm:$0xff] %v10948
      %11026 = vst [vmem:[%s278 + $0x11b] sm:$0xff] %v10949
      %11027 = vst [vmem:[%s278 + $0x123] sm:$0xff] %v10950
      %11028 = vst [vmem:[%s278 + $0x12b] sm:$0x3f] %v10951
      %p11029 = scmp.lt.s32.totalorder %s18, 1
      %s11030 = scalar_select %p11029, %s18, 1
      %s11031 = smul.addr %s11030, 41
      %s11032 = smul.addr %s11031, 8
      %s11033 = scalar_lea.vmem %s7, %s11032
      // Predicated region
      $region49: #{tpu_custom_call.1} parent=47 // pred_check
        %p11034 = pneg %p188
      $region50: #{tpu_custom_call.1} parent=47 // pred_check_branch
        %11036 = sbr.rel (%p11034) target = $region52
      $region51: #{tpu_custom_call.1} parent=47 // pred_region
        _
      $region52: #{tpu_custom_call.1} parent=47 // pred_fallthru
        _
    $region48: #{tpu_custom_call.1} parent=5 // pred_fallthru
      _
    %p11037 = scmp.le.s32.totalorder 2, %s13
    // Predicated region
    $region53: #{tpu_custom_call.1} parent=5 // pred_check
      %p11038 = pneg %p11037
    $region54: #{tpu_custom_call.1} parent=5 // pred_check_branch
      %11040 = sbr.rel (%p11038) target = $region56
    $region55: #{tpu_custom_call.1} parent=5 // pred_region
      %s11041 = ssub.s32 %s13, 2
      // Predicated region
      $region57: #{tpu_custom_call.1} parent=55 // pred_check
        %p11042 = pneg %p194
      $region58: #{tpu_custom_call.1} parent=55 // pred_check_branch
        %11044 = sbr.rel (%p11042) target = $region60
      $region59: #{tpu_custom_call.1} parent=55 // pred_region
        %p11045 = scmp.lt.s32.totalorder %s19, 1
        %s11046 = scalar_select %p11045, %s19, 1
        %s11047 = smul.addr %s11046, 41
        %s11048 = smul.addr %s11047, 8
        %s11049 = scalar_lea.vmem %s7, %s11048
      $region60: #{tpu_custom_call.1} parent=55 // pred_fallthru
        _
    $region56: #{tpu_custom_call.1} parent=5 // pred_fallthru
      _
  $region6: #{tpu_custom_call.1} parent=0 // loop_footer
    %s17 = sadd.s32 1, %s13
  $region7: #{tpu_custom_call.1} parent=0 // loop_footer_branch
    %12 = sbr.rel target = $region3
  $region8: #{tpu_custom_call.1} parent=0 // loop_exit
    _

</llo_original>
